<compile_context>
chip_gen: v7x
topology: tpu7x:2x2x1
jax: 0.10.0
libtpu: 0.0.40
codegen_flags: <defaults>
</compile_context>

<pallas_src>
import functools

import jax
import jax.numpy as jnp
from jax import lax
from jax.experimental import pallas as pl
from jax.experimental.pallas import tpu as pltpu

EPS = 1e-5
LANE = 128


def _round_up(x, m):
    return (x + m - 1) // m * m


# ---------------------------------------------------------------------------
# Kernel 1: conv1 (3x3, stride s) + optional 1x1 projection shortcut.
# Pads x spatially inside VMEM, builds one bf16 im2col patch, one MXU matmul.
# Emits bf16 conv outputs and per-sample f32 (sum, sum_sq) BN statistics.
# ---------------------------------------------------------------------------
def _conv1_kernel(*refs, stride, has_proj):
    if has_proj:
        (x_ref, w1_ref, ws_ref,
         y1_ref, st1_ref, sr_ref, sts_ref, xp_ref, patch_ref) = refs
    else:
        (x_ref, w1_ref, y1_ref, st1_ref, xp_ref, patch_ref) = refs
        ws_ref = sr_ref = sts_ref = None

    _, H, W, Cin = x_ref.shape
    _, Ho, Wo, Cp = y1_ref.shape
    M = Ho * Wo
    s = stride

    # Fold the 1-pixel zero pad into VMEM (no XLA-side jnp.pad HBM pass):
    # zero only the border, write the interior once (single f32->bf16 cast).
    zr = jnp.zeros((1, W + 2, Cin), xp_ref.dtype)
    zc = jnp.zeros((H, 1, Cin), xp_ref.dtype)
    xp_ref[0:1, :, :] = zr
    xp_ref[H + 1:H + 2, :, :] = zr
    xp_ref[1:H + 1, 0:1, :] = zc
    xp_ref[1:H + 1, W + 1:W + 2, :] = zc
    xp_ref[1:H + 1, 1:W + 1, :] = x_ref[0].astype(xp_ref.dtype)

    def window(kh, kw):
        # (Ho, Wo, Cin) window of the padded input for one conv tap.
        if s == 1:
            return xp_ref[kh:kh + Ho, kw:kw + Wo, :]
        # TODO(synk): stride-2 sublane gathers could be avoided with an
        # even/odd W de-interleave; not exercised by the stride=1 test path.
        return xp_ref[pl.ds(kh, Ho, s), pl.ds(kw, Wo, s), :]

    # bf16 im2col: taps are already bf16 (no full-tensor cast), one matmul.
    # TODO(synk): when Cin % 128 != 0 the tap column offsets are lane-masked;
    # padding the tap stride to 128 would make these stores fully lane-dense.
    for kh in range(3):
        for kw in range(3):
            t = kh * 3 + kw
            patch_ref[:, :, t * Cin:(t + 1) * Cin] = window(kh, kw)

    acc = jnp.dot(patch_ref[...].reshape(M, 9 * Cin), w1_ref[...],
                  preferred_element_type=jnp.float32)
    st1_ref[0, 0:1, :] = jnp.sum(acc, axis=0, keepdims=True)
    st1_ref[0, 1:2, :] = jnp.sum(acc * acc, axis=0, keepdims=True)
    y1_ref[0] = acc.reshape(Ho, Wo, Cp).astype(y1_ref.dtype)

    if has_proj:
        xs = window(1, 1).reshape(M, Cin)
        sc = jnp.dot(xs, ws_ref[...], preferred_element_type=jnp.float32)
        sts_ref[0, 0:1, :] = jnp.sum(sc, axis=0, keepdims=True)
        sts_ref[0, 1:2, :] = jnp.sum(sc * sc, axis=0, keepdims=True)
        sr_ref[0] = sc.reshape(Ho, Wo, Cp).astype(sr_ref.dtype)


# ---------------------------------------------------------------------------
# Kernel 2: folded BN1 + ReLU applied on the fly, then conv2 (3x3, stride 1)
# as 3 accumulated matmuls over per-kh-row patches (K = 3*Cp each).
# Emits bf16 conv2 output and per-sample f32 BN2 stats.
# ---------------------------------------------------------------------------
def _conv2_kernel(y1_ref, s1_ref, b1_ref, w2_ref, y2_ref, st2_ref,
                  h1p_ref, rowp_ref):
    _, Ho, Wo, Cp = y1_ref.shape
    M = Ho * Wo

    # Folded BN1 + ReLU in f32; one bf16 cast when writing the padded scratch.
    h1 = jnp.maximum(y1_ref[0] * s1_ref[...] + b1_ref[...], 0.0)

    zr = jnp.zeros((1, Wo + 2, Cp), h1p_ref.dtype)
    zc = jnp.zeros((Ho, 1, Cp), h1p_ref.dtype)
    h1p_ref[0:1, :, :] = zr
    h1p_ref[Ho + 1:Ho + 2, :, :] = zr
    h1p_ref[1:Ho + 1, 0:1, :] = zc
    h1p_ref[1:Ho + 1, Wo + 1:Wo + 2, :] = zc
    h1p_ref[1:Ho + 1, 1:Wo + 1, :] = h1.astype(h1p_ref.dtype)

    # One kh-row of the im2col patch at a time (lane-dense Cp-wide tap copies,
    # 3x smaller scratch), accumulate 3 MXU matmuls into an f32 accumulator.
    acc = None
    for kh in range(3):
        for kw in range(3):
            rowp_ref[:, :, kw * Cp:(kw + 1) * Cp] = (
                h1p_ref[kh:kh + Ho, kw:kw + Wo, :])
        part = jnp.dot(rowp_ref[...].reshape(M, 3 * Cp), w2_ref[kh],
                       preferred_element_type=jnp.float32)
        acc = part if acc is None else acc + part

    st2_ref[0, 0:1, :] = jnp.sum(acc, axis=0, keepdims=True)
    st2_ref[0, 1:2, :] = jnp.sum(acc * acc, axis=0, keepdims=True)
    y2_ref[0] = acc.reshape(Ho, Wo, Cp).astype(y2_ref.dtype)


# ---------------------------------------------------------------------------
# Kernel 3: folded BN2 (+ folded shortcut-BN) + residual add + ReLU.
# ---------------------------------------------------------------------------
def _residual_proj_kernel(y2_ref, s2_ref, b2_ref, sh_ref, ss_ref, bs_ref,
                          out_ref):
    h2 = y2_ref[0] * s2_ref[...] + b2_ref[...]
    sc = sh_ref[0] * ss_ref[...] + bs_ref[...]
    out_ref[0] = jnp.maximum(h2 + sc, 0.0).astype(out_ref.dtype)


def _residual_id_kernel(y2_ref, s2_ref, b2_ref, x_ref, out_ref, *, cin):
    # Identity shortcut: add the raw (unpadded) Cin lanes of x directly —
    # no channel-padding HBM copy in the wrapper.
    h2 = y2_ref[0] * s2_ref[...] + b2_ref[...]
    cp = h2.shape[-1]
    out_ref[0, :, :, :cin] = jnp.maximum(
        h2[:, :, :cin] + x_ref[0], 0.0).astype(out_ref.dtype)
    if cp > cin:
        out_ref[0, :, :, cin:] = jnp.maximum(
            h2[:, :, cin:], 0.0).astype(out_ref.dtype)


# ---------------------------------------------------------------------------
# Parameters (PyTorch layouts) and packing into kernel-friendly layouts.
# ---------------------------------------------------------------------------
def init_params(key, cin, cout):
    ks = jax.random.split(key, 9)
    return {
        "w1": 0.1 * jax.random.normal(ks[0], (cout, cin, 3, 3), jnp.float32),
        "g1": 1.0 + 0.1 * jax.random.normal(ks[1], (cout,), jnp.float32),
        "b1": 0.1 * jax.random.normal(ks[2], (cout,), jnp.float32),
        "w2": 0.1 * jax.random.normal(ks[3], (cout, cout, 3, 3), jnp.float32),
        "g2": 1.0 + 0.1 * jax.random.normal(ks[4], (cout,), jnp.float32),
        "b2": 0.1 * jax.random.normal(ks[5], (cout,), jnp.float32),
        "ws": 0.1 * jax.random.normal(ks[6], (cout, cin, 1, 1), jnp.float32),
        "gs": 1.0 + 0.1 * jax.random.normal(ks[7], (cout,), jnp.float32),
        "bs": 0.1 * jax.random.normal(ks[8], (cout,), jnp.float32),
    }


def _pack_params(p, cin, cout, cp):
    pc = cp - cout
    # w1: (Cout,Cin,3,3) -> (kh,kw,ci,co) -> (9*Cin, Cp), bf16.
    w1 = jnp.transpose(p["w1"], (2, 3, 1, 0)).reshape(9 * cin, cout)
    w1 = jnp.pad(w1, ((0, 0), (0, pc))).astype(jnp.bfloat16)
    # w2: (Cout,Cout,3,3) -> (kh, kw*ci, co) = (3, 3*Cp, Cp), bf16.
    w2 = jnp.transpose(p["w2"], (2, 3, 1, 0))
    w2 = jnp.pad(w2, ((0, 0), (0, 0), (0, pc), (0, pc)))
    w2 = w2.reshape(3, 3 * cp, cp).astype(jnp.bfloat16)
    ws = jnp.pad(p["ws"][:, :, 0, 0].T, ((0, 0), (0, pc))).astype(jnp.bfloat16)
    padv = lambda v: jnp.pad(v, (0, pc))
    return {"w1": w1, "w2": w2, "ws": ws,
            "g1": padv(p["g1"]), "b1": padv(p["b1"]),
            "g2": padv(p["g2"]), "b2": padv(p["b2"]),
            "gs": padv(p["gs"]), "bs": padv(p["bs"])}


def _bn_fold(stats, gamma, beta, count):
    """Global batch stats from per-sample (sum, sum_sq) -> folded scale/bias."""
    tot = jnp.sum(stats, axis=0)                           # (2, Cp)
    mean = tot[0] / count
    var = jnp.maximum(tot[1] / count - mean * mean, 0.0)   # biased variance
    scale = gamma * lax.rsqrt(var + EPS)
    bias = beta - mean * scale
    return scale.reshape(1, -1), bias.reshape(1, -1)


@functools.partial(jax.jit, static_argnames=("stride",))
def basic_block_forward(x_nchw, params, *, stride=1):
    """Forward pass of BasicBlock. Input/output are NCHW (PyTorch convention)."""
    B, Cin, H, W = x_nchw.shape
    Cout = params["w1"].shape[0]
    Ho = (H - 1) // stride + 1
    Wo = (W - 1) // stride + 1
    has_proj = (stride != 1) or (Cin != Cout)
    Cp = _round_up(Cout, LANE)
    count = B * Ho * Wo

    # TODO(synk): the NCHW<->NHWC transposes (and the final channel-pad slice)
    # are interface plumbing; a whole-network NHWC pipeline would remove them.
    x = jnp.transpose(x_nchw, (0, 2, 3, 1))                # NCHW -> NHWC
    kp = _pack_params(params, Cin, Cout, Cp)

    cparams = pltpu.CompilerParams(dimension_semantics=("parallel",),
                                   vmem_limit_bytes=32 * 1024 * 1024)
    # TODO(synk): v7x could additionally tile Ho into row blocks (halo in the
    # index_map) for finer megacore balance; batch-only grid is kept here.

    x_spec = pl.BlockSpec((1, H, W, Cin), lambda b: (b, 0, 0, 0))
    act_spec = pl.BlockSpec((1, Ho, Wo, Cp), lambda b: (b, 0, 0, 0))
    st_spec = pl.BlockSpec((1, 2, Cp), lambda b: (b, 0, 0))
    vec_spec = pl.BlockSpec((1, Cp), lambda b: (0, 0))
    w1_spec = pl.BlockSpec((9 * Cin, Cp), lambda b: (0, 0))
    ws_spec = pl.BlockSpec((Cin, Cp), lambda b: (0, 0))
    w2_spec = pl.BlockSpec((3, 3 * Cp, Cp), lambda b: (0, 0, 0))

    act_shape = jax.ShapeDtypeStruct((B, Ho, Wo, Cp), jnp.bfloat16)   # bf16 HBM
    st_shape = jax.ShapeDtypeStruct((B, 2, Cp), jnp.float32)
    out_shape = jax.ShapeDtypeStruct((B, Ho, Wo, Cp), jnp.float32)

    scratch1 = [pltpu.VMEM((H + 2, W + 2, Cin), jnp.bfloat16),   # padded x
                pltpu.VMEM((Ho, Wo, 9 * Cin), jnp.bfloat16)]     # im2col patch

    # ---- kernel 1: conv1 (+ projection shortcut) + per-sample BN stats ----
    if has_proj:
        y1, st1, s_raw, st_s = pl.pallas_call(
            functools.partial(_conv1_kernel, stride=stride, has_proj=True),
            grid=(B,),
            in_specs=[x_spec, w1_spec, ws_spec],
            out_specs=(act_spec, st_spec, act_spec, st_spec),
            out_shape=(act_shape, st_shape, act_shape, st_shape),
            scratch_shapes=scratch1, compiler_params=cparams,
        )(x, kp["w1"], kp["ws"])
    else:
        y1, st1 = pl.pallas_call(
            functools.partial(_conv1_kernel, stride=stride, has_proj=False),
            grid=(B,),
            in_specs=[x_spec, w1_spec],
            out_specs=(act_spec, st_spec),
            out_shape=(act_shape, st_shape),
            scratch_shapes=scratch1, compiler_params=cparams,
        )(x, kp["w1"])

    s1, b1 = _bn_fold(st1, kp["g1"], kp["b1"], count)

    # ---- kernel 2: BN1+ReLU (folded) -> conv2 (3 accumulated matmuls) ----
    y2, st2 = pl.pallas_call(
        _conv2_kernel,
        grid=(B,),
        in_specs=[act_spec, vec_spec, vec_spec, w2_spec],
        out_specs=(act_spec, st_spec),
        out_shape=(act_shape, st_shape),
        scratch_shapes=[pltpu.VMEM((Ho + 2, Wo + 2, Cp), jnp.bfloat16),
                        pltpu.VMEM((Ho, Wo, 3 * Cp), jnp.bfloat16)],
        compiler_params=cparams,
    )(y1, s1, b1, kp["w2"])

    s2, b2 = _bn_fold(st2, kp["g2"], kp["b2"], count)

    # ---- kernel 3: BN2 (folded) + shortcut + add + ReLU ----
    if has_proj:
        ss, bs = _bn_fold(st_s, kp["gs"], kp["bs"], count)
        out_p = pl.pallas_call(
            _residual_proj_kernel,
            grid=(B,),
            in_specs=[act_spec, vec_spec, vec_spec, act_spec, vec_spec, vec_spec],
            out_specs=act_spec,
            out_shape=out_shape,
            compiler_params=cparams,
        )(y2, s2, b2, s_raw, ss, bs)
    else:
        out_p = pl.pallas_call(
            functools.partial(_residual_id_kernel, cin=Cin),
            grid=(B,),
            in_specs=[act_spec, vec_spec, vec_spec, x_spec],
            out_specs=act_spec,
            out_shape=out_shape,
            compiler_params=cparams,
        )(y2, s2, b2, x)

    out = out_p[..., :Cout]                                 # drop channel pad
    return jnp.transpose(out, (0, 3, 1, 2))                 # NHWC -> NCHW


def _reference(x_nchw, p, stride):
    """Pure-JAX reference with the PyTorch module semantics (training-mode BN).

    Conv operands and inter-stage activations are rounded to bf16 exactly where
    the Pallas kernels intentionally use bf16 (with f32 accumulation), so the
    comparison isolates kernel correctness from the precision tradeoff."""
    def rnd(v):
        return v.astype(jnp.bfloat16).astype(jnp.float32)

    def conv(x, w, s, pad):
        return lax.conv_general_dilated(
            rnd(x), rnd(w), (s, s), [(pad, pad), (pad, pad)],
            dimension_numbers=("NCHW", "OIHW", "NCHW"),
            preferred_element_type=jnp.float32,
            precision=lax.Precision.HIGHEST)

    def bn(y, g, b):
        mean = jnp.mean(y, axis=(0, 2, 3), keepdims=True)
        var = jnp.mean((y - mean) ** 2, axis=(0, 2, 3), keepdims=True)
        return ((y - mean) * lax.rsqrt(var + EPS) * g.reshape(1, -1, 1, 1)
                + b.reshape(1, -1, 1, 1))

    cout, cin = p["w1"].shape[0], p["w1"].shape[1]
    y1 = rnd(conv(x_nchw, p["w1"], stride, 1))        # bf16 inter-stage storage
    h = jax.nn.relu(bn(y1, p["g1"], p["b1"]))
    y2 = rnd(conv(h, p["w2"], 1, 1))
    h2 = bn(y2, p["g2"], p["b2"])
    if stride != 1 or cin != cout:
        sc = bn(rnd(conv(x_nchw, p["ws"], stride, 0)), p["gs"], p["bs"])
    else:
        sc = x_nchw
    return jax.nn.relu(h2 + sc)


if __name__ == "__main__":
    key = jax.random.PRNGKey(0)
    kx1, kp1, kx2, kp2 = jax.random.split(key, 4)

    # 1) channel-changing block -> exercises the 1x1 projection shortcut path.
    B, Cin, Cout, H, W, stride = 2, 4, 8, 16, 16, 1
    x = jax.random.normal(kx1, (B, Cin, H, W), jnp.float32)
    params = init_params(kp1, Cin, Cout)
    out = jax.block_until_ready(basic_block_forward(x, params, stride=stride))
    ref = jax.block_until_ready(_reference(x, params, stride))
    assert out.shape == ref.shape, (out.shape, ref.shape)
    assert bool(jnp.allclose(out, ref, rtol=2e-2, atol=2e-2)), (
        "projection path mismatch, max abs err "
        f"{float(jnp.max(jnp.abs(out - ref)))}")

    # 2) same-channel block -> exercises the identity shortcut path.
    x2 = jax.random.normal(kx2, (2, 8, 16, 16), jnp.float32)
    params2 = init_params(kp2, 8, 8)
    out2 = jax.block_until_ready(basic_block_forward(x2, params2, stride=1))
    ref2 = jax.block_until_ready(_reference(x2, params2, 1))
    assert out2.shape == ref2.shape, (out2.shape, ref2.shape)
    assert bool(jnp.allclose(out2, ref2, rtol=2e-2, atol=2e-2)), (
        "identity path mismatch, max abs err "
        f"{float(jnp.max(jnp.abs(out2 - ref2)))}")

    # TODO(synk): BatchNorm running_mean/running_var buffer updates (a training
    # side effect) are not modeled; only the forward output is produced.
    print("KERNEL_OK")
</pallas_src>

<mosaic_0001>
module attributes {stable_mosaic.version = 11 : i64} {
  func.func @_conv1_kernel(%arg0: i32, %arg1: memref<1x16x16x4xf32, #tpu.memory_space<vmem>>, %arg2: memref<36x128xbf16, #tpu.memory_space<vmem>>, %arg3: memref<4x128xbf16, #tpu.memory_space<vmem>>, %arg4: memref<1x16x16x128xbf16, #tpu.memory_space<vmem>>, %arg5: memref<1x2x128xf32, #tpu.memory_space<vmem>>, %arg6: memref<1x16x16x128xbf16, #tpu.memory_space<vmem>>, %arg7: memref<1x2x128xf32, #tpu.memory_space<vmem>>, %arg8: memref<18x18x4xbf16, #tpu.memory_space<vmem>>, %arg9: memref<16x16x36xbf16, #tpu.memory_space<vmem>>) attributes {dimension_semantics = [#tpu.dimension_semantics<parallel>], iteration_bounds = array<i64: 2>, scalar_prefetch = 0 : i64, scratch_operands = 2 : i64, tpu.core_type = #tpu.core_type<tc>, window_params = [{transform_indices = @transform_0, window_bounds = array<i64: 1, 16, 16, 4>}, {pipeline_mode = #tpu.pipeline_mode<synchronous>, transform_indices = @transform_1, window_bounds = array<i64: 36, 128>}, {pipeline_mode = #tpu.pipeline_mode<synchronous>, transform_indices = @transform_2, window_bounds = array<i64: 4, 128>}, {transform_indices = @transform_3, window_bounds = array<i64: 1, 16, 16, 128>}, {transform_indices = @transform_4, window_bounds = array<i64: 1, 2, 128>}, {transform_indices = @transform_5, window_bounds = array<i64: 1, 16, 16, 128>}, {transform_indices = @transform_6, window_bounds = array<i64: 1, 2, 128>}]} {
    %cst = arith.constant 0.000000e+00 : bf16
    %0 = vector.broadcast %cst : bf16 to vector<1x18x4xbf16>
    %cst_0 = arith.constant 0.000000e+00 : bf16
    %1 = vector.broadcast %cst_0 : bf16 to vector<16x1x4xbf16>
    %c0 = arith.constant 0 : index
    %c0_1 = arith.constant 0 : index
    %c0_2 = arith.constant 0 : index
    %2 = vector.load %arg8[%c0, %c0_1, %c0_2] : memref<18x18x4xbf16, #tpu.memory_space<vmem>>, vector<1x18x4xbf16>
    tpu.vector_store %arg8[%c0, %c0_1, %c0_2], %0 {strides = array<i32>} : memref<18x18x4xbf16, #tpu.memory_space<vmem>>, vector<1x18x4xbf16>,
    %c17 = arith.constant 17 : index
    %c0_3 = arith.constant 0 : index
    %c0_4 = arith.constant 0 : index
    %3 = vector.load %arg8[%c17, %c0_3, %c0_4] : memref<18x18x4xbf16, #tpu.memory_space<vmem>>, vector<1x18x4xbf16>
    tpu.vector_store %arg8[%c17, %c0_3, %c0_4], %0 {strides = array<i32>} : memref<18x18x4xbf16, #tpu.memory_space<vmem>>, vector<1x18x4xbf16>,
    %c1 = arith.constant 1 : index
    %c0_5 = arith.constant 0 : index
    %c0_6 = arith.constant 0 : index
    %4 = vector.load %arg8[%c1, %c0_5, %c0_6] : memref<18x18x4xbf16, #tpu.memory_space<vmem>>, vector<16x1x4xbf16>
    tpu.vector_store %arg8[%c1, %c0_5, %c0_6], %1 {strides = array<i32>} : memref<18x18x4xbf16, #tpu.memory_space<vmem>>, vector<16x1x4xbf16>,
    %c1_7 = arith.constant 1 : index
    %c17_8 = arith.constant 17 : index
    %c0_9 = arith.constant 0 : index
    %5 = vector.load %arg8[%c1_7, %c17_8, %c0_9] : memref<18x18x4xbf16, #tpu.memory_space<vmem>>, vector<16x1x4xbf16>
    tpu.vector_store %arg8[%c1_7, %c17_8, %c0_9], %1 {strides = array<i32>} : memref<18x18x4xbf16, #tpu.memory_space<vmem>>, vector<16x1x4xbf16>,
    %c0_10 = arith.constant 0 : index
    %c0_11 = arith.constant 0 : index
    %c0_12 = arith.constant 0 : index
    %c0_13 = arith.constant 0 : index
    %6 = vector.load %arg1[%c0_10, %c0_11, %c0_12, %c0_13] : memref<1x16x16x4xf32, #tpu.memory_space<vmem>>, vector<1x16x16x4xf32>
    %7 = vector.shape_cast %6 : vector<1x16x16x4xf32> to vector<16x16x4xf32>
    %8 = arith.truncf %7 : vector<16x16x4xf32> to vector<16x16x4xbf16>
    %c1_14 = arith.constant 1 : index
    %c1_15 = arith.constant 1 : index
    %c0_16 = arith.constant 0 : index
    %9 = vector.load %arg8[%c1_14, %c1_15, %c0_16] : memref<18x18x4xbf16, #tpu.memory_space<vmem>>, vector<16x16x4xbf16>
    tpu.vector_store %arg8[%c1_14, %c1_15, %c0_16], %8 {strides = array<i32>} : memref<18x18x4xbf16, #tpu.memory_space<vmem>>, vector<16x16x4xbf16>,
    %c0_17 = arith.constant 0 : index
    %c0_18 = arith.constant 0 : index
    %c0_19 = arith.constant 0 : index
    %10 = vector.load %arg8[%c0_17, %c0_18, %c0_19] : memref<18x18x4xbf16, #tpu.memory_space<vmem>>, vector<16x16x4xbf16>
    %c0_20 = arith.constant 0 : index
    %c0_21 = arith.constant 0 : index
    %c0_22 = arith.constant 0 : index
    %11 = vector.load %arg9[%c0_20, %c0_21, %c0_22] : memref<16x16x36xbf16, #tpu.memory_space<vmem>>, vector<16x16x4xbf16>
    tpu.vector_store %arg9[%c0_20, %c0_21, %c0_22], %10 {strides = array<i32>} : memref<16x16x36xbf16, #tpu.memory_space<vmem>>, vector<16x16x4xbf16>,
    %c0_23 = arith.constant 0 : index
    %c1_24 = arith.constant 1 : index
    %c0_25 = arith.constant 0 : index
    %12 = vector.load %arg8[%c0_23, %c1_24, %c0_25] : memref<18x18x4xbf16, #tpu.memory_space<vmem>>, vector<16x16x4xbf16>
    %c0_26 = arith.constant 0 : index
    %c0_27 = arith.constant 0 : index
    %c4 = arith.constant 4 : index
    %13 = vector.load %arg9[%c0_26, %c0_27, %c4] : memref<16x16x36xbf16, #tpu.memory_space<vmem>>, vector<16x16x4xbf16>
    tpu.vector_store %arg9[%c0_26, %c0_27, %c4], %12 {strides = array<i32>} : memref<16x16x36xbf16, #tpu.memory_space<vmem>>, vector<16x16x4xbf16>,
    %c0_28 = arith.constant 0 : index
    %c2 = arith.constant 2 : index
    %c0_29 = arith.constant 0 : index
    %14 = vector.load %arg8[%c0_28, %c2, %c0_29] : memref<18x18x4xbf16, #tpu.memory_space<vmem>>, vector<16x16x4xbf16>
    %c0_30 = arith.constant 0 : index
    %c0_31 = arith.constant 0 : index
    %c8 = arith.constant 8 : index
    %15 = vector.load %arg9[%c0_30, %c0_31, %c8] : memref<16x16x36xbf16, #tpu.memory_space<vmem>>, vector<16x16x4xbf16>
    tpu.vector_store %arg9[%c0_30, %c0_31, %c8], %14 {strides = array<i32>} : memref<16x16x36xbf16, #tpu.memory_space<vmem>>, vector<16x16x4xbf16>,
    %c1_32 = arith.constant 1 : index
    %c0_33 = arith.constant 0 : index
    %c0_34 = arith.constant 0 : index
    %16 = vector.load %arg8[%c1_32, %c0_33, %c0_34] : memref<18x18x4xbf16, #tpu.memory_space<vmem>>, vector<16x16x4xbf16>
    %c0_35 = arith.constant 0 : index
    %c0_36 = arith.constant 0 : index
    %c12 = arith.constant 12 : index
    %17 = vector.load %arg9[%c0_35, %c0_36, %c12] : memref<16x16x36xbf16, #tpu.memory_space<vmem>>, vector<16x16x4xbf16>
    tpu.vector_store %arg9[%c0_35, %c0_36, %c12], %16 {strides = array<i32>} : memref<16x16x36xbf16, #tpu.memory_space<vmem>>, vector<16x16x4xbf16>,
    %c1_37 = arith.constant 1 : index
    %c1_38 = arith.constant 1 : index
    %c0_39 = arith.constant 0 : index
    %18 = vector.load %arg8[%c1_37, %c1_38, %c0_39] : memref<18x18x4xbf16, #tpu.memory_space<vmem>>, vector<16x16x4xbf16>
    %c0_40 = arith.constant 0 : index
    %c0_41 = arith.constant 0 : index
    %c16 = arith.constant 16 : index
    %19 = vector.load %arg9[%c0_40, %c0_41, %c16] : memref<16x16x36xbf16, #tpu.memory_space<vmem>>, vector<16x16x4xbf16>
    tpu.vector_store %arg9[%c0_40, %c0_41, %c16], %18 {strides = array<i32>} : memref<16x16x36xbf16, #tpu.memory_space<vmem>>, vector<16x16x4xbf16>,
    %c1_42 = arith.constant 1 : index
    %c2_43 = arith.constant 2 : index
    %c0_44 = arith.constant 0 : index
    %20 = vector.load %arg8[%c1_42, %c2_43, %c0_44] : memref<18x18x4xbf16, #tpu.memory_space<vmem>>, vector<16x16x4xbf16>
    %c0_45 = arith.constant 0 : index
    %c0_46 = arith.constant 0 : index
    %c20 = arith.constant 20 : index
    %21 = vector.load %arg9[%c0_45, %c0_46, %c20] : memref<16x16x36xbf16, #tpu.memory_space<vmem>>, vector<16x16x4xbf16>
    tpu.vector_store %arg9[%c0_45, %c0_46, %c20], %20 {strides = array<i32>} : memref<16x16x36xbf16, #tpu.memory_space<vmem>>, vector<16x16x4xbf16>,
    %c2_47 = arith.constant 2 : index
    %c0_48 = arith.constant 0 : index
    %c0_49 = arith.constant 0 : index
    %22 = vector.load %arg8[%c2_47, %c0_48, %c0_49] : memref<18x18x4xbf16, #tpu.memory_space<vmem>>, vector<16x16x4xbf16>
    %c0_50 = arith.constant 0 : index
    %c0_51 = arith.constant 0 : index
    %c24 = arith.constant 24 : index
    %23 = vector.load %arg9[%c0_50, %c0_51, %c24] : memref<16x16x36xbf16, #tpu.memory_space<vmem>>, vector<16x16x4xbf16>
    tpu.vector_store %arg9[%c0_50, %c0_51, %c24], %22 {strides = array<i32>} : memref<16x16x36xbf16, #tpu.memory_space<vmem>>, vector<16x16x4xbf16>,
    %c2_52 = arith.constant 2 : index
    %c1_53 = arith.constant 1 : index
    %c0_54 = arith.constant 0 : index
    %24 = vector.load %arg8[%c2_52, %c1_53, %c0_54] : memref<18x18x4xbf16, #tpu.memory_space<vmem>>, vector<16x16x4xbf16>
    %c0_55 = arith.constant 0 : index
    %c0_56 = arith.constant 0 : index
    %c28 = arith.constant 28 : index
    %25 = vector.load %arg9[%c0_55, %c0_56, %c28] : memref<16x16x36xbf16, #tpu.memory_space<vmem>>, vector<16x16x4xbf16>
    tpu.vector_store %arg9[%c0_55, %c0_56, %c28], %24 {strides = array<i32>} : memref<16x16x36xbf16, #tpu.memory_space<vmem>>, vector<16x16x4xbf16>,
    %c2_57 = arith.constant 2 : index
    %c2_58 = arith.constant 2 : index
    %c0_59 = arith.constant 0 : index
    %26 = vector.load %arg8[%c2_57, %c2_58, %c0_59] : memref<18x18x4xbf16, #tpu.memory_space<vmem>>, vector<16x16x4xbf16>
    %c0_60 = arith.constant 0 : index
    %c0_61 = arith.constant 0 : index
    %c32 = arith.constant 32 : index
    %27 = vector.load %arg9[%c0_60, %c0_61, %c32] : memref<16x16x36xbf16, #tpu.memory_space<vmem>>, vector<16x16x4xbf16>
    tpu.vector_store %arg9[%c0_60, %c0_61, %c32], %26 {strides = array<i32>} : memref<16x16x36xbf16, #tpu.memory_space<vmem>>, vector<16x16x4xbf16>,
    %c0_62 = arith.constant 0 : index
    %c0_63 = arith.constant 0 : index
    %c0_64 = arith.constant 0 : index
    %28 = vector.load %arg9[%c0_62, %c0_63, %c0_64] : memref<16x16x36xbf16, #tpu.memory_space<vmem>>, vector<16x16x36xbf16>
    %29 = vector.shape_cast %28 : vector<16x16x36xbf16> to vector<256x36xbf16>
    %c0_65 = arith.constant 0 : index
    %c0_66 = arith.constant 0 : index
    %30 = vector.load %arg2[%c0_65, %c0_66] : memref<36x128xbf16, #tpu.memory_space<vmem>>, vector<36x128xbf16>
    %cst_67 = arith.constant dense<0.000000e+00> : vector<256x128xf32>
    %31 = tpu.matmul %29, %30, %cst_67 {dimension_numbers = #tpu.dot_dimension_numbers<[1], [0], [0], [1], [0, 0, 1, 1], [], []>} : vector<256x36xbf16>, vector<36x128xbf16>, vector<256x128xf32> -> vector<256x128xf32>
    %cst_68 = arith.constant dense<0.000000e+00> : vector<128xf32>
    %32 = vector.multi_reduction <add>, %31, %cst_68 [0] : vector<256x128xf32> to vector<128xf32>
    %33 = vector.shape_cast %32 : vector<128xf32> to vector<1x128xf32>
    %c0_69 = arith.constant 0 : index
    %c0_70 = arith.constant 0 : index
    %c0_71 = arith.constant 0 : index
    %34 = vector.load %arg5[%c0_69, %c0_70, %c0_71] : memref<1x2x128xf32, #tpu.memory_space<vmem>>, vector<1x1x128xf32>
    %35 = vector.shape_cast %34 : vector<1x1x128xf32> to vector<1x128xf32>
    %36 = vector.shape_cast %33 : vector<1x128xf32> to vector<1x1x128xf32>
    tpu.vector_store %arg5[%c0_69, %c0_70, %c0_71], %36 {strides = array<i32>} : memref<1x2x128xf32, #tpu.memory_space<vmem>>, vector<1x1x128xf32>,
    %37 = arith.mulf %31, %31 : vector<256x128xf32>
    %cst_72 = arith.constant dense<0.000000e+00> : vector<128xf32>
    %38 = vector.multi_reduction <add>, %37, %cst_72 [0] : vector<256x128xf32> to vector<128xf32>
    %39 = vector.shape_cast %38 : vector<128xf32> to vector<1x128xf32>
    %c0_73 = arith.constant 0 : index
    %c1_74 = arith.constant 1 : index
    %c0_75 = arith.constant 0 : index
    %40 = vector.load %arg5[%c0_73, %c1_74, %c0_75] : memref<1x2x128xf32, #tpu.memory_space<vmem>>, vector<1x1x128xf32>
    %41 = vector.shape_cast %40 : vector<1x1x128xf32> to vector<1x128xf32>
    %42 = vector.shape_cast %39 : vector<1x128xf32> to vector<1x1x128xf32>
    tpu.vector_store %arg5[%c0_73, %c1_74, %c0_75], %42 {strides = array<i32>} : memref<1x2x128xf32, #tpu.memory_space<vmem>>, vector<1x1x128xf32>,
    %43 = vector.shape_cast %31 : vector<256x128xf32> to vector<16x16x128xf32>
    %44 = arith.truncf %43 : vector<16x16x128xf32> to vector<16x16x128xbf16>
    %c0_76 = arith.constant 0 : index
    %c0_77 = arith.constant 0 : index
    %c0_78 = arith.constant 0 : index
    %c0_79 = arith.constant 0 : index
    %45 = vector.load %arg4[%c0_76, %c0_77, %c0_78, %c0_79] : memref<1x16x16x128xbf16, #tpu.memory_space<vmem>>, vector<1x16x16x128xbf16>
    %46 = vector.shape_cast %45 : vector<1x16x16x128xbf16> to vector<16x16x128xbf16>
    %47 = vector.shape_cast %44 : vector<16x16x128xbf16> to vector<1x16x16x128xbf16>
    tpu.vector_store %arg4[%c0_76, %c0_77, %c0_78, %c0_79], %47 {strides = array<i32>} : memref<1x16x16x128xbf16, #tpu.memory_space<vmem>>, vector<1x16x16x128xbf16>,
    %c1_80 = arith.constant 1 : index
    %c1_81 = arith.constant 1 : index
    %c0_82 = arith.constant 0 : index
    %48 = vector.load %arg8[%c1_80, %c1_81, %c0_82] : memref<18x18x4xbf16, #tpu.memory_space<vmem>>, vector<16x16x4xbf16>
    %49 = vector.shape_cast %48 : vector<16x16x4xbf16> to vector<256x4xbf16>
    %c0_83 = arith.constant 0 : index
    %c0_84 = arith.constant 0 : index
    %50 = vector.load %arg3[%c0_83, %c0_84] : memref<4x128xbf16, #tpu.memory_space<vmem>>, vector<4x128xbf16>
    %cst_85 = arith.constant dense<0.000000e+00> : vector<256x128xf32>
    %51 = tpu.matmul %49, %50, %cst_85 {dimension_numbers = #tpu.dot_dimension_numbers<[1], [0], [0], [1], [0, 0, 1, 1], [], []>} : vector<256x4xbf16>, vector<4x128xbf16>, vector<256x128xf32> -> vector<256x128xf32>
    %cst_86 = arith.constant dense<0.000000e+00> : vector<128xf32>
    %52 = vector.multi_reduction <add>, %51, %cst_86 [0] : vector<256x128xf32> to vector<128xf32>
    %53 = vector.shape_cast %52 : vector<128xf32> to vector<1x128xf32>
    %c0_87 = arith.constant 0 : index
    %c0_88 = arith.constant 0 : index
    %c0_89 = arith.constant 0 : index
    %54 = vector.load %arg7[%c0_87, %c0_88, %c0_89] : memref<1x2x128xf32, #tpu.memory_space<vmem>>, vector<1x1x128xf32>
    %55 = vector.shape_cast %54 : vector<1x1x128xf32> to vector<1x128xf32>
    %56 = vector.shape_cast %53 : vector<1x128xf32> to vector<1x1x128xf32>
    tpu.vector_store %arg7[%c0_87, %c0_88, %c0_89], %56 {strides = array<i32>} : memref<1x2x128xf32, #tpu.memory_space<vmem>>, vector<1x1x128xf32>,
    %57 = arith.mulf %51, %51 : vector<256x128xf32>
    %cst_90 = arith.constant dense<0.000000e+00> : vector<128xf32>
    %58 = vector.multi_reduction <add>, %57, %cst_90 [0] : vector<256x128xf32> to vector<128xf32>
    %59 = vector.shape_cast %58 : vector<128xf32> to vector<1x128xf32>
    %c0_91 = arith.constant 0 : index
    %c1_92 = arith.constant 1 : index
    %c0_93 = arith.constant 0 : index
    %60 = vector.load %arg7[%c0_91, %c1_92, %c0_93] : memref<1x2x128xf32, #tpu.memory_space<vmem>>, vector<1x1x128xf32>
    %61 = vector.shape_cast %60 : vector<1x1x128xf32> to vector<1x128xf32>
    %62 = vector.shape_cast %59 : vector<1x128xf32> to vector<1x1x128xf32>
    tpu.vector_store %arg7[%c0_91, %c1_92, %c0_93], %62 {strides = array<i32>} : memref<1x2x128xf32, #tpu.memory_space<vmem>>, vector<1x1x128xf32>,
    %63 = vector.shape_cast %51 : vector<256x128xf32> to vector<16x16x128xf32>
    %64 = arith.truncf %63 : vector<16x16x128xf32> to vector<16x16x128xbf16>
    %c0_94 = arith.constant 0 : index
    %c0_95 = arith.constant 0 : index
    %c0_96 = arith.constant 0 : index
    %c0_97 = arith.constant 0 : index
    %65 = vector.load %arg6[%c0_94, %c0_95, %c0_96, %c0_97] : memref<1x16x16x128xbf16, #tpu.memory_space<vmem>>, vector<1x16x16x128xbf16>
    %66 = vector.shape_cast %65 : vector<1x16x16x128xbf16> to vector<16x16x128xbf16>
    %67 = vector.shape_cast %64 : vector<16x16x128xbf16> to vector<1x16x16x128xbf16>
    tpu.vector_store %arg6[%c0_94, %c0_95, %c0_96, %c0_97], %67 {strides = array<i32>} : memref<1x16x16x128xbf16, #tpu.memory_space<vmem>>, vector<1x16x16x128xbf16>,
    return
  }
  func.func @transform_0(%arg0: i32) -> (i32, i32, i32, i32) {
    %c0_i32 = arith.constant 0 : i32
    %c0_i32_0 = arith.constant 0 : i32
    %c0_i32_1 = arith.constant 0 : i32
    %c0_i32_2 = arith.constant 0 : i32
    return %arg0, %c0_i32, %c0_i32_0, %c0_i32_1 : i32, i32, i32, i32
  }
  func.func @transform_1(%arg0: i32) -> (i32, i32) {
    %c0_i32 = arith.constant 0 : i32
    %c0_i32_0 = arith.constant 0 : i32
    %c0_i32_1 = arith.constant 0 : i32
    return %c0_i32, %c0_i32_0 : i32, i32
  }
  func.func @transform_2(%arg0: i32) -> (i32, i32) {
    %c0_i32 = arith.constant 0 : i32
    %c0_i32_0 = arith.constant 0 : i32
    %c0_i32_1 = arith.constant 0 : i32
    return %c0_i32, %c0_i32_0 : i32, i32
  }
  func.func @transform_3(%arg0: i32) -> (i32, i32, i32, i32) {
    %c0_i32 = arith.constant 0 : i32
    %c0_i32_0 = arith.constant 0 : i32
    %c0_i32_1 = arith.constant 0 : i32
    %c0_i32_2 = arith.constant 0 : i32
    return %arg0, %c0_i32, %c0_i32_0, %c0_i32_1 : i32, i32, i32, i32
  }
  func.func @transform_4(%arg0: i32) -> (i32, i32, i32) {
    %c0_i32 = arith.constant 0 : i32
    %c0_i32_0 = arith.constant 0 : i32
    %c0_i32_1 = arith.constant 0 : i32
    return %arg0, %c0_i32, %c0_i32_0 : i32, i32, i32
  }
  func.func @transform_5(%arg0: i32) -> (i32, i32, i32, i32) {
    %c0_i32 = arith.constant 0 : i32
    %c0_i32_0 = arith.constant 0 : i32
    %c0_i32_1 = arith.constant 0 : i32
    %c0_i32_2 = arith.constant 0 : i32
    return %arg0, %c0_i32, %c0_i32_0, %c0_i32_1 : i32, i32, i32, i32
  }
  func.func @transform_6(%arg0: i32) -> (i32, i32, i32) {
    %c0_i32 = arith.constant 0 : i32
    %c0_i32_0 = arith.constant 0 : i32
    %c0_i32_1 = arith.constant 0 : i32
    return %arg0, %c0_i32, %c0_i32_0 : i32, i32, i32
  }
}

module attributes {stable_mosaic.version = 11 : i64} {
  func.func @_residual_proj_kernel(%arg0: i32, %arg1: memref<1x16x16x128xbf16, #tpu.memory_space<vmem>>, %arg2: memref<1x128xf32, #tpu.memory_space<vmem>>, %arg3: memref<1x128xf32, #tpu.memory_space<vmem>>, %arg4: memref<1x16x16x128xbf16, #tpu.memory_space<vmem>>, %arg5: memref<1x128xf32, #tpu.memory_space<vmem>>, %arg6: memref<1x128xf32, #tpu.memory_space<vmem>>, %arg7: memref<1x16x16x128xf32, #tpu.memory_space<vmem>>) attributes {dimension_semantics = [#tpu.dimension_semantics<parallel>], iteration_bounds = array<i64: 2>, scalar_prefetch = 0 : i64, scratch_operands = 0 : i64, tpu.core_type = #tpu.core_type<tc>, window_params = [{transform_indices = @transform_0, window_bounds = array<i64: 1, 16, 16, 128>}, {pipeline_mode = #tpu.pipeline_mode<synchronous>, transform_indices = @transform_1, window_bounds = array<i64: 1, 128>}, {pipeline_mode = #tpu.pipeline_mode<synchronous>, transform_indices = @transform_2, window_bounds = array<i64: 1, 128>}, {transform_indices = @transform_3, window_bounds = array<i64: 1, 16, 16, 128>}, {pipeline_mode = #tpu.pipeline_mode<synchronous>, transform_indices = @transform_4, window_bounds = array<i64: 1, 128>}, {pipeline_mode = #tpu.pipeline_mode<synchronous>, transform_indices = @transform_5, window_bounds = array<i64: 1, 128>}, {transform_indices = @transform_6, window_bounds = array<i64: 1, 16, 16, 128>}]} {
    %c0 = arith.constant 0 : index
    %c0_0 = arith.constant 0 : index
    %c0_1 = arith.constant 0 : index
    %c0_2 = arith.constant 0 : index
    %0 = vector.load %arg1[%c0, %c0_0, %c0_1, %c0_2] : memref<1x16x16x128xbf16, #tpu.memory_space<vmem>>, vector<1x16x16x128xbf16>
    %1 = vector.shape_cast %0 : vector<1x16x16x128xbf16> to vector<16x16x128xbf16>
    %c0_3 = arith.constant 0 : index
    %c0_4 = arith.constant 0 : index
    %2 = vector.load %arg2[%c0_3, %c0_4] : memref<1x128xf32, #tpu.memory_space<vmem>>, vector<1x128xf32>
    %3 = arith.extf %1 : vector<16x16x128xbf16> to vector<16x16x128xf32>
    %4 = vector.shape_cast %2 : vector<1x128xf32> to vector<1x1x128xf32>
    %5 = vector.broadcast %4 : vector<1x1x128xf32> to vector<16x16x128xf32>
    %6 = arith.mulf %3, %5 : vector<16x16x128xf32>
    %c0_5 = arith.constant 0 : index
    %c0_6 = arith.constant 0 : index
    %7 = vector.load %arg3[%c0_5, %c0_6] : memref<1x128xf32, #tpu.memory_space<vmem>>, vector<1x128xf32>
    %8 = vector.shape_cast %7 : vector<1x128xf32> to vector<1x1x128xf32>
    %9 = vector.broadcast %8 : vector<1x1x128xf32> to vector<16x16x128xf32>
    %10 = arith.addf %6, %9 : vector<16x16x128xf32>
    %c0_7 = arith.constant 0 : index
    %c0_8 = arith.constant 0 : index
    %c0_9 = arith.constant 0 : index
    %c0_10 = arith.constant 0 : index
    %11 = vector.load %arg4[%c0_7, %c0_8, %c0_9, %c0_10] : memref<1x16x16x128xbf16, #tpu.memory_space<vmem>>, vector<1x16x16x128xbf16>
    %12 = vector.shape_cast %11 : vector<1x16x16x128xbf16> to vector<16x16x128xbf16>
    %c0_11 = arith.constant 0 : index
    %c0_12 = arith.constant 0 : index
    %13 = vector.load %arg5[%c0_11, %c0_12] : memref<1x128xf32, #tpu.memory_space<vmem>>, vector<1x128xf32>
    %14 = arith.extf %12 : vector<16x16x128xbf16> to vector<16x16x128xf32>
    %15 = vector.shape_cast %13 : vector<1x128xf32> to vector<1x1x128xf32>
    %16 = vector.broadcast %15 : vector<1x1x128xf32> to vector<16x16x128xf32>
    %17 = arith.mulf %14, %16 : vector<16x16x128xf32>
    %c0_13 = arith.constant 0 : index
    %c0_14 = arith.constant 0 : index
    %18 = vector.load %arg6[%c0_13, %c0_14] : memref<1x128xf32, #tpu.memory_space<vmem>>, vector<1x128xf32>
    %19 = vector.shape_cast %18 : vector<1x128xf32> to vector<1x1x128xf32>
    %20 = vector.broadcast %19 : vector<1x1x128xf32> to vector<16x16x128xf32>
    %21 = arith.addf %17, %20 : vector<16x16x128xf32>
    %22 = arith.addf %10, %21 : vector<16x16x128xf32>
    %cst = arith.constant 0.000000e+00 : f32
    %23 = vector.broadcast %cst : f32 to vector<16x16x128xf32>
    %24 = arith.maximumf %22, %23 : vector<16x16x128xf32>
    %c0_15 = arith.constant 0 : index
    %c0_16 = arith.constant 0 : index
    %c0_17 = arith.constant 0 : index
    %c0_18 = arith.constant 0 : index
    %25 = vector.load %arg7[%c0_15, %c0_16, %c0_17, %c0_18] : memref<1x16x16x128xf32, #tpu.memory_space<vmem>>, vector<1x16x16x128xf32>
    %26 = vector.shape_cast %25 : vector<1x16x16x128xf32> to vector<16x16x128xf32>
    %27 = vector.shape_cast %24 : vector<16x16x128xf32> to vector<1x16x16x128xf32>
    tpu.vector_store %arg7[%c0_15, %c0_16, %c0_17, %c0_18], %27 {strides = array<i32>} : memref<1x16x16x128xf32, #tpu.memory_space<vmem>>, vector<1x16x16x128xf32>,
    return
  }
  func.func @transform_0(%arg0: i32) -> (i32, i32, i32, i32) {
    %c0_i32 = arith.constant 0 : i32
    %c0_i32_0 = arith.constant 0 : i32
    %c0_i32_1 = arith.constant 0 : i32
    %c0_i32_2 = arith.constant 0 : i32
    return %arg0, %c0_i32, %c0_i32_0, %c0_i32_1 : i32, i32, i32, i32
  }
  func.func @transform_1(%arg0: i32) -> (i32, i32) {
    %c0_i32 = arith.constant 0 : i32
    %c0_i32_0 = arith.constant 0 : i32
    %c0_i32_1 = arith.constant 0 : i32
    return %c0_i32, %c0_i32_0 : i32, i32
  }
  func.func @transform_2(%arg0: i32) -> (i32, i32) {
    %c0_i32 = arith.constant 0 : i32
    %c0_i32_0 = arith.constant 0 : i32
    %c0_i32_1 = arith.constant 0 : i32
    return %c0_i32, %c0_i32_0 : i32, i32
  }
  func.func @transform_3(%arg0: i32) -> (i32, i32, i32, i32) {
    %c0_i32 = arith.constant 0 : i32
    %c0_i32_0 = arith.constant 0 : i32
    %c0_i32_1 = arith.constant 0 : i32
    %c0_i32_2 = arith.constant 0 : i32
    return %arg0, %c0_i32, %c0_i32_0, %c0_i32_1 : i32, i32, i32, i32
  }
  func.func @transform_4(%arg0: i32) -> (i32, i32) {
    %c0_i32 = arith.constant 0 : i32
    %c0_i32_0 = arith.constant 0 : i32
    %c0_i32_1 = arith.constant 0 : i32
    return %c0_i32, %c0_i32_0 : i32, i32
  }
  func.func @transform_5(%arg0: i32) -> (i32, i32) {
    %c0_i32 = arith.constant 0 : i32
    %c0_i32_0 = arith.constant 0 : i32
    %c0_i32_1 = arith.constant 0 : i32
    return %c0_i32, %c0_i32_0 : i32, i32
  }
  func.func @transform_6(%arg0: i32) -> (i32, i32, i32, i32) {
    %c0_i32 = arith.constant 0 : i32
    %c0_i32_0 = arith.constant 0 : i32
    %c0_i32_1 = arith.constant 0 : i32
    %c0_i32_2 = arith.constant 0 : i32
    return %arg0, %c0_i32, %c0_i32_0, %c0_i32_1 : i32, i32, i32, i32
  }
}

module attributes {stable_mosaic.version = 11 : i64} {
  func.func @_conv2_kernel(%arg0: i32, %arg1: memref<1x16x16x128xbf16, #tpu.memory_space<vmem>>, %arg2: memref<1x128xf32, #tpu.memory_space<vmem>>, %arg3: memref<1x128xf32, #tpu.memory_space<vmem>>, %arg4: memref<3x384x128xbf16, #tpu.memory_space<vmem>>, %arg5: memref<1x16x16x128xbf16, #tpu.memory_space<vmem>>, %arg6: memref<1x2x128xf32, #tpu.memory_space<vmem>>, %arg7: memref<18x18x128xbf16, #tpu.memory_space<vmem>>, %arg8: memref<16x16x384xbf16, #tpu.memory_space<vmem>>) attributes {dimension_semantics = [#tpu.dimension_semantics<parallel>], iteration_bounds = array<i64: 2>, scalar_prefetch = 0 : i64, scratch_operands = 2 : i64, tpu.core_type = #tpu.core_type<tc>, window_params = [{transform_indices = @transform_0, window_bounds = array<i64: 1, 16, 16, 128>}, {pipeline_mode = #tpu.pipeline_mode<synchronous>, transform_indices = @transform_1, window_bounds = array<i64: 1, 128>}, {pipeline_mode = #tpu.pipeline_mode<synchronous>, transform_indices = @transform_2, window_bounds = array<i64: 1, 128>}, {pipeline_mode = #tpu.pipeline_mode<synchronous>, transform_indices = @transform_3, window_bounds = array<i64: 3, 384, 128>}, {transform_indices = @transform_4, window_bounds = array<i64: 1, 16, 16, 128>}, {transform_indices = @transform_5, window_bounds = array<i64: 1, 2, 128>}]} {
    %c0 = arith.constant 0 : index
    %c0_0 = arith.constant 0 : index
    %c0_1 = arith.constant 0 : index
    %c0_2 = arith.constant 0 : index
    %0 = vector.load %arg1[%c0, %c0_0, %c0_1, %c0_2] : memref<1x16x16x128xbf16, #tpu.memory_space<vmem>>, vector<1x16x16x128xbf16>
    %1 = vector.shape_cast %0 : vector<1x16x16x128xbf16> to vector<16x16x128xbf16>
    %c0_3 = arith.constant 0 : index
    %c0_4 = arith.constant 0 : index
    %2 = vector.load %arg2[%c0_3, %c0_4] : memref<1x128xf32, #tpu.memory_space<vmem>>, vector<1x128xf32>
    %3 = arith.extf %1 : vector<16x16x128xbf16> to vector<16x16x128xf32>
    %4 = vector.shape_cast %2 : vector<1x128xf32> to vector<1x1x128xf32>
    %5 = vector.broadcast %4 : vector<1x1x128xf32> to vector<16x16x128xf32>
    %6 = arith.mulf %3, %5 : vector<16x16x128xf32>
    %c0_5 = arith.constant 0 : index
    %c0_6 = arith.constant 0 : index
    %7 = vector.load %arg3[%c0_5, %c0_6] : memref<1x128xf32, #tpu.memory_space<vmem>>, vector<1x128xf32>
    %8 = vector.shape_cast %7 : vector<1x128xf32> to vector<1x1x128xf32>
    %9 = vector.broadcast %8 : vector<1x1x128xf32> to vector<16x16x128xf32>
    %10 = arith.addf %6, %9 : vector<16x16x128xf32>
    %cst = arith.constant 0.000000e+00 : f32
    %11 = vector.broadcast %cst : f32 to vector<16x16x128xf32>
    %12 = arith.maximumf %10, %11 : vector<16x16x128xf32>
    %cst_7 = arith.constant 0.000000e+00 : bf16
    %13 = vector.broadcast %cst_7 : bf16 to vector<1x18x128xbf16>
    %cst_8 = arith.constant 0.000000e+00 : bf16
    %14 = vector.broadcast %cst_8 : bf16 to vector<16x1x128xbf16>
    %c0_9 = arith.constant 0 : index
    %c0_10 = arith.constant 0 : index
    %c0_11 = arith.constant 0 : index
    %15 = vector.load %arg7[%c0_9, %c0_10, %c0_11] : memref<18x18x128xbf16, #tpu.memory_space<vmem>>, vector<1x18x128xbf16>
    tpu.vector_store %arg7[%c0_9, %c0_10, %c0_11], %13 {strides = array<i32>} : memref<18x18x128xbf16, #tpu.memory_space<vmem>>, vector<1x18x128xbf16>,
    %c17 = arith.constant 17 : index
    %c0_12 = arith.constant 0 : index
    %c0_13 = arith.constant 0 : index
    %16 = vector.load %arg7[%c17, %c0_12, %c0_13] : memref<18x18x128xbf16, #tpu.memory_space<vmem>>, vector<1x18x128xbf16>
    tpu.vector_store %arg7[%c17, %c0_12, %c0_13], %13 {strides = array<i32>} : memref<18x18x128xbf16, #tpu.memory_space<vmem>>, vector<1x18x128xbf16>,
    %c1 = arith.constant 1 : index
    %c0_14 = arith.constant 0 : index
    %c0_15 = arith.constant 0 : index
    %17 = vector.load %arg7[%c1, %c0_14, %c0_15] : memref<18x18x128xbf16, #tpu.memory_space<vmem>>, vector<16x1x128xbf16>
    tpu.vector_store %arg7[%c1, %c0_14, %c0_15], %14 {strides = array<i32>} : memref<18x18x128xbf16, #tpu.memory_space<vmem>>, vector<16x1x128xbf16>,
    %c1_16 = arith.constant 1 : index
    %c17_17 = arith.constant 17 : index
    %c0_18 = arith.constant 0 : index
    %18 = vector.load %arg7[%c1_16, %c17_17, %c0_18] : memref<18x18x128xbf16, #tpu.memory_space<vmem>>, vector<16x1x128xbf16>
    tpu.vector_store %arg7[%c1_16, %c17_17, %c0_18], %14 {strides = array<i32>} : memref<18x18x128xbf16, #tpu.memory_space<vmem>>, vector<16x1x128xbf16>,
    %19 = arith.truncf %12 : vector<16x16x128xf32> to vector<16x16x128xbf16>
    %c1_19 = arith.constant 1 : index
    %c1_20 = arith.constant 1 : index
    %c0_21 = arith.constant 0 : index
    %20 = vector.load %arg7[%c1_19, %c1_20, %c0_21] : memref<18x18x128xbf16, #tpu.memory_space<vmem>>, vector<16x16x128xbf16>
    tpu.vector_store %arg7[%c1_19, %c1_20, %c0_21], %19 {strides = array<i32>} : memref<18x18x128xbf16, #tpu.memory_space<vmem>>, vector<16x16x128xbf16>,
    %c0_22 = arith.constant 0 : index
    %c0_23 = arith.constant 0 : index
    %c0_24 = arith.constant 0 : index
    %21 = vector.load %arg7[%c0_22, %c0_23, %c0_24] : memref<18x18x128xbf16, #tpu.memory_space<vmem>>, vector<16x16x128xbf16>
    %c0_25 = arith.constant 0 : index
    %c0_26 = arith.constant 0 : index
    %c0_27 = arith.constant 0 : index
    %22 = vector.load %arg8[%c0_25, %c0_26, %c0_27] : memref<16x16x384xbf16, #tpu.memory_space<vmem>>, vector<16x16x128xbf16>
    tpu.vector_store %arg8[%c0_25, %c0_26, %c0_27], %21 {strides = array<i32>} : memref<16x16x384xbf16, #tpu.memory_space<vmem>>, vector<16x16x128xbf16>,
    %c0_28 = arith.constant 0 : index
    %c1_29 = arith.constant 1 : index
    %c0_30 = arith.constant 0 : index
    %23 = vector.load %arg7[%c0_28, %c1_29, %c0_30] : memref<18x18x128xbf16, #tpu.memory_space<vmem>>, vector<16x16x128xbf16>
    %c0_31 = arith.constant 0 : index
    %c0_32 = arith.constant 0 : index
    %c128 = arith.constant 128 : index
    %24 = vector.load %arg8[%c0_31, %c0_32, %c128] : memref<16x16x384xbf16, #tpu.memory_space<vmem>>, vector<16x16x128xbf16>
    tpu.vector_store %arg8[%c0_31, %c0_32, %c128], %23 {strides = array<i32>} : memref<16x16x384xbf16, #tpu.memory_space<vmem>>, vector<16x16x128xbf16>,
    %c0_33 = arith.constant 0 : index
    %c2 = arith.constant 2 : index
    %c0_34 = arith.constant 0 : index
    %25 = vector.load %arg7[%c0_33, %c2, %c0_34] : memref<18x18x128xbf16, #tpu.memory_space<vmem>>, vector<16x16x128xbf16>
    %c0_35 = arith.constant 0 : index
    %c0_36 = arith.constant 0 : index
    %c256 = arith.constant 256 : index
    %26 = vector.load %arg8[%c0_35, %c0_36, %c256] : memref<16x16x384xbf16, #tpu.memory_space<vmem>>, vector<16x16x128xbf16>
    tpu.vector_store %arg8[%c0_35, %c0_36, %c256], %25 {strides = array<i32>} : memref<16x16x384xbf16, #tpu.memory_space<vmem>>, vector<16x16x128xbf16>,
    %c0_37 = arith.constant 0 : index
    %c0_38 = arith.constant 0 : index
    %c0_39 = arith.constant 0 : index
    %27 = vector.load %arg8[%c0_37, %c0_38, %c0_39] : memref<16x16x384xbf16, #tpu.memory_space<vmem>>, vector<16x16x384xbf16>
    %28 = vector.shape_cast %27 : vector<16x16x384xbf16> to vector<256x384xbf16>
    %c0_40 = arith.constant 0 : index
    %c0_41 = arith.constant 0 : index
    %c0_42 = arith.constant 0 : index
    %29 = vector.load %arg4[%c0_40, %c0_41, %c0_42] : memref<3x384x128xbf16, #tpu.memory_space<vmem>>, vector<1x384x128xbf16>
    %30 = vector.shape_cast %29 : vector<1x384x128xbf16> to vector<384x128xbf16>
    %cst_43 = arith.constant dense<0.000000e+00> : vector<256x128xf32>
    %31 = tpu.matmul %28, %30, %cst_43 {dimension_numbers = #tpu.dot_dimension_numbers<[1], [0], [0], [1], [0, 0, 1, 1], [], []>} : vector<256x384xbf16>, vector<384x128xbf16>, vector<256x128xf32> -> vector<256x128xf32>
    %c1_44 = arith.constant 1 : index
    %c0_45 = arith.constant 0 : index
    %c0_46 = arith.constant 0 : index
    %32 = vector.load %arg7[%c1_44, %c0_45, %c0_46] : memref<18x18x128xbf16, #tpu.memory_space<vmem>>, vector<16x16x128xbf16>
    %c0_47 = arith.constant 0 : index
    %c0_48 = arith.constant 0 : index
    %c0_49 = arith.constant 0 : index
    %33 = vector.load %arg8[%c0_47, %c0_48, %c0_49] : memref<16x16x384xbf16, #tpu.memory_space<vmem>>, vector<16x16x128xbf16>
    tpu.vector_store %arg8[%c0_47, %c0_48, %c0_49], %32 {strides = array<i32>} : memref<16x16x384xbf16, #tpu.memory_space<vmem>>, vector<16x16x128xbf16>,
    %c1_50 = arith.constant 1 : index
    %c1_51 = arith.constant 1 : index
    %c0_52 = arith.constant 0 : index
    %34 = vector.load %arg7[%c1_50, %c1_51, %c0_52] : memref<18x18x128xbf16, #tpu.memory_space<vmem>>, vector<16x16x128xbf16>
    %c0_53 = arith.constant 0 : index
    %c0_54 = arith.constant 0 : index
    %c128_55 = arith.constant 128 : index
    %35 = vector.load %arg8[%c0_53, %c0_54, %c128_55] : memref<16x16x384xbf16, #tpu.memory_space<vmem>>, vector<16x16x128xbf16>
    tpu.vector_store %arg8[%c0_53, %c0_54, %c128_55], %34 {strides = array<i32>} : memref<16x16x384xbf16, #tpu.memory_space<vmem>>, vector<16x16x128xbf16>,
    %c1_56 = arith.constant 1 : index
    %c2_57 = arith.constant 2 : index
    %c0_58 = arith.constant 0 : index
    %36 = vector.load %arg7[%c1_56, %c2_57, %c0_58] : memref<18x18x128xbf16, #tpu.memory_space<vmem>>, vector<16x16x128xbf16>
    %c0_59 = arith.constant 0 : index
    %c0_60 = arith.constant 0 : index
    %c256_61 = arith.constant 256 : index
    %37 = vector.load %arg8[%c0_59, %c0_60, %c256_61] : memref<16x16x384xbf16, #tpu.memory_space<vmem>>, vector<16x16x128xbf16>
    tpu.vector_store %arg8[%c0_59, %c0_60, %c256_61], %36 {strides = array<i32>} : memref<16x16x384xbf16, #tpu.memory_space<vmem>>, vector<16x16x128xbf16>,
    %c0_62 = arith.constant 0 : index
    %c0_63 = arith.constant 0 : index
    %c0_64 = arith.constant 0 : index
    %38 = vector.load %arg8[%c0_62, %c0_63, %c0_64] : memref<16x16x384xbf16, #tpu.memory_space<vmem>>, vector<16x16x384xbf16>
    %39 = vector.shape_cast %38 : vector<16x16x384xbf16> to vector<256x384xbf16>
    %c1_65 = arith.constant 1 : index
    %c0_66 = arith.constant 0 : index
    %c0_67 = arith.constant 0 : index
    %40 = vector.load %arg4[%c1_65, %c0_66, %c0_67] : memref<3x384x128xbf16, #tpu.memory_space<vmem>>, vector<1x384x128xbf16>
    %41 = vector.shape_cast %40 : vector<1x384x128xbf16> to vector<384x128xbf16>
    %cst_68 = arith.constant dense<0.000000e+00> : vector<256x128xf32>
    %42 = tpu.matmul %39, %41, %cst_68 {dimension_numbers = #tpu.dot_dimension_numbers<[1], [0], [0], [1], [0, 0, 1, 1], [], []>} : vector<256x384xbf16>, vector<384x128xbf16>, vector<256x128xf32> -> vector<256x128xf32>
    %43 = arith.addf %31, %42 : vector<256x128xf32>
    %c2_69 = arith.constant 2 : index
    %c0_70 = arith.constant 0 : index
    %c0_71 = arith.constant 0 : index
    %44 = vector.load %arg7[%c2_69, %c0_70, %c0_71] : memref<18x18x128xbf16, #tpu.memory_space<vmem>>, vector<16x16x128xbf16>
    %c0_72 = arith.constant 0 : index
    %c0_73 = arith.constant 0 : index
    %c0_74 = arith.constant 0 : index
    %45 = vector.load %arg8[%c0_72, %c0_73, %c0_74] : memref<16x16x384xbf16, #tpu.memory_space<vmem>>, vector<16x16x128xbf16>
    tpu.vector_store %arg8[%c0_72, %c0_73, %c0_74], %44 {strides = array<i32>} : memref<16x16x384xbf16, #tpu.memory_space<vmem>>, vector<16x16x128xbf16>,
    %c2_75 = arith.constant 2 : index
    %c1_76 = arith.constant 1 : index
    %c0_77 = arith.constant 0 : index
    %46 = vector.load %arg7[%c2_75, %c1_76, %c0_77] : memref<18x18x128xbf16, #tpu.memory_space<vmem>>, vector<16x16x128xbf16>
    %c0_78 = arith.constant 0 : index
    %c0_79 = arith.constant 0 : index
    %c128_80 = arith.constant 128 : index
    %47 = vector.load %arg8[%c0_78, %c0_79, %c128_80] : memref<16x16x384xbf16, #tpu.memory_space<vmem>>, vector<16x16x128xbf16>
    tpu.vector_store %arg8[%c0_78, %c0_79, %c128_80], %46 {strides = array<i32>} : memref<16x16x384xbf16, #tpu.memory_space<vmem>>, vector<16x16x128xbf16>,
    %c2_81 = arith.constant 2 : index
    %c2_82 = arith.constant 2 : index
    %c0_83 = arith.constant 0 : index
    %48 = vector.load %arg7[%c2_81, %c2_82, %c0_83] : memref<18x18x128xbf16, #tpu.memory_space<vmem>>, vector<16x16x128xbf16>
    %c0_84 = arith.constant 0 : index
    %c0_85 = arith.constant 0 : index
    %c256_86 = arith.constant 256 : index
    %49 = vector.load %arg8[%c0_84, %c0_85, %c256_86] : memref<16x16x384xbf16, #tpu.memory_space<vmem>>, vector<16x16x128xbf16>
    tpu.vector_store %arg8[%c0_84, %c0_85, %c256_86], %48 {strides = array<i32>} : memref<16x16x384xbf16, #tpu.memory_space<vmem>>, vector<16x16x128xbf16>,
    %c0_87 = arith.constant 0 : index
    %c0_88 = arith.constant 0 : index
    %c0_89 = arith.constant 0 : index
    %50 = vector.load %arg8[%c0_87, %c0_88, %c0_89] : memref<16x16x384xbf16, #tpu.memory_space<vmem>>, vector<16x16x384xbf16>
    %51 = vector.shape_cast %50 : vector<16x16x384xbf16> to vector<256x384xbf16>
    %c2_90 = arith.constant 2 : index
    %c0_91 = arith.constant 0 : index
    %c0_92 = arith.constant 0 : index
    %52 = vector.load %arg4[%c2_90, %c0_91, %c0_92] : memref<3x384x128xbf16, #tpu.memory_space<vmem>>, vector<1x384x128xbf16>
    %53 = vector.shape_cast %52 : vector<1x384x128xbf16> to vector<384x128xbf16>
    %cst_93 = arith.constant dense<0.000000e+00> : vector<256x128xf32>
    %54 = tpu.matmul %51, %53, %cst_93 {dimension_numbers = #tpu.dot_dimension_numbers<[1], [0], [0], [1], [0, 0, 1, 1], [], []>} : vector<256x384xbf16>, vector<384x128xbf16>, vector<256x128xf32> -> vector<256x128xf32>
    %55 = arith.addf %43, %54 : vector<256x128xf32>
    %cst_94 = arith.constant dense<0.000000e+00> : vector<128xf32>
    %56 = vector.multi_reduction <add>, %55, %cst_94 [0] : vector<256x128xf32> to vector<128xf32>
    %57 = vector.shape_cast %56 : vector<128xf32> to vector<1x128xf32>
    %c0_95 = arith.constant 0 : index
    %c0_96 = arith.constant 0 : index
    %c0_97 = arith.constant 0 : index
    %58 = vector.load %arg6[%c0_95, %c0_96, %c0_97] : memref<1x2x128xf32, #tpu.memory_space<vmem>>, vector<1x1x128xf32>
    %59 = vector.shape_cast %58 : vector<1x1x128xf32> to vector<1x128xf32>
    %60 = vector.shape_cast %57 : vector<1x128xf32> to vector<1x1x128xf32>
    tpu.vector_store %arg6[%c0_95, %c0_96, %c0_97], %60 {strides = array<i32>} : memref<1x2x128xf32, #tpu.memory_space<vmem>>, vector<1x1x128xf32>,
    %61 = arith.mulf %55, %55 : vector<256x128xf32>
    %cst_98 = arith.constant dense<0.000000e+00> : vector<128xf32>
    %62 = vector.multi_reduction <add>, %61, %cst_98 [0] : vector<256x128xf32> to vector<128xf32>
    %63 = vector.shape_cast %62 : vector<128xf32> to vector<1x128xf32>
    %c0_99 = arith.constant 0 : index
    %c1_100 = arith.constant 1 : index
    %c0_101 = arith.constant 0 : index
    %64 = vector.load %arg6[%c0_99, %c1_100, %c0_101] : memref<1x2x128xf32, #tpu.memory_space<vmem>>, vector<1x1x128xf32>
    %65 = vector.shape_cast %64 : vector<1x1x128xf32> to vector<1x128xf32>
    %66 = vector.shape_cast %63 : vector<1x128xf32> to vector<1x1x128xf32>
    tpu.vector_store %arg6[%c0_99, %c1_100, %c0_101], %66 {strides = array<i32>} : memref<1x2x128xf32, #tpu.memory_space<vmem>>, vector<1x1x128xf32>,
    %67 = vector.shape_cast %55 : vector<256x128xf32> to vector<16x16x128xf32>
    %68 = arith.truncf %67 : vector<16x16x128xf32> to vector<16x16x128xbf16>
    %c0_102 = arith.constant 0 : index
    %c0_103 = arith.constant 0 : index
    %c0_104 = arith.constant 0 : index
    %c0_105 = arith.constant 0 : index
    %69 = vector.load %arg5[%c0_102, %c0_103, %c0_104, %c0_105] : memref<1x16x16x128xbf16, #tpu.memory_space<vmem>>, vector<1x16x16x128xbf16>
    %70 = vector.shape_cast %69 : vector<1x16x16x128xbf16> to vector<16x16x128xbf16>
    %71 = vector.shape_cast %68 : vector<16x16x128xbf16> to vector<1x16x16x128xbf16>
    tpu.vector_store %arg5[%c0_102, %c0_103, %c0_104, %c0_105], %71 {strides = array<i32>} : memref<1x16x16x128xbf16, #tpu.memory_space<vmem>>, vector<1x16x16x128xbf16>,
    return
  }
  func.func @transform_0(%arg0: i32) -> (i32, i32, i32, i32) {
    %c0_i32 = arith.constant 0 : i32
    %c0_i32_0 = arith.constant 0 : i32
    %c0_i32_1 = arith.constant 0 : i32
    %c0_i32_2 = arith.constant 0 : i32
    return %arg0, %c0_i32, %c0_i32_0, %c0_i32_1 : i32, i32, i32, i32
  }
  func.func @transform_1(%arg0: i32) -> (i32, i32) {
    %c0_i32 = arith.constant 0 : i32
    %c0_i32_0 = arith.constant 0 : i32
    %c0_i32_1 = arith.constant 0 : i32
    return %c0_i32, %c0_i32_0 : i32, i32
  }
  func.func @transform_2(%arg0: i32) -> (i32, i32) {
    %c0_i32 = arith.constant 0 : i32
    %c0_i32_0 = arith.constant 0 : i32
    %c0_i32_1 = arith.constant 0 : i32
    return %c0_i32, %c0_i32_0 : i32, i32
  }
  func.func @transform_3(%arg0: i32) -> (i32, i32, i32) {
    %c0_i32 = arith.constant 0 : i32
    %c0_i32_0 = arith.constant 0 : i32
    %c0_i32_1 = arith.constant 0 : i32
    %c0_i32_2 = arith.constant 0 : i32
    return %c0_i32, %c0_i32_0, %c0_i32_1 : i32, i32, i32
  }
  func.func @transform_4(%arg0: i32) -> (i32, i32, i32, i32) {
    %c0_i32 = arith.constant 0 : i32
    %c0_i32_0 = arith.constant 0 : i32
    %c0_i32_1 = arith.constant 0 : i32
    %c0_i32_2 = arith.constant 0 : i32
    return %arg0, %c0_i32, %c0_i32_0, %c0_i32_1 : i32, i32, i32, i32
  }
  func.func @transform_5(%arg0: i32) -> (i32, i32, i32) {
    %c0_i32 = arith.constant 0 : i32
    %c0_i32_0 = arith.constant 0 : i32
    %c0_i32_1 = arith.constant 0 : i32
    return %arg0, %c0_i32, %c0_i32_0 : i32, i32, i32
  }
}

</mosaic_0001>

<llo_original>
// kernel: basic_block_forward.5
$region0: #{basic_block_forward.5}
  #allocation0 [shape = 'u32[]', space=smem, size = 0x4, offset = 0x4, fixed_abs, tag = 'smem constant byte address 0x4 - core index']
  #allocation1 [shape = 'u32[144,128]{1,0:T(1,128)}', space=vmem, size = 0x12000, scoped, tag = 'internal scratch']
  %s0 = inlined_call_operand.vmem [shape: bf16[2,16,16,128], index: 0, kind: input, shape index: {}]
  %s1 = inlined_call_operand.vmem [shape: f32[1,128], index: 1, kind: input, shape index: {}]
  %s2 = inlined_call_operand.vmem [shape: f32[1,128], index: 2, kind: input, shape index: {}]
  %s3 = inlined_call_operand.vmem [shape: bf16[2,16,16,128], index: 3, kind: input, shape index: {}]
  %s4 = inlined_call_operand.vmem [shape: f32[1,128], index: 4, kind: input, shape index: {}]
  %s5 = inlined_call_operand.vmem [shape: f32[1,128], index: 5, kind: input, shape index: {}]
  %s6 = inlined_call_operand.vmem [shape: f32[2,16,16,128], index: 6, kind: output, shape index: {}]
  %s7 = sld [smem:[#allocation0]]
  $region57: #{basic_block_forward.5} parent=0
    _
  %s9 = ssub.s32 1, %s7
  %s10 = scalar_select 0, %s9, %s7
  loop: start=0, step=1, limit=4
  $region2: #{basic_block_forward.5} parent=0 // loop_pre_header
    _
  $region3: #{basic_block_forward.5} parent=0 // loop_header
    %s12 = sphi 0, %s16
    %p13 = scmp.ge.s32.totalorder %s12, 4
    %s22 = sphi 0, %s24
    %s25 = sphi 0, %s22
    %s26 = sphi 0, %s25
    %s42 = sphi 0, %s26
    %s46 = sphi 0, %s46
    %s48 = sphi 0, %s46
    %s49 = sphi 0, %s48
    %s63 = sphi 0, %s49
    %s67 = sphi 0, %s67
    %s69 = sphi 0, %s67
    %s70 = sphi 0, %s69
    %s84 = sphi 0, %s70
    %s90 = sphi 0, %s92
    %s93 = sphi 0, %s90
    %s94 = sphi 0, %s93
    %s110 = sphi 0, %s94
    %s114 = sphi 0, %s114
    %s116 = sphi 0, %s114
    %s117 = sphi 0, %s116
    %s131 = sphi 0, %s117
    %s135 = sphi 0, %s135
    %s137 = sphi 0, %s135
    %s138 = sphi 0, %s137
    %s152 = sphi 0, %s138
    %s158 = sphi 0, %s160
    %s161 = sphi 0, %s158
    %s162 = sphi 0, %s161
    %s178 = sphi 0, %s162
  $region4: #{basic_block_forward.5} parent=0 // loop_header_branch
    %15 = sbr.rel (%p13) target = $region8
  $region5: #{basic_block_forward.5} parent=0 // loop_body
    %s17 = ssub.s32 %s12, 1
    %s18 = ssub.s32 %s12, 2
    %s19 = sadd.s32 %s12, 1
    %s20 = ssub.s32 %s12, %s19
    %p21 = scmp.eq.s32.totalorder %s20, 0
    %s23 = sadd.s32 %s22, 1
    %s24 = scalar_select %p21, %s22, %s23
    %p27 = pneg %p21
    %p28 = scmp.eq.s32.totalorder %s12, 1
    %p29 = por %p27, %p28
    %p30 = scmp.ne.s32.totalorder %s22, %s25
    %p31 = scmp.eq.s32.totalorder %s12, 0
    %p32 = por %p30, %p31
    %p33 = scmp.ne.s32.totalorder %s22, %s25
    %p34 = scmp.eq.s32.totalorder %s17, 1
    %p35 = por %p33, %p34
    %p36 = scmp.ne.s32.totalorder %s25, %s26
    %p37 = scmp.eq.s32.totalorder %s17, 0
    %p38 = por %p36, %p37
    %p39 = scmp.ne.s32.totalorder %s25, %s26
    %p40 = scmp.eq.s32.totalorder %s18, 1
    %p41 = por %p39, %p40
    %p43 = scmp.ne.s32.totalorder %s26, %s42
    %p44 = scmp.eq.s32.totalorder %s18, 0
    %p45 = por %p43, %p44
    %s47 = sadd.s32 %s46, 1
    %p50 = scmp.eq.s32.totalorder %s12, 1
    %p51 = scmp.ne.s32.totalorder %s46, %s48
    %p52 = scmp.eq.s32.totalorder %s12, 0
    %p53 = por %p51, %p52
    %p54 = scmp.ne.s32.totalorder %s46, %s48
    %p55 = scmp.eq.s32.totalorder %s17, 1
    %p56 = por %p54, %p55
    %p57 = scmp.ne.s32.totalorder %s48, %s49
    %p58 = scmp.eq.s32.totalorder %s17, 0
    %p59 = por %p57, %p58
    %p60 = scmp.ne.s32.totalorder %s48, %s49
    %p61 = scmp.eq.s32.totalorder %s18, 1
    %p62 = por %p60, %p61
    %p64 = scmp.ne.s32.totalorder %s49, %s63
    %p65 = scmp.eq.s32.totalorder %s18, 0
    %p66 = por %p64, %p65
    %s68 = sadd.s32 %s67, 1
    %p71 = scmp.eq.s32.totalorder %s12, 1
    %p72 = scmp.ne.s32.totalorder %s67, %s69
    %p73 = scmp.eq.s32.totalorder %s12, 0
    %p74 = por %p72, %p73
    %p75 = scmp.ne.s32.totalorder %s67, %s69
    %p76 = scmp.eq.s32.totalorder %s17, 1
    %p77 = por %p75, %p76
    %p78 = scmp.ne.s32.totalorder %s69, %s70
    %p79 = scmp.eq.s32.totalorder %s17, 0
    %p80 = por %p78, %p79
    %p81 = scmp.ne.s32.totalorder %s69, %s70
    %p82 = scmp.eq.s32.totalorder %s18, 1
    %p83 = por %p81, %p82
    %p85 = scmp.ne.s32.totalorder %s70, %s84
    %p86 = scmp.eq.s32.totalorder %s18, 0
    %p87 = por %p85, %p86
    %s88 = ssub.s32 %s12, %s19
    %p89 = scmp.eq.s32.totalorder %s88, 0
    %s91 = sadd.s32 %s90, 1
    %s92 = scalar_select %p89, %s90, %s91
    %p95 = pneg %p89
    %p96 = scmp.eq.s32.totalorder %s12, 1
    %p97 = por %p95, %p96
    %p98 = scmp.ne.s32.totalorder %s90, %s93
    %p99 = scmp.eq.s32.totalorder %s12, 0
    %p100 = por %p98, %p99
    %p101 = scmp.ne.s32.totalorder %s90, %s93
    %p102 = scmp.eq.s32.totalorder %s17, 1
    %p103 = por %p101, %p102
    %p104 = scmp.ne.s32.totalorder %s93, %s94
    %p105 = scmp.eq.s32.totalorder %s17, 0
    %p106 = por %p104, %p105
    %p107 = scmp.ne.s32.totalorder %s93, %s94
    %p108 = scmp.eq.s32.totalorder %s18, 1
    %p109 = por %p107, %p108
    %p111 = scmp.ne.s32.totalorder %s94, %s110
    %p112 = scmp.eq.s32.totalorder %s18, 0
    %p113 = por %p111, %p112
    %s115 = sadd.s32 %s114, 1
    %p118 = scmp.eq.s32.totalorder %s12, 1
    %p119 = scmp.ne.s32.totalorder %s114, %s116
    %p120 = scmp.eq.s32.totalorder %s12, 0
    %p121 = por %p119, %p120
    %p122 = scmp.ne.s32.totalorder %s114, %s116
    %p123 = scmp.eq.s32.totalorder %s17, 1
    %p124 = por %p122, %p123
    %p125 = scmp.ne.s32.totalorder %s116, %s117
    %p126 = scmp.eq.s32.totalorder %s17, 0
    %p127 = por %p125, %p126
    %p128 = scmp.ne.s32.totalorder %s116, %s117
    %p129 = scmp.eq.s32.totalorder %s18, 1
    %p130 = por %p128, %p129
    %p132 = scmp.ne.s32.totalorder %s117, %s131
    %p133 = scmp.eq.s32.totalorder %s18, 0
    %p134 = por %p132, %p133
    %s136 = sadd.s32 %s135, 1
    %p139 = scmp.eq.s32.totalorder %s12, 1
    %p140 = scmp.ne.s32.totalorder %s135, %s137
    %p141 = scmp.eq.s32.totalorder %s12, 0
    %p142 = por %p140, %p141
    %p143 = scmp.ne.s32.totalorder %s135, %s137
    %p144 = scmp.eq.s32.totalorder %s17, 1
    %p145 = por %p143, %p144
    %p146 = scmp.ne.s32.totalorder %s137, %s138
    %p147 = scmp.eq.s32.totalorder %s17, 0
    %p148 = por %p146, %p147
    %p149 = scmp.ne.s32.totalorder %s137, %s138
    %p150 = scmp.eq.s32.totalorder %s18, 1
    %p151 = por %p149, %p150
    %p153 = scmp.ne.s32.totalorder %s138, %s152
    %p154 = scmp.eq.s32.totalorder %s18, 0
    %p155 = por %p153, %p154
    %s156 = ssub.s32 %s12, %s19
    %p157 = scmp.eq.s32.totalorder %s156, 0
    %s159 = sadd.s32 %s158, 1
    %s160 = scalar_select %p157, %s158, %s159
    %p163 = pneg %p157
    %p164 = scmp.eq.s32.totalorder %s12, 1
    %p165 = por %p163, %p164
    %p166 = scmp.ne.s32.totalorder %s158, %s161
    %p167 = scmp.eq.s32.totalorder %s12, 0
    %p168 = por %p166, %p167
    %p169 = scmp.ne.s32.totalorder %s158, %s161
    %p170 = scmp.eq.s32.totalorder %s17, 1
    %p171 = por %p169, %p170
    %p172 = scmp.ne.s32.totalorder %s161, %s162
    %p173 = scmp.eq.s32.totalorder %s17, 0
    %p174 = por %p172, %p173
    %p175 = scmp.ne.s32.totalorder %s161, %s162
    %p176 = scmp.eq.s32.totalorder %s18, 1
    %p177 = por %p175, %p176
    %p179 = scmp.ne.s32.totalorder %s162, %s178
    %p180 = scmp.eq.s32.totalorder %s18, 0
    %p181 = por %p179, %p180
    %p182 = scmp.le.s32.totalorder 1, %s12
    %p183 = scmp.lt.s32.totalorder %s12, 3
    %p184 = pnand %p182, %p183
    %p185 = pneg %p184
    // Predicated region
    $region9: #{basic_block_forward.5} parent=5 // pred_check
      _
    $region10: #{basic_block_forward.5} parent=5 // pred_check_branch
      %187 = sbr.rel (%p184) target = $region12
    $region11: #{basic_block_forward.5} parent=5 // pred_region
      %s188 = ssub.s32 %s12, 1
      // Predicated region
      $region13: #{basic_block_forward.5} parent=11 // pred_check
        %p189 = pneg %p59
      $region14: #{basic_block_forward.5} parent=11 // pred_check_branch
        %191 = sbr.rel (%p189) target = $region16
      $region15: #{basic_block_forward.5} parent=11 // pred_region
        _
      $region16: #{basic_block_forward.5} parent=11 // pred_fallthru
        _
      // Predicated region
      $region17: #{basic_block_forward.5} parent=11 // pred_check
        %p192 = pneg %p80
      $region18: #{basic_block_forward.5} parent=11 // pred_check_branch
        %194 = sbr.rel (%p192) target = $region20
      $region19: #{basic_block_forward.5} parent=11 // pred_region
        _
      $region20: #{basic_block_forward.5} parent=11 // pred_fallthru
        _
      // Predicated region
      $region21: #{basic_block_forward.5} parent=11 // pred_check
        %p195 = pneg %p127
      $region22: #{basic_block_forward.5} parent=11 // pred_check_branch
        %197 = sbr.rel (%p195) target = $region24
      $region23: #{basic_block_forward.5} parent=11 // pred_region
        _
      $region24: #{basic_block_forward.5} parent=11 // pred_fallthru
        _
      // Predicated region
      $region25: #{basic_block_forward.5} parent=11 // pred_check
        %p198 = pneg %p148
      $region26: #{basic_block_forward.5} parent=11 // pred_check_branch
        %200 = sbr.rel (%p198) target = $region28
      $region27: #{basic_block_forward.5} parent=11 // pred_region
        _
      $region28: #{basic_block_forward.5} parent=11 // pred_fallthru
        _
    $region12: #{basic_block_forward.5} parent=5 // pred_fallthru
      _
    %p201 = scmp.lt.s32.totalorder %s12, 2
    // Predicated region
    $region29: #{basic_block_forward.5} parent=5 // pred_check
      %p202 = pneg %p201
    $region30: #{basic_block_forward.5} parent=5 // pred_check_branch
      %204 = sbr.rel (%p202) target = $region32
    $region31: #{basic_block_forward.5} parent=5 // pred_region
      // Predicated region
      $region33: #{basic_block_forward.5} parent=31 // pred_check
        %p205 = pneg %p32
      $region34: #{basic_block_forward.5} parent=31 // pred_check_branch
        %207 = sbr.rel (%p205) target = $region36
      $region35: #{basic_block_forward.5} parent=31 // pred_region
        %p208 = scmp.lt.s32.totalorder %s12, 1
        %s209 = scalar_select %p208, %s12, 1
        %s210 = smul.addr %s209, 32
        %s211 = smul.addr %s210, 4
        %s212 = scalar_lea.vmem %s0, %s211
      $region36: #{basic_block_forward.5} parent=31 // pred_fallthru
        _
      // Predicated region
      $region37: #{basic_block_forward.5} parent=31 // pred_check
        %p213 = pneg %p100
      $region38: #{basic_block_forward.5} parent=31 // pred_check_branch
        %215 = sbr.rel (%p213) target = $region40
      $region39: #{basic_block_forward.5} parent=31 // pred_region
        %p216 = scmp.lt.s32.totalorder %s12, 1
        %s217 = scalar_select %p216, %s12, 1
        %s218 = smul.addr %s217, 32
        %s219 = smul.addr %s218, 4
        %s220 = scalar_lea.vmem %s3, %s219
      $region40: #{basic_block_forward.5} parent=31 // pred_fallthru
        _
    $region32: #{basic_block_forward.5} parent=5 // pred_fallthru
      _
    %p221 = scmp.le.s32.totalorder 1, %s12
    %p222 = scmp.lt.s32.totalorder %s12, 3
    %p223 = pnand %p221, %p222
    %p224 = pneg %p223
    // Predicated region
    $region41: #{basic_block_forward.5} parent=5 // pred_check
      _
    $region42: #{basic_block_forward.5} parent=5 // pred_check_branch
      %226 = sbr.rel (%p223) target = $region44
    $region43: #{basic_block_forward.5} parent=5 // pred_region
      %s227 = ssub.s32 %s12, 1
      %p228 = scmp.lt.s32.totalorder %s17, 1
      %s229 = scalar_select %p228, %s17, 1
      %s230 = smul.addr %s229, 32
      %s231 = smul.addr %s230, 4
      %s232 = scalar_lea.vmem %s0, %s231
      %p233 = pneg %p38
      %p234 = pneg %p35
      %p235 = pneg %p59
      %p236 = pneg %p56
      %p237 = pneg %p80
      %p238 = pneg %p77
      %p239 = scmp.lt.s32.totalorder %s17, 1
      %s240 = scalar_select %p239, %s17, 1
      %s241 = smul.addr %s240, 32
      %s242 = smul.addr %s241, 4
      %s243 = scalar_lea.vmem %s3, %s242
      %p244 = pneg %p106
      %p245 = pneg %p103
      %p246 = pneg %p127
      %p247 = pneg %p124
      %p248 = pneg %p148
      %p249 = pneg %p145
      %p250 = pneg %p174
      %p251 = pneg %p171
      %p252 = scmp.lt.s32.totalorder %s17, 1
      %s253 = scalar_select %p252, %s17, 1
      %s254 = smul.addr %s253, 32
      %s255 = smul.addr %s254, 8
      %s256 = scalar_lea.vmem %s6, %s255
      %p257 = scmp.lt.s32.totalorder %s17, 1
      %s258 = scalar_select %p257, %s17, 1
      %s259 = smul.addr %s258, 32
      %s260 = smul.addr %s259, 4
      %s261 = scalar_lea.vmem %s0, %s260
      %p262 = scmp.lt.s32.totalorder %s17, 1
      %s263 = scalar_select %p262, %s17, 1
      %s264 = smul.addr %s263, 32
      %s265 = smul.addr %s264, 4
      %s266 = scalar_lea.vmem %s3, %s265
      %p267 = scmp.lt.s32.totalorder %s17, 1
      %s268 = scalar_select %p267, %s17, 1
      %s269 = smul.addr %s268, 32
      %s270 = smul.addr %s269, 8
      %s271 = scalar_lea.vmem %s6, %s270
      %v272 = vld [vmem:[%s261] sm:$0xf]
      %v273 = vld [vmem:[%s261 + $0x4] sm:$0xf]
      %v274 = vld [vmem:[%s261 + $0x8] sm:$0xf]
      %v275 = vld [vmem:[%s261 + $0xc] sm:$0xf]
      %v276 = vld [vmem:[%s261 + $0x10] sm:$0xf]
      %v277 = vld [vmem:[%s261 + $0x14] sm:$0xf]
      %v278 = vld [vmem:[%s261 + $0x18] sm:$0xf]
      %v279 = vld [vmem:[%s261 + $0x1c] sm:$0xf]
      %v280 = vld [vmem:[%s261 + $0x20] sm:$0xf]
      %v281 = vld [vmem:[%s261 + $0x24] sm:$0xf]
      %v282 = vld [vmem:[%s261 + $0x28] sm:$0xf]
      %v283 = vld [vmem:[%s261 + $0x2c] sm:$0xf]
      %v284 = vld [vmem:[%s261 + $0x30] sm:$0xf]
      %v285 = vld [vmem:[%s261 + $0x34] sm:$0xf]
      %v286 = vld [vmem:[%s261 + $0x38] sm:$0xf]
      %v287 = vld [vmem:[%s261 + $0x3c] sm:$0xf]
      %v288 = vld [vmem:[%s261 + $0x40] sm:$0xf]
      %v289 = vld [vmem:[%s261 + $0x44] sm:$0xf]
      %v290 = vld [vmem:[%s261 + $0x48] sm:$0xf]
      %v291 = vld [vmem:[%s261 + $0x4c] sm:$0xf]
      %v292 = vld [vmem:[%s261 + $0x50] sm:$0xf]
      %v293 = vld [vmem:[%s261 + $0x54] sm:$0xf]
      %v294 = vld [vmem:[%s261 + $0x58] sm:$0xf]
      %v295 = vld [vmem:[%s261 + $0x5c] sm:$0xf]
      %v296 = vld [vmem:[%s261 + $0x60] sm:$0xf]
      %v297 = vld [vmem:[%s261 + $0x64] sm:$0xf]
      %v298 = vld [vmem:[%s261 + $0x68] sm:$0xf]
      %v299 = vld [vmem:[%s261 + $0x6c] sm:$0xf]
      %v300 = vld [vmem:[%s261 + $0x70] sm:$0xf]
      %v301 = vld [vmem:[%s261 + $0x74] sm:$0xf]
      %v302 = vld [vmem:[%s261 + $0x78] sm:$0xf]
      %v303 = vld [vmem:[%s261 + $0x7c] sm:$0xf]
      %v304 = vld [vmem:[%s1] sm:$0x1]
      %v305 = vunpack.c.l.bf16 %v272
      %v306 = vunpack.c.l.bf16 %v273
      %v307 = vunpack.c.l.bf16 %v274
      %v308 = vunpack.c.l.bf16 %v275
      %v309 = vunpack.c.l.bf16 %v276
      %v310 = vunpack.c.l.bf16 %v277
      %v311 = vunpack.c.l.bf16 %v278
      %v312 = vunpack.c.l.bf16 %v279
      %v313 = vunpack.c.l.bf16 %v280
      %v314 = vunpack.c.l.bf16 %v281
      %v315 = vunpack.c.l.bf16 %v282
      %v316 = vunpack.c.l.bf16 %v283
      %v317 = vunpack.c.l.bf16 %v284
      %v318 = vunpack.c.l.bf16 %v285
      %v319 = vunpack.c.l.bf16 %v286
      %v320 = vunpack.c.l.bf16 %v287
      %v321 = vunpack.c.l.bf16 %v288
      %v322 = vunpack.c.l.bf16 %v289
      %v323 = vunpack.c.l.bf16 %v290
      %v324 = vunpack.c.l.bf16 %v291
      %v325 = vunpack.c.l.bf16 %v292
      %v326 = vunpack.c.l.bf16 %v293
      %v327 = vunpack.c.l.bf16 %v294
      %v328 = vunpack.c.l.bf16 %v295
      %v329 = vunpack.c.l.bf16 %v296
      %v330 = vunpack.c.l.bf16 %v297
      %v331 = vunpack.c.l.bf16 %v298
      %v332 = vunpack.c.l.bf16 %v299
      %v333 = vunpack.c.l.bf16 %v300
      %v334 = vunpack.c.l.bf16 %v301
      %v335 = vunpack.c.l.bf16 %v302
      %v336 = vunpack.c.l.bf16 %v303
      %v338 = vlaneseq
      %v339 = vshrl.u32 %v338, 7
      %v340 = vsub.s32 0, %v339
      %v341 = vrot.slane %v304, %v340
      %v343 = vmul.f32 %v305, %v341
      %v344 = vmul.f32 %v306, %v341
      %v345 = vmul.f32 %v307, %v341
      %v346 = vmul.f32 %v308, %v341
      %v347 = vmul.f32 %v309, %v341
      %v348 = vmul.f32 %v310, %v341
      %v349 = vmul.f32 %v311, %v341
      %v350 = vmul.f32 %v312, %v341
      %v351 = vmul.f32 %v313, %v341
      %v352 = vmul.f32 %v314, %v341
      %v353 = vmul.f32 %v315, %v341
      %v354 = vmul.f32 %v316, %v341
      %v355 = vmul.f32 %v317, %v341
      %v356 = vmul.f32 %v318, %v341
      %v357 = vmul.f32 %v319, %v341
      %v358 = vmul.f32 %v320, %v341
      %v359 = vmul.f32 %v321, %v341
      %v360 = vmul.f32 %v322, %v341
      %v361 = vmul.f32 %v323, %v341
      %v362 = vmul.f32 %v324, %v341
      %v363 = vmul.f32 %v325, %v341
      %v364 = vmul.f32 %v326, %v341
      %v365 = vmul.f32 %v327, %v341
      %v366 = vmul.f32 %v328, %v341
      %v367 = vmul.f32 %v329, %v341
      %v368 = vmul.f32 %v330, %v341
      %v369 = vmul.f32 %v331, %v341
      %v370 = vmul.f32 %v332, %v341
      %v371 = vmul.f32 %v333, %v341
      %v372 = vmul.f32 %v334, %v341
      %v373 = vmul.f32 %v335, %v341
      %v374 = vmul.f32 %v336, %v341
      %v375 = vld [vmem:[%s2] sm:$0x1]
      %v377 = vlaneseq
      %v378 = vshrl.u32 %v377, 7
      %v379 = vsub.s32 0, %v378
      %v380 = vrot.slane %v375, %v379
      %v382 = vadd.f32 %v343, %v380
      %v383 = vadd.f32 %v344, %v380
      %v384 = vadd.f32 %v345, %v380
      %v385 = vadd.f32 %v346, %v380
      %v386 = vadd.f32 %v347, %v380
      %v387 = vadd.f32 %v348, %v380
      %v388 = vadd.f32 %v349, %v380
      %v389 = vadd.f32 %v350, %v380
      %v390 = vadd.f32 %v351, %v380
      %v391 = vadd.f32 %v352, %v380
      %v392 = vadd.f32 %v353, %v380
      %v393 = vadd.f32 %v354, %v380
      %v394 = vadd.f32 %v355, %v380
      %v395 = vadd.f32 %v356, %v380
      %v396 = vadd.f32 %v357, %v380
      %v397 = vadd.f32 %v358, %v380
      %v398 = vadd.f32 %v359, %v380
      %v399 = vadd.f32 %v360, %v380
      %v400 = vadd.f32 %v361, %v380
      %v401 = vadd.f32 %v362, %v380
      %v402 = vadd.f32 %v363, %v380
      %v403 = vadd.f32 %v364, %v380
      %v404 = vadd.f32 %v365, %v380
      %v405 = vadd.f32 %v366, %v380
      %v406 = vadd.f32 %v367, %v380
      %v407 = vadd.f32 %v368, %v380
      %v408 = vadd.f32 %v369, %v380
      %v409 = vadd.f32 %v370, %v380
      %v410 = vadd.f32 %v371, %v380
      %v411 = vadd.f32 %v372, %v380
      %v412 = vadd.f32 %v373, %v380
      %v413 = vadd.f32 %v374, %v380
      %v414 = vld [vmem:[%s266] sm:$0xf]
      %v415 = vld [vmem:[%s266 + $0x4] sm:$0xf]
      %v416 = vld [vmem:[%s266 + $0x8] sm:$0xf]
      %v417 = vld [vmem:[%s266 + $0xc] sm:$0xf]
      %v418 = vld [vmem:[%s266 + $0x10] sm:$0xf]
      %v419 = vld [vmem:[%s266 + $0x14] sm:$0xf]
      %v420 = vld [vmem:[%s266 + $0x18] sm:$0xf]
      %v421 = vld [vmem:[%s266 + $0x1c] sm:$0xf]
      %v422 = vld [vmem:[%s266 + $0x20] sm:$0xf]
      %v423 = vld [vmem:[%s266 + $0x24] sm:$0xf]
      %v424 = vld [vmem:[%s266 + $0x28] sm:$0xf]
      %v425 = vld [vmem:[%s266 + $0x2c] sm:$0xf]
      %v426 = vld [vmem:[%s266 + $0x30] sm:$0xf]
      %v427 = vld [vmem:[%s266 + $0x34] sm:$0xf]
      %v428 = vld [vmem:[%s266 + $0x38] sm:$0xf]
      %v429 = vld [vmem:[%s266 + $0x3c] sm:$0xf]
      %v430 = vld [vmem:[%s266 + $0x40] sm:$0xf]
      %v431 = vld [vmem:[%s266 + $0x44] sm:$0xf]
      %v432 = vld [vmem:[%s266 + $0x48] sm:$0xf]
      %v433 = vld [vmem:[%s266 + $0x4c] sm:$0xf]
      %v434 = vld [vmem:[%s266 + $0x50] sm:$0xf]
      %v435 = vld [vmem:[%s266 + $0x54] sm:$0xf]
      %v436 = vld [vmem:[%s266 + $0x58] sm:$0xf]
      %v437 = vld [vmem:[%s266 + $0x5c] sm:$0xf]
      %v438 = vld [vmem:[%s266 + $0x60] sm:$0xf]
      %v439 = vld [vmem:[%s266 + $0x64] sm:$0xf]
      %v440 = vld [vmem:[%s266 + $0x68] sm:$0xf]
      %v441 = vld [vmem:[%s266 + $0x6c] sm:$0xf]
      %v442 = vld [vmem:[%s266 + $0x70] sm:$0xf]
      %v443 = vld [vmem:[%s266 + $0x74] sm:$0xf]
      %v444 = vld [vmem:[%s266 + $0x78] sm:$0xf]
      %v445 = vld [vmem:[%s266 + $0x7c] sm:$0xf]
      %v446 = vld [vmem:[%s4] sm:$0x1]
      %v447 = vunpack.c.l.bf16 %v414
      %v448 = vunpack.c.l.bf16 %v415
      %v449 = vunpack.c.l.bf16 %v416
      %v450 = vunpack.c.l.bf16 %v417
      %v451 = vunpack.c.l.bf16 %v418
      %v452 = vunpack.c.l.bf16 %v419
      %v453 = vunpack.c.l.bf16 %v420
      %v454 = vunpack.c.l.bf16 %v421
      %v455 = vunpack.c.l.bf16 %v422
      %v456 = vunpack.c.l.bf16 %v423
      %v457 = vunpack.c.l.bf16 %v424
      %v458 = vunpack.c.l.bf16 %v425
      %v459 = vunpack.c.l.bf16 %v426
      %v460 = vunpack.c.l.bf16 %v427
      %v461 = vunpack.c.l.bf16 %v428
      %v462 = vunpack.c.l.bf16 %v429
      %v463 = vunpack.c.l.bf16 %v430
      %v464 = vunpack.c.l.bf16 %v431
      %v465 = vunpack.c.l.bf16 %v432
      %v466 = vunpack.c.l.bf16 %v433
      %v467 = vunpack.c.l.bf16 %v434
      %v468 = vunpack.c.l.bf16 %v435
      %v469 = vunpack.c.l.bf16 %v436
      %v470 = vunpack.c.l.bf16 %v437
      %v471 = vunpack.c.l.bf16 %v438
      %v472 = vunpack.c.l.bf16 %v439
      %v473 = vunpack.c.l.bf16 %v440
      %v474 = vunpack.c.l.bf16 %v441
      %v475 = vunpack.c.l.bf16 %v442
      %v476 = vunpack.c.l.bf16 %v443
      %v477 = vunpack.c.l.bf16 %v444
      %v478 = vunpack.c.l.bf16 %v445
      %v480 = vlaneseq
      %v481 = vshrl.u32 %v480, 7
      %v482 = vsub.s32 0, %v481
      %v483 = vrot.slane %v446, %v482
      %v485 = vmul.f32 %v447, %v483
      %v486 = vmul.f32 %v448, %v483
      %v487 = vmul.f32 %v449, %v483
      %v488 = vmul.f32 %v450, %v483
      %v489 = vmul.f32 %v451, %v483
      %v490 = vmul.f32 %v452, %v483
      %v491 = vmul.f32 %v453, %v483
      %v492 = vmul.f32 %v454, %v483
      %v493 = vmul.f32 %v455, %v483
      %v494 = vmul.f32 %v456, %v483
      %v495 = vmul.f32 %v457, %v483
      %v496 = vmul.f32 %v458, %v483
      %v497 = vmul.f32 %v459, %v483
      %v498 = vmul.f32 %v460, %v483
      %v499 = vmul.f32 %v461, %v483
      %v500 = vmul.f32 %v462, %v483
      %v501 = vmul.f32 %v463, %v483
      %v502 = vmul.f32 %v464, %v483
      %v503 = vmul.f32 %v465, %v483
      %v504 = vmul.f32 %v466, %v483
      %v505 = vmul.f32 %v467, %v483
      %v506 = vmul.f32 %v468, %v483
      %v507 = vmul.f32 %v469, %v483
      %v508 = vmul.f32 %v470, %v483
      %v509 = vmul.f32 %v471, %v483
      %v510 = vmul.f32 %v472, %v483
      %v511 = vmul.f32 %v473, %v483
      %v512 = vmul.f32 %v474, %v483
      %v513 = vmul.f32 %v475, %v483
      %v514 = vmul.f32 %v476, %v483
      %v515 = vmul.f32 %v477, %v483
      %v516 = vmul.f32 %v478, %v483
      %v517 = vld [vmem:[%s5] sm:$0x1]
      %v519 = vlaneseq
      %v520 = vshrl.u32 %v519, 7
      %v521 = vsub.s32 0, %v520
      %v522 = vrot.slane %v517, %v521
      %v524 = vadd.f32 %v485, %v522
      %v525 = vadd.f32 %v486, %v522
      %v526 = vadd.f32 %v487, %v522
      %v527 = vadd.f32 %v488, %v522
      %v528 = vadd.f32 %v489, %v522
      %v529 = vadd.f32 %v490, %v522
      %v530 = vadd.f32 %v491, %v522
      %v531 = vadd.f32 %v492, %v522
      %v532 = vadd.f32 %v493, %v522
      %v533 = vadd.f32 %v494, %v522
      %v534 = vadd.f32 %v495, %v522
      %v535 = vadd.f32 %v496, %v522
      %v536 = vadd.f32 %v497, %v522
      %v537 = vadd.f32 %v498, %v522
      %v538 = vadd.f32 %v499, %v522
      %v539 = vadd.f32 %v500, %v522
      %v540 = vadd.f32 %v501, %v522
      %v541 = vadd.f32 %v502, %v522
      %v542 = vadd.f32 %v503, %v522
      %v543 = vadd.f32 %v504, %v522
      %v544 = vadd.f32 %v505, %v522
      %v545 = vadd.f32 %v506, %v522
      %v546 = vadd.f32 %v507, %v522
      %v547 = vadd.f32 %v508, %v522
      %v548 = vadd.f32 %v509, %v522
      %v549 = vadd.f32 %v510, %v522
      %v550 = vadd.f32 %v511, %v522
      %v551 = vadd.f32 %v512, %v522
      %v552 = vadd.f32 %v513, %v522
      %v553 = vadd.f32 %v514, %v522
      %v554 = vadd.f32 %v515, %v522
      %v555 = vadd.f32 %v516, %v522
      %v556 = vadd.f32 %v382, %v524
      %v557 = vadd.f32 %v383, %v525
      %v558 = vadd.f32 %v384, %v526
      %v559 = vadd.f32 %v385, %v527
      %v560 = vadd.f32 %v386, %v528
      %v561 = vadd.f32 %v387, %v529
      %v562 = vadd.f32 %v388, %v530
      %v563 = vadd.f32 %v389, %v531
      %v564 = vadd.f32 %v390, %v532
      %v565 = vadd.f32 %v391, %v533
      %v566 = vadd.f32 %v392, %v534
      %v567 = vadd.f32 %v393, %v535
      %v568 = vadd.f32 %v394, %v536
      %v569 = vadd.f32 %v395, %v537
      %v570 = vadd.f32 %v396, %v538
      %v571 = vadd.f32 %v397, %v539
      %v572 = vadd.f32 %v398, %v540
      %v573 = vadd.f32 %v399, %v541
      %v574 = vadd.f32 %v400, %v542
      %v575 = vadd.f32 %v401, %v543
      %v576 = vadd.f32 %v402, %v544
      %v577 = vadd.f32 %v403, %v545
      %v578 = vadd.f32 %v404, %v546
      %v579 = vadd.f32 %v405, %v547
      %v580 = vadd.f32 %v406, %v548
      %v581 = vadd.f32 %v407, %v549
      %v582 = vadd.f32 %v408, %v550
      %v583 = vadd.f32 %v409, %v551
      %v584 = vadd.f32 %v410, %v552
      %v585 = vadd.f32 %v411, %v553
      %v586 = vadd.f32 %v412, %v554
      %v587 = vadd.f32 %v413, %v555
      %v588 = vmax.f32 %v556, 0.0
      %v589 = vmax.f32 %v557, 0.0
      %v590 = vmax.f32 %v558, 0.0
      %v591 = vmax.f32 %v559, 0.0
      %v592 = vmax.f32 %v560, 0.0
      %v593 = vmax.f32 %v561, 0.0
      %v594 = vmax.f32 %v562, 0.0
      %v595 = vmax.f32 %v563, 0.0
      %v596 = vmax.f32 %v564, 0.0
      %v597 = vmax.f32 %v565, 0.0
      %v598 = vmax.f32 %v566, 0.0
      %v599 = vmax.f32 %v567, 0.0
      %v600 = vmax.f32 %v568, 0.0
      %v601 = vmax.f32 %v569, 0.0
      %v602 = vmax.f32 %v570, 0.0
      %v603 = vmax.f32 %v571, 0.0
      %v604 = vmax.f32 %v572, 0.0
      %v605 = vmax.f32 %v573, 0.0
      %v606 = vmax.f32 %v574, 0.0
      %v607 = vmax.f32 %v575, 0.0
      %v608 = vmax.f32 %v576, 0.0
      %v609 = vmax.f32 %v577, 0.0
      %v610 = vmax.f32 %v578, 0.0
      %v611 = vmax.f32 %v579, 0.0
      %v612 = vmax.f32 %v580, 0.0
      %v613 = vmax.f32 %v581, 0.0
      %v614 = vmax.f32 %v582, 0.0
      %v615 = vmax.f32 %v583, 0.0
      %v616 = vmax.f32 %v584, 0.0
      %v617 = vmax.f32 %v585, 0.0
      %v618 = vmax.f32 %v586, 0.0
      %v619 = vmax.f32 %v587, 0.0
      %620 = vst [vmem:[%s271] sm:$0xff] %v588
      %621 = vst [vmem:[%s271 + $0x8] sm:$0xff] %v589
      %622 = vst [vmem:[%s271 + $0x10] sm:$0xff] %v590
      %623 = vst [vmem:[%s271 + $0x18] sm:$0xff] %v591
      %624 = vst [vmem:[%s271 + $0x20] sm:$0xff] %v592
      %625 = vst [vmem:[%s271 + $0x28] sm:$0xff] %v593
      %626 = vst [vmem:[%s271 + $0x30] sm:$0xff] %v594
      %627 = vst [vmem:[%s271 + $0x38] sm:$0xff] %v595
      %628 = vst [vmem:[%s271 + $0x40] sm:$0xff] %v596
      %629 = vst [vmem:[%s271 + $0x48] sm:$0xff] %v597
      %630 = vst [vmem:[%s271 + $0x50] sm:$0xff] %v598
      %631 = vst [vmem:[%s271 + $0x58] sm:$0xff] %v599
      %632 = vst [vmem:[%s271 + $0x60] sm:$0xff] %v600
      %633 = vst [vmem:[%s271 + $0x68] sm:$0xff] %v601
      %634 = vst [vmem:[%s271 + $0x70] sm:$0xff] %v602
      %635 = vst [vmem:[%s271 + $0x78] sm:$0xff] %v603
      %636 = vst [vmem:[%s271 + $0x80] sm:$0xff] %v604
      %637 = vst [vmem:[%s271 + $0x88] sm:$0xff] %v605
      %638 = vst [vmem:[%s271 + $0x90] sm:$0xff] %v606
      %639 = vst [vmem:[%s271 + $0x98] sm:$0xff] %v607
      %640 = vst [vmem:[%s271 + $0xa0] sm:$0xff] %v608
      %641 = vst [vmem:[%s271 + $0xa8] sm:$0xff] %v609
      %642 = vst [vmem:[%s271 + $0xb0] sm:$0xff] %v610
      %643 = vst [vmem:[%s271 + $0xb8] sm:$0xff] %v611
      %644 = vst [vmem:[%s271 + $0xc0] sm:$0xff] %v612
      %645 = vst [vmem:[%s271 + $0xc8] sm:$0xff] %v613
      %646 = vst [vmem:[%s271 + $0xd0] sm:$0xff] %v614
      %647 = vst [vmem:[%s271 + $0xd8] sm:$0xff] %v615
      %648 = vst [vmem:[%s271 + $0xe0] sm:$0xff] %v616
      %649 = vst [vmem:[%s271 + $0xe8] sm:$0xff] %v617
      %650 = vst [vmem:[%s271 + $0xf0] sm:$0xff] %v618
      %651 = vst [vmem:[%s271 + $0xf8] sm:$0xff] %v619
      %p652 = scmp.lt.s32.totalorder %s17, 1
      %s653 = scalar_select %p652, %s17, 1
      %s654 = smul.addr %s653, 32
      %s655 = smul.addr %s654, 8
      %s656 = scalar_lea.vmem %s6, %s655
      // Predicated region
      $region45: #{basic_block_forward.5} parent=43 // pred_check
        %p657 = pneg %p171
      $region46: #{basic_block_forward.5} parent=43 // pred_check_branch
        %659 = sbr.rel (%p657) target = $region48
      $region47: #{basic_block_forward.5} parent=43 // pred_region
        _
      $region48: #{basic_block_forward.5} parent=43 // pred_fallthru
        _
    $region44: #{basic_block_forward.5} parent=5 // pred_fallthru
      _
    %p660 = scmp.le.s32.totalorder 2, %s12
    // Predicated region
    $region49: #{basic_block_forward.5} parent=5 // pred_check
      %p661 = pneg %p660
    $region50: #{basic_block_forward.5} parent=5 // pred_check_branch
      %663 = sbr.rel (%p661) target = $region52
    $region51: #{basic_block_forward.5} parent=5 // pred_region
      %s664 = ssub.s32 %s12, 2
      // Predicated region
      $region53: #{basic_block_forward.5} parent=51 // pred_check
        %p665 = pneg %p177
      $region54: #{basic_block_forward.5} parent=51 // pred_check_branch
        %667 = sbr.rel (%p665) target = $region56
      $region55: #{basic_block_forward.5} parent=51 // pred_region
        %p668 = scmp.lt.s32.totalorder %s18, 1
        %s669 = scalar_select %p668, %s18, 1
        %s670 = smul.addr %s669, 32
        %s671 = smul.addr %s670, 8
        %s672 = scalar_lea.vmem %s6, %s671
      $region56: #{basic_block_forward.5} parent=51 // pred_fallthru
        _
    $region52: #{basic_block_forward.5} parent=5 // pred_fallthru
      _
  $region6: #{basic_block_forward.5} parent=0 // loop_footer
    %s16 = sadd.s32 1, %s12
  $region7: #{basic_block_forward.5} parent=0 // loop_footer_branch
    %11 = sbr.rel target = $region3
  $region8: #{basic_block_forward.5} parent=0 // loop_exit
    _

// kernel: basic_block_forward.3
$region0: #{basic_block_forward.3}
  #allocation0 [shape = 'u32[]', space=smem, size = 0x4, offset = 0x4, fixed_abs, tag = 'smem constant byte address 0x4 - core index']
  #allocation1 [shape = 'u32[144,128]{1,0:T(1,128)}', space=vmem, size = 0x12000, scoped, tag = 'internal scratch']
  #allocation2 [shape = 'bf16[18,18,4]{2,1,0:T(8,128)(2,1)}', space=vmem, size = 0x1b000, scoped, tag = 'scratch operand']
  #allocation3 [shape = 'bf16[16,16,36]{2,1,0:T(16,128)(2,1)}', space=vmem, size = 0x10000, scoped, tag = 'scratch operand']
  %s0 = inlined_call_operand.vmem [shape: f32[2,16,16,4], index: 0, kind: input, shape index: {}]
  %s1 = inlined_call_operand.vmem [shape: bf16[36,128], index: 1, kind: input, shape index: {}]
  %s2 = inlined_call_operand.vmem [shape: bf16[4,128], index: 2, kind: input, shape index: {}]
  %s3 = inlined_call_operand.vmem [shape: bf16[2,16,16,128], index: 3, kind: output, shape index: {0}]
  %s4 = inlined_call_operand.vmem [shape: f32[2,2,128], index: 4, kind: output, shape index: {1}]
  %s5 = inlined_call_operand.vmem [shape: bf16[2,16,16,128], index: 5, kind: output, shape index: {2}]
  %s6 = inlined_call_operand.vmem [shape: f32[2,2,128], index: 6, kind: output, shape index: {3}]
  %7 = xla_tuple %s3, %s4, %s5, %s6
  %s8 = sld [smem:[#allocation0]]
  $region69: #{basic_block_forward.3} parent=0
    _
  %s10 = ssub.s32 1, %s8
  %s11 = scalar_select 0, %s10, %s8
  loop: start=0, step=1, limit=4
  $region2: #{basic_block_forward.3} parent=0 // loop_pre_header
    _
  $region3: #{basic_block_forward.3} parent=0 // loop_header
    %s13 = sphi 0, %s17
    %p14 = scmp.ge.s32.totalorder %s13, 4
    %s23 = sphi 0, %s25
    %s26 = sphi 0, %s23
    %s27 = sphi 0, %s26
    %s43 = sphi 0, %s27
    %s47 = sphi 0, %s47
    %s49 = sphi 0, %s47
    %s50 = sphi 0, %s49
    %s64 = sphi 0, %s50
    %s68 = sphi 0, %s68
    %s70 = sphi 0, %s68
    %s71 = sphi 0, %s70
    %s85 = sphi 0, %s71
    %s91 = sphi 0, %s93
    %s94 = sphi 0, %s91
    %s95 = sphi 0, %s94
    %s111 = sphi 0, %s95
    %s117 = sphi 0, %s119
    %s120 = sphi 0, %s117
    %s121 = sphi 0, %s120
    %s137 = sphi 0, %s121
    %s143 = sphi 0, %s145
    %s146 = sphi 0, %s143
    %s147 = sphi 0, %s146
    %s163 = sphi 0, %s147
    %s169 = sphi 0, %s171
    %s172 = sphi 0, %s169
    %s173 = sphi 0, %s172
    %s189 = sphi 0, %s173
  $region4: #{basic_block_forward.3} parent=0 // loop_header_branch
    %16 = sbr.rel (%p14) target = $region8
  $region5: #{basic_block_forward.3} parent=0 // loop_body
    %s18 = ssub.s32 %s13, 1
    %s19 = ssub.s32 %s13, 2
    %s20 = sadd.s32 %s13, 1
    %s21 = ssub.s32 %s13, %s20
    %p22 = scmp.eq.s32.totalorder %s21, 0
    %s24 = sadd.s32 %s23, 1
    %s25 = scalar_select %p22, %s23, %s24
    %p28 = pneg %p22
    %p29 = scmp.eq.s32.totalorder %s13, 1
    %p30 = por %p28, %p29
    %p31 = scmp.ne.s32.totalorder %s23, %s26
    %p32 = scmp.eq.s32.totalorder %s13, 0
    %p33 = por %p31, %p32
    %p34 = scmp.ne.s32.totalorder %s23, %s26
    %p35 = scmp.eq.s32.totalorder %s18, 1
    %p36 = por %p34, %p35
    %p37 = scmp.ne.s32.totalorder %s26, %s27
    %p38 = scmp.eq.s32.totalorder %s18, 0
    %p39 = por %p37, %p38
    %p40 = scmp.ne.s32.totalorder %s26, %s27
    %p41 = scmp.eq.s32.totalorder %s19, 1
    %p42 = por %p40, %p41
    %p44 = scmp.ne.s32.totalorder %s27, %s43
    %p45 = scmp.eq.s32.totalorder %s19, 0
    %p46 = por %p44, %p45
    %s48 = sadd.s32 %s47, 1
    %p51 = scmp.eq.s32.totalorder %s13, 1
    %p52 = scmp.ne.s32.totalorder %s47, %s49
    %p53 = scmp.eq.s32.totalorder %s13, 0
    %p54 = por %p52, %p53
    %p55 = scmp.ne.s32.totalorder %s47, %s49
    %p56 = scmp.eq.s32.totalorder %s18, 1
    %p57 = por %p55, %p56
    %p58 = scmp.ne.s32.totalorder %s49, %s50
    %p59 = scmp.eq.s32.totalorder %s18, 0
    %p60 = por %p58, %p59
    %p61 = scmp.ne.s32.totalorder %s49, %s50
    %p62 = scmp.eq.s32.totalorder %s19, 1
    %p63 = por %p61, %p62
    %p65 = scmp.ne.s32.totalorder %s50, %s64
    %p66 = scmp.eq.s32.totalorder %s19, 0
    %p67 = por %p65, %p66
    %s69 = sadd.s32 %s68, 1
    %p72 = scmp.eq.s32.totalorder %s13, 1
    %p73 = scmp.ne.s32.totalorder %s68, %s70
    %p74 = scmp.eq.s32.totalorder %s13, 0
    %p75 = por %p73, %p74
    %p76 = scmp.ne.s32.totalorder %s68, %s70
    %p77 = scmp.eq.s32.totalorder %s18, 1
    %p78 = por %p76, %p77
    %p79 = scmp.ne.s32.totalorder %s70, %s71
    %p80 = scmp.eq.s32.totalorder %s18, 0
    %p81 = por %p79, %p80
    %p82 = scmp.ne.s32.totalorder %s70, %s71
    %p83 = scmp.eq.s32.totalorder %s19, 1
    %p84 = por %p82, %p83
    %p86 = scmp.ne.s32.totalorder %s71, %s85
    %p87 = scmp.eq.s32.totalorder %s19, 0
    %p88 = por %p86, %p87
    %s89 = ssub.s32 %s13, %s20
    %p90 = scmp.eq.s32.totalorder %s89, 0
    %s92 = sadd.s32 %s91, 1
    %s93 = scalar_select %p90, %s91, %s92
    %p96 = pneg %p90
    %p97 = scmp.eq.s32.totalorder %s13, 1
    %p98 = por %p96, %p97
    %p99 = scmp.ne.s32.totalorder %s91, %s94
    %p100 = scmp.eq.s32.totalorder %s13, 0
    %p101 = por %p99, %p100
    %p102 = scmp.ne.s32.totalorder %s91, %s94
    %p103 = scmp.eq.s32.totalorder %s18, 1
    %p104 = por %p102, %p103
    %p105 = scmp.ne.s32.totalorder %s94, %s95
    %p106 = scmp.eq.s32.totalorder %s18, 0
    %p107 = por %p105, %p106
    %p108 = scmp.ne.s32.totalorder %s94, %s95
    %p109 = scmp.eq.s32.totalorder %s19, 1
    %p110 = por %p108, %p109
    %p112 = scmp.ne.s32.totalorder %s95, %s111
    %p113 = scmp.eq.s32.totalorder %s19, 0
    %p114 = por %p112, %p113
    %s115 = ssub.s32 %s13, %s20
    %p116 = scmp.eq.s32.totalorder %s115, 0
    %s118 = sadd.s32 %s117, 1
    %s119 = scalar_select %p116, %s117, %s118
    %p122 = pneg %p116
    %p123 = scmp.eq.s32.totalorder %s13, 1
    %p124 = por %p122, %p123
    %p125 = scmp.ne.s32.totalorder %s117, %s120
    %p126 = scmp.eq.s32.totalorder %s13, 0
    %p127 = por %p125, %p126
    %p128 = scmp.ne.s32.totalorder %s117, %s120
    %p129 = scmp.eq.s32.totalorder %s18, 1
    %p130 = por %p128, %p129
    %p131 = scmp.ne.s32.totalorder %s120, %s121
    %p132 = scmp.eq.s32.totalorder %s18, 0
    %p133 = por %p131, %p132
    %p134 = scmp.ne.s32.totalorder %s120, %s121
    %p135 = scmp.eq.s32.totalorder %s19, 1
    %p136 = por %p134, %p135
    %p138 = scmp.ne.s32.totalorder %s121, %s137
    %p139 = scmp.eq.s32.totalorder %s19, 0
    %p140 = por %p138, %p139
    %s141 = ssub.s32 %s13, %s20
    %p142 = scmp.eq.s32.totalorder %s141, 0
    %s144 = sadd.s32 %s143, 1
    %s145 = scalar_select %p142, %s143, %s144
    %p148 = pneg %p142
    %p149 = scmp.eq.s32.totalorder %s13, 1
    %p150 = por %p148, %p149
    %p151 = scmp.ne.s32.totalorder %s143, %s146
    %p152 = scmp.eq.s32.totalorder %s13, 0
    %p153 = por %p151, %p152
    %p154 = scmp.ne.s32.totalorder %s143, %s146
    %p155 = scmp.eq.s32.totalorder %s18, 1
    %p156 = por %p154, %p155
    %p157 = scmp.ne.s32.totalorder %s146, %s147
    %p158 = scmp.eq.s32.totalorder %s18, 0
    %p159 = por %p157, %p158
    %p160 = scmp.ne.s32.totalorder %s146, %s147
    %p161 = scmp.eq.s32.totalorder %s19, 1
    %p162 = por %p160, %p161
    %p164 = scmp.ne.s32.totalorder %s147, %s163
    %p165 = scmp.eq.s32.totalorder %s19, 0
    %p166 = por %p164, %p165
    %s167 = ssub.s32 %s13, %s20
    %p168 = scmp.eq.s32.totalorder %s167, 0
    %s170 = sadd.s32 %s169, 1
    %s171 = scalar_select %p168, %s169, %s170
    %p174 = pneg %p168
    %p175 = scmp.eq.s32.totalorder %s13, 1
    %p176 = por %p174, %p175
    %p177 = scmp.ne.s32.totalorder %s169, %s172
    %p178 = scmp.eq.s32.totalorder %s13, 0
    %p179 = por %p177, %p178
    %p180 = scmp.ne.s32.totalorder %s169, %s172
    %p181 = scmp.eq.s32.totalorder %s18, 1
    %p182 = por %p180, %p181
    %p183 = scmp.ne.s32.totalorder %s172, %s173
    %p184 = scmp.eq.s32.totalorder %s18, 0
    %p185 = por %p183, %p184
    %p186 = scmp.ne.s32.totalorder %s172, %s173
    %p187 = scmp.eq.s32.totalorder %s19, 1
    %p188 = por %p186, %p187
    %p190 = scmp.ne.s32.totalorder %s173, %s189
    %p191 = scmp.eq.s32.totalorder %s19, 0
    %p192 = por %p190, %p191
    %p193 = scmp.le.s32.totalorder 1, %s13
    %p194 = scmp.lt.s32.totalorder %s13, 3
    %p195 = pnand %p193, %p194
    %p196 = pneg %p195
    // Predicated region
    $region9: #{basic_block_forward.3} parent=5 // pred_check
      _
    $region10: #{basic_block_forward.3} parent=5 // pred_check_branch
      %198 = sbr.rel (%p195) target = $region12
    $region11: #{basic_block_forward.3} parent=5 // pred_region
      %s199 = ssub.s32 %s13, 1
      // Predicated region
      $region13: #{basic_block_forward.3} parent=11 // pred_check
        %p200 = pneg %p60
      $region14: #{basic_block_forward.3} parent=11 // pred_check_branch
        %202 = sbr.rel (%p200) target = $region16
      $region15: #{basic_block_forward.3} parent=11 // pred_region
        _
      $region16: #{basic_block_forward.3} parent=11 // pred_fallthru
        _
      // Predicated region
      $region17: #{basic_block_forward.3} parent=11 // pred_check
        %p203 = pneg %p81
      $region18: #{basic_block_forward.3} parent=11 // pred_check_branch
        %205 = sbr.rel (%p203) target = $region20
      $region19: #{basic_block_forward.3} parent=11 // pred_region
        _
      $region20: #{basic_block_forward.3} parent=11 // pred_fallthru
        _
    $region12: #{basic_block_forward.3} parent=5 // pred_fallthru
      _
    %p206 = scmp.lt.s32.totalorder %s13, 2
    // Predicated region
    $region21: #{basic_block_forward.3} parent=5 // pred_check
      %p207 = pneg %p206
    $region22: #{basic_block_forward.3} parent=5 // pred_check_branch
      %209 = sbr.rel (%p207) target = $region24
    $region23: #{basic_block_forward.3} parent=5 // pred_region
      // Predicated region
      $region25: #{basic_block_forward.3} parent=23 // pred_check
        %p210 = pneg %p33
      $region26: #{basic_block_forward.3} parent=23 // pred_check_branch
        %212 = sbr.rel (%p210) target = $region28
      $region27: #{basic_block_forward.3} parent=23 // pred_region
        %p213 = scmp.lt.s32.totalorder %s13, 1
        %s214 = scalar_select %p213, %s13, 1
        %s215 = smul.addr %s214, 32
        %s216 = smul.addr %s215, 8
        %s217 = scalar_lea.vmem %s0, %s216
      $region28: #{basic_block_forward.3} parent=23 // pred_fallthru
        _
    $region24: #{basic_block_forward.3} parent=5 // pred_fallthru
      _
    %p218 = scmp.le.s32.totalorder 1, %s13
    %p219 = scmp.lt.s32.totalorder %s13, 3
    %p220 = pnand %p218, %p219
    %p221 = pneg %p220
    // Predicated region
    $region29: #{basic_block_forward.3} parent=5 // pred_check
      _
    $region30: #{basic_block_forward.3} parent=5 // pred_check_branch
      %223 = sbr.rel (%p220) target = $region32
    $region31: #{basic_block_forward.3} parent=5 // pred_region
      %s224 = ssub.s32 %s13, 1
      %p225 = scmp.lt.s32.totalorder %s18, 1
      %s226 = scalar_select %p225, %s18, 1
      %s227 = smul.addr %s226, 32
      %s228 = smul.addr %s227, 8
      %s229 = scalar_lea.vmem %s0, %s228
      %p230 = pneg %p39
      %p231 = pneg %p36
      %p232 = pneg %p60
      %p233 = pneg %p57
      %p234 = pneg %p81
      %p235 = pneg %p78
      %p236 = pneg %p107
      %p237 = pneg %p104
      %p238 = scmp.lt.s32.totalorder %s18, 1
      %s239 = scalar_select %p238, %s18, 1
      %s240 = smul.addr %s239, 32
      %s241 = smul.addr %s240, 4
      %s242 = scalar_lea.vmem %s3, %s241
      %p243 = pneg %p133
      %p244 = pneg %p130
      %p245 = scmp.lt.s32.totalorder %s18, 1
      %s246 = scalar_select %p245, %s18, 1
      %s247 = smul.addr %s246, 2
      %s248 = scalar_lea.vmem %s4, %s247
      %p249 = pneg %p159
      %p250 = pneg %p156
      %p251 = scmp.lt.s32.totalorder %s18, 1
      %s252 = scalar_select %p251, %s18, 1
      %s253 = smul.addr %s252, 32
      %s254 = smul.addr %s253, 4
      %s255 = scalar_lea.vmem %s5, %s254
      %p256 = pneg %p185
      %p257 = pneg %p182
      %p258 = scmp.lt.s32.totalorder %s18, 1
      %s259 = scalar_select %p258, %s18, 1
      %s260 = smul.addr %s259, 2
      %s261 = scalar_lea.vmem %s6, %s260
      %p262 = scmp.lt.s32.totalorder %s18, 1
      %s263 = scalar_select %p262, %s18, 1
      %s264 = smul.addr %s263, 32
      %s265 = smul.addr %s264, 8
      %s266 = scalar_lea.vmem %s0, %s265
      %p267 = scmp.lt.s32.totalorder %s18, 1
      %s268 = scalar_select %p267, %s18, 1
      %s269 = smul.addr %s268, 32
      %s270 = smul.addr %s269, 4
      %s271 = scalar_lea.vmem %s3, %s270
      %p272 = scmp.lt.s32.totalorder %s18, 1
      %s273 = scalar_select %p272, %s18, 1
      %s274 = smul.addr %s273, 2
      %s275 = scalar_lea.vmem %s4, %s274
      %p276 = scmp.lt.s32.totalorder %s18, 1
      %s277 = scalar_select %p276, %s18, 1
      %s278 = smul.addr %s277, 32
      %s279 = smul.addr %s278, 4
      %s280 = scalar_lea.vmem %s5, %s279
      %p281 = scmp.lt.s32.totalorder %s18, 1
      %s282 = scalar_select %p281, %s18, 1
      %s283 = smul.addr %s282, 2
      %s284 = scalar_lea.vmem %s6, %s283
      %vm286 = vcmask 27648
      %287 = vst.msk [vmem:[#allocation2] sm:$0xf] %vm286, 0
      %288 = vst.msk [vmem:[#allocation2 + $0x4] sm:$0xf] %vm286, 0
      %vm289 = vcmask 24576
      %290 = vst.msk [vmem:[#allocation2 + $0x8] sm:$0x1] %vm289, 0
      %s291 = scalar_lea.vmem [#allocation2], 204
      %292 = vst.msk [vmem:[%s291] sm:$0xf] %vm286, 0
      %293 = vst.msk [vmem:[%s291 + $0x4] sm:$0xf] %vm286, 0
      %294 = vst.msk [vmem:[%s291 + $0x8] sm:$0x1] %vm289, 0
      %s295 = scalar_lea.vmem [#allocation2], 12
      %vm296 = vcmask 24576
      %vm297 = vsmask.f32 256
      %vm298 = vmand %vm296, %vm297
      %v299 = vld [vmem:[%s295] sm:$0x1]
      %v300 = vsel %vm298, 0, %v299
      %301 = vst [vmem:[%s295] sm:$0x1] %v300
      %v302 = vld [vmem:[%s295 + $0xc] sm:$0x1]
      %v303 = vsel %vm298, 0, %v302
      %304 = vst [vmem:[%s295 + $0xc] sm:$0x1] %v303
      %v305 = vld [vmem:[%s295 + $0x18] sm:$0x1]
      %v306 = vsel %vm298, 0, %v305
      %307 = vst [vmem:[%s295 + $0x18] sm:$0x1] %v306
      %v308 = vld [vmem:[%s295 + $0x24] sm:$0x1]
      %v309 = vsel %vm298, 0, %v308
      %310 = vst [vmem:[%s295 + $0x24] sm:$0x1] %v309
      %v311 = vld [vmem:[%s295 + $0x30] sm:$0x1]
      %v312 = vsel %vm298, 0, %v311
      %313 = vst [vmem:[%s295 + $0x30] sm:$0x1] %v312
      %v314 = vld [vmem:[%s295 + $0x3c] sm:$0x1]
      %v315 = vsel %vm298, 0, %v314
      %316 = vst [vmem:[%s295 + $0x3c] sm:$0x1] %v315
      %v317 = vld [vmem:[%s295 + $0x48] sm:$0x1]
      %v318 = vsel %vm298, 0, %v317
      %319 = vst [vmem:[%s295 + $0x48] sm:$0x1] %v318
      %v320 = vld [vmem:[%s295 + $0x54] sm:$0x1]
      %v321 = vsel %vm298, 0, %v320
      %322 = vst [vmem:[%s295 + $0x54] sm:$0x1] %v321
      %v323 = vld [vmem:[%s295 + $0x60] sm:$0x1]
      %v324 = vsel %vm298, 0, %v323
      %325 = vst [vmem:[%s295 + $0x60] sm:$0x1] %v324
      %v326 = vld [vmem:[%s295 + $0x6c] sm:$0x1]
      %v327 = vsel %vm298, 0, %v326
      %328 = vst [vmem:[%s295 + $0x6c] sm:$0x1] %v327
      %v329 = vld [vmem:[%s295 + $0x78] sm:$0x1]
      %v330 = vsel %vm298, 0, %v329
      %331 = vst [vmem:[%s295 + $0x78] sm:$0x1] %v330
      %v332 = vld [vmem:[%s295 + $0x84] sm:$0x1]
      %v333 = vsel %vm298, 0, %v332
      %334 = vst [vmem:[%s295 + $0x84] sm:$0x1] %v333
      %v335 = vld [vmem:[%s295 + $0x90] sm:$0x1]
      %v336 = vsel %vm298, 0, %v335
      %337 = vst [vmem:[%s295 + $0x90] sm:$0x1] %v336
      %v338 = vld [vmem:[%s295 + $0x9c] sm:$0x1]
      %v339 = vsel %vm298, 0, %v338
      %340 = vst [vmem:[%s295 + $0x9c] sm:$0x1] %v339
      %v341 = vld [vmem:[%s295 + $0xa8] sm:$0x1]
      %v342 = vsel %vm298, 0, %v341
      %343 = vst [vmem:[%s295 + $0xa8] sm:$0x1] %v342
      %v344 = vld [vmem:[%s295 + $0xb4] sm:$0x1]
      %v345 = vsel %vm298, 0, %v344
      %346 = vst [vmem:[%s295 + $0xb4] sm:$0x1] %v345
      %vm347 = vsmask.f32 7938
      %vm348 = vmand %vm296, %vm347
      %v349 = vld [vmem:[%s295 + $0x8] sm:$0x1]
      %v350 = vsel %vm348, 0, %v349
      %351 = vst [vmem:[%s295 + $0x8] sm:$0x1] %v350
      %v352 = vld [vmem:[%s295 + $0x14] sm:$0x1]
      %v353 = vsel %vm348, 0, %v352
      %354 = vst [vmem:[%s295 + $0x14] sm:$0x1] %v353
      %v355 = vld [vmem:[%s295 + $0x20] sm:$0x1]
      %v356 = vsel %vm348, 0, %v355
      %357 = vst [vmem:[%s295 + $0x20] sm:$0x1] %v356
      %v358 = vld [vmem:[%s295 + $0x2c] sm:$0x1]
      %v359 = vsel %vm348, 0, %v358
      %360 = vst [vmem:[%s295 + $0x2c] sm:$0x1] %v359
      %v361 = vld [vmem:[%s295 + $0x38] sm:$0x1]
      %v362 = vsel %vm348, 0, %v361
      %363 = vst [vmem:[%s295 + $0x38] sm:$0x1] %v362
      %v364 = vld [vmem:[%s295 + $0x44] sm:$0x1]
      %v365 = vsel %vm348, 0, %v364
      %366 = vst [vmem:[%s295 + $0x44] sm:$0x1] %v365
      %v367 = vld [vmem:[%s295 + $0x50] sm:$0x1]
      %v368 = vsel %vm348, 0, %v367
      %369 = vst [vmem:[%s295 + $0x50] sm:$0x1] %v368
      %v370 = vld [vmem:[%s295 + $0x5c] sm:$0x1]
      %v371 = vsel %vm348, 0, %v370
      %372 = vst [vmem:[%s295 + $0x5c] sm:$0x1] %v371
      %v373 = vld [vmem:[%s295 + $0x68] sm:$0x1]
      %v374 = vsel %vm348, 0, %v373
      %375 = vst [vmem:[%s295 + $0x68] sm:$0x1] %v374
      %v376 = vld [vmem:[%s295 + $0x74] sm:$0x1]
      %v377 = vsel %vm348, 0, %v376
      %378 = vst [vmem:[%s295 + $0x74] sm:$0x1] %v377
      %v379 = vld [vmem:[%s295 + $0x80] sm:$0x1]
      %v380 = vsel %vm348, 0, %v379
      %381 = vst [vmem:[%s295 + $0x80] sm:$0x1] %v380
      %v382 = vld [vmem:[%s295 + $0x8c] sm:$0x1]
      %v383 = vsel %vm348, 0, %v382
      %384 = vst [vmem:[%s295 + $0x8c] sm:$0x1] %v383
      %v385 = vld [vmem:[%s295 + $0x98] sm:$0x1]
      %v386 = vsel %vm348, 0, %v385
      %387 = vst [vmem:[%s295 + $0x98] sm:$0x1] %v386
      %v388 = vld [vmem:[%s295 + $0xa4] sm:$0x1]
      %v389 = vsel %vm348, 0, %v388
      %390 = vst [vmem:[%s295 + $0xa4] sm:$0x1] %v389
      %v391 = vld [vmem:[%s295 + $0xb0] sm:$0x1]
      %v392 = vsel %vm348, 0, %v391
      %393 = vst [vmem:[%s295 + $0xb0] sm:$0x1] %v392
      %v394 = vld [vmem:[%s295 + $0xbc] sm:$0x1]
      %v395 = vsel %vm348, 0, %v394
      %396 = vst [vmem:[%s295 + $0xbc] sm:$0x1] %v395
      %v397 = vld [vmem:[%s266] sm:$0xff]
      %v398 = vld [vmem:[%s266 + $0x8] sm:$0xff]
      %v399 = vld [vmem:[%s266 + $0x10] sm:$0xff]
      %v400 = vld [vmem:[%s266 + $0x18] sm:$0xff]
      %v401 = vld [vmem:[%s266 + $0x20] sm:$0xff]
      %v402 = vld [vmem:[%s266 + $0x28] sm:$0xff]
      %v403 = vld [vmem:[%s266 + $0x30] sm:$0xff]
      %v404 = vld [vmem:[%s266 + $0x38] sm:$0xff]
      %v405 = vld [vmem:[%s266 + $0x40] sm:$0xff]
      %v406 = vld [vmem:[%s266 + $0x48] sm:$0xff]
      %v407 = vld [vmem:[%s266 + $0x50] sm:$0xff]
      %v408 = vld [vmem:[%s266 + $0x58] sm:$0xff]
      %v409 = vld [vmem:[%s266 + $0x60] sm:$0xff]
      %v410 = vld [vmem:[%s266 + $0x68] sm:$0xff]
      %v411 = vld [vmem:[%s266 + $0x70] sm:$0xff]
      %v412 = vld [vmem:[%s266 + $0x78] sm:$0xff]
      %v413 = vld [vmem:[%s266 + $0x80] sm:$0xff]
      %v414 = vld [vmem:[%s266 + $0x88] sm:$0xff]
      %v415 = vld [vmem:[%s266 + $0x90] sm:$0xff]
      %v416 = vld [vmem:[%s266 + $0x98] sm:$0xff]
      %v417 = vld [vmem:[%s266 + $0xa0] sm:$0xff]
      %v418 = vld [vmem:[%s266 + $0xa8] sm:$0xff]
      %v419 = vld [vmem:[%s266 + $0xb0] sm:$0xff]
      %v420 = vld [vmem:[%s266 + $0xb8] sm:$0xff]
      %v421 = vld [vmem:[%s266 + $0xc0] sm:$0xff]
      %v422 = vld [vmem:[%s266 + $0xc8] sm:$0xff]
      %v423 = vld [vmem:[%s266 + $0xd0] sm:$0xff]
      %v424 = vld [vmem:[%s266 + $0xd8] sm:$0xff]
      %v425 = vld [vmem:[%s266 + $0xe0] sm:$0xff]
      %v426 = vld [vmem:[%s266 + $0xe8] sm:$0xff]
      %v427 = vld [vmem:[%s266 + $0xf0] sm:$0xff]
      %v428 = vld [vmem:[%s266 + $0xf8] sm:$0xff]
      %v429 = vpack.c.bf16 %v398, %v397
      %v430 = vpack.c.bf16 %v400, %v399
      %v431 = vpack.c.bf16 %v402, %v401
      %v432 = vpack.c.bf16 %v404, %v403
      %v433 = vpack.c.bf16 %v406, %v405
      %v434 = vpack.c.bf16 %v408, %v407
      %v435 = vpack.c.bf16 %v410, %v409
      %v436 = vpack.c.bf16 %v412, %v411
      %v437 = vpack.c.bf16 %v414, %v413
      %v438 = vpack.c.bf16 %v416, %v415
      %v439 = vpack.c.bf16 %v418, %v417
      %v440 = vpack.c.bf16 %v420, %v419
      %v441 = vpack.c.bf16 %v422, %v421
      %v442 = vpack.c.bf16 %v424, %v423
      %v443 = vpack.c.bf16 %v426, %v425
      %v444 = vpack.c.bf16 %v428, %v427
      %v461 = vunpack.c.l.b16 %v429
      %v462 = vunpack.c.h.b16 %v429
      %v463 = vunpack.c.l.b16 %v430
      %v464 = vunpack.c.h.b16 %v430
      %v465 = vunpack.c.l.b16 %v431
      %v466 = vunpack.c.h.b16 %v431
      %v467 = vunpack.c.l.b16 %v432
      %v468 = vunpack.c.h.b16 %v432
      %v469 = vunpack.c.l.b16 %v433
      %v470 = vunpack.c.h.b16 %v433
      %v471 = vunpack.c.l.b16 %v434
      %v472 = vunpack.c.h.b16 %v434
      %v473 = vunpack.c.l.b16 %v435
      %v474 = vunpack.c.h.b16 %v435
      %v475 = vunpack.c.l.b16 %v436
      %v476 = vunpack.c.h.b16 %v436
      %v477 = vunpack.c.l.b16 %v437
      %v478 = vunpack.c.h.b16 %v437
      %v479 = vunpack.c.l.b16 %v438
      %v480 = vunpack.c.h.b16 %v438
      %v481 = vunpack.c.l.b16 %v439
      %v482 = vunpack.c.h.b16 %v439
      %v483 = vunpack.c.l.b16 %v440
      %v484 = vunpack.c.h.b16 %v440
      %v485 = vunpack.c.l.b16 %v441
      %v486 = vunpack.c.h.b16 %v441
      %v487 = vunpack.c.l.b16 %v442
      %v488 = vunpack.c.h.b16 %v442
      %v489 = vunpack.c.l.b16 %v443
      %v490 = vunpack.c.h.b16 %v443
      %v491 = vunpack.c.l.b16 %v444
      %v492 = vunpack.c.h.b16 %v444
      %v493 = vpack.c.b16 %v461, %v461
      %v494 = vpack.c.b16 %v462, %v462
      %v495 = vpack.c.b16 %v463, %v463
      %v496 = vpack.c.b16 %v464, %v464
      %v497 = vpack.c.b16 %v465, %v465
      %v498 = vpack.c.b16 %v466, %v466
      %v499 = vpack.c.b16 %v467, %v467
      %v500 = vpack.c.b16 %v468, %v468
      %v501 = vpack.c.b16 %v469, %v469
      %v502 = vpack.c.b16 %v470, %v470
      %v503 = vpack.c.b16 %v471, %v471
      %v504 = vpack.c.b16 %v472, %v472
      %v505 = vpack.c.b16 %v473, %v473
      %v506 = vpack.c.b16 %v474, %v474
      %v507 = vpack.c.b16 %v475, %v475
      %v508 = vpack.c.b16 %v476, %v476
      %v509 = vpack.c.b16 %v477, %v477
      %v510 = vpack.c.b16 %v478, %v478
      %v511 = vpack.c.b16 %v479, %v479
      %v512 = vpack.c.b16 %v480, %v480
      %v513 = vpack.c.b16 %v481, %v481
      %v514 = vpack.c.b16 %v482, %v482
      %v515 = vpack.c.b16 %v483, %v483
      %v516 = vpack.c.b16 %v484, %v484
      %v517 = vpack.c.b16 %v485, %v485
      %v518 = vpack.c.b16 %v486, %v486
      %v519 = vpack.c.b16 %v487, %v487
      %v520 = vpack.c.b16 %v488, %v488
      %v521 = vpack.c.b16 %v489, %v489
      %v522 = vpack.c.b16 %v490, %v490
      %v523 = vpack.c.b16 %v491, %v491
      %v524 = vpack.c.b16 %v492, %v492
      %vm525 = vsmask.f32 4368
      %vm526 = vmor %vm297, %vm525
      %v528 = vshrl.u32 %v493, 16
      %v530 = vrot.slane %v528, 7
      %v531 = vshll.u32 %v493, 16
      %v533 = vor.u32 %v530, %v531
      %v534 = vrot.slane %v530, 4
      %v536 = vshrl.u32 %v494, 16
      %v538 = vrot.slane %v536, 7
      %v539 = vshll.u32 %v494, 16
      %v541 = vor.u32 %v538, %v539
      %v542 = vsel %vm526, %v534, %v541
      %v543 = vrot.slane %v538, 4
      %v545 = vshrl.u32 %v495, 16
      %v547 = vrot.slane %v545, 7
      %v548 = vshll.u32 %v495, 16
      %v550 = vor.u32 %v547, %v548
      %v551 = vrot.slane %v547, 4
      %v553 = vshrl.u32 %v496, 16
      %v555 = vrot.slane %v553, 7
      %v556 = vshll.u32 %v496, 16
      %v558 = vor.u32 %v555, %v556
      %v559 = vsel %vm526, %v551, %v558
      %v560 = vrot.slane %v555, 4
      %v562 = vshrl.u32 %v497, 16
      %v564 = vrot.slane %v562, 7
      %v565 = vshll.u32 %v497, 16
      %v567 = vor.u32 %v564, %v565
      %v568 = vrot.slane %v564, 4
      %v570 = vshrl.u32 %v498, 16
      %v572 = vrot.slane %v570, 7
      %v573 = vshll.u32 %v498, 16
      %v575 = vor.u32 %v572, %v573
      %v576 = vsel %vm526, %v568, %v575
      %v577 = vrot.slane %v572, 4
      %v579 = vshrl.u32 %v499, 16
      %v581 = vrot.slane %v579, 7
      %v582 = vshll.u32 %v499, 16
      %v584 = vor.u32 %v581, %v582
      %v585 = vrot.slane %v581, 4
      %v587 = vshrl.u32 %v500, 16
      %v589 = vrot.slane %v587, 7
      %v590 = vshll.u32 %v500, 16
      %v592 = vor.u32 %v589, %v590
      %v593 = vsel %vm526, %v585, %v592
      %v594 = vrot.slane %v589, 4
      %v596 = vshrl.u32 %v501, 16
      %v598 = vrot.slane %v596, 7
      %v599 = vshll.u32 %v501, 16
      %v601 = vor.u32 %v598, %v599
      %v602 = vrot.slane %v598, 4
      %v604 = vshrl.u32 %v502, 16
      %v606 = vrot.slane %v604, 7
      %v607 = vshll.u32 %v502, 16
      %v609 = vor.u32 %v606, %v607
      %v610 = vsel %vm526, %v602, %v609
      %v611 = vrot.slane %v606, 4
      %v613 = vshrl.u32 %v503, 16
      %v615 = vrot.slane %v613, 7
      %v616 = vshll.u32 %v503, 16
      %v618 = vor.u32 %v615, %v616
      %v619 = vrot.slane %v615, 4
      %v621 = vshrl.u32 %v504, 16
      %v623 = vrot.slane %v621, 7
      %v624 = vshll.u32 %v504, 16
      %v626 = vor.u32 %v623, %v624
      %v627 = vsel %vm526, %v619, %v626
      %v628 = vrot.slane %v623, 4
      %v630 = vshrl.u32 %v505, 16
      %v632 = vrot.slane %v630, 7
      %v633 = vshll.u32 %v505, 16
      %v635 = vor.u32 %v632, %v633
      %v636 = vrot.slane %v632, 4
      %v638 = vshrl.u32 %v506, 16
      %v640 = vrot.slane %v638, 7
      %v641 = vshll.u32 %v506, 16
      %v643 = vor.u32 %v640, %v641
      %v644 = vsel %vm526, %v636, %v643
      %v645 = vrot.slane %v640, 4
      %v647 = vshrl.u32 %v507, 16
      %v649 = vrot.slane %v647, 7
      %v650 = vshll.u32 %v507, 16
      %v652 = vor.u32 %v649, %v650
      %v653 = vrot.slane %v649, 4
      %v655 = vshrl.u32 %v508, 16
      %v657 = vrot.slane %v655, 7
      %v658 = vshll.u32 %v508, 16
      %v660 = vor.u32 %v657, %v658
      %v661 = vsel %vm526, %v653, %v660
      %v662 = vrot.slane %v657, 4
      %v664 = vshrl.u32 %v509, 16
      %v666 = vrot.slane %v664, 7
      %v667 = vshll.u32 %v509, 16
      %v669 = vor.u32 %v666, %v667
      %v670 = vrot.slane %v666, 4
      %v672 = vshrl.u32 %v510, 16
      %v674 = vrot.slane %v672, 7
      %v675 = vshll.u32 %v510, 16
      %v677 = vor.u32 %v674, %v675
      %v678 = vsel %vm526, %v670, %v677
      %v679 = vrot.slane %v674, 4
      %v681 = vshrl.u32 %v511, 16
      %v683 = vrot.slane %v681, 7
      %v684 = vshll.u32 %v511, 16
      %v686 = vor.u32 %v683, %v684
      %v687 = vrot.slane %v683, 4
      %v689 = vshrl.u32 %v512, 16
      %v691 = vrot.slane %v689, 7
      %v692 = vshll.u32 %v512, 16
      %v694 = vor.u32 %v691, %v692
      %v695 = vsel %vm526, %v687, %v694
      %v696 = vrot.slane %v691, 4
      %v698 = vshrl.u32 %v513, 16
      %v700 = vrot.slane %v698, 7
      %v701 = vshll.u32 %v513, 16
      %v703 = vor.u32 %v700, %v701
      %v704 = vrot.slane %v700, 4
      %v706 = vshrl.u32 %v514, 16
      %v708 = vrot.slane %v706, 7
      %v709 = vshll.u32 %v514, 16
      %v711 = vor.u32 %v708, %v709
      %v712 = vsel %vm526, %v704, %v711
      %v713 = vrot.slane %v708, 4
      %v715 = vshrl.u32 %v515, 16
      %v717 = vrot.slane %v715, 7
      %v718 = vshll.u32 %v515, 16
      %v720 = vor.u32 %v717, %v718
      %v721 = vrot.slane %v717, 4
      %v723 = vshrl.u32 %v516, 16
      %v725 = vrot.slane %v723, 7
      %v726 = vshll.u32 %v516, 16
      %v728 = vor.u32 %v725, %v726
      %v729 = vsel %vm526, %v721, %v728
      %v730 = vrot.slane %v725, 4
      %v732 = vshrl.u32 %v517, 16
      %v734 = vrot.slane %v732, 7
      %v735 = vshll.u32 %v517, 16
      %v737 = vor.u32 %v734, %v735
      %v738 = vrot.slane %v734, 4
      %v740 = vshrl.u32 %v518, 16
      %v742 = vrot.slane %v740, 7
      %v743 = vshll.u32 %v518, 16
      %v745 = vor.u32 %v742, %v743
      %v746 = vsel %vm526, %v738, %v745
      %v747 = vrot.slane %v742, 4
      %v749 = vshrl.u32 %v519, 16
      %v751 = vrot.slane %v749, 7
      %v752 = vshll.u32 %v519, 16
      %v754 = vor.u32 %v751, %v752
      %v755 = vrot.slane %v751, 4
      %v757 = vshrl.u32 %v520, 16
      %v759 = vrot.slane %v757, 7
      %v760 = vshll.u32 %v520, 16
      %v762 = vor.u32 %v759, %v760
      %v763 = vsel %vm526, %v755, %v762
      %v764 = vrot.slane %v759, 4
      %v766 = vshrl.u32 %v521, 16
      %v768 = vrot.slane %v766, 7
      %v769 = vshll.u32 %v521, 16
      %v771 = vor.u32 %v768, %v769
      %v772 = vrot.slane %v768, 4
      %v774 = vshrl.u32 %v522, 16
      %v776 = vrot.slane %v774, 7
      %v777 = vshll.u32 %v522, 16
      %v779 = vor.u32 %v776, %v777
      %v780 = vsel %vm526, %v772, %v779
      %v781 = vrot.slane %v776, 4
      %v783 = vshrl.u32 %v523, 16
      %v785 = vrot.slane %v783, 7
      %v786 = vshll.u32 %v523, 16
      %v788 = vor.u32 %v785, %v786
      %v789 = vrot.slane %v785, 4
      %v791 = vshrl.u32 %v524, 16
      %v793 = vrot.slane %v791, 7
      %v794 = vshll.u32 %v524, 16
      %v796 = vor.u32 %v793, %v794
      %v797 = vsel %vm526, %v789, %v796
      %v798 = vrot.slane %v793, 4
      %vm847 = vcmask 27648
      %vm848 = vmand %vm847, %vm347
      %v849 = vld [vmem:[%s295] sm:$0xf]
      %v850 = vsel %vm848, %v533, %v849
      %851 = vst [vmem:[%s295] sm:$0xf] %v850
      %852 = vst.msk [vmem:[%s295 + $0x4] sm:$0xf] %vm286, %v542
      %v853 = vld [vmem:[%s295 + $0x8] sm:$0x1]
      %v854 = vsel %vm298, %v543, %v853
      %855 = vst [vmem:[%s295 + $0x8] sm:$0x1] %v854
      %v856 = vld [vmem:[%s295 + $0xc] sm:$0xf]
      %v857 = vsel %vm848, %v550, %v856
      %858 = vst [vmem:[%s295 + $0xc] sm:$0xf] %v857
      %859 = vst.msk [vmem:[%s295 + $0x10] sm:$0xf] %vm286, %v559
      %v860 = vld [vmem:[%s295 + $0x14] sm:$0x1]
      %v861 = vsel %vm298, %v560, %v860
      %862 = vst [vmem:[%s295 + $0x14] sm:$0x1] %v861
      %v863 = vld [vmem:[%s295 + $0x18] sm:$0xf]
      %v864 = vsel %vm848, %v567, %v863
      %865 = vst [vmem:[%s295 + $0x18] sm:$0xf] %v864
      %866 = vst.msk [vmem:[%s295 + $0x1c] sm:$0xf] %vm286, %v576
      %v867 = vld [vmem:[%s295 + $0x20] sm:$0x1]
      %v868 = vsel %vm298, %v577, %v867
      %869 = vst [vmem:[%s295 + $0x20] sm:$0x1] %v868
      %v870 = vld [vmem:[%s295 + $0x24] sm:$0xf]
      %v871 = vsel %vm848, %v584, %v870
      %872 = vst [vmem:[%s295 + $0x24] sm:$0xf] %v871
      %873 = vst.msk [vmem:[%s295 + $0x28] sm:$0xf] %vm286, %v593
      %v874 = vld [vmem:[%s295 + $0x2c] sm:$0x1]
      %v875 = vsel %vm298, %v594, %v874
      %876 = vst [vmem:[%s295 + $0x2c] sm:$0x1] %v875
      %v877 = vld [vmem:[%s295 + $0x30] sm:$0xf]
      %v878 = vsel %vm848, %v601, %v877
      %879 = vst [vmem:[%s295 + $0x30] sm:$0xf] %v878
      %880 = vst.msk [vmem:[%s295 + $0x34] sm:$0xf] %vm286, %v610
      %v881 = vld [vmem:[%s295 + $0x38] sm:$0x1]
      %v882 = vsel %vm298, %v611, %v881
      %883 = vst [vmem:[%s295 + $0x38] sm:$0x1] %v882
      %v884 = vld [vmem:[%s295 + $0x3c] sm:$0xf]
      %v885 = vsel %vm848, %v618, %v884
      %886 = vst [vmem:[%s295 + $0x3c] sm:$0xf] %v885
      %887 = vst.msk [vmem:[%s295 + $0x40] sm:$0xf] %vm286, %v627
      %v888 = vld [vmem:[%s295 + $0x44] sm:$0x1]
      %v889 = vsel %vm298, %v628, %v888
      %890 = vst [vmem:[%s295 + $0x44] sm:$0x1] %v889
      %v891 = vld [vmem:[%s295 + $0x48] sm:$0xf]
      %v892 = vsel %vm848, %v635, %v891
      %893 = vst [vmem:[%s295 + $0x48] sm:$0xf] %v892
      %894 = vst.msk [vmem:[%s295 + $0x4c] sm:$0xf] %vm286, %v644
      %v895 = vld [vmem:[%s295 + $0x50] sm:$0x1]
      %v896 = vsel %vm298, %v645, %v895
      %897 = vst [vmem:[%s295 + $0x50] sm:$0x1] %v896
      %v898 = vld [vmem:[%s295 + $0x54] sm:$0xf]
      %v899 = vsel %vm848, %v652, %v898
      %900 = vst [vmem:[%s295 + $0x54] sm:$0xf] %v899
      %901 = vst.msk [vmem:[%s295 + $0x58] sm:$0xf] %vm286, %v661
      %v902 = vld [vmem:[%s295 + $0x5c] sm:$0x1]
      %v903 = vsel %vm298, %v662, %v902
      %904 = vst [vmem:[%s295 + $0x5c] sm:$0x1] %v903
      %v905 = vld [vmem:[%s295 + $0x60] sm:$0xf]
      %v906 = vsel %vm848, %v669, %v905
      %907 = vst [vmem:[%s295 + $0x60] sm:$0xf] %v906
      %908 = vst.msk [vmem:[%s295 + $0x64] sm:$0xf] %vm286, %v678
      %v909 = vld [vmem:[%s295 + $0x68] sm:$0x1]
      %v910 = vsel %vm298, %v679, %v909
      %911 = vst [vmem:[%s295 + $0x68] sm:$0x1] %v910
      %v912 = vld [vmem:[%s295 + $0x6c] sm:$0xf]
      %v913 = vsel %vm848, %v686, %v912
      %914 = vst [vmem:[%s295 + $0x6c] sm:$0xf] %v913
      %915 = vst.msk [vmem:[%s295 + $0x70] sm:$0xf] %vm286, %v695
      %v916 = vld [vmem:[%s295 + $0x74] sm:$0x1]
      %v917 = vsel %vm298, %v696, %v916
      %918 = vst [vmem:[%s295 + $0x74] sm:$0x1] %v917
      %v919 = vld [vmem:[%s295 + $0x78] sm:$0xf]
      %v920 = vsel %vm848, %v703, %v919
      %921 = vst [vmem:[%s295 + $0x78] sm:$0xf] %v920
      %922 = vst.msk [vmem:[%s295 + $0x7c] sm:$0xf] %vm286, %v712
      %v923 = vld [vmem:[%s295 + $0x80] sm:$0x1]
      %v924 = vsel %vm298, %v713, %v923
      %925 = vst [vmem:[%s295 + $0x80] sm:$0x1] %v924
      %v926 = vld [vmem:[%s295 + $0x84] sm:$0xf]
      %v927 = vsel %vm848, %v720, %v926
      %928 = vst [vmem:[%s295 + $0x84] sm:$0xf] %v927
      %929 = vst.msk [vmem:[%s295 + $0x88] sm:$0xf] %vm286, %v729
      %v930 = vld [vmem:[%s295 + $0x8c] sm:$0x1]
      %v931 = vsel %vm298, %v730, %v930
      %932 = vst [vmem:[%s295 + $0x8c] sm:$0x1] %v931
      %v933 = vld [vmem:[%s295 + $0x90] sm:$0xf]
      %v934 = vsel %vm848, %v737, %v933
      %935 = vst [vmem:[%s295 + $0x90] sm:$0xf] %v934
      %936 = vst.msk [vmem:[%s295 + $0x94] sm:$0xf] %vm286, %v746
      %v937 = vld [vmem:[%s295 + $0x98] sm:$0x1]
      %v938 = vsel %vm298, %v747, %v937
      %939 = vst [vmem:[%s295 + $0x98] sm:$0x1] %v938
      %v940 = vld [vmem:[%s295 + $0x9c] sm:$0xf]
      %v941 = vsel %vm848, %v754, %v940
      %942 = vst [vmem:[%s295 + $0x9c] sm:$0xf] %v941
      %943 = vst.msk [vmem:[%s295 + $0xa0] sm:$0xf] %vm286, %v763
      %v944 = vld [vmem:[%s295 + $0xa4] sm:$0x1]
      %v945 = vsel %vm298, %v764, %v944
      %946 = vst [vmem:[%s295 + $0xa4] sm:$0x1] %v945
      %v947 = vld [vmem:[%s295 + $0xa8] sm:$0xf]
      %v948 = vsel %vm848, %v771, %v947
      %949 = vst [vmem:[%s295 + $0xa8] sm:$0xf] %v948
      %950 = vst.msk [vmem:[%s295 + $0xac] sm:$0xf] %vm286, %v780
      %v951 = vld [vmem:[%s295 + $0xb0] sm:$0x1]
      %v952 = vsel %vm298, %v781, %v951
      %953 = vst [vmem:[%s295 + $0xb0] sm:$0x1] %v952
      %v954 = vld [vmem:[%s295 + $0xb4] sm:$0xf]
      %v955 = vsel %vm848, %v788, %v954
      %956 = vst [vmem:[%s295 + $0xb4] sm:$0xf] %v955
      %957 = vst.msk [vmem:[%s295 + $0xb8] sm:$0xf] %vm286, %v797
      %v958 = vld [vmem:[%s295 + $0xbc] sm:$0x1]
      %v959 = vsel %vm298, %v798, %v958
      %960 = vst [vmem:[%s295 + $0xbc] sm:$0x1] %v959
      %v961 = vld [vmem:[#allocation2] sm:$0xf]
      %v962 = vld [vmem:[#allocation2 + $0x4] sm:$0xf]
      %v963 = vld [vmem:[#allocation2 + $0xc] sm:$0xf]
      %v964 = vld [vmem:[#allocation2 + $0x10] sm:$0xf]
      %v965 = vld [vmem:[#allocation2 + $0x18] sm:$0xf]
      %v966 = vld [vmem:[#allocation2 + $0x1c] sm:$0xf]
      %v967 = vld [vmem:[#allocation2 + $0x24] sm:$0xf]
      %v968 = vld [vmem:[#allocation2 + $0x28] sm:$0xf]
      %v969 = vld [vmem:[#allocation2 + $0x30] sm:$0xf]
      %v970 = vld [vmem:[#allocation2 + $0x34] sm:$0xf]
      %v971 = vld [vmem:[#allocation2 + $0x3c] sm:$0xf]
      %v972 = vld [vmem:[#allocation2 + $0x40] sm:$0xf]
      %v973 = vld [vmem:[#allocation2 + $0x48] sm:$0xf]
      %v974 = vld [vmem:[#allocation2 + $0x4c] sm:$0xf]
      %v975 = vld [vmem:[#allocation2 + $0x54] sm:$0xf]
      %v976 = vld [vmem:[#allocation2 + $0x58] sm:$0xf]
      %v977 = vld [vmem:[#allocation2 + $0x60] sm:$0xf]
      %v978 = vld [vmem:[#allocation2 + $0x64] sm:$0xf]
      %v979 = vld [vmem:[#allocation2 + $0x6c] sm:$0xf]
      %v980 = vld [vmem:[#allocation2 + $0x70] sm:$0xf]
      %v981 = vld [vmem:[#allocation2 + $0x78] sm:$0xf]
      %v982 = vld [vmem:[#allocation2 + $0x7c] sm:$0xf]
      %v983 = vld [vmem:[#allocation2 + $0x84] sm:$0xf]
      %v984 = vld [vmem:[#allocation2 + $0x88] sm:$0xf]
      %v985 = vld [vmem:[#allocation2 + $0x90] sm:$0xf]
      %v986 = vld [vmem:[#allocation2 + $0x94] sm:$0xf]
      %v987 = vld [vmem:[#allocation2 + $0x9c] sm:$0xf]
      %v988 = vld [vmem:[#allocation2 + $0xa0] sm:$0xf]
      %v989 = vld [vmem:[#allocation2 + $0xa8] sm:$0xf]
      %v990 = vld [vmem:[#allocation2 + $0xac] sm:$0xf]
      %v991 = vld [vmem:[#allocation2 + $0xb4] sm:$0xf]
      %v992 = vld [vmem:[#allocation2 + $0xb8] sm:$0xf]
      %v1025 = vunpack.c.l.b16 %v961
      %v1026 = vunpack.c.l.b16 %v962
      %v1027 = vunpack.c.l.b16 %v963
      %v1028 = vunpack.c.l.b16 %v964
      %v1029 = vunpack.c.l.b16 %v965
      %v1030 = vunpack.c.l.b16 %v966
      %v1031 = vunpack.c.l.b16 %v967
      %v1032 = vunpack.c.l.b16 %v968
      %v1033 = vunpack.c.l.b16 %v969
      %v1034 = vunpack.c.l.b16 %v970
      %v1035 = vunpack.c.l.b16 %v971
      %v1036 = vunpack.c.l.b16 %v972
      %v1037 = vunpack.c.l.b16 %v973
      %v1038 = vunpack.c.l.b16 %v974
      %v1039 = vunpack.c.l.b16 %v975
      %v1040 = vunpack.c.l.b16 %v976
      %v1041 = vunpack.c.l.b16 %v977
      %v1042 = vunpack.c.l.b16 %v978
      %v1043 = vunpack.c.l.b16 %v979
      %v1044 = vunpack.c.l.b16 %v980
      %v1045 = vunpack.c.l.b16 %v981
      %v1046 = vunpack.c.l.b16 %v982
      %v1047 = vunpack.c.l.b16 %v983
      %v1048 = vunpack.c.l.b16 %v984
      %v1049 = vunpack.c.l.b16 %v985
      %v1050 = vunpack.c.l.b16 %v986
      %v1051 = vunpack.c.l.b16 %v987
      %v1052 = vunpack.c.l.b16 %v988
      %v1053 = vunpack.c.l.b16 %v989
      %v1054 = vunpack.c.l.b16 %v990
      %v1055 = vunpack.c.l.b16 %v991
      %v1056 = vunpack.c.l.b16 %v992
      %v1057 = vpack.c.b16 %v1026, %v1025
      %v1058 = vpack.c.b16 %v1028, %v1027
      %v1059 = vpack.c.b16 %v1030, %v1029
      %v1060 = vpack.c.b16 %v1032, %v1031
      %v1061 = vpack.c.b16 %v1034, %v1033
      %v1062 = vpack.c.b16 %v1036, %v1035
      %v1063 = vpack.c.b16 %v1038, %v1037
      %v1064 = vpack.c.b16 %v1040, %v1039
      %v1065 = vpack.c.b16 %v1042, %v1041
      %v1066 = vpack.c.b16 %v1044, %v1043
      %v1067 = vpack.c.b16 %v1046, %v1045
      %v1068 = vpack.c.b16 %v1048, %v1047
      %v1069 = vpack.c.b16 %v1050, %v1049
      %v1070 = vpack.c.b16 %v1052, %v1051
      %v1071 = vpack.c.b16 %v1054, %v1053
      %v1072 = vpack.c.b16 %v1056, %v1055
      %vm1089 = vcmask 31744
      %1090 = vst.msk [vmem:[#allocation3] sm:$0xff] %vm1089, %v1057
      %1091 = vst.msk [vmem:[#allocation3 + $0x8] sm:$0xff] %vm1089, %v1058
      %1092 = vst.msk [vmem:[#allocation3 + $0x10] sm:$0xff] %vm1089, %v1059
      %1093 = vst.msk [vmem:[#allocation3 + $0x18] sm:$0xff] %vm1089, %v1060
      %1094 = vst.msk [vmem:[#allocation3 + $0x20] sm:$0xff] %vm1089, %v1061
      %1095 = vst.msk [vmem:[#allocation3 + $0x28] sm:$0xff] %vm1089, %v1062
      %1096 = vst.msk [vmem:[#allocation3 + $0x30] sm:$0xff] %vm1089, %v1063
      %1097 = vst.msk [vmem:[#allocation3 + $0x38] sm:$0xff] %vm1089, %v1064
      %1098 = vst.msk [vmem:[#allocation3 + $0x40] sm:$0xff] %vm1089, %v1065
      %1099 = vst.msk [vmem:[#allocation3 + $0x48] sm:$0xff] %vm1089, %v1066
      %1100 = vst.msk [vmem:[#allocation3 + $0x50] sm:$0xff] %vm1089, %v1067
      %1101 = vst.msk [vmem:[#allocation3 + $0x58] sm:$0xff] %vm1089, %v1068
      %1102 = vst.msk [vmem:[#allocation3 + $0x60] sm:$0xff] %vm1089, %v1069
      %1103 = vst.msk [vmem:[#allocation3 + $0x68] sm:$0xff] %vm1089, %v1070
      %1104 = vst.msk [vmem:[#allocation3 + $0x70] sm:$0xff] %vm1089, %v1071
      %1105 = vst.msk [vmem:[#allocation3 + $0x78] sm:$0xff] %vm1089, %v1072
      %v1106 = vld [vmem:[#allocation2] sm:$0xf]
      %v1107 = vld [vmem:[#allocation2 + $0x4] sm:$0xf]
      %v1108 = vld [vmem:[#allocation2 + $0x8] sm:$0x1]
      %v1109 = vld [vmem:[#allocation2 + $0xc] sm:$0xf]
      %v1110 = vld [vmem:[#allocation2 + $0x10] sm:$0xf]
      %v1111 = vld [vmem:[#allocation2 + $0x14] sm:$0x1]
      %v1112 = vld [vmem:[#allocation2 + $0x18] sm:$0xf]
      %v1113 = vld [vmem:[#allocation2 + $0x1c] sm:$0xf]
      %v1114 = vld [vmem:[#allocation2 + $0x20] sm:$0x1]
      %v1115 = vld [vmem:[#allocation2 + $0x24] sm:$0xf]
      %v1116 = vld [vmem:[#allocation2 + $0x28] sm:$0xf]
      %v1117 = vld [vmem:[#allocation2 + $0x2c] sm:$0x1]
      %v1118 = vld [vmem:[#allocation2 + $0x30] sm:$0xf]
      %v1119 = vld [vmem:[#allocation2 + $0x34] sm:$0xf]
      %v1120 = vld [vmem:[#allocation2 + $0x38] sm:$0x1]
      %v1121 = vld [vmem:[#allocation2 + $0x3c] sm:$0xf]
      %v1122 = vld [vmem:[#allocation2 + $0x40] sm:$0xf]
      %v1123 = vld [vmem:[#allocation2 + $0x44] sm:$0x1]
      %v1124 = vld [vmem:[#allocation2 + $0x48] sm:$0xf]
      %v1125 = vld [vmem:[#allocation2 + $0x4c] sm:$0xf]
      %v1126 = vld [vmem:[#allocation2 + $0x50] sm:$0x1]
      %v1127 = vld [vmem:[#allocation2 + $0x54] sm:$0xf]
      %v1128 = vld [vmem:[#allocation2 + $0x58] sm:$0xf]
      %v1129 = vld [vmem:[#allocation2 + $0x5c] sm:$0x1]
      %v1130 = vld [vmem:[#allocation2 + $0x60] sm:$0xf]
      %v1131 = vld [vmem:[#allocation2 + $0x64] sm:$0xf]
      %v1132 = vld [vmem:[#allocation2 + $0x68] sm:$0x1]
      %v1133 = vld [vmem:[#allocation2 + $0x6c] sm:$0xf]
      %v1134 = vld [vmem:[#allocation2 + $0x70] sm:$0xf]
      %v1135 = vld [vmem:[#allocation2 + $0x74] sm:$0x1]
      %v1136 = vld [vmem:[#allocation2 + $0x78] sm:$0xf]
      %v1137 = vld [vmem:[#allocation2 + $0x7c] sm:$0xf]
      %v1138 = vld [vmem:[#allocation2 + $0x80] sm:$0x1]
      %v1139 = vld [vmem:[#allocation2 + $0x84] sm:$0xf]
      %v1140 = vld [vmem:[#allocation2 + $0x88] sm:$0xf]
      %v1141 = vld [vmem:[#allocation2 + $0x8c] sm:$0x1]
      %v1142 = vld [vmem:[#allocation2 + $0x90] sm:$0xf]
      %v1143 = vld [vmem:[#allocation2 + $0x94] sm:$0xf]
      %v1144 = vld [vmem:[#allocation2 + $0x98] sm:$0x1]
      %v1145 = vld [vmem:[#allocation2 + $0x9c] sm:$0xf]
      %v1146 = vld [vmem:[#allocation2 + $0xa0] sm:$0xf]
      %v1147 = vld [vmem:[#allocation2 + $0xa4] sm:$0x1]
      %v1148 = vld [vmem:[#allocation2 + $0xa8] sm:$0xf]
      %v1149 = vld [vmem:[#allocation2 + $0xac] sm:$0xf]
      %v1150 = vld [vmem:[#allocation2 + $0xb0] sm:$0x1]
      %v1151 = vld [vmem:[#allocation2 + $0xb4] sm:$0xf]
      %v1152 = vld [vmem:[#allocation2 + $0xb8] sm:$0xf]
      %v1153 = vld [vmem:[#allocation2 + $0xbc] sm:$0x1]
      %v1202 = vunpack.c.l.b16 %v1106
      %v1203 = vunpack.c.l.b16 %v1107
      %v1204 = vunpack.c.l.b16 %v1108
      %v1205 = vunpack.c.l.b16 %v1109
      %v1206 = vunpack.c.l.b16 %v1110
      %v1207 = vunpack.c.l.b16 %v1111
      %v1208 = vunpack.c.l.b16 %v1112
      %v1209 = vunpack.c.l.b16 %v1113
      %v1210 = vunpack.c.l.b16 %v1114
      %v1211 = vunpack.c.l.b16 %v1115
      %v1212 = vunpack.c.l.b16 %v1116
      %v1213 = vunpack.c.l.b16 %v1117
      %v1214 = vunpack.c.l.b16 %v1118
      %v1215 = vunpack.c.l.b16 %v1119
      %v1216 = vunpack.c.l.b16 %v1120
      %v1217 = vunpack.c.l.b16 %v1121
      %v1218 = vunpack.c.l.b16 %v1122
      %v1219 = vunpack.c.l.b16 %v1123
      %v1220 = vunpack.c.l.b16 %v1124
      %v1221 = vunpack.c.l.b16 %v1125
      %v1222 = vunpack.c.l.b16 %v1126
      %v1223 = vunpack.c.l.b16 %v1127
      %v1224 = vunpack.c.l.b16 %v1128
      %v1225 = vunpack.c.l.b16 %v1129
      %v1226 = vunpack.c.l.b16 %v1130
      %v1227 = vunpack.c.l.b16 %v1131
      %v1228 = vunpack.c.l.b16 %v1132
      %v1229 = vunpack.c.l.b16 %v1133
      %v1230 = vunpack.c.l.b16 %v1134
      %v1231 = vunpack.c.l.b16 %v1135
      %v1232 = vunpack.c.l.b16 %v1136
      %v1233 = vunpack.c.l.b16 %v1137
      %v1234 = vunpack.c.l.b16 %v1138
      %v1235 = vunpack.c.l.b16 %v1139
      %v1236 = vunpack.c.l.b16 %v1140
      %v1237 = vunpack.c.l.b16 %v1141
      %v1238 = vunpack.c.l.b16 %v1142
      %v1239 = vunpack.c.l.b16 %v1143
      %v1240 = vunpack.c.l.b16 %v1144
      %v1241 = vunpack.c.l.b16 %v1145
      %v1242 = vunpack.c.l.b16 %v1146
      %v1243 = vunpack.c.l.b16 %v1147
      %v1244 = vunpack.c.l.b16 %v1148
      %v1245 = vunpack.c.l.b16 %v1149
      %v1246 = vunpack.c.l.b16 %v1150
      %v1247 = vunpack.c.l.b16 %v1151
      %v1248 = vunpack.c.l.b16 %v1152
      %v1249 = vunpack.c.l.b16 %v1153
      %v1250 = vpack.c.b16 %v1203, %v1202
      %v1251 = vpack.c.b16 %v1204, %v1204
      %v1252 = vpack.c.b16 %v1206, %v1205
      %v1253 = vpack.c.b16 %v1207, %v1207
      %v1254 = vpack.c.b16 %v1209, %v1208
      %v1255 = vpack.c.b16 %v1210, %v1210
      %v1256 = vpack.c.b16 %v1212, %v1211
      %v1257 = vpack.c.b16 %v1213, %v1213
      %v1258 = vpack.c.b16 %v1215, %v1214
      %v1259 = vpack.c.b16 %v1216, %v1216
      %v1260 = vpack.c.b16 %v1218, %v1217
      %v1261 = vpack.c.b16 %v1219, %v1219
      %v1262 = vpack.c.b16 %v1221, %v1220
      %v1263 = vpack.c.b16 %v1222, %v1222
      %v1264 = vpack.c.b16 %v1224, %v1223
      %v1265 = vpack.c.b16 %v1225, %v1225
      %v1266 = vpack.c.b16 %v1227, %v1226
      %v1267 = vpack.c.b16 %v1228, %v1228
      %v1268 = vpack.c.b16 %v1230, %v1229
      %v1269 = vpack.c.b16 %v1231, %v1231
      %v1270 = vpack.c.b16 %v1233, %v1232
      %v1271 = vpack.c.b16 %v1234, %v1234
      %v1272 = vpack.c.b16 %v1236, %v1235
      %v1273 = vpack.c.b16 %v1237, %v1237
      %v1274 = vpack.c.b16 %v1239, %v1238
      %v1275 = vpack.c.b16 %v1240, %v1240
      %v1276 = vpack.c.b16 %v1242, %v1241
      %v1277 = vpack.c.b16 %v1243, %v1243
      %v1278 = vpack.c.b16 %v1245, %v1244
      %v1279 = vpack.c.b16 %v1246, %v1246
      %v1280 = vpack.c.b16 %v1248, %v1247
      %v1281 = vpack.c.b16 %v1249, %v1249
      %vm1282 = vsmask.f32 7424
      %v1284 = vshrl.u32 %v1250, 16
      %v1286 = vshll.u32 %v1250, 16
      %v1288 = vrot.slane %v1286, 1
      %v1289 = vor.u32 %v1284, %v1288
      %v1291 = vshll.u32 %v1251, 16
      %v1293 = vrot.slane %v1291, 1
      %v1294 = vsel %vm1282, %v1289, %v1293
      %v1296 = vshrl.u32 %v1252, 16
      %v1298 = vshll.u32 %v1252, 16
      %v1300 = vrot.slane %v1298, 1
      %v1301 = vor.u32 %v1296, %v1300
      %v1303 = vshll.u32 %v1253, 16
      %v1305 = vrot.slane %v1303, 1
      %v1306 = vsel %vm1282, %v1301, %v1305
      %v1308 = vshrl.u32 %v1254, 16
      %v1310 = vshll.u32 %v1254, 16
      %v1312 = vrot.slane %v1310, 1
      %v1313 = vor.u32 %v1308, %v1312
      %v1315 = vshll.u32 %v1255, 16
      %v1317 = vrot.slane %v1315, 1
      %v1318 = vsel %vm1282, %v1313, %v1317
      %v1320 = vshrl.u32 %v1256, 16
      %v1322 = vshll.u32 %v1256, 16
      %v1324 = vrot.slane %v1322, 1
      %v1325 = vor.u32 %v1320, %v1324
      %v1327 = vshll.u32 %v1257, 16
      %v1329 = vrot.slane %v1327, 1
      %v1330 = vsel %vm1282, %v1325, %v1329
      %v1332 = vshrl.u32 %v1258, 16
      %v1334 = vshll.u32 %v1258, 16
      %v1336 = vrot.slane %v1334, 1
      %v1337 = vor.u32 %v1332, %v1336
      %v1339 = vshll.u32 %v1259, 16
      %v1341 = vrot.slane %v1339, 1
      %v1342 = vsel %vm1282, %v1337, %v1341
      %v1344 = vshrl.u32 %v1260, 16
      %v1346 = vshll.u32 %v1260, 16
      %v1348 = vrot.slane %v1346, 1
      %v1349 = vor.u32 %v1344, %v1348
      %v1351 = vshll.u32 %v1261, 16
      %v1353 = vrot.slane %v1351, 1
      %v1354 = vsel %vm1282, %v1349, %v1353
      %v1356 = vshrl.u32 %v1262, 16
      %v1358 = vshll.u32 %v1262, 16
      %v1360 = vrot.slane %v1358, 1
      %v1361 = vor.u32 %v1356, %v1360
      %v1363 = vshll.u32 %v1263, 16
      %v1365 = vrot.slane %v1363, 1
      %v1366 = vsel %vm1282, %v1361, %v1365
      %v1368 = vshrl.u32 %v1264, 16
      %v1370 = vshll.u32 %v1264, 16
      %v1372 = vrot.slane %v1370, 1
      %v1373 = vor.u32 %v1368, %v1372
      %v1375 = vshll.u32 %v1265, 16
      %v1377 = vrot.slane %v1375, 1
      %v1378 = vsel %vm1282, %v1373, %v1377
      %v1380 = vshrl.u32 %v1266, 16
      %v1382 = vshll.u32 %v1266, 16
      %v1384 = vrot.slane %v1382, 1
      %v1385 = vor.u32 %v1380, %v1384
      %v1387 = vshll.u32 %v1267, 16
      %v1389 = vrot.slane %v1387, 1
      %v1390 = vsel %vm1282, %v1385, %v1389
      %v1392 = vshrl.u32 %v1268, 16
      %v1394 = vshll.u32 %v1268, 16
      %v1396 = vrot.slane %v1394, 1
      %v1397 = vor.u32 %v1392, %v1396
      %v1399 = vshll.u32 %v1269, 16
      %v1401 = vrot.slane %v1399, 1
      %v1402 = vsel %vm1282, %v1397, %v1401
      %v1404 = vshrl.u32 %v1270, 16
      %v1406 = vshll.u32 %v1270, 16
      %v1408 = vrot.slane %v1406, 1
      %v1409 = vor.u32 %v1404, %v1408
      %v1411 = vshll.u32 %v1271, 16
      %v1413 = vrot.slane %v1411, 1
      %v1414 = vsel %vm1282, %v1409, %v1413
      %v1416 = vshrl.u32 %v1272, 16
      %v1418 = vshll.u32 %v1272, 16
      %v1420 = vrot.slane %v1418, 1
      %v1421 = vor.u32 %v1416, %v1420
      %v1423 = vshll.u32 %v1273, 16
      %v1425 = vrot.slane %v1423, 1
      %v1426 = vsel %vm1282, %v1421, %v1425
      %v1428 = vshrl.u32 %v1274, 16
      %v1430 = vshll.u32 %v1274, 16
      %v1432 = vrot.slane %v1430, 1
      %v1433 = vor.u32 %v1428, %v1432
      %v1435 = vshll.u32 %v1275, 16
      %v1437 = vrot.slane %v1435, 1
      %v1438 = vsel %vm1282, %v1433, %v1437
      %v1440 = vshrl.u32 %v1276, 16
      %v1442 = vshll.u32 %v1276, 16
      %v1444 = vrot.slane %v1442, 1
      %v1445 = vor.u32 %v1440, %v1444
      %v1447 = vshll.u32 %v1277, 16
      %v1449 = vrot.slane %v1447, 1
      %v1450 = vsel %vm1282, %v1445, %v1449
      %v1452 = vshrl.u32 %v1278, 16
      %v1454 = vshll.u32 %v1278, 16
      %v1456 = vrot.slane %v1454, 1
      %v1457 = vor.u32 %v1452, %v1456
      %v1459 = vshll.u32 %v1279, 16
      %v1461 = vrot.slane %v1459, 1
      %v1462 = vsel %vm1282, %v1457, %v1461
      %v1464 = vshrl.u32 %v1280, 16
      %v1466 = vshll.u32 %v1280, 16
      %v1468 = vrot.slane %v1466, 1
      %v1469 = vor.u32 %v1464, %v1468
      %v1471 = vshll.u32 %v1281, 16
      %v1473 = vrot.slane %v1471, 1
      %v1474 = vsel %vm1282, %v1469, %v1473
      %1475 = vrot.lane.b32.xlu0 %v1294, 4
      %v1476 = vpop.permute.xlu0 %1475
      %1477 = vrot.lane.b32.xlu0 %v1306, 4
      %v1478 = vpop.permute.xlu0 %1477
      %1479 = vrot.lane.b32.xlu0 %v1318, 4
      %v1480 = vpop.permute.xlu0 %1479
      %1481 = vrot.lane.b32.xlu0 %v1330, 4
      %v1482 = vpop.permute.xlu0 %1481
      %1483 = vrot.lane.b32.xlu0 %v1342, 4
      %v1484 = vpop.permute.xlu0 %1483
      %1485 = vrot.lane.b32.xlu0 %v1354, 4
      %v1486 = vpop.permute.xlu0 %1485
      %1487 = vrot.lane.b32.xlu0 %v1366, 4
      %v1488 = vpop.permute.xlu0 %1487
      %1489 = vrot.lane.b32.xlu0 %v1378, 4
      %v1490 = vpop.permute.xlu0 %1489
      %1491 = vrot.lane.b32.xlu0 %v1390, 4
      %v1492 = vpop.permute.xlu0 %1491
      %1493 = vrot.lane.b32.xlu0 %v1402, 4
      %v1494 = vpop.permute.xlu0 %1493
      %1495 = vrot.lane.b32.xlu0 %v1414, 4
      %v1496 = vpop.permute.xlu0 %1495
      %1497 = vrot.lane.b32.xlu0 %v1426, 4
      %v1498 = vpop.permute.xlu0 %1497
      %1499 = vrot.lane.b32.xlu0 %v1438, 4
      %v1500 = vpop.permute.xlu0 %1499
      %1501 = vrot.lane.b32.xlu0 %v1450, 4
      %v1502 = vpop.permute.xlu0 %1501
      %1503 = vrot.lane.b32.xlu0 %v1462, 4
      %v1504 = vpop.permute.xlu0 %1503
      %1505 = vrot.lane.b32.xlu0 %v1474, 4
      %v1506 = vpop.permute.xlu0 %1505
      %vm1523 = vcmask 64544
      %1524 = vst.msk [vmem:[#allocation3] sm:$0xff] %vm1523, %v1476
      %1525 = vst.msk [vmem:[#allocation3 + $0x8] sm:$0xff] %vm1523, %v1478
      %1526 = vst.msk [vmem:[#allocation3 + $0x10] sm:$0xff] %vm1523, %v1480
      %1527 = vst.msk [vmem:[#allocation3 + $0x18] sm:$0xff] %vm1523, %v1482
      %1528 = vst.msk [vmem:[#allocation3 + $0x20] sm:$0xff] %vm1523, %v1484
      %1529 = vst.msk [vmem:[#allocation3 + $0x28] sm:$0xff] %vm1523, %v1486
      %1530 = vst.msk [vmem:[#allocation3 + $0x30] sm:$0xff] %vm1523, %v1488
      %1531 = vst.msk [vmem:[#allocation3 + $0x38] sm:$0xff] %vm1523, %v1490
      %1532 = vst.msk [vmem:[#allocation3 + $0x40] sm:$0xff] %vm1523, %v1492
      %1533 = vst.msk [vmem:[#allocation3 + $0x48] sm:$0xff] %vm1523, %v1494
      %1534 = vst.msk [vmem:[#allocation3 + $0x50] sm:$0xff] %vm1523, %v1496
      %1535 = vst.msk [vmem:[#allocation3 + $0x58] sm:$0xff] %vm1523, %v1498
      %1536 = vst.msk [vmem:[#allocation3 + $0x60] sm:$0xff] %vm1523, %v1500
      %1537 = vst.msk [vmem:[#allocation3 + $0x68] sm:$0xff] %vm1523, %v1502
      %1538 = vst.msk [vmem:[#allocation3 + $0x70] sm:$0xff] %vm1523, %v1504
      %1539 = vst.msk [vmem:[#allocation3 + $0x78] sm:$0xff] %vm1523, %v1506
      %v1540 = vld [vmem:[#allocation2] sm:$0xe]
      %v1541 = vld [vmem:[#allocation2 + $0x4] sm:$0xf]
      %v1542 = vld [vmem:[#allocation2 + $0x8] sm:$0x1]
      %v1543 = vld [vmem:[#allocation2 + $0xc] sm:$0xe]
      %v1544 = vld [vmem:[#allocation2 + $0x10] sm:$0xf]
      %v1545 = vld [vmem:[#allocation2 + $0x14] sm:$0x1]
      %v1546 = vld [vmem:[#allocation2 + $0x18] sm:$0xe]
      %v1547 = vld [vmem:[#allocation2 + $0x1c] sm:$0xf]
      %v1548 = vld [vmem:[#allocation2 + $0x20] sm:$0x1]
      %v1549 = vld [vmem:[#allocation2 + $0x24] sm:$0xe]
      %v1550 = vld [vmem:[#allocation2 + $0x28] sm:$0xf]
      %v1551 = vld [vmem:[#allocation2 + $0x2c] sm:$0x1]
      %v1552 = vld [vmem:[#allocation2 + $0x30] sm:$0xe]
      %v1553 = vld [vmem:[#allocation2 + $0x34] sm:$0xf]
      %v1554 = vld [vmem:[#allocation2 + $0x38] sm:$0x1]
      %v1555 = vld [vmem:[#allocation2 + $0x3c] sm:$0xe]
      %v1556 = vld [vmem:[#allocation2 + $0x40] sm:$0xf]
      %v1557 = vld [vmem:[#allocation2 + $0x44] sm:$0x1]
      %v1558 = vld [vmem:[#allocation2 + $0x48] sm:$0xe]
      %v1559 = vld [vmem:[#allocation2 + $0x4c] sm:$0xf]
      %v1560 = vld [vmem:[#allocation2 + $0x50] sm:$0x1]
      %v1561 = vld [vmem:[#allocation2 + $0x54] sm:$0xe]
      %v1562 = vld [vmem:[#allocation2 + $0x58] sm:$0xf]
      %v1563 = vld [vmem:[#allocation2 + $0x5c] sm:$0x1]
      %v1564 = vld [vmem:[#allocation2 + $0x60] sm:$0xe]
      %v1565 = vld [vmem:[#allocation2 + $0x64] sm:$0xf]
      %v1566 = vld [vmem:[#allocation2 + $0x68] sm:$0x1]
      %v1567 = vld [vmem:[#allocation2 + $0x6c] sm:$0xe]
      %v1568 = vld [vmem:[#allocation2 + $0x70] sm:$0xf]
      %v1569 = vld [vmem:[#allocation2 + $0x74] sm:$0x1]
      %v1570 = vld [vmem:[#allocation2 + $0x78] sm:$0xe]
      %v1571 = vld [vmem:[#allocation2 + $0x7c] sm:$0xf]
      %v1572 = vld [vmem:[#allocation2 + $0x80] sm:$0x1]
      %v1573 = vld [vmem:[#allocation2 + $0x84] sm:$0xe]
      %v1574 = vld [vmem:[#allocation2 + $0x88] sm:$0xf]
      %v1575 = vld [vmem:[#allocation2 + $0x8c] sm:$0x1]
      %v1576 = vld [vmem:[#allocation2 + $0x90] sm:$0xe]
      %v1577 = vld [vmem:[#allocation2 + $0x94] sm:$0xf]
      %v1578 = vld [vmem:[#allocation2 + $0x98] sm:$0x1]
      %v1579 = vld [vmem:[#allocation2 + $0x9c] sm:$0xe]
      %v1580 = vld [vmem:[#allocation2 + $0xa0] sm:$0xf]
      %v1581 = vld [vmem:[#allocation2 + $0xa4] sm:$0x1]
      %v1582 = vld [vmem:[#allocation2 + $0xa8] sm:$0xe]
      %v1583 = vld [vmem:[#allocation2 + $0xac] sm:$0xf]
      %v1584 = vld [vmem:[#allocation2 + $0xb0] sm:$0x1]
      %v1585 = vld [vmem:[#allocation2 + $0xb4] sm:$0xe]
      %v1586 = vld [vmem:[#allocation2 + $0xb8] sm:$0xf]
      %v1587 = vld [vmem:[#allocation2 + $0xbc] sm:$0x1]
      %v1636 = vunpack.c.l.b16 %v1540
      %v1637 = vunpack.c.l.b16 %v1541
      %v1638 = vunpack.c.l.b16 %v1542
      %v1639 = vunpack.c.l.b16 %v1543
      %v1640 = vunpack.c.l.b16 %v1544
      %v1641 = vunpack.c.l.b16 %v1545
      %v1642 = vunpack.c.l.b16 %v1546
      %v1643 = vunpack.c.l.b16 %v1547
      %v1644 = vunpack.c.l.b16 %v1548
      %v1645 = vunpack.c.l.b16 %v1549
      %v1646 = vunpack.c.l.b16 %v1550
      %v1647 = vunpack.c.l.b16 %v1551
      %v1648 = vunpack.c.l.b16 %v1552
      %v1649 = vunpack.c.l.b16 %v1553
      %v1650 = vunpack.c.l.b16 %v1554
      %v1651 = vunpack.c.l.b16 %v1555
      %v1652 = vunpack.c.l.b16 %v1556
      %v1653 = vunpack.c.l.b16 %v1557
      %v1654 = vunpack.c.l.b16 %v1558
      %v1655 = vunpack.c.l.b16 %v1559
      %v1656 = vunpack.c.l.b16 %v1560
      %v1657 = vunpack.c.l.b16 %v1561
      %v1658 = vunpack.c.l.b16 %v1562
      %v1659 = vunpack.c.l.b16 %v1563
      %v1660 = vunpack.c.l.b16 %v1564
      %v1661 = vunpack.c.l.b16 %v1565
      %v1662 = vunpack.c.l.b16 %v1566
      %v1663 = vunpack.c.l.b16 %v1567
      %v1664 = vunpack.c.l.b16 %v1568
      %v1665 = vunpack.c.l.b16 %v1569
      %v1666 = vunpack.c.l.b16 %v1570
      %v1667 = vunpack.c.l.b16 %v1571
      %v1668 = vunpack.c.l.b16 %v1572
      %v1669 = vunpack.c.l.b16 %v1573
      %v1670 = vunpack.c.l.b16 %v1574
      %v1671 = vunpack.c.l.b16 %v1575
      %v1672 = vunpack.c.l.b16 %v1576
      %v1673 = vunpack.c.l.b16 %v1577
      %v1674 = vunpack.c.l.b16 %v1578
      %v1675 = vunpack.c.l.b16 %v1579
      %v1676 = vunpack.c.l.b16 %v1580
      %v1677 = vunpack.c.l.b16 %v1581
      %v1678 = vunpack.c.l.b16 %v1582
      %v1679 = vunpack.c.l.b16 %v1583
      %v1680 = vunpack.c.l.b16 %v1584
      %v1681 = vunpack.c.l.b16 %v1585
      %v1682 = vunpack.c.l.b16 %v1586
      %v1683 = vunpack.c.l.b16 %v1587
      %v1684 = vpack.c.b16 %v1637, %v1636
      %v1685 = vpack.c.b16 %v1638, %v1638
      %v1686 = vpack.c.b16 %v1640, %v1639
      %v1687 = vpack.c.b16 %v1641, %v1641
      %v1688 = vpack.c.b16 %v1643, %v1642
      %v1689 = vpack.c.b16 %v1644, %v1644
      %v1690 = vpack.c.b16 %v1646, %v1645
      %v1691 = vpack.c.b16 %v1647, %v1647
      %v1692 = vpack.c.b16 %v1649, %v1648
      %v1693 = vpack.c.b16 %v1650, %v1650
      %v1694 = vpack.c.b16 %v1652, %v1651
      %v1695 = vpack.c.b16 %v1653, %v1653
      %v1696 = vpack.c.b16 %v1655, %v1654
      %v1697 = vpack.c.b16 %v1656, %v1656
      %v1698 = vpack.c.b16 %v1658, %v1657
      %v1699 = vpack.c.b16 %v1659, %v1659
      %v1700 = vpack.c.b16 %v1661, %v1660
      %v1701 = vpack.c.b16 %v1662, %v1662
      %v1702 = vpack.c.b16 %v1664, %v1663
      %v1703 = vpack.c.b16 %v1665, %v1665
      %v1704 = vpack.c.b16 %v1667, %v1666
      %v1705 = vpack.c.b16 %v1668, %v1668
      %v1706 = vpack.c.b16 %v1670, %v1669
      %v1707 = vpack.c.b16 %v1671, %v1671
      %v1708 = vpack.c.b16 %v1673, %v1672
      %v1709 = vpack.c.b16 %v1674, %v1674
      %v1710 = vpack.c.b16 %v1676, %v1675
      %v1711 = vpack.c.b16 %v1677, %v1677
      %v1712 = vpack.c.b16 %v1679, %v1678
      %v1713 = vpack.c.b16 %v1680, %v1680
      %v1714 = vpack.c.b16 %v1682, %v1681
      %v1715 = vpack.c.b16 %v1683, %v1683
      %vm1716 = vcmask 1046528
      %v1717 = vrot.slane %v1684, 1
      %v1718 = vrot.slane %v1685, 1
      %v1719 = vsel %vm1716, %v1717, %v1718
      %v1720 = vrot.slane %v1686, 1
      %v1721 = vrot.slane %v1687, 1
      %v1722 = vsel %vm1716, %v1720, %v1721
      %v1723 = vrot.slane %v1688, 1
      %v1724 = vrot.slane %v1689, 1
      %v1725 = vsel %vm1716, %v1723, %v1724
      %v1726 = vrot.slane %v1690, 1
      %v1727 = vrot.slane %v1691, 1
      %v1728 = vsel %vm1716, %v1726, %v1727
      %v1729 = vrot.slane %v1692, 1
      %v1730 = vrot.slane %v1693, 1
      %v1731 = vsel %vm1716, %v1729, %v1730
      %v1732 = vrot.slane %v1694, 1
      %v1733 = vrot.slane %v1695, 1
      %v1734 = vsel %vm1716, %v1732, %v1733
      %v1735 = vrot.slane %v1696, 1
      %v1736 = vrot.slane %v1697, 1
      %v1737 = vsel %vm1716, %v1735, %v1736
      %v1738 = vrot.slane %v1698, 1
      %v1739 = vrot.slane %v1699, 1
      %v1740 = vsel %vm1716, %v1738, %v1739
      %v1741 = vrot.slane %v1700, 1
      %v1742 = vrot.slane %v1701, 1
      %v1743 = vsel %vm1716, %v1741, %v1742
      %v1744 = vrot.slane %v1702, 1
      %v1745 = vrot.slane %v1703, 1
      %v1746 = vsel %vm1716, %v1744, %v1745
      %v1747 = vrot.slane %v1704, 1
      %v1748 = vrot.slane %v1705, 1
      %v1749 = vsel %vm1716, %v1747, %v1748
      %v1750 = vrot.slane %v1706, 1
      %v1751 = vrot.slane %v1707, 1
      %v1752 = vsel %vm1716, %v1750, %v1751
      %v1753 = vrot.slane %v1708, 1
      %v1754 = vrot.slane %v1709, 1
      %v1755 = vsel %vm1716, %v1753, %v1754
      %v1756 = vrot.slane %v1710, 1
      %v1757 = vrot.slane %v1711, 1
      %v1758 = vsel %vm1716, %v1756, %v1757
      %v1759 = vrot.slane %v1712, 1
      %v1760 = vrot.slane %v1713, 1
      %v1761 = vsel %vm1716, %v1759, %v1760
      %v1762 = vrot.slane %v1714, 1
      %v1763 = vrot.slane %v1715, 1
      %v1764 = vsel %vm1716, %v1762, %v1763
      %1765 = vrot.lane.b32.xlu0 %v1719, 8
      %v1766 = vpop.permute.xlu0 %1765
      %1767 = vrot.lane.b32.xlu0 %v1722, 8
      %v1768 = vpop.permute.xlu0 %1767
      %1769 = vrot.lane.b32.xlu0 %v1725, 8
      %v1770 = vpop.permute.xlu0 %1769
      %1771 = vrot.lane.b32.xlu0 %v1728, 8
      %v1772 = vpop.permute.xlu0 %1771
      %1773 = vrot.lane.b32.xlu0 %v1731, 8
      %v1774 = vpop.permute.xlu0 %1773
      %1775 = vrot.lane.b32.xlu0 %v1734, 8
      %v1776 = vpop.permute.xlu0 %1775
      %1777 = vrot.lane.b32.xlu0 %v1737, 8
      %v1778 = vpop.permute.xlu0 %1777
      %1779 = vrot.lane.b32.xlu0 %v1740, 8
      %v1780 = vpop.permute.xlu0 %1779
      %1781 = vrot.lane.b32.xlu0 %v1743, 8
      %v1782 = vpop.permute.xlu0 %1781
      %1783 = vrot.lane.b32.xlu0 %v1746, 8
      %v1784 = vpop.permute.xlu0 %1783
      %1785 = vrot.lane.b32.xlu0 %v1749, 8
      %v1786 = vpop.permute.xlu0 %1785
      %1787 = vrot.lane.b32.xlu0 %v1752, 8
      %v1788 = vpop.permute.xlu0 %1787
      %1789 = vrot.lane.b32.xlu0 %v1755, 8
      %v1790 = vpop.permute.xlu0 %1789
      %1791 = vrot.lane.b32.xlu0 %v1758, 8
      %v1792 = vpop.permute.xlu0 %1791
      %1793 = vrot.lane.b32.xlu0 %v1761, 8
      %v1794 = vpop.permute.xlu0 %1793
      %1795 = vrot.lane.b32.xlu0 %v1764, 8
      %v1796 = vpop.permute.xlu0 %1795
      %vm1813 = vcmask 97344
      %1814 = vst.msk [vmem:[#allocation3] sm:$0xff] %vm1813, %v1766
      %1815 = vst.msk [vmem:[#allocation3 + $0x8] sm:$0xff] %vm1813, %v1768
      %1816 = vst.msk [vmem:[#allocation3 + $0x10] sm:$0xff] %vm1813, %v1770
      %1817 = vst.msk [vmem:[#allocation3 + $0x18] sm:$0xff] %vm1813, %v1772
      %1818 = vst.msk [vmem:[#allocation3 + $0x20] sm:$0xff] %vm1813, %v1774
      %1819 = vst.msk [vmem:[#allocation3 + $0x28] sm:$0xff] %vm1813, %v1776
      %1820 = vst.msk [vmem:[#allocation3 + $0x30] sm:$0xff] %vm1813, %v1778
      %1821 = vst.msk [vmem:[#allocation3 + $0x38] sm:$0xff] %vm1813, %v1780
      %1822 = vst.msk [vmem:[#allocation3 + $0x40] sm:$0xff] %vm1813, %v1782
      %1823 = vst.msk [vmem:[#allocation3 + $0x48] sm:$0xff] %vm1813, %v1784
      %1824 = vst.msk [vmem:[#allocation3 + $0x50] sm:$0xff] %vm1813, %v1786
      %1825 = vst.msk [vmem:[#allocation3 + $0x58] sm:$0xff] %vm1813, %v1788
      %1826 = vst.msk [vmem:[#allocation3 + $0x60] sm:$0xff] %vm1813, %v1790
      %1827 = vst.msk [vmem:[#allocation3 + $0x68] sm:$0xff] %vm1813, %v1792
      %1828 = vst.msk [vmem:[#allocation3 + $0x70] sm:$0xff] %vm1813, %v1794
      %1829 = vst.msk [vmem:[#allocation3 + $0x78] sm:$0xff] %vm1813, %v1796
      %v1830 = vld [vmem:[%s295] sm:$0xf]
      %v1831 = vld [vmem:[%s295 + $0x4] sm:$0xf]
      %v1832 = vld [vmem:[%s295 + $0xc] sm:$0xf]
      %v1833 = vld [vmem:[%s295 + $0x10] sm:$0xf]
      %v1834 = vld [vmem:[%s295 + $0x18] sm:$0xf]
      %v1835 = vld [vmem:[%s295 + $0x1c] sm:$0xf]
      %v1836 = vld [vmem:[%s295 + $0x24] sm:$0xf]
      %v1837 = vld [vmem:[%s295 + $0x28] sm:$0xf]
      %v1838 = vld [vmem:[%s295 + $0x30] sm:$0xf]
      %v1839 = vld [vmem:[%s295 + $0x34] sm:$0xf]
      %v1840 = vld [vmem:[%s295 + $0x3c] sm:$0xf]
      %v1841 = vld [vmem:[%s295 + $0x40] sm:$0xf]
      %v1842 = vld [vmem:[%s295 + $0x48] sm:$0xf]
      %v1843 = vld [vmem:[%s295 + $0x4c] sm:$0xf]
      %v1844 = vld [vmem:[%s295 + $0x54] sm:$0xf]
      %v1845 = vld [vmem:[%s295 + $0x58] sm:$0xf]
      %v1846 = vld [vmem:[%s295 + $0x60] sm:$0xf]
      %v1847 = vld [vmem:[%s295 + $0x64] sm:$0xf]
      %v1848 = vld [vmem:[%s295 + $0x6c] sm:$0xf]
      %v1849 = vld [vmem:[%s295 + $0x70] sm:$0xf]
      %v1850 = vld [vmem:[%s295 + $0x78] sm:$0xf]
      %v1851 = vld [vmem:[%s295 + $0x7c] sm:$0xf]
      %v1852 = vld [vmem:[%s295 + $0x84] sm:$0xf]
      %v1853 = vld [vmem:[%s295 + $0x88] sm:$0xf]
      %v1854 = vld [vmem:[%s295 + $0x90] sm:$0xf]
      %v1855 = vld [vmem:[%s295 + $0x94] sm:$0xf]
      %v1856 = vld [vmem:[%s295 + $0x9c] sm:$0xf]
      %v1857 = vld [vmem:[%s295 + $0xa0] sm:$0xf]
      %v1858 = vld [vmem:[%s295 + $0xa8] sm:$0xf]
      %v1859 = vld [vmem:[%s295 + $0xac] sm:$0xf]
      %v1860 = vld [vmem:[%s295 + $0xb4] sm:$0xf]
      %v1861 = vld [vmem:[%s295 + $0xb8] sm:$0xf]
      %v1894 = vunpack.c.l.b16 %v1830
      %v1895 = vunpack.c.l.b16 %v1831
      %v1896 = vunpack.c.l.b16 %v1832
      %v1897 = vunpack.c.l.b16 %v1833
      %v1898 = vunpack.c.l.b16 %v1834
      %v1899 = vunpack.c.l.b16 %v1835
      %v1900 = vunpack.c.l.b16 %v1836
      %v1901 = vunpack.c.l.b16 %v1837
      %v1902 = vunpack.c.l.b16 %v1838
      %v1903 = vunpack.c.l.b16 %v1839
      %v1904 = vunpack.c.l.b16 %v1840
      %v1905 = vunpack.c.l.b16 %v1841
      %v1906 = vunpack.c.l.b16 %v1842
      %v1907 = vunpack.c.l.b16 %v1843
      %v1908 = vunpack.c.l.b16 %v1844
      %v1909 = vunpack.c.l.b16 %v1845
      %v1910 = vunpack.c.l.b16 %v1846
      %v1911 = vunpack.c.l.b16 %v1847
      %v1912 = vunpack.c.l.b16 %v1848
      %v1913 = vunpack.c.l.b16 %v1849
      %v1914 = vunpack.c.l.b16 %v1850
      %v1915 = vunpack.c.l.b16 %v1851
      %v1916 = vunpack.c.l.b16 %v1852
      %v1917 = vunpack.c.l.b16 %v1853
      %v1918 = vunpack.c.l.b16 %v1854
      %v1919 = vunpack.c.l.b16 %v1855
      %v1920 = vunpack.c.l.b16 %v1856
      %v1921 = vunpack.c.l.b16 %v1857
      %v1922 = vunpack.c.l.b16 %v1858
      %v1923 = vunpack.c.l.b16 %v1859
      %v1924 = vunpack.c.l.b16 %v1860
      %v1925 = vunpack.c.l.b16 %v1861
      %v1926 = vpack.c.b16 %v1895, %v1894
      %v1927 = vpack.c.b16 %v1897, %v1896
      %v1928 = vpack.c.b16 %v1899, %v1898
      %v1929 = vpack.c.b16 %v1901, %v1900
      %v1930 = vpack.c.b16 %v1903, %v1902
      %v1931 = vpack.c.b16 %v1905, %v1904
      %v1932 = vpack.c.b16 %v1907, %v1906
      %v1933 = vpack.c.b16 %v1909, %v1908
      %v1934 = vpack.c.b16 %v1911, %v1910
      %v1935 = vpack.c.b16 %v1913, %v1912
      %v1936 = vpack.c.b16 %v1915, %v1914
      %v1937 = vpack.c.b16 %v1917, %v1916
      %v1938 = vpack.c.b16 %v1919, %v1918
      %v1939 = vpack.c.b16 %v1921, %v1920
      %v1940 = vpack.c.b16 %v1923, %v1922
      %v1941 = vpack.c.b16 %v1925, %v1924
      %1942 = vrot.lane.b32.xlu0 %v1926, 12
      %v1943 = vpop.permute.xlu0 %1942
      %1944 = vrot.lane.b32.xlu0 %v1927, 12
      %v1945 = vpop.permute.xlu0 %1944
      %1946 = vrot.lane.b32.xlu0 %v1928, 12
      %v1947 = vpop.permute.xlu0 %1946
      %1948 = vrot.lane.b32.xlu0 %v1929, 12
      %v1949 = vpop.permute.xlu0 %1948
      %1950 = vrot.lane.b32.xlu0 %v1930, 12
      %v1951 = vpop.permute.xlu0 %1950
      %1952 = vrot.lane.b32.xlu0 %v1931, 12
      %v1953 = vpop.permute.xlu0 %1952
      %1954 = vrot.lane.b32.xlu0 %v1932, 12
      %v1955 = vpop.permute.xlu0 %1954
      %1956 = vrot.lane.b32.xlu0 %v1933, 12
      %v1957 = vpop.permute.xlu0 %1956
      %1958 = vrot.lane.b32.xlu0 %v1934, 12
      %v1959 = vpop.permute.xlu0 %1958
      %1960 = vrot.lane.b32.xlu0 %v1935, 12
      %v1961 = vpop.permute.xlu0 %1960
      %1962 = vrot.lane.b32.xlu0 %v1936, 12
      %v1963 = vpop.permute.xlu0 %1962
      %1964 = vrot.lane.b32.xlu0 %v1937, 12
      %v1965 = vpop.permute.xlu0 %1964
      %1966 = vrot.lane.b32.xlu0 %v1938, 12
      %v1967 = vpop.permute.xlu0 %1966
      %1968 = vrot.lane.b32.xlu0 %v1939, 12
      %v1969 = vpop.permute.xlu0 %1968
      %1970 = vrot.lane.b32.xlu0 %v1940, 12
      %v1971 = vpop.permute.xlu0 %1970
      %1972 = vrot.lane.b32.xlu0 %v1941, 12
      %v1973 = vpop.permute.xlu0 %1972
      %vm1990 = vcmask 130144
      %1991 = vst.msk [vmem:[#allocation3] sm:$0xff] %vm1990, %v1943
      %1992 = vst.msk [vmem:[#allocation3 + $0x8] sm:$0xff] %vm1990, %v1945
      %1993 = vst.msk [vmem:[#allocation3 + $0x10] sm:$0xff] %vm1990, %v1947
      %1994 = vst.msk [vmem:[#allocation3 + $0x18] sm:$0xff] %vm1990, %v1949
      %1995 = vst.msk [vmem:[#allocation3 + $0x20] sm:$0xff] %vm1990, %v1951
      %1996 = vst.msk [vmem:[#allocation3 + $0x28] sm:$0xff] %vm1990, %v1953
      %1997 = vst.msk [vmem:[#allocation3 + $0x30] sm:$0xff] %vm1990, %v1955
      %1998 = vst.msk [vmem:[#allocation3 + $0x38] sm:$0xff] %vm1990, %v1957
      %1999 = vst.msk [vmem:[#allocation3 + $0x40] sm:$0xff] %vm1990, %v1959
      %2000 = vst.msk [vmem:[#allocation3 + $0x48] sm:$0xff] %vm1990, %v1961
      %2001 = vst.msk [vmem:[#allocation3 + $0x50] sm:$0xff] %vm1990, %v1963
      %2002 = vst.msk [vmem:[#allocation3 + $0x58] sm:$0xff] %vm1990, %v1965
      %2003 = vst.msk [vmem:[#allocation3 + $0x60] sm:$0xff] %vm1990, %v1967
      %2004 = vst.msk [vmem:[#allocation3 + $0x68] sm:$0xff] %vm1990, %v1969
      %2005 = vst.msk [vmem:[#allocation3 + $0x70] sm:$0xff] %vm1990, %v1971
      %2006 = vst.msk [vmem:[#allocation3 + $0x78] sm:$0xff] %vm1990, %v1973
      %v2007 = vld [vmem:[%s295] sm:$0xf]
      %v2008 = vld [vmem:[%s295 + $0x4] sm:$0xf]
      %v2009 = vld [vmem:[%s295 + $0x8] sm:$0x1]
      %v2010 = vld [vmem:[%s295 + $0xc] sm:$0xf]
      %v2011 = vld [vmem:[%s295 + $0x10] sm:$0xf]
      %v2012 = vld [vmem:[%s295 + $0x14] sm:$0x1]
      %v2013 = vld [vmem:[%s295 + $0x18] sm:$0xf]
      %v2014 = vld [vmem:[%s295 + $0x1c] sm:$0xf]
      %v2015 = vld [vmem:[%s295 + $0x20] sm:$0x1]
      %v2016 = vld [vmem:[%s295 + $0x24] sm:$0xf]
      %v2017 = vld [vmem:[%s295 + $0x28] sm:$0xf]
      %v2018 = vld [vmem:[%s295 + $0x2c] sm:$0x1]
      %v2019 = vld [vmem:[%s295 + $0x30] sm:$0xf]
      %v2020 = vld [vmem:[%s295 + $0x34] sm:$0xf]
      %v2021 = vld [vmem:[%s295 + $0x38] sm:$0x1]
      %v2022 = vld [vmem:[%s295 + $0x3c] sm:$0xf]
      %v2023 = vld [vmem:[%s295 + $0x40] sm:$0xf]
      %v2024 = vld [vmem:[%s295 + $0x44] sm:$0x1]
      %v2025 = vld [vmem:[%s295 + $0x48] sm:$0xf]
      %v2026 = vld [vmem:[%s295 + $0x4c] sm:$0xf]
      %v2027 = vld [vmem:[%s295 + $0x50] sm:$0x1]
      %v2028 = vld [vmem:[%s295 + $0x54] sm:$0xf]
      %v2029 = vld [vmem:[%s295 + $0x58] sm:$0xf]
      %v2030 = vld [vmem:[%s295 + $0x5c] sm:$0x1]
      %v2031 = vld [vmem:[%s295 + $0x60] sm:$0xf]
      %v2032 = vld [vmem:[%s295 + $0x64] sm:$0xf]
      %v2033 = vld [vmem:[%s295 + $0x68] sm:$0x1]
      %v2034 = vld [vmem:[%s295 + $0x6c] sm:$0xf]
      %v2035 = vld [vmem:[%s295 + $0x70] sm:$0xf]
      %v2036 = vld [vmem:[%s295 + $0x74] sm:$0x1]
      %v2037 = vld [vmem:[%s295 + $0x78] sm:$0xf]
      %v2038 = vld [vmem:[%s295 + $0x7c] sm:$0xf]
      %v2039 = vld [vmem:[%s295 + $0x80] sm:$0x1]
      %v2040 = vld [vmem:[%s295 + $0x84] sm:$0xf]
      %v2041 = vld [vmem:[%s295 + $0x88] sm:$0xf]
      %v2042 = vld [vmem:[%s295 + $0x8c] sm:$0x1]
      %v2043 = vld [vmem:[%s295 + $0x90] sm:$0xf]
      %v2044 = vld [vmem:[%s295 + $0x94] sm:$0xf]
      %v2045 = vld [vmem:[%s295 + $0x98] sm:$0x1]
      %v2046 = vld [vmem:[%s295 + $0x9c] sm:$0xf]
      %v2047 = vld [vmem:[%s295 + $0xa0] sm:$0xf]
      %v2048 = vld [vmem:[%s295 + $0xa4] sm:$0x1]
      %v2049 = vld [vmem:[%s295 + $0xa8] sm:$0xf]
      %v2050 = vld [vmem:[%s295 + $0xac] sm:$0xf]
      %v2051 = vld [vmem:[%s295 + $0xb0] sm:$0x1]
      %v2052 = vld [vmem:[%s295 + $0xb4] sm:$0xf]
      %v2053 = vld [vmem:[%s295 + $0xb8] sm:$0xf]
      %v2054 = vld [vmem:[%s295 + $0xbc] sm:$0x1]
      %v2103 = vunpack.c.l.b16 %v2007
      %v2104 = vunpack.c.l.b16 %v2008
      %v2105 = vunpack.c.l.b16 %v2009
      %v2106 = vunpack.c.l.b16 %v2010
      %v2107 = vunpack.c.l.b16 %v2011
      %v2108 = vunpack.c.l.b16 %v2012
      %v2109 = vunpack.c.l.b16 %v2013
      %v2110 = vunpack.c.l.b16 %v2014
      %v2111 = vunpack.c.l.b16 %v2015
      %v2112 = vunpack.c.l.b16 %v2016
      %v2113 = vunpack.c.l.b16 %v2017
      %v2114 = vunpack.c.l.b16 %v2018
      %v2115 = vunpack.c.l.b16 %v2019
      %v2116 = vunpack.c.l.b16 %v2020
      %v2117 = vunpack.c.l.b16 %v2021
      %v2118 = vunpack.c.l.b16 %v2022
      %v2119 = vunpack.c.l.b16 %v2023
      %v2120 = vunpack.c.l.b16 %v2024
      %v2121 = vunpack.c.l.b16 %v2025
      %v2122 = vunpack.c.l.b16 %v2026
      %v2123 = vunpack.c.l.b16 %v2027
      %v2124 = vunpack.c.l.b16 %v2028
      %v2125 = vunpack.c.l.b16 %v2029
      %v2126 = vunpack.c.l.b16 %v2030
      %v2127 = vunpack.c.l.b16 %v2031
      %v2128 = vunpack.c.l.b16 %v2032
      %v2129 = vunpack.c.l.b16 %v2033
      %v2130 = vunpack.c.l.b16 %v2034
      %v2131 = vunpack.c.l.b16 %v2035
      %v2132 = vunpack.c.l.b16 %v2036
      %v2133 = vunpack.c.l.b16 %v2037
      %v2134 = vunpack.c.l.b16 %v2038
      %v2135 = vunpack.c.l.b16 %v2039
      %v2136 = vunpack.c.l.b16 %v2040
      %v2137 = vunpack.c.l.b16 %v2041
      %v2138 = vunpack.c.l.b16 %v2042
      %v2139 = vunpack.c.l.b16 %v2043
      %v2140 = vunpack.c.l.b16 %v2044
      %v2141 = vunpack.c.l.b16 %v2045
      %v2142 = vunpack.c.l.b16 %v2046
      %v2143 = vunpack.c.l.b16 %v2047
      %v2144 = vunpack.c.l.b16 %v2048
      %v2145 = vunpack.c.l.b16 %v2049
      %v2146 = vunpack.c.l.b16 %v2050
      %v2147 = vunpack.c.l.b16 %v2051
      %v2148 = vunpack.c.l.b16 %v2052
      %v2149 = vunpack.c.l.b16 %v2053
      %v2150 = vunpack.c.l.b16 %v2054
      %v2151 = vpack.c.b16 %v2104, %v2103
      %v2152 = vpack.c.b16 %v2105, %v2105
      %v2153 = vpack.c.b16 %v2107, %v2106
      %v2154 = vpack.c.b16 %v2108, %v2108
      %v2155 = vpack.c.b16 %v2110, %v2109
      %v2156 = vpack.c.b16 %v2111, %v2111
      %v2157 = vpack.c.b16 %v2113, %v2112
      %v2158 = vpack.c.b16 %v2114, %v2114
      %v2159 = vpack.c.b16 %v2116, %v2115
      %v2160 = vpack.c.b16 %v2117, %v2117
      %v2161 = vpack.c.b16 %v2119, %v2118
      %v2162 = vpack.c.b16 %v2120, %v2120
      %v2163 = vpack.c.b16 %v2122, %v2121
      %v2164 = vpack.c.b16 %v2123, %v2123
      %v2165 = vpack.c.b16 %v2125, %v2124
      %v2166 = vpack.c.b16 %v2126, %v2126
      %v2167 = vpack.c.b16 %v2128, %v2127
      %v2168 = vpack.c.b16 %v2129, %v2129
      %v2169 = vpack.c.b16 %v2131, %v2130
      %v2170 = vpack.c.b16 %v2132, %v2132
      %v2171 = vpack.c.b16 %v2134, %v2133
      %v2172 = vpack.c.b16 %v2135, %v2135
      %v2173 = vpack.c.b16 %v2137, %v2136
      %v2174 = vpack.c.b16 %v2138, %v2138
      %v2175 = vpack.c.b16 %v2140, %v2139
      %v2176 = vpack.c.b16 %v2141, %v2141
      %v2177 = vpack.c.b16 %v2143, %v2142
      %v2178 = vpack.c.b16 %v2144, %v2144
      %v2179 = vpack.c.b16 %v2146, %v2145
      %v2180 = vpack.c.b16 %v2147, %v2147
      %v2181 = vpack.c.b16 %v2149, %v2148
      %v2182 = vpack.c.b16 %v2150, %v2150
      %v2184 = vshrl.u32 %v2151, 16
      %v2186 = vshll.u32 %v2151, 16
      %v2188 = vrot.slane %v2186, 1
      %v2189 = vor.u32 %v2184, %v2188
      %v2191 = vshll.u32 %v2152, 16
      %v2193 = vrot.slane %v2191, 1
      %v2194 = vsel %vm1282, %v2189, %v2193
      %v2196 = vshrl.u32 %v2153, 16
      %v2198 = vshll.u32 %v2153, 16
      %v2200 = vrot.slane %v2198, 1
      %v2201 = vor.u32 %v2196, %v2200
      %v2203 = vshll.u32 %v2154, 16
      %v2205 = vrot.slane %v2203, 1
      %v2206 = vsel %vm1282, %v2201, %v2205
      %v2208 = vshrl.u32 %v2155, 16
      %v2210 = vshll.u32 %v2155, 16
      %v2212 = vrot.slane %v2210, 1
      %v2213 = vor.u32 %v2208, %v2212
      %v2215 = vshll.u32 %v2156, 16
      %v2217 = vrot.slane %v2215, 1
      %v2218 = vsel %vm1282, %v2213, %v2217
      %v2220 = vshrl.u32 %v2157, 16
      %v2222 = vshll.u32 %v2157, 16
      %v2224 = vrot.slane %v2222, 1
      %v2225 = vor.u32 %v2220, %v2224
      %v2227 = vshll.u32 %v2158, 16
      %v2229 = vrot.slane %v2227, 1
      %v2230 = vsel %vm1282, %v2225, %v2229
      %v2232 = vshrl.u32 %v2159, 16
      %v2234 = vshll.u32 %v2159, 16
      %v2236 = vrot.slane %v2234, 1
      %v2237 = vor.u32 %v2232, %v2236
      %v2239 = vshll.u32 %v2160, 16
      %v2241 = vrot.slane %v2239, 1
      %v2242 = vsel %vm1282, %v2237, %v2241
      %v2244 = vshrl.u32 %v2161, 16
      %v2246 = vshll.u32 %v2161, 16
      %v2248 = vrot.slane %v2246, 1
      %v2249 = vor.u32 %v2244, %v2248
      %v2251 = vshll.u32 %v2162, 16
      %v2253 = vrot.slane %v2251, 1
      %v2254 = vsel %vm1282, %v2249, %v2253
      %v2256 = vshrl.u32 %v2163, 16
      %v2258 = vshll.u32 %v2163, 16
      %v2260 = vrot.slane %v2258, 1
      %v2261 = vor.u32 %v2256, %v2260
      %v2263 = vshll.u32 %v2164, 16
      %v2265 = vrot.slane %v2263, 1
      %v2266 = vsel %vm1282, %v2261, %v2265
      %v2268 = vshrl.u32 %v2165, 16
      %v2270 = vshll.u32 %v2165, 16
      %v2272 = vrot.slane %v2270, 1
      %v2273 = vor.u32 %v2268, %v2272
      %v2275 = vshll.u32 %v2166, 16
      %v2277 = vrot.slane %v2275, 1
      %v2278 = vsel %vm1282, %v2273, %v2277
      %v2280 = vshrl.u32 %v2167, 16
      %v2282 = vshll.u32 %v2167, 16
      %v2284 = vrot.slane %v2282, 1
      %v2285 = vor.u32 %v2280, %v2284
      %v2287 = vshll.u32 %v2168, 16
      %v2289 = vrot.slane %v2287, 1
      %v2290 = vsel %vm1282, %v2285, %v2289
      %v2292 = vshrl.u32 %v2169, 16
      %v2294 = vshll.u32 %v2169, 16
      %v2296 = vrot.slane %v2294, 1
      %v2297 = vor.u32 %v2292, %v2296
      %v2299 = vshll.u32 %v2170, 16
      %v2301 = vrot.slane %v2299, 1
      %v2302 = vsel %vm1282, %v2297, %v2301
      %v2304 = vshrl.u32 %v2171, 16
      %v2306 = vshll.u32 %v2171, 16
      %v2308 = vrot.slane %v2306, 1
      %v2309 = vor.u32 %v2304, %v2308
      %v2311 = vshll.u32 %v2172, 16
      %v2313 = vrot.slane %v2311, 1
      %v2314 = vsel %vm1282, %v2309, %v2313
      %v2316 = vshrl.u32 %v2173, 16
      %v2318 = vshll.u32 %v2173, 16
      %v2320 = vrot.slane %v2318, 1
      %v2321 = vor.u32 %v2316, %v2320
      %v2323 = vshll.u32 %v2174, 16
      %v2325 = vrot.slane %v2323, 1
      %v2326 = vsel %vm1282, %v2321, %v2325
      %v2328 = vshrl.u32 %v2175, 16
      %v2330 = vshll.u32 %v2175, 16
      %v2332 = vrot.slane %v2330, 1
      %v2333 = vor.u32 %v2328, %v2332
      %v2335 = vshll.u32 %v2176, 16
      %v2337 = vrot.slane %v2335, 1
      %v2338 = vsel %vm1282, %v2333, %v2337
      %v2340 = vshrl.u32 %v2177, 16
      %v2342 = vshll.u32 %v2177, 16
      %v2344 = vrot.slane %v2342, 1
      %v2345 = vor.u32 %v2340, %v2344
      %v2347 = vshll.u32 %v2178, 16
      %v2349 = vrot.slane %v2347, 1
      %v2350 = vsel %vm1282, %v2345, %v2349
      %v2352 = vshrl.u32 %v2179, 16
      %v2354 = vshll.u32 %v2179, 16
      %v2356 = vrot.slane %v2354, 1
      %v2357 = vor.u32 %v2352, %v2356
      %v2359 = vshll.u32 %v2180, 16
      %v2361 = vrot.slane %v2359, 1
      %v2362 = vsel %vm1282, %v2357, %v2361
      %v2364 = vshrl.u32 %v2181, 16
      %v2366 = vshll.u32 %v2181, 16
      %v2368 = vrot.slane %v2366, 1
      %v2369 = vor.u32 %v2364, %v2368
      %v2371 = vshll.u32 %v2182, 16
      %v2373 = vrot.slane %v2371, 1
      %v2374 = vsel %vm1282, %v2369, %v2373
      %2375 = vrot.lane.b32.xlu0 %v2194, 16
      %v2376 = vpop.permute.xlu0 %2375
      %2377 = vrot.lane.b32.xlu0 %v2206, 16
      %v2378 = vpop.permute.xlu0 %2377
      %2379 = vrot.lane.b32.xlu0 %v2218, 16
      %v2380 = vpop.permute.xlu0 %2379
      %2381 = vrot.lane.b32.xlu0 %v2230, 16
      %v2382 = vpop.permute.xlu0 %2381
      %2383 = vrot.lane.b32.xlu0 %v2242, 16
      %v2384 = vpop.permute.xlu0 %2383
      %2385 = vrot.lane.b32.xlu0 %v2254, 16
      %v2386 = vpop.permute.xlu0 %2385
      %2387 = vrot.lane.b32.xlu0 %v2266, 16
      %v2388 = vpop.permute.xlu0 %2387
      %2389 = vrot.lane.b32.xlu0 %v2278, 16
      %v2390 = vpop.permute.xlu0 %2389
      %2391 = vrot.lane.b32.xlu0 %v2290, 16
      %v2392 = vpop.permute.xlu0 %2391
      %2393 = vrot.lane.b32.xlu0 %v2302, 16
      %v2394 = vpop.permute.xlu0 %2393
      %2395 = vrot.lane.b32.xlu0 %v2314, 16
      %v2396 = vpop.permute.xlu0 %2395
      %2397 = vrot.lane.b32.xlu0 %v2326, 16
      %v2398 = vpop.permute.xlu0 %2397
      %2399 = vrot.lane.b32.xlu0 %v2338, 16
      %v2400 = vpop.permute.xlu0 %2399
      %2401 = vrot.lane.b32.xlu0 %v2350, 16
      %v2402 = vpop.permute.xlu0 %2401
      %2403 = vrot.lane.b32.xlu0 %v2362, 16
      %v2404 = vpop.permute.xlu0 %2403
      %2405 = vrot.lane.b32.xlu0 %v2374, 16
      %v2406 = vpop.permute.xlu0 %2405
      %vm2423 = vcmask 162944
      %2424 = vst.msk [vmem:[#allocation3] sm:$0xff] %vm2423, %v2376
      %2425 = vst.msk [vmem:[#allocation3 + $0x8] sm:$0xff] %vm2423, %v2378
      %2426 = vst.msk [vmem:[#allocation3 + $0x10] sm:$0xff] %vm2423, %v2380
      %2427 = vst.msk [vmem:[#allocation3 + $0x18] sm:$0xff] %vm2423, %v2382
      %2428 = vst.msk [vmem:[#allocation3 + $0x20] sm:$0xff] %vm2423, %v2384
      %2429 = vst.msk [vmem:[#allocation3 + $0x28] sm:$0xff] %vm2423, %v2386
      %2430 = vst.msk [vmem:[#allocation3 + $0x30] sm:$0xff] %vm2423, %v2388
      %2431 = vst.msk [vmem:[#allocation3 + $0x38] sm:$0xff] %vm2423, %v2390
      %2432 = vst.msk [vmem:[#allocation3 + $0x40] sm:$0xff] %vm2423, %v2392
      %2433 = vst.msk [vmem:[#allocation3 + $0x48] sm:$0xff] %vm2423, %v2394
      %2434 = vst.msk [vmem:[#allocation3 + $0x50] sm:$0xff] %vm2423, %v2396
      %2435 = vst.msk [vmem:[#allocation3 + $0x58] sm:$0xff] %vm2423, %v2398
      %2436 = vst.msk [vmem:[#allocation3 + $0x60] sm:$0xff] %vm2423, %v2400
      %2437 = vst.msk [vmem:[#allocation3 + $0x68] sm:$0xff] %vm2423, %v2402
      %2438 = vst.msk [vmem:[#allocation3 + $0x70] sm:$0xff] %vm2423, %v2404
      %2439 = vst.msk [vmem:[#allocation3 + $0x78] sm:$0xff] %vm2423, %v2406
      %v2440 = vld [vmem:[%s295] sm:$0xe]
      %v2441 = vld [vmem:[%s295 + $0x4] sm:$0xf]
      %v2442 = vld [vmem:[%s295 + $0x8] sm:$0x1]
      %v2443 = vld [vmem:[%s295 + $0xc] sm:$0xe]
      %v2444 = vld [vmem:[%s295 + $0x10] sm:$0xf]
      %v2445 = vld [vmem:[%s295 + $0x14] sm:$0x1]
      %v2446 = vld [vmem:[%s295 + $0x18] sm:$0xe]
      %v2447 = vld [vmem:[%s295 + $0x1c] sm:$0xf]
      %v2448 = vld [vmem:[%s295 + $0x20] sm:$0x1]
      %v2449 = vld [vmem:[%s295 + $0x24] sm:$0xe]
      %v2450 = vld [vmem:[%s295 + $0x28] sm:$0xf]
      %v2451 = vld [vmem:[%s295 + $0x2c] sm:$0x1]
      %v2452 = vld [vmem:[%s295 + $0x30] sm:$0xe]
      %v2453 = vld [vmem:[%s295 + $0x34] sm:$0xf]
      %v2454 = vld [vmem:[%s295 + $0x38] sm:$0x1]
      %v2455 = vld [vmem:[%s295 + $0x3c] sm:$0xe]
      %v2456 = vld [vmem:[%s295 + $0x40] sm:$0xf]
      %v2457 = vld [vmem:[%s295 + $0x44] sm:$0x1]
      %v2458 = vld [vmem:[%s295 + $0x48] sm:$0xe]
      %v2459 = vld [vmem:[%s295 + $0x4c] sm:$0xf]
      %v2460 = vld [vmem:[%s295 + $0x50] sm:$0x1]
      %v2461 = vld [vmem:[%s295 + $0x54] sm:$0xe]
      %v2462 = vld [vmem:[%s295 + $0x58] sm:$0xf]
      %v2463 = vld [vmem:[%s295 + $0x5c] sm:$0x1]
      %v2464 = vld [vmem:[%s295 + $0x60] sm:$0xe]
      %v2465 = vld [vmem:[%s295 + $0x64] sm:$0xf]
      %v2466 = vld [vmem:[%s295 + $0x68] sm:$0x1]
      %v2467 = vld [vmem:[%s295 + $0x6c] sm:$0xe]
      %v2468 = vld [vmem:[%s295 + $0x70] sm:$0xf]
      %v2469 = vld [vmem:[%s295 + $0x74] sm:$0x1]
      %v2470 = vld [vmem:[%s295 + $0x78] sm:$0xe]
      %v2471 = vld [vmem:[%s295 + $0x7c] sm:$0xf]
      %v2472 = vld [vmem:[%s295 + $0x80] sm:$0x1]
      %v2473 = vld [vmem:[%s295 + $0x84] sm:$0xe]
      %v2474 = vld [vmem:[%s295 + $0x88] sm:$0xf]
      %v2475 = vld [vmem:[%s295 + $0x8c] sm:$0x1]
      %v2476 = vld [vmem:[%s295 + $0x90] sm:$0xe]
      %v2477 = vld [vmem:[%s295 + $0x94] sm:$0xf]
      %v2478 = vld [vmem:[%s295 + $0x98] sm:$0x1]
      %v2479 = vld [vmem:[%s295 + $0x9c] sm:$0xe]
      %v2480 = vld [vmem:[%s295 + $0xa0] sm:$0xf]
      %v2481 = vld [vmem:[%s295 + $0xa4] sm:$0x1]
      %v2482 = vld [vmem:[%s295 + $0xa8] sm:$0xe]
      %v2483 = vld [vmem:[%s295 + $0xac] sm:$0xf]
      %v2484 = vld [vmem:[%s295 + $0xb0] sm:$0x1]
      %v2485 = vld [vmem:[%s295 + $0xb4] sm:$0xe]
      %v2486 = vld [vmem:[%s295 + $0xb8] sm:$0xf]
      %v2487 = vld [vmem:[%s295 + $0xbc] sm:$0x1]
      %v2536 = vunpack.c.l.b16 %v2440
      %v2537 = vunpack.c.l.b16 %v2441
      %v2538 = vunpack.c.l.b16 %v2442
      %v2539 = vunpack.c.l.b16 %v2443
      %v2540 = vunpack.c.l.b16 %v2444
      %v2541 = vunpack.c.l.b16 %v2445
      %v2542 = vunpack.c.l.b16 %v2446
      %v2543 = vunpack.c.l.b16 %v2447
      %v2544 = vunpack.c.l.b16 %v2448
      %v2545 = vunpack.c.l.b16 %v2449
      %v2546 = vunpack.c.l.b16 %v2450
      %v2547 = vunpack.c.l.b16 %v2451
      %v2548 = vunpack.c.l.b16 %v2452
      %v2549 = vunpack.c.l.b16 %v2453
      %v2550 = vunpack.c.l.b16 %v2454
      %v2551 = vunpack.c.l.b16 %v2455
      %v2552 = vunpack.c.l.b16 %v2456
      %v2553 = vunpack.c.l.b16 %v2457
      %v2554 = vunpack.c.l.b16 %v2458
      %v2555 = vunpack.c.l.b16 %v2459
      %v2556 = vunpack.c.l.b16 %v2460
      %v2557 = vunpack.c.l.b16 %v2461
      %v2558 = vunpack.c.l.b16 %v2462
      %v2559 = vunpack.c.l.b16 %v2463
      %v2560 = vunpack.c.l.b16 %v2464
      %v2561 = vunpack.c.l.b16 %v2465
      %v2562 = vunpack.c.l.b16 %v2466
      %v2563 = vunpack.c.l.b16 %v2467
      %v2564 = vunpack.c.l.b16 %v2468
      %v2565 = vunpack.c.l.b16 %v2469
      %v2566 = vunpack.c.l.b16 %v2470
      %v2567 = vunpack.c.l.b16 %v2471
      %v2568 = vunpack.c.l.b16 %v2472
      %v2569 = vunpack.c.l.b16 %v2473
      %v2570 = vunpack.c.l.b16 %v2474
      %v2571 = vunpack.c.l.b16 %v2475
      %v2572 = vunpack.c.l.b16 %v2476
      %v2573 = vunpack.c.l.b16 %v2477
      %v2574 = vunpack.c.l.b16 %v2478
      %v2575 = vunpack.c.l.b16 %v2479
      %v2576 = vunpack.c.l.b16 %v2480
      %v2577 = vunpack.c.l.b16 %v2481
      %v2578 = vunpack.c.l.b16 %v2482
      %v2579 = vunpack.c.l.b16 %v2483
      %v2580 = vunpack.c.l.b16 %v2484
      %v2581 = vunpack.c.l.b16 %v2485
      %v2582 = vunpack.c.l.b16 %v2486
      %v2583 = vunpack.c.l.b16 %v2487
      %v2584 = vpack.c.b16 %v2537, %v2536
      %v2585 = vpack.c.b16 %v2538, %v2538
      %v2586 = vpack.c.b16 %v2540, %v2539
      %v2587 = vpack.c.b16 %v2541, %v2541
      %v2588 = vpack.c.b16 %v2543, %v2542
      %v2589 = vpack.c.b16 %v2544, %v2544
      %v2590 = vpack.c.b16 %v2546, %v2545
      %v2591 = vpack.c.b16 %v2547, %v2547
      %v2592 = vpack.c.b16 %v2549, %v2548
      %v2593 = vpack.c.b16 %v2550, %v2550
      %v2594 = vpack.c.b16 %v2552, %v2551
      %v2595 = vpack.c.b16 %v2553, %v2553
      %v2596 = vpack.c.b16 %v2555, %v2554
      %v2597 = vpack.c.b16 %v2556, %v2556
      %v2598 = vpack.c.b16 %v2558, %v2557
      %v2599 = vpack.c.b16 %v2559, %v2559
      %v2600 = vpack.c.b16 %v2561, %v2560
      %v2601 = vpack.c.b16 %v2562, %v2562
      %v2602 = vpack.c.b16 %v2564, %v2563
      %v2603 = vpack.c.b16 %v2565, %v2565
      %v2604 = vpack.c.b16 %v2567, %v2566
      %v2605 = vpack.c.b16 %v2568, %v2568
      %v2606 = vpack.c.b16 %v2570, %v2569
      %v2607 = vpack.c.b16 %v2571, %v2571
      %v2608 = vpack.c.b16 %v2573, %v2572
      %v2609 = vpack.c.b16 %v2574, %v2574
      %v2610 = vpack.c.b16 %v2576, %v2575
      %v2611 = vpack.c.b16 %v2577, %v2577
      %v2612 = vpack.c.b16 %v2579, %v2578
      %v2613 = vpack.c.b16 %v2580, %v2580
      %v2614 = vpack.c.b16 %v2582, %v2581
      %v2615 = vpack.c.b16 %v2583, %v2583
      %v2616 = vrot.slane %v2584, 1
      %v2617 = vrot.slane %v2585, 1
      %v2618 = vsel %vm1716, %v2616, %v2617
      %v2619 = vrot.slane %v2586, 1
      %v2620 = vrot.slane %v2587, 1
      %v2621 = vsel %vm1716, %v2619, %v2620
      %v2622 = vrot.slane %v2588, 1
      %v2623 = vrot.slane %v2589, 1
      %v2624 = vsel %vm1716, %v2622, %v2623
      %v2625 = vrot.slane %v2590, 1
      %v2626 = vrot.slane %v2591, 1
      %v2627 = vsel %vm1716, %v2625, %v2626
      %v2628 = vrot.slane %v2592, 1
      %v2629 = vrot.slane %v2593, 1
      %v2630 = vsel %vm1716, %v2628, %v2629
      %v2631 = vrot.slane %v2594, 1
      %v2632 = vrot.slane %v2595, 1
      %v2633 = vsel %vm1716, %v2631, %v2632
      %v2634 = vrot.slane %v2596, 1
      %v2635 = vrot.slane %v2597, 1
      %v2636 = vsel %vm1716, %v2634, %v2635
      %v2637 = vrot.slane %v2598, 1
      %v2638 = vrot.slane %v2599, 1
      %v2639 = vsel %vm1716, %v2637, %v2638
      %v2640 = vrot.slane %v2600, 1
      %v2641 = vrot.slane %v2601, 1
      %v2642 = vsel %vm1716, %v2640, %v2641
      %v2643 = vrot.slane %v2602, 1
      %v2644 = vrot.slane %v2603, 1
      %v2645 = vsel %vm1716, %v2643, %v2644
      %v2646 = vrot.slane %v2604, 1
      %v2647 = vrot.slane %v2605, 1
      %v2648 = vsel %vm1716, %v2646, %v2647
      %v2649 = vrot.slane %v2606, 1
      %v2650 = vrot.slane %v2607, 1
      %v2651 = vsel %vm1716, %v2649, %v2650
      %v2652 = vrot.slane %v2608, 1
      %v2653 = vrot.slane %v2609, 1
      %v2654 = vsel %vm1716, %v2652, %v2653
      %v2655 = vrot.slane %v2610, 1
      %v2656 = vrot.slane %v2611, 1
      %v2657 = vsel %vm1716, %v2655, %v2656
      %v2658 = vrot.slane %v2612, 1
      %v2659 = vrot.slane %v2613, 1
      %v2660 = vsel %vm1716, %v2658, %v2659
      %v2661 = vrot.slane %v2614, 1
      %v2662 = vrot.slane %v2615, 1
      %v2663 = vsel %vm1716, %v2661, %v2662
      %2664 = vrot.lane.b32.xlu0 %v2618, 20
      %v2665 = vpop.permute.xlu0 %2664
      %2666 = vrot.lane.b32.xlu0 %v2621, 20
      %v2667 = vpop.permute.xlu0 %2666
      %2668 = vrot.lane.b32.xlu0 %v2624, 20
      %v2669 = vpop.permute.xlu0 %2668
      %2670 = vrot.lane.b32.xlu0 %v2627, 20
      %v2671 = vpop.permute.xlu0 %2670
      %2672 = vrot.lane.b32.xlu0 %v2630, 20
      %v2673 = vpop.permute.xlu0 %2672
      %2674 = vrot.lane.b32.xlu0 %v2633, 20
      %v2675 = vpop.permute.xlu0 %2674
      %2676 = vrot.lane.b32.xlu0 %v2636, 20
      %v2677 = vpop.permute.xlu0 %2676
      %2678 = vrot.lane.b32.xlu0 %v2639, 20
      %v2679 = vpop.permute.xlu0 %2678
      %2680 = vrot.lane.b32.xlu0 %v2642, 20
      %v2681 = vpop.permute.xlu0 %2680
      %2682 = vrot.lane.b32.xlu0 %v2645, 20
      %v2683 = vpop.permute.xlu0 %2682
      %2684 = vrot.lane.b32.xlu0 %v2648, 20
      %v2685 = vpop.permute.xlu0 %2684
      %2686 = vrot.lane.b32.xlu0 %v2651, 20
      %v2687 = vpop.permute.xlu0 %2686
      %2688 = vrot.lane.b32.xlu0 %v2654, 20
      %v2689 = vpop.permute.xlu0 %2688
      %2690 = vrot.lane.b32.xlu0 %v2657, 20
      %v2691 = vpop.permute.xlu0 %2690
      %2692 = vrot.lane.b32.xlu0 %v2660, 20
      %v2693 = vpop.permute.xlu0 %2692
      %2694 = vrot.lane.b32.xlu0 %v2663, 20
      %v2695 = vpop.permute.xlu0 %2694
      %vm2712 = vcmask 195744
      %2713 = vst.msk [vmem:[#allocation3] sm:$0xff] %vm2712, %v2665
      %2714 = vst.msk [vmem:[#allocation3 + $0x8] sm:$0xff] %vm2712, %v2667
      %2715 = vst.msk [vmem:[#allocation3 + $0x10] sm:$0xff] %vm2712, %v2669
      %2716 = vst.msk [vmem:[#allocation3 + $0x18] sm:$0xff] %vm2712, %v2671
      %2717 = vst.msk [vmem:[#allocation3 + $0x20] sm:$0xff] %vm2712, %v2673
      %2718 = vst.msk [vmem:[#allocation3 + $0x28] sm:$0xff] %vm2712, %v2675
      %2719 = vst.msk [vmem:[#allocation3 + $0x30] sm:$0xff] %vm2712, %v2677
      %2720 = vst.msk [vmem:[#allocation3 + $0x38] sm:$0xff] %vm2712, %v2679
      %2721 = vst.msk [vmem:[#allocation3 + $0x40] sm:$0xff] %vm2712, %v2681
      %2722 = vst.msk [vmem:[#allocation3 + $0x48] sm:$0xff] %vm2712, %v2683
      %2723 = vst.msk [vmem:[#allocation3 + $0x50] sm:$0xff] %vm2712, %v2685
      %2724 = vst.msk [vmem:[#allocation3 + $0x58] sm:$0xff] %vm2712, %v2687
      %2725 = vst.msk [vmem:[#allocation3 + $0x60] sm:$0xff] %vm2712, %v2689
      %2726 = vst.msk [vmem:[#allocation3 + $0x68] sm:$0xff] %vm2712, %v2691
      %2727 = vst.msk [vmem:[#allocation3 + $0x70] sm:$0xff] %vm2712, %v2693
      %2728 = vst.msk [vmem:[#allocation3 + $0x78] sm:$0xff] %vm2712, %v2695
      %s2729 = scalar_lea.vmem [#allocation2], 24
      %v2730 = vld [vmem:[%s2729] sm:$0xf]
      %v2731 = vld [vmem:[%s2729 + $0x4] sm:$0xf]
      %v2732 = vld [vmem:[%s2729 + $0xc] sm:$0xf]
      %v2733 = vld [vmem:[%s2729 + $0x10] sm:$0xf]
      %v2734 = vld [vmem:[%s2729 + $0x18] sm:$0xf]
      %v2735 = vld [vmem:[%s2729 + $0x1c] sm:$0xf]
      %v2736 = vld [vmem:[%s2729 + $0x24] sm:$0xf]
      %v2737 = vld [vmem:[%s2729 + $0x28] sm:$0xf]
      %v2738 = vld [vmem:[%s2729 + $0x30] sm:$0xf]
      %v2739 = vld [vmem:[%s2729 + $0x34] sm:$0xf]
      %v2740 = vld [vmem:[%s2729 + $0x3c] sm:$0xf]
      %v2741 = vld [vmem:[%s2729 + $0x40] sm:$0xf]
      %v2742 = vld [vmem:[%s2729 + $0x48] sm:$0xf]
      %v2743 = vld [vmem:[%s2729 + $0x4c] sm:$0xf]
      %v2744 = vld [vmem:[%s2729 + $0x54] sm:$0xf]
      %v2745 = vld [vmem:[%s2729 + $0x58] sm:$0xf]
      %v2746 = vld [vmem:[%s2729 + $0x60] sm:$0xf]
      %v2747 = vld [vmem:[%s2729 + $0x64] sm:$0xf]
      %v2748 = vld [vmem:[%s2729 + $0x6c] sm:$0xf]
      %v2749 = vld [vmem:[%s2729 + $0x70] sm:$0xf]
      %v2750 = vld [vmem:[%s2729 + $0x78] sm:$0xf]
      %v2751 = vld [vmem:[%s2729 + $0x7c] sm:$0xf]
      %v2752 = vld [vmem:[%s2729 + $0x84] sm:$0xf]
      %v2753 = vld [vmem:[%s2729 + $0x88] sm:$0xf]
      %v2754 = vld [vmem:[%s2729 + $0x90] sm:$0xf]
      %v2755 = vld [vmem:[%s2729 + $0x94] sm:$0xf]
      %v2756 = vld [vmem:[%s2729 + $0x9c] sm:$0xf]
      %v2757 = vld [vmem:[%s2729 + $0xa0] sm:$0xf]
      %v2758 = vld [vmem:[%s2729 + $0xa8] sm:$0xf]
      %v2759 = vld [vmem:[%s2729 + $0xac] sm:$0xf]
      %v2760 = vld [vmem:[%s2729 + $0xb4] sm:$0xf]
      %v2761 = vld [vmem:[%s2729 + $0xb8] sm:$0xf]
      %v2794 = vunpack.c.l.b16 %v2730
      %v2795 = vunpack.c.l.b16 %v2731
      %v2796 = vunpack.c.l.b16 %v2732
      %v2797 = vunpack.c.l.b16 %v2733
      %v2798 = vunpack.c.l.b16 %v2734
      %v2799 = vunpack.c.l.b16 %v2735
      %v2800 = vunpack.c.l.b16 %v2736
      %v2801 = vunpack.c.l.b16 %v2737
      %v2802 = vunpack.c.l.b16 %v2738
      %v2803 = vunpack.c.l.b16 %v2739
      %v2804 = vunpack.c.l.b16 %v2740
      %v2805 = vunpack.c.l.b16 %v2741
      %v2806 = vunpack.c.l.b16 %v2742
      %v2807 = vunpack.c.l.b16 %v2743
      %v2808 = vunpack.c.l.b16 %v2744
      %v2809 = vunpack.c.l.b16 %v2745
      %v2810 = vunpack.c.l.b16 %v2746
      %v2811 = vunpack.c.l.b16 %v2747
      %v2812 = vunpack.c.l.b16 %v2748
      %v2813 = vunpack.c.l.b16 %v2749
      %v2814 = vunpack.c.l.b16 %v2750
      %v2815 = vunpack.c.l.b16 %v2751
      %v2816 = vunpack.c.l.b16 %v2752
      %v2817 = vunpack.c.l.b16 %v2753
      %v2818 = vunpack.c.l.b16 %v2754
      %v2819 = vunpack.c.l.b16 %v2755
      %v2820 = vunpack.c.l.b16 %v2756
      %v2821 = vunpack.c.l.b16 %v2757
      %v2822 = vunpack.c.l.b16 %v2758
      %v2823 = vunpack.c.l.b16 %v2759
      %v2824 = vunpack.c.l.b16 %v2760
      %v2825 = vunpack.c.l.b16 %v2761
      %v2826 = vpack.c.b16 %v2795, %v2794
      %v2827 = vpack.c.b16 %v2797, %v2796
      %v2828 = vpack.c.b16 %v2799, %v2798
      %v2829 = vpack.c.b16 %v2801, %v2800
      %v2830 = vpack.c.b16 %v2803, %v2802
      %v2831 = vpack.c.b16 %v2805, %v2804
      %v2832 = vpack.c.b16 %v2807, %v2806
      %v2833 = vpack.c.b16 %v2809, %v2808
      %v2834 = vpack.c.b16 %v2811, %v2810
      %v2835 = vpack.c.b16 %v2813, %v2812
      %v2836 = vpack.c.b16 %v2815, %v2814
      %v2837 = vpack.c.b16 %v2817, %v2816
      %v2838 = vpack.c.b16 %v2819, %v2818
      %v2839 = vpack.c.b16 %v2821, %v2820
      %v2840 = vpack.c.b16 %v2823, %v2822
      %v2841 = vpack.c.b16 %v2825, %v2824
      %2842 = vrot.lane.b32.xlu0 %v2826, 24
      %v2843 = vpop.permute.xlu0 %2842
      %2844 = vrot.lane.b32.xlu0 %v2827, 24
      %v2845 = vpop.permute.xlu0 %2844
      %2846 = vrot.lane.b32.xlu0 %v2828, 24
      %v2847 = vpop.permute.xlu0 %2846
      %2848 = vrot.lane.b32.xlu0 %v2829, 24
      %v2849 = vpop.permute.xlu0 %2848
      %2850 = vrot.lane.b32.xlu0 %v2830, 24
      %v2851 = vpop.permute.xlu0 %2850
      %2852 = vrot.lane.b32.xlu0 %v2831, 24
      %v2853 = vpop.permute.xlu0 %2852
      %2854 = vrot.lane.b32.xlu0 %v2832, 24
      %v2855 = vpop.permute.xlu0 %2854
      %2856 = vrot.lane.b32.xlu0 %v2833, 24
      %v2857 = vpop.permute.xlu0 %2856
      %2858 = vrot.lane.b32.xlu0 %v2834, 24
      %v2859 = vpop.permute.xlu0 %2858
      %2860 = vrot.lane.b32.xlu0 %v2835, 24
      %v2861 = vpop.permute.xlu0 %2860
      %2862 = vrot.lane.b32.xlu0 %v2836, 24
      %v2863 = vpop.permute.xlu0 %2862
      %2864 = vrot.lane.b32.xlu0 %v2837, 24
      %v2865 = vpop.permute.xlu0 %2864
      %2866 = vrot.lane.b32.xlu0 %v2838, 24
      %v2867 = vpop.permute.xlu0 %2866
      %2868 = vrot.lane.b32.xlu0 %v2839, 24
      %v2869 = vpop.permute.xlu0 %2868
      %2870 = vrot.lane.b32.xlu0 %v2840, 24
      %v2871 = vpop.permute.xlu0 %2870
      %2872 = vrot.lane.b32.xlu0 %v2841, 24
      %v2873 = vpop.permute.xlu0 %2872
      %vm2890 = vcmask 228544
      %2891 = vst.msk [vmem:[#allocation3] sm:$0xff] %vm2890, %v2843
      %2892 = vst.msk [vmem:[#allocation3 + $0x8] sm:$0xff] %vm2890, %v2845
      %2893 = vst.msk [vmem:[#allocation3 + $0x10] sm:$0xff] %vm2890, %v2847
      %2894 = vst.msk [vmem:[#allocation3 + $0x18] sm:$0xff] %vm2890, %v2849
      %2895 = vst.msk [vmem:[#allocation3 + $0x20] sm:$0xff] %vm2890, %v2851
      %2896 = vst.msk [vmem:[#allocation3 + $0x28] sm:$0xff] %vm2890, %v2853
      %2897 = vst.msk [vmem:[#allocation3 + $0x30] sm:$0xff] %vm2890, %v2855
      %2898 = vst.msk [vmem:[#allocation3 + $0x38] sm:$0xff] %vm2890, %v2857
      %2899 = vst.msk [vmem:[#allocation3 + $0x40] sm:$0xff] %vm2890, %v2859
      %2900 = vst.msk [vmem:[#allocation3 + $0x48] sm:$0xff] %vm2890, %v2861
      %2901 = vst.msk [vmem:[#allocation3 + $0x50] sm:$0xff] %vm2890, %v2863
      %2902 = vst.msk [vmem:[#allocation3 + $0x58] sm:$0xff] %vm2890, %v2865
      %2903 = vst.msk [vmem:[#allocation3 + $0x60] sm:$0xff] %vm2890, %v2867
      %2904 = vst.msk [vmem:[#allocation3 + $0x68] sm:$0xff] %vm2890, %v2869
      %2905 = vst.msk [vmem:[#allocation3 + $0x70] sm:$0xff] %vm2890, %v2871
      %2906 = vst.msk [vmem:[#allocation3 + $0x78] sm:$0xff] %vm2890, %v2873
      %v2907 = vld [vmem:[%s2729] sm:$0xf]
      %v2908 = vld [vmem:[%s2729 + $0x4] sm:$0xf]
      %v2909 = vld [vmem:[%s2729 + $0x8] sm:$0x1]
      %v2910 = vld [vmem:[%s2729 + $0xc] sm:$0xf]
      %v2911 = vld [vmem:[%s2729 + $0x10] sm:$0xf]
      %v2912 = vld [vmem:[%s2729 + $0x14] sm:$0x1]
      %v2913 = vld [vmem:[%s2729 + $0x18] sm:$0xf]
      %v2914 = vld [vmem:[%s2729 + $0x1c] sm:$0xf]
      %v2915 = vld [vmem:[%s2729 + $0x20] sm:$0x1]
      %v2916 = vld [vmem:[%s2729 + $0x24] sm:$0xf]
      %v2917 = vld [vmem:[%s2729 + $0x28] sm:$0xf]
      %v2918 = vld [vmem:[%s2729 + $0x2c] sm:$0x1]
      %v2919 = vld [vmem:[%s2729 + $0x30] sm:$0xf]
      %v2920 = vld [vmem:[%s2729 + $0x34] sm:$0xf]
      %v2921 = vld [vmem:[%s2729 + $0x38] sm:$0x1]
      %v2922 = vld [vmem:[%s2729 + $0x3c] sm:$0xf]
      %v2923 = vld [vmem:[%s2729 + $0x40] sm:$0xf]
      %v2924 = vld [vmem:[%s2729 + $0x44] sm:$0x1]
      %v2925 = vld [vmem:[%s2729 + $0x48] sm:$0xf]
      %v2926 = vld [vmem:[%s2729 + $0x4c] sm:$0xf]
      %v2927 = vld [vmem:[%s2729 + $0x50] sm:$0x1]
      %v2928 = vld [vmem:[%s2729 + $0x54] sm:$0xf]
      %v2929 = vld [vmem:[%s2729 + $0x58] sm:$0xf]
      %v2930 = vld [vmem:[%s2729 + $0x5c] sm:$0x1]
      %v2931 = vld [vmem:[%s2729 + $0x60] sm:$0xf]
      %v2932 = vld [vmem:[%s2729 + $0x64] sm:$0xf]
      %v2933 = vld [vmem:[%s2729 + $0x68] sm:$0x1]
      %v2934 = vld [vmem:[%s2729 + $0x6c] sm:$0xf]
      %v2935 = vld [vmem:[%s2729 + $0x70] sm:$0xf]
      %v2936 = vld [vmem:[%s2729 + $0x74] sm:$0x1]
      %v2937 = vld [vmem:[%s2729 + $0x78] sm:$0xf]
      %v2938 = vld [vmem:[%s2729 + $0x7c] sm:$0xf]
      %v2939 = vld [vmem:[%s2729 + $0x80] sm:$0x1]
      %v2940 = vld [vmem:[%s2729 + $0x84] sm:$0xf]
      %v2941 = vld [vmem:[%s2729 + $0x88] sm:$0xf]
      %v2942 = vld [vmem:[%s2729 + $0x8c] sm:$0x1]
      %v2943 = vld [vmem:[%s2729 + $0x90] sm:$0xf]
      %v2944 = vld [vmem:[%s2729 + $0x94] sm:$0xf]
      %v2945 = vld [vmem:[%s2729 + $0x98] sm:$0x1]
      %v2946 = vld [vmem:[%s2729 + $0x9c] sm:$0xf]
      %v2947 = vld [vmem:[%s2729 + $0xa0] sm:$0xf]
      %v2948 = vld [vmem:[%s2729 + $0xa4] sm:$0x1]
      %v2949 = vld [vmem:[%s2729 + $0xa8] sm:$0xf]
      %v2950 = vld [vmem:[%s2729 + $0xac] sm:$0xf]
      %v2951 = vld [vmem:[%s2729 + $0xb0] sm:$0x1]
      %v2952 = vld [vmem:[%s2729 + $0xb4] sm:$0xf]
      %v2953 = vld [vmem:[%s2729 + $0xb8] sm:$0xf]
      %v2954 = vld [vmem:[%s2729 + $0xbc] sm:$0x1]
      %v3003 = vunpack.c.l.b16 %v2907
      %v3004 = vunpack.c.l.b16 %v2908
      %v3005 = vunpack.c.l.b16 %v2909
      %v3006 = vunpack.c.l.b16 %v2910
      %v3007 = vunpack.c.l.b16 %v2911
      %v3008 = vunpack.c.l.b16 %v2912
      %v3009 = vunpack.c.l.b16 %v2913
      %v3010 = vunpack.c.l.b16 %v2914
      %v3011 = vunpack.c.l.b16 %v2915
      %v3012 = vunpack.c.l.b16 %v2916
      %v3013 = vunpack.c.l.b16 %v2917
      %v3014 = vunpack.c.l.b16 %v2918
      %v3015 = vunpack.c.l.b16 %v2919
      %v3016 = vunpack.c.l.b16 %v2920
      %v3017 = vunpack.c.l.b16 %v2921
      %v3018 = vunpack.c.l.b16 %v2922
      %v3019 = vunpack.c.l.b16 %v2923
      %v3020 = vunpack.c.l.b16 %v2924
      %v3021 = vunpack.c.l.b16 %v2925
      %v3022 = vunpack.c.l.b16 %v2926
      %v3023 = vunpack.c.l.b16 %v2927
      %v3024 = vunpack.c.l.b16 %v2928
      %v3025 = vunpack.c.l.b16 %v2929
      %v3026 = vunpack.c.l.b16 %v2930
      %v3027 = vunpack.c.l.b16 %v2931
      %v3028 = vunpack.c.l.b16 %v2932
      %v3029 = vunpack.c.l.b16 %v2933
      %v3030 = vunpack.c.l.b16 %v2934
      %v3031 = vunpack.c.l.b16 %v2935
      %v3032 = vunpack.c.l.b16 %v2936
      %v3033 = vunpack.c.l.b16 %v2937
      %v3034 = vunpack.c.l.b16 %v2938
      %v3035 = vunpack.c.l.b16 %v2939
      %v3036 = vunpack.c.l.b16 %v2940
      %v3037 = vunpack.c.l.b16 %v2941
      %v3038 = vunpack.c.l.b16 %v2942
      %v3039 = vunpack.c.l.b16 %v2943
      %v3040 = vunpack.c.l.b16 %v2944
      %v3041 = vunpack.c.l.b16 %v2945
      %v3042 = vunpack.c.l.b16 %v2946
      %v3043 = vunpack.c.l.b16 %v2947
      %v3044 = vunpack.c.l.b16 %v2948
      %v3045 = vunpack.c.l.b16 %v2949
      %v3046 = vunpack.c.l.b16 %v2950
      %v3047 = vunpack.c.l.b16 %v2951
      %v3048 = vunpack.c.l.b16 %v2952
      %v3049 = vunpack.c.l.b16 %v2953
      %v3050 = vunpack.c.l.b16 %v2954
      %v3051 = vpack.c.b16 %v3004, %v3003
      %v3052 = vpack.c.b16 %v3005, %v3005
      %v3053 = vpack.c.b16 %v3007, %v3006
      %v3054 = vpack.c.b16 %v3008, %v3008
      %v3055 = vpack.c.b16 %v3010, %v3009
      %v3056 = vpack.c.b16 %v3011, %v3011
      %v3057 = vpack.c.b16 %v3013, %v3012
      %v3058 = vpack.c.b16 %v3014, %v3014
      %v3059 = vpack.c.b16 %v3016, %v3015
      %v3060 = vpack.c.b16 %v3017, %v3017
      %v3061 = vpack.c.b16 %v3019, %v3018
      %v3062 = vpack.c.b16 %v3020, %v3020
      %v3063 = vpack.c.b16 %v3022, %v3021
      %v3064 = vpack.c.b16 %v3023, %v3023
      %v3065 = vpack.c.b16 %v3025, %v3024
      %v3066 = vpack.c.b16 %v3026, %v3026
      %v3067 = vpack.c.b16 %v3028, %v3027
      %v3068 = vpack.c.b16 %v3029, %v3029
      %v3069 = vpack.c.b16 %v3031, %v3030
      %v3070 = vpack.c.b16 %v3032, %v3032
      %v3071 = vpack.c.b16 %v3034, %v3033
      %v3072 = vpack.c.b16 %v3035, %v3035
      %v3073 = vpack.c.b16 %v3037, %v3036
      %v3074 = vpack.c.b16 %v3038, %v3038
      %v3075 = vpack.c.b16 %v3040, %v3039
      %v3076 = vpack.c.b16 %v3041, %v3041
      %v3077 = vpack.c.b16 %v3043, %v3042
      %v3078 = vpack.c.b16 %v3044, %v3044
      %v3079 = vpack.c.b16 %v3046, %v3045
      %v3080 = vpack.c.b16 %v3047, %v3047
      %v3081 = vpack.c.b16 %v3049, %v3048
      %v3082 = vpack.c.b16 %v3050, %v3050
      %v3084 = vshrl.u32 %v3051, 16
      %v3086 = vshll.u32 %v3051, 16
      %v3088 = vrot.slane %v3086, 1
      %v3089 = vor.u32 %v3084, %v3088
      %v3091 = vshll.u32 %v3052, 16
      %v3093 = vrot.slane %v3091, 1
      %v3094 = vsel %vm1282, %v3089, %v3093
      %v3096 = vshrl.u32 %v3053, 16
      %v3098 = vshll.u32 %v3053, 16
      %v3100 = vrot.slane %v3098, 1
      %v3101 = vor.u32 %v3096, %v3100
      %v3103 = vshll.u32 %v3054, 16
      %v3105 = vrot.slane %v3103, 1
      %v3106 = vsel %vm1282, %v3101, %v3105
      %v3108 = vshrl.u32 %v3055, 16
      %v3110 = vshll.u32 %v3055, 16
      %v3112 = vrot.slane %v3110, 1
      %v3113 = vor.u32 %v3108, %v3112
      %v3115 = vshll.u32 %v3056, 16
      %v3117 = vrot.slane %v3115, 1
      %v3118 = vsel %vm1282, %v3113, %v3117
      %v3120 = vshrl.u32 %v3057, 16
      %v3122 = vshll.u32 %v3057, 16
      %v3124 = vrot.slane %v3122, 1
      %v3125 = vor.u32 %v3120, %v3124
      %v3127 = vshll.u32 %v3058, 16
      %v3129 = vrot.slane %v3127, 1
      %v3130 = vsel %vm1282, %v3125, %v3129
      %v3132 = vshrl.u32 %v3059, 16
      %v3134 = vshll.u32 %v3059, 16
      %v3136 = vrot.slane %v3134, 1
      %v3137 = vor.u32 %v3132, %v3136
      %v3139 = vshll.u32 %v3060, 16
      %v3141 = vrot.slane %v3139, 1
      %v3142 = vsel %vm1282, %v3137, %v3141
      %v3144 = vshrl.u32 %v3061, 16
      %v3146 = vshll.u32 %v3061, 16
      %v3148 = vrot.slane %v3146, 1
      %v3149 = vor.u32 %v3144, %v3148
      %v3151 = vshll.u32 %v3062, 16
      %v3153 = vrot.slane %v3151, 1
      %v3154 = vsel %vm1282, %v3149, %v3153
      %v3156 = vshrl.u32 %v3063, 16
      %v3158 = vshll.u32 %v3063, 16
      %v3160 = vrot.slane %v3158, 1
      %v3161 = vor.u32 %v3156, %v3160
      %v3163 = vshll.u32 %v3064, 16
      %v3165 = vrot.slane %v3163, 1
      %v3166 = vsel %vm1282, %v3161, %v3165
      %v3168 = vshrl.u32 %v3065, 16
      %v3170 = vshll.u32 %v3065, 16
      %v3172 = vrot.slane %v3170, 1
      %v3173 = vor.u32 %v3168, %v3172
      %v3175 = vshll.u32 %v3066, 16
      %v3177 = vrot.slane %v3175, 1
      %v3178 = vsel %vm1282, %v3173, %v3177
      %v3180 = vshrl.u32 %v3067, 16
      %v3182 = vshll.u32 %v3067, 16
      %v3184 = vrot.slane %v3182, 1
      %v3185 = vor.u32 %v3180, %v3184
      %v3187 = vshll.u32 %v3068, 16
      %v3189 = vrot.slane %v3187, 1
      %v3190 = vsel %vm1282, %v3185, %v3189
      %v3192 = vshrl.u32 %v3069, 16
      %v3194 = vshll.u32 %v3069, 16
      %v3196 = vrot.slane %v3194, 1
      %v3197 = vor.u32 %v3192, %v3196
      %v3199 = vshll.u32 %v3070, 16
      %v3201 = vrot.slane %v3199, 1
      %v3202 = vsel %vm1282, %v3197, %v3201
      %v3204 = vshrl.u32 %v3071, 16
      %v3206 = vshll.u32 %v3071, 16
      %v3208 = vrot.slane %v3206, 1
      %v3209 = vor.u32 %v3204, %v3208
      %v3211 = vshll.u32 %v3072, 16
      %v3213 = vrot.slane %v3211, 1
      %v3214 = vsel %vm1282, %v3209, %v3213
      %v3216 = vshrl.u32 %v3073, 16
      %v3218 = vshll.u32 %v3073, 16
      %v3220 = vrot.slane %v3218, 1
      %v3221 = vor.u32 %v3216, %v3220
      %v3223 = vshll.u32 %v3074, 16
      %v3225 = vrot.slane %v3223, 1
      %v3226 = vsel %vm1282, %v3221, %v3225
      %v3228 = vshrl.u32 %v3075, 16
      %v3230 = vshll.u32 %v3075, 16
      %v3232 = vrot.slane %v3230, 1
      %v3233 = vor.u32 %v3228, %v3232
      %v3235 = vshll.u32 %v3076, 16
      %v3237 = vrot.slane %v3235, 1
      %v3238 = vsel %vm1282, %v3233, %v3237
      %v3240 = vshrl.u32 %v3077, 16
      %v3242 = vshll.u32 %v3077, 16
      %v3244 = vrot.slane %v3242, 1
      %v3245 = vor.u32 %v3240, %v3244
      %v3247 = vshll.u32 %v3078, 16
      %v3249 = vrot.slane %v3247, 1
      %v3250 = vsel %vm1282, %v3245, %v3249
      %v3252 = vshrl.u32 %v3079, 16
      %v3254 = vshll.u32 %v3079, 16
      %v3256 = vrot.slane %v3254, 1
      %v3257 = vor.u32 %v3252, %v3256
      %v3259 = vshll.u32 %v3080, 16
      %v3261 = vrot.slane %v3259, 1
      %v3262 = vsel %vm1282, %v3257, %v3261
      %v3264 = vshrl.u32 %v3081, 16
      %v3266 = vshll.u32 %v3081, 16
      %v3268 = vrot.slane %v3266, 1
      %v3269 = vor.u32 %v3264, %v3268
      %v3271 = vshll.u32 %v3082, 16
      %v3273 = vrot.slane %v3271, 1
      %v3274 = vsel %vm1282, %v3269, %v3273
      %3275 = vrot.lane.b32.xlu0 %v3094, 28
      %v3276 = vpop.permute.xlu0 %3275
      %3277 = vrot.lane.b32.xlu0 %v3106, 28
      %v3278 = vpop.permute.xlu0 %3277
      %3279 = vrot.lane.b32.xlu0 %v3118, 28
      %v3280 = vpop.permute.xlu0 %3279
      %3281 = vrot.lane.b32.xlu0 %v3130, 28
      %v3282 = vpop.permute.xlu0 %3281
      %3283 = vrot.lane.b32.xlu0 %v3142, 28
      %v3284 = vpop.permute.xlu0 %3283
      %3285 = vrot.lane.b32.xlu0 %v3154, 28
      %v3286 = vpop.permute.xlu0 %3285
      %3287 = vrot.lane.b32.xlu0 %v3166, 28
      %v3288 = vpop.permute.xlu0 %3287
      %3289 = vrot.lane.b32.xlu0 %v3178, 28
      %v3290 = vpop.permute.xlu0 %3289
      %3291 = vrot.lane.b32.xlu0 %v3190, 28
      %v3292 = vpop.permute.xlu0 %3291
      %3293 = vrot.lane.b32.xlu0 %v3202, 28
      %v3294 = vpop.permute.xlu0 %3293
      %3295 = vrot.lane.b32.xlu0 %v3214, 28
      %v3296 = vpop.permute.xlu0 %3295
      %3297 = vrot.lane.b32.xlu0 %v3226, 28
      %v3298 = vpop.permute.xlu0 %3297
      %3299 = vrot.lane.b32.xlu0 %v3238, 28
      %v3300 = vpop.permute.xlu0 %3299
      %3301 = vrot.lane.b32.xlu0 %v3250, 28
      %v3302 = vpop.permute.xlu0 %3301
      %3303 = vrot.lane.b32.xlu0 %v3262, 28
      %v3304 = vpop.permute.xlu0 %3303
      %3305 = vrot.lane.b32.xlu0 %v3274, 28
      %v3306 = vpop.permute.xlu0 %3305
      %vm3323 = vcmask 261344
      %3324 = vst.msk [vmem:[#allocation3] sm:$0xff] %vm3323, %v3276
      %3325 = vst.msk [vmem:[#allocation3 + $0x8] sm:$0xff] %vm3323, %v3278
      %3326 = vst.msk [vmem:[#allocation3 + $0x10] sm:$0xff] %vm3323, %v3280
      %3327 = vst.msk [vmem:[#allocation3 + $0x18] sm:$0xff] %vm3323, %v3282
      %3328 = vst.msk [vmem:[#allocation3 + $0x20] sm:$0xff] %vm3323, %v3284
      %3329 = vst.msk [vmem:[#allocation3 + $0x28] sm:$0xff] %vm3323, %v3286
      %3330 = vst.msk [vmem:[#allocation3 + $0x30] sm:$0xff] %vm3323, %v3288
      %3331 = vst.msk [vmem:[#allocation3 + $0x38] sm:$0xff] %vm3323, %v3290
      %3332 = vst.msk [vmem:[#allocation3 + $0x40] sm:$0xff] %vm3323, %v3292
      %3333 = vst.msk [vmem:[#allocation3 + $0x48] sm:$0xff] %vm3323, %v3294
      %3334 = vst.msk [vmem:[#allocation3 + $0x50] sm:$0xff] %vm3323, %v3296
      %3335 = vst.msk [vmem:[#allocation3 + $0x58] sm:$0xff] %vm3323, %v3298
      %3336 = vst.msk [vmem:[#allocation3 + $0x60] sm:$0xff] %vm3323, %v3300
      %3337 = vst.msk [vmem:[#allocation3 + $0x68] sm:$0xff] %vm3323, %v3302
      %3338 = vst.msk [vmem:[#allocation3 + $0x70] sm:$0xff] %vm3323, %v3304
      %3339 = vst.msk [vmem:[#allocation3 + $0x78] sm:$0xff] %vm3323, %v3306
      %v3340 = vld [vmem:[%s2729] sm:$0xe]
      %v3341 = vld [vmem:[%s2729 + $0x4] sm:$0xf]
      %v3342 = vld [vmem:[%s2729 + $0x8] sm:$0x1]
      %v3343 = vld [vmem:[%s2729 + $0xc] sm:$0xe]
      %v3344 = vld [vmem:[%s2729 + $0x10] sm:$0xf]
      %v3345 = vld [vmem:[%s2729 + $0x14] sm:$0x1]
      %v3346 = vld [vmem:[%s2729 + $0x18] sm:$0xe]
      %v3347 = vld [vmem:[%s2729 + $0x1c] sm:$0xf]
      %v3348 = vld [vmem:[%s2729 + $0x20] sm:$0x1]
      %v3349 = vld [vmem:[%s2729 + $0x24] sm:$0xe]
      %v3350 = vld [vmem:[%s2729 + $0x28] sm:$0xf]
      %v3351 = vld [vmem:[%s2729 + $0x2c] sm:$0x1]
      %v3352 = vld [vmem:[%s2729 + $0x30] sm:$0xe]
      %v3353 = vld [vmem:[%s2729 + $0x34] sm:$0xf]
      %v3354 = vld [vmem:[%s2729 + $0x38] sm:$0x1]
      %v3355 = vld [vmem:[%s2729 + $0x3c] sm:$0xe]
      %v3356 = vld [vmem:[%s2729 + $0x40] sm:$0xf]
      %v3357 = vld [vmem:[%s2729 + $0x44] sm:$0x1]
      %v3358 = vld [vmem:[%s2729 + $0x48] sm:$0xe]
      %v3359 = vld [vmem:[%s2729 + $0x4c] sm:$0xf]
      %v3360 = vld [vmem:[%s2729 + $0x50] sm:$0x1]
      %v3361 = vld [vmem:[%s2729 + $0x54] sm:$0xe]
      %v3362 = vld [vmem:[%s2729 + $0x58] sm:$0xf]
      %v3363 = vld [vmem:[%s2729 + $0x5c] sm:$0x1]
      %v3364 = vld [vmem:[%s2729 + $0x60] sm:$0xe]
      %v3365 = vld [vmem:[%s2729 + $0x64] sm:$0xf]
      %v3366 = vld [vmem:[%s2729 + $0x68] sm:$0x1]
      %v3367 = vld [vmem:[%s2729 + $0x6c] sm:$0xe]
      %v3368 = vld [vmem:[%s2729 + $0x70] sm:$0xf]
      %v3369 = vld [vmem:[%s2729 + $0x74] sm:$0x1]
      %v3370 = vld [vmem:[%s2729 + $0x78] sm:$0xe]
      %v3371 = vld [vmem:[%s2729 + $0x7c] sm:$0xf]
      %v3372 = vld [vmem:[%s2729 + $0x80] sm:$0x1]
      %v3373 = vld [vmem:[%s2729 + $0x84] sm:$0xe]
      %v3374 = vld [vmem:[%s2729 + $0x88] sm:$0xf]
      %v3375 = vld [vmem:[%s2729 + $0x8c] sm:$0x1]
      %v3376 = vld [vmem:[%s2729 + $0x90] sm:$0xe]
      %v3377 = vld [vmem:[%s2729 + $0x94] sm:$0xf]
      %v3378 = vld [vmem:[%s2729 + $0x98] sm:$0x1]
      %v3379 = vld [vmem:[%s2729 + $0x9c] sm:$0xe]
      %v3380 = vld [vmem:[%s2729 + $0xa0] sm:$0xf]
      %v3381 = vld [vmem:[%s2729 + $0xa4] sm:$0x1]
      %v3382 = vld [vmem:[%s2729 + $0xa8] sm:$0xe]
      %v3383 = vld [vmem:[%s2729 + $0xac] sm:$0xf]
      %v3384 = vld [vmem:[%s2729 + $0xb0] sm:$0x1]
      %v3385 = vld [vmem:[%s2729 + $0xb4] sm:$0xe]
      %v3386 = vld [vmem:[%s2729 + $0xb8] sm:$0xf]
      %v3387 = vld [vmem:[%s2729 + $0xbc] sm:$0x1]
      %v3436 = vunpack.c.l.b16 %v3340
      %v3437 = vunpack.c.l.b16 %v3341
      %v3438 = vunpack.c.l.b16 %v3342
      %v3439 = vunpack.c.l.b16 %v3343
      %v3440 = vunpack.c.l.b16 %v3344
      %v3441 = vunpack.c.l.b16 %v3345
      %v3442 = vunpack.c.l.b16 %v3346
      %v3443 = vunpack.c.l.b16 %v3347
      %v3444 = vunpack.c.l.b16 %v3348
      %v3445 = vunpack.c.l.b16 %v3349
      %v3446 = vunpack.c.l.b16 %v3350
      %v3447 = vunpack.c.l.b16 %v3351
      %v3448 = vunpack.c.l.b16 %v3352
      %v3449 = vunpack.c.l.b16 %v3353
      %v3450 = vunpack.c.l.b16 %v3354
      %v3451 = vunpack.c.l.b16 %v3355
      %v3452 = vunpack.c.l.b16 %v3356
      %v3453 = vunpack.c.l.b16 %v3357
      %v3454 = vunpack.c.l.b16 %v3358
      %v3455 = vunpack.c.l.b16 %v3359
      %v3456 = vunpack.c.l.b16 %v3360
      %v3457 = vunpack.c.l.b16 %v3361
      %v3458 = vunpack.c.l.b16 %v3362
      %v3459 = vunpack.c.l.b16 %v3363
      %v3460 = vunpack.c.l.b16 %v3364
      %v3461 = vunpack.c.l.b16 %v3365
      %v3462 = vunpack.c.l.b16 %v3366
      %v3463 = vunpack.c.l.b16 %v3367
      %v3464 = vunpack.c.l.b16 %v3368
      %v3465 = vunpack.c.l.b16 %v3369
      %v3466 = vunpack.c.l.b16 %v3370
      %v3467 = vunpack.c.l.b16 %v3371
      %v3468 = vunpack.c.l.b16 %v3372
      %v3469 = vunpack.c.l.b16 %v3373
      %v3470 = vunpack.c.l.b16 %v3374
      %v3471 = vunpack.c.l.b16 %v3375
      %v3472 = vunpack.c.l.b16 %v3376
      %v3473 = vunpack.c.l.b16 %v3377
      %v3474 = vunpack.c.l.b16 %v3378
      %v3475 = vunpack.c.l.b16 %v3379
      %v3476 = vunpack.c.l.b16 %v3380
      %v3477 = vunpack.c.l.b16 %v3381
      %v3478 = vunpack.c.l.b16 %v3382
      %v3479 = vunpack.c.l.b16 %v3383
      %v3480 = vunpack.c.l.b16 %v3384
      %v3481 = vunpack.c.l.b16 %v3385
      %v3482 = vunpack.c.l.b16 %v3386
      %v3483 = vunpack.c.l.b16 %v3387
      %v3484 = vpack.c.b16 %v3437, %v3436
      %v3485 = vpack.c.b16 %v3438, %v3438
      %v3486 = vpack.c.b16 %v3440, %v3439
      %v3487 = vpack.c.b16 %v3441, %v3441
      %v3488 = vpack.c.b16 %v3443, %v3442
      %v3489 = vpack.c.b16 %v3444, %v3444
      %v3490 = vpack.c.b16 %v3446, %v3445
      %v3491 = vpack.c.b16 %v3447, %v3447
      %v3492 = vpack.c.b16 %v3449, %v3448
      %v3493 = vpack.c.b16 %v3450, %v3450
      %v3494 = vpack.c.b16 %v3452, %v3451
      %v3495 = vpack.c.b16 %v3453, %v3453
      %v3496 = vpack.c.b16 %v3455, %v3454
      %v3497 = vpack.c.b16 %v3456, %v3456
      %v3498 = vpack.c.b16 %v3458, %v3457
      %v3499 = vpack.c.b16 %v3459, %v3459
      %v3500 = vpack.c.b16 %v3461, %v3460
      %v3501 = vpack.c.b16 %v3462, %v3462
      %v3502 = vpack.c.b16 %v3464, %v3463
      %v3503 = vpack.c.b16 %v3465, %v3465
      %v3504 = vpack.c.b16 %v3467, %v3466
      %v3505 = vpack.c.b16 %v3468, %v3468
      %v3506 = vpack.c.b16 %v3470, %v3469
      %v3507 = vpack.c.b16 %v3471, %v3471
      %v3508 = vpack.c.b16 %v3473, %v3472
      %v3509 = vpack.c.b16 %v3474, %v3474
      %v3510 = vpack.c.b16 %v3476, %v3475
      %v3511 = vpack.c.b16 %v3477, %v3477
      %v3512 = vpack.c.b16 %v3479, %v3478
      %v3513 = vpack.c.b16 %v3480, %v3480
      %v3514 = vpack.c.b16 %v3482, %v3481
      %v3515 = vpack.c.b16 %v3483, %v3483
      %v3516 = vrot.slane %v3484, 1
      %v3517 = vrot.slane %v3485, 1
      %v3518 = vsel %vm1716, %v3516, %v3517
      %v3519 = vrot.slane %v3486, 1
      %v3520 = vrot.slane %v3487, 1
      %v3521 = vsel %vm1716, %v3519, %v3520
      %v3522 = vrot.slane %v3488, 1
      %v3523 = vrot.slane %v3489, 1
      %v3524 = vsel %vm1716, %v3522, %v3523
      %v3525 = vrot.slane %v3490, 1
      %v3526 = vrot.slane %v3491, 1
      %v3527 = vsel %vm1716, %v3525, %v3526
      %v3528 = vrot.slane %v3492, 1
      %v3529 = vrot.slane %v3493, 1
      %v3530 = vsel %vm1716, %v3528, %v3529
      %v3531 = vrot.slane %v3494, 1
      %v3532 = vrot.slane %v3495, 1
      %v3533 = vsel %vm1716, %v3531, %v3532
      %v3534 = vrot.slane %v3496, 1
      %v3535 = vrot.slane %v3497, 1
      %v3536 = vsel %vm1716, %v3534, %v3535
      %v3537 = vrot.slane %v3498, 1
      %v3538 = vrot.slane %v3499, 1
      %v3539 = vsel %vm1716, %v3537, %v3538
      %v3540 = vrot.slane %v3500, 1
      %v3541 = vrot.slane %v3501, 1
      %v3542 = vsel %vm1716, %v3540, %v3541
      %v3543 = vrot.slane %v3502, 1
      %v3544 = vrot.slane %v3503, 1
      %v3545 = vsel %vm1716, %v3543, %v3544
      %v3546 = vrot.slane %v3504, 1
      %v3547 = vrot.slane %v3505, 1
      %v3548 = vsel %vm1716, %v3546, %v3547
      %v3549 = vrot.slane %v3506, 1
      %v3550 = vrot.slane %v3507, 1
      %v3551 = vsel %vm1716, %v3549, %v3550
      %v3552 = vrot.slane %v3508, 1
      %v3553 = vrot.slane %v3509, 1
      %v3554 = vsel %vm1716, %v3552, %v3553
      %v3555 = vrot.slane %v3510, 1
      %v3556 = vrot.slane %v3511, 1
      %v3557 = vsel %vm1716, %v3555, %v3556
      %v3558 = vrot.slane %v3512, 1
      %v3559 = vrot.slane %v3513, 1
      %v3560 = vsel %vm1716, %v3558, %v3559
      %v3561 = vrot.slane %v3514, 1
      %v3562 = vrot.slane %v3515, 1
      %v3563 = vsel %vm1716, %v3561, %v3562
      %3564 = vrot.lane.b32.xlu0 %v3518, 32
      %v3565 = vpop.permute.xlu0 %3564
      %3566 = vrot.lane.b32.xlu0 %v3521, 32
      %v3567 = vpop.permute.xlu0 %3566
      %3568 = vrot.lane.b32.xlu0 %v3524, 32
      %v3569 = vpop.permute.xlu0 %3568
      %3570 = vrot.lane.b32.xlu0 %v3527, 32
      %v3571 = vpop.permute.xlu0 %3570
      %3572 = vrot.lane.b32.xlu0 %v3530, 32
      %v3573 = vpop.permute.xlu0 %3572
      %3574 = vrot.lane.b32.xlu0 %v3533, 32
      %v3575 = vpop.permute.xlu0 %3574
      %3576 = vrot.lane.b32.xlu0 %v3536, 32
      %v3577 = vpop.permute.xlu0 %3576
      %3578 = vrot.lane.b32.xlu0 %v3539, 32
      %v3579 = vpop.permute.xlu0 %3578
      %3580 = vrot.lane.b32.xlu0 %v3542, 32
      %v3581 = vpop.permute.xlu0 %3580
      %3582 = vrot.lane.b32.xlu0 %v3545, 32
      %v3583 = vpop.permute.xlu0 %3582
      %3584 = vrot.lane.b32.xlu0 %v3548, 32
      %v3585 = vpop.permute.xlu0 %3584
      %3586 = vrot.lane.b32.xlu0 %v3551, 32
      %v3587 = vpop.permute.xlu0 %3586
      %3588 = vrot.lane.b32.xlu0 %v3554, 32
      %v3589 = vpop.permute.xlu0 %3588
      %3590 = vrot.lane.b32.xlu0 %v3557, 32
      %v3591 = vpop.permute.xlu0 %3590
      %3592 = vrot.lane.b32.xlu0 %v3560, 32
      %v3593 = vpop.permute.xlu0 %3592
      %3594 = vrot.lane.b32.xlu0 %v3563, 32
      %v3595 = vpop.permute.xlu0 %3594
      %vm3612 = vcmask 294144
      %3613 = vst.msk [vmem:[#allocation3] sm:$0xff] %vm3612, %v3565
      %3614 = vst.msk [vmem:[#allocation3 + $0x8] sm:$0xff] %vm3612, %v3567
      %3615 = vst.msk [vmem:[#allocation3 + $0x10] sm:$0xff] %vm3612, %v3569
      %3616 = vst.msk [vmem:[#allocation3 + $0x18] sm:$0xff] %vm3612, %v3571
      %3617 = vst.msk [vmem:[#allocation3 + $0x20] sm:$0xff] %vm3612, %v3573
      %3618 = vst.msk [vmem:[#allocation3 + $0x28] sm:$0xff] %vm3612, %v3575
      %3619 = vst.msk [vmem:[#allocation3 + $0x30] sm:$0xff] %vm3612, %v3577
      %3620 = vst.msk [vmem:[#allocation3 + $0x38] sm:$0xff] %vm3612, %v3579
      %3621 = vst.msk [vmem:[#allocation3 + $0x40] sm:$0xff] %vm3612, %v3581
      %3622 = vst.msk [vmem:[#allocation3 + $0x48] sm:$0xff] %vm3612, %v3583
      %3623 = vst.msk [vmem:[#allocation3 + $0x50] sm:$0xff] %vm3612, %v3585
      %3624 = vst.msk [vmem:[#allocation3 + $0x58] sm:$0xff] %vm3612, %v3587
      %3625 = vst.msk [vmem:[#allocation3 + $0x60] sm:$0xff] %vm3612, %v3589
      %3626 = vst.msk [vmem:[#allocation3 + $0x68] sm:$0xff] %vm3612, %v3591
      %3627 = vst.msk [vmem:[#allocation3 + $0x70] sm:$0xff] %vm3612, %v3593
      %3628 = vst.msk [vmem:[#allocation3 + $0x78] sm:$0xff] %vm3612, %v3595
      %v3629 = vld [vmem:[#allocation3] sm:$0xff]
      %v3630 = vld [vmem:[#allocation3 + $0x8] sm:$0xff]
      %v3631 = vld [vmem:[#allocation3 + $0x10] sm:$0xff]
      %v3632 = vld [vmem:[#allocation3 + $0x18] sm:$0xff]
      %v3633 = vld [vmem:[#allocation3 + $0x20] sm:$0xff]
      %v3634 = vld [vmem:[#allocation3 + $0x28] sm:$0xff]
      %v3635 = vld [vmem:[#allocation3 + $0x30] sm:$0xff]
      %v3636 = vld [vmem:[#allocation3 + $0x38] sm:$0xff]
      %v3637 = vld [vmem:[#allocation3 + $0x40] sm:$0xff]
      %v3638 = vld [vmem:[#allocation3 + $0x48] sm:$0xff]
      %v3639 = vld [vmem:[#allocation3 + $0x50] sm:$0xff]
      %v3640 = vld [vmem:[#allocation3 + $0x58] sm:$0xff]
      %v3641 = vld [vmem:[#allocation3 + $0x60] sm:$0xff]
      %v3642 = vld [vmem:[#allocation3 + $0x68] sm:$0xff]
      %v3643 = vld [vmem:[#allocation3 + $0x70] sm:$0xff]
      %v3644 = vld [vmem:[#allocation3 + $0x78] sm:$0xff]
      %v3645 = vld [vmem:[%s1] sm:$0xf]
      %v3646 = vld [vmem:[%s1 + $0x4] sm:$0xf]
      %v3647 = vld [vmem:[%s1 + $0x8] sm:$0xf]
      %v3648 = vld [vmem:[%s1 + $0xc] sm:$0xf]
      %v3649 = vld [vmem:[%s1 + $0x10] sm:$0x3]
      %v3655 = vunpack.c.l.b16 %v3645
      %v3656 = vunpack.c.l.b16 %v3646
      %v3657 = vunpack.c.l.b16 %v3647
      %v3658 = vunpack.c.l.b16 %v3648
      %v3659 = vunpack.c.l.b16 %v3649
      %v3660 = vpack.c.b16 %v3656, %v3655
      %v3661 = vpack.c.b16 %v3658, %v3657
      %v3662 = vpack.c.b16 %v3659, %v3659
      %vm3665 = vcmask 293888
      %v3667 = vsel %vm3665, %v3629, 0
      %v3670 = vsel %vm3665, %v3630, 0
      %v3673 = vsel %vm3665, %v3631, 0
      %v3676 = vsel %vm3665, %v3632, 0
      %v3679 = vsel %vm3665, %v3633, 0
      %v3682 = vsel %vm3665, %v3634, 0
      %v3685 = vsel %vm3665, %v3635, 0
      %v3688 = vsel %vm3665, %v3636, 0
      %v3691 = vsel %vm3665, %v3637, 0
      %v3694 = vsel %vm3665, %v3638, 0
      %v3697 = vsel %vm3665, %v3639, 0
      %v3700 = vsel %vm3665, %v3640, 0
      %v3703 = vsel %vm3665, %v3641, 0
      %v3706 = vsel %vm3665, %v3642, 0
      %v3709 = vsel %vm3665, %v3643, 0
      %v3712 = vsel %vm3665, %v3644, 0
      %vm3714 = vcmask 1041408
      %v3716 = vsel %vm3714, %v3662, 0
      %3718 = vmatprep.subr.bf16.mxu0 0
      %3719 = vmatpush1.bf16.msra.mxu0 %v3660
      %3720 = vmatprep.subr.bf16.mxu0 0
      %3721 = vmatpush1.bf16.msra.mxu0 %v3661
      %3722 = vmatprep.subr.bf16.mxu0 0
      %3723 = vmatpush1.bf16.msra.mxu0 %v3716
      %3724 = vmatprep.subr.bf16.mxu0 0
      %3725 = vmatpush1.bf16.msra.mxu0 0
      %3726 = vmatprep.subr.bf16.mxu0 0
      %3727 = vmatpush1.bf16.msra.mxu0 0
      %3728 = vmatprep.subr.bf16.mxu0 0
      %3729 = vmatpush1.bf16.msra.mxu0 0
      %3730 = vmatprep.subr.bf16.mxu0 0
      %3731 = vmatpush1.bf16.msra.mxu0 0
      %3732 = vmatprep.subr.bf16.mxu0 0
      %3733 = vmatpush1.bf16.msra.mxu0 0
      %3734 = vmatprep.subr.bf16.mxu0 0
      %3735 = vmatpush1.bf16.msra.mxu0 0
      %3736 = vmatprep.subr.bf16.mxu0 0
      %3737 = vmatpush1.bf16.msra.mxu0 0
      %3738 = vmatprep.subr.bf16.mxu0 0
      %3739 = vmatpush1.bf16.msra.mxu0 0
      %3740 = vmatprep.subr.bf16.mxu0 0
      %3741 = vmatpush1.bf16.msra.mxu0 0
      %3742 = vmatprep.subr.bf16.mxu0 0
      %3743 = vmatpush1.bf16.msra.mxu0 0
      %3744 = vmatprep.subr.bf16.mxu0 0
      %3745 = vmatpush1.bf16.msra.mxu0 0
      %3746 = vmatprep.subr.bf16.mxu0 0
      %3747 = vmatpush1.bf16.msra.mxu0 0
      %3748 = vmatprep.subr.bf16.mxu0 0
      %3749 = vmatpush1.bf16.msra.mxu0 0
      %3750 = vmatprep.mubr.bf16.mxu0 0
      %3751 = vmatmul.mubr.bf16.gmra.mrb[0].mxu0 %v3667
      %v3752 = vpop.f32.mrb[0].mxu0
      %v3753 = vadd.f32 0.0, %v3752
      %v3754 = vpop.f32.mrb[0].mxu0
      %v3755 = vpop.f32.mrb[0].mxu0
      %v3756 = vadd.f32 0.0, %v3755
      %v3757 = vpop.f32.mrb[0].mxu0
      %3758 = vmatprep.mubr.bf16.mxu0 0
      %3759 = vmatmul.mubr.bf16.gmra.mrb[0].mxu0 %v3670
      %v3760 = vpop.f32.mrb[0].mxu0
      %v3761 = vadd.f32 0.0, %v3760
      %v3762 = vpop.f32.mrb[0].mxu0
      %v3763 = vpop.f32.mrb[0].mxu0
      %v3764 = vadd.f32 0.0, %v3763
      %v3765 = vpop.f32.mrb[0].mxu0
      %3766 = vmatprep.mubr.bf16.mxu0 0
      %3767 = vmatmul.mubr.bf16.gmra.mrb[0].mxu0 %v3673
      %v3768 = vpop.f32.mrb[0].mxu0
      %v3769 = vadd.f32 0.0, %v3768
      %v3770 = vpop.f32.mrb[0].mxu0
      %v3771 = vpop.f32.mrb[0].mxu0
      %v3772 = vadd.f32 0.0, %v3771
      %v3773 = vpop.f32.mrb[0].mxu0
      %3774 = vmatprep.mubr.bf16.mxu0 0
      %3775 = vmatmul.mubr.bf16.gmra.mrb[0].mxu0 %v3676
      %v3776 = vpop.f32.mrb[0].mxu0
      %v3777 = vadd.f32 0.0, %v3776
      %v3778 = vpop.f32.mrb[0].mxu0
      %v3779 = vpop.f32.mrb[0].mxu0
      %v3780 = vadd.f32 0.0, %v3779
      %v3781 = vpop.f32.mrb[0].mxu0
      %3782 = vmatprep.mubr.bf16.mxu0 0
      %3783 = vmatmul.mubr.bf16.gmra.mrb[0].mxu0 %v3679
      %v3784 = vpop.f32.mrb[0].mxu0
      %v3785 = vadd.f32 0.0, %v3784
      %v3786 = vpop.f32.mrb[0].mxu0
      %v3787 = vpop.f32.mrb[0].mxu0
      %v3788 = vadd.f32 0.0, %v3787
      %v3789 = vpop.f32.mrb[0].mxu0
      %3790 = vmatprep.mubr.bf16.mxu0 0
      %3791 = vmatmul.mubr.bf16.gmra.mrb[0].mxu0 %v3682
      %v3792 = vpop.f32.mrb[0].mxu0
      %v3793 = vadd.f32 0.0, %v3792
      %v3794 = vpop.f32.mrb[0].mxu0
      %v3795 = vpop.f32.mrb[0].mxu0
      %v3796 = vadd.f32 0.0, %v3795
      %v3797 = vpop.f32.mrb[0].mxu0
      %3798 = vmatprep.mubr.bf16.mxu0 0
      %3799 = vmatmul.mubr.bf16.gmra.mrb[0].mxu0 %v3685
      %v3800 = vpop.f32.mrb[0].mxu0
      %v3801 = vadd.f32 0.0, %v3800
      %v3802 = vpop.f32.mrb[0].mxu0
      %v3803 = vpop.f32.mrb[0].mxu0
      %v3804 = vadd.f32 0.0, %v3803
      %v3805 = vpop.f32.mrb[0].mxu0
      %3806 = vmatprep.mubr.bf16.mxu0 0
      %3807 = vmatmul.mubr.bf16.gmra.mrb[0].mxu0 %v3688
      %v3808 = vpop.f32.mrb[0].mxu0
      %v3809 = vadd.f32 0.0, %v3808
      %v3810 = vpop.f32.mrb[0].mxu0
      %v3811 = vpop.f32.mrb[0].mxu0
      %v3812 = vadd.f32 0.0, %v3811
      %v3813 = vpop.f32.mrb[0].mxu0
      %3814 = vmatprep.mubr.bf16.mxu0 0
      %3815 = vmatmul.mubr.bf16.gmra.mrb[0].mxu0 %v3691
      %v3816 = vpop.f32.mrb[0].mxu0
      %v3817 = vadd.f32 0.0, %v3816
      %v3818 = vpop.f32.mrb[0].mxu0
      %v3819 = vpop.f32.mrb[0].mxu0
      %v3820 = vadd.f32 0.0, %v3819
      %v3821 = vpop.f32.mrb[0].mxu0
      %3822 = vmatprep.mubr.bf16.mxu0 0
      %3823 = vmatmul.mubr.bf16.gmra.mrb[0].mxu0 %v3694
      %v3824 = vpop.f32.mrb[0].mxu0
      %v3825 = vadd.f32 0.0, %v3824
      %v3826 = vpop.f32.mrb[0].mxu0
      %v3827 = vpop.f32.mrb[0].mxu0
      %v3828 = vadd.f32 0.0, %v3827
      %v3829 = vpop.f32.mrb[0].mxu0
      %3830 = vmatprep.mubr.bf16.mxu0 0
      %3831 = vmatmul.mubr.bf16.gmra.mrb[0].mxu0 %v3697
      %v3832 = vpop.f32.mrb[0].mxu0
      %v3833 = vadd.f32 0.0, %v3832
      %v3834 = vpop.f32.mrb[0].mxu0
      %v3835 = vpop.f32.mrb[0].mxu0
      %v3836 = vadd.f32 0.0, %v3835
      %v3837 = vpop.f32.mrb[0].mxu0
      %3838 = vmatprep.mubr.bf16.mxu0 0
      %3839 = vmatmul.mubr.bf16.gmra.mrb[0].mxu0 %v3700
      %v3840 = vpop.f32.mrb[0].mxu0
      %v3841 = vadd.f32 0.0, %v3840
      %v3842 = vpop.f32.mrb[0].mxu0
      %v3843 = vpop.f32.mrb[0].mxu0
      %v3844 = vadd.f32 0.0, %v3843
      %v3845 = vpop.f32.mrb[0].mxu0
      %3846 = vmatprep.mubr.bf16.mxu0 0
      %3847 = vmatmul.mubr.bf16.gmra.mrb[0].mxu0 %v3703
      %v3848 = vpop.f32.mrb[0].mxu0
      %v3849 = vadd.f32 0.0, %v3848
      %v3850 = vpop.f32.mrb[0].mxu0
      %v3851 = vpop.f32.mrb[0].mxu0
      %v3852 = vadd.f32 0.0, %v3851
      %v3853 = vpop.f32.mrb[0].mxu0
      %3854 = vmatprep.mubr.bf16.mxu0 0
      %3855 = vmatmul.mubr.bf16.gmra.mrb[0].mxu0 %v3706
      %v3856 = vpop.f32.mrb[0].mxu0
      %v3857 = vadd.f32 0.0, %v3856
      %v3858 = vpop.f32.mrb[0].mxu0
      %v3859 = vpop.f32.mrb[0].mxu0
      %v3860 = vadd.f32 0.0, %v3859
      %v3861 = vpop.f32.mrb[0].mxu0
      %3862 = vmatprep.mubr.bf16.mxu0 0
      %3863 = vmatmul.mubr.bf16.gmra.mrb[0].mxu0 %v3709
      %v3864 = vpop.f32.mrb[0].mxu0
      %v3865 = vadd.f32 0.0, %v3864
      %v3866 = vpop.f32.mrb[0].mxu0
      %v3867 = vpop.f32.mrb[0].mxu0
      %v3868 = vadd.f32 0.0, %v3867
      %v3869 = vpop.f32.mrb[0].mxu0
      %3870 = vmatprep.mubr.bf16.mxu0 0
      %3871 = vmatmul.mubr.bf16.gmra.mrb[0].mxu0 %v3712
      %v3872 = vpop.f32.mrb[0].mxu0
      %v3873 = vadd.f32 0.0, %v3872
      %v3874 = vpop.f32.mrb[0].mxu0
      %v3875 = vpop.f32.mrb[0].mxu0
      %v3876 = vadd.f32 0.0, %v3875
      %v3877 = vpop.f32.mrb[0].mxu0
      %3878 = vdwg.mxu0
      %v3879 = vadd.f32 %v3753, %v3756
      %v3880 = vadd.f32 %v3879, %v3761
      %v3881 = vadd.f32 %v3880, %v3764
      %v3882 = vadd.f32 %v3881, %v3769
      %v3883 = vadd.f32 %v3882, %v3772
      %v3884 = vadd.f32 %v3883, %v3777
      %v3885 = vadd.f32 %v3884, %v3780
      %v3886 = vadd.f32 %v3885, %v3785
      %v3887 = vadd.f32 %v3886, %v3788
      %v3888 = vadd.f32 %v3887, %v3793
      %v3889 = vadd.f32 %v3888, %v3796
      %v3890 = vadd.f32 %v3889, %v3801
      %v3891 = vadd.f32 %v3890, %v3804
      %v3892 = vadd.f32 %v3891, %v3809
      %v3893 = vadd.f32 %v3892, %v3812
      %v3894 = vadd.f32 %v3893, %v3817
      %v3895 = vadd.f32 %v3894, %v3820
      %v3896 = vadd.f32 %v3895, %v3825
      %v3897 = vadd.f32 %v3896, %v3828
      %v3898 = vadd.f32 %v3897, %v3833
      %v3899 = vadd.f32 %v3898, %v3836
      %v3900 = vadd.f32 %v3899, %v3841
      %v3901 = vadd.f32 %v3900, %v3844
      %v3902 = vadd.f32 %v3901, %v3849
      %v3903 = vadd.f32 %v3902, %v3852
      %v3904 = vadd.f32 %v3903, %v3857
      %v3905 = vadd.f32 %v3904, %v3860
      %v3906 = vadd.f32 %v3905, %v3865
      %v3907 = vadd.f32 %v3906, %v3868
      %v3908 = vadd.f32 %v3907, %v3873
      %v3909 = vadd.f32 %v3908, %v3876
      %v3910 = vrot.slane %v3909, 4
      %v3911 = vadd.f32 %v3909, %v3910
      %v3912 = vrot.slane %v3911, 2
      %v3913 = vadd.f32 %v3911, %v3912
      %v3914 = vrot.slane %v3913, 1
      %v3915 = vadd.f32 %v3913, %v3914
      %3916 = vst [vmem:[%s275] sm:$0x1] %v3915
      %v3917 = vmul.f32 %v3753, %v3753
      %v3918 = vmul.f32 %v3756, %v3756
      %v3919 = vmul.f32 %v3761, %v3761
      %v3920 = vmul.f32 %v3764, %v3764
      %v3921 = vmul.f32 %v3769, %v3769
      %v3922 = vmul.f32 %v3772, %v3772
      %v3923 = vmul.f32 %v3777, %v3777
      %v3924 = vmul.f32 %v3780, %v3780
      %v3925 = vmul.f32 %v3785, %v3785
      %v3926 = vmul.f32 %v3788, %v3788
      %v3927 = vmul.f32 %v3793, %v3793
      %v3928 = vmul.f32 %v3796, %v3796
      %v3929 = vmul.f32 %v3801, %v3801
      %v3930 = vmul.f32 %v3804, %v3804
      %v3931 = vmul.f32 %v3809, %v3809
      %v3932 = vmul.f32 %v3812, %v3812
      %v3933 = vmul.f32 %v3817, %v3817
      %v3934 = vmul.f32 %v3820, %v3820
      %v3935 = vmul.f32 %v3825, %v3825
      %v3936 = vmul.f32 %v3828, %v3828
      %v3937 = vmul.f32 %v3833, %v3833
      %v3938 = vmul.f32 %v3836, %v3836
      %v3939 = vmul.f32 %v3841, %v3841
      %v3940 = vmul.f32 %v3844, %v3844
      %v3941 = vmul.f32 %v3849, %v3849
      %v3942 = vmul.f32 %v3852, %v3852
      %v3943 = vmul.f32 %v3857, %v3857
      %v3944 = vmul.f32 %v3860, %v3860
      %v3945 = vmul.f32 %v3865, %v3865
      %v3946 = vmul.f32 %v3868, %v3868
      %v3947 = vmul.f32 %v3873, %v3873
      %v3948 = vmul.f32 %v3876, %v3876
      %v3949 = vadd.f32 %v3917, %v3918
      %v3950 = vadd.f32 %v3949, %v3919
      %v3951 = vadd.f32 %v3950, %v3920
      %v3952 = vadd.f32 %v3951, %v3921
      %v3953 = vadd.f32 %v3952, %v3922
      %v3954 = vadd.f32 %v3953, %v3923
      %v3955 = vadd.f32 %v3954, %v3924
      %v3956 = vadd.f32 %v3955, %v3925
      %v3957 = vadd.f32 %v3956, %v3926
      %v3958 = vadd.f32 %v3957, %v3927
      %v3959 = vadd.f32 %v3958, %v3928
      %v3960 = vadd.f32 %v3959, %v3929
      %v3961 = vadd.f32 %v3960, %v3930
      %v3962 = vadd.f32 %v3961, %v3931
      %v3963 = vadd.f32 %v3962, %v3932
      %v3964 = vadd.f32 %v3963, %v3933
      %v3965 = vadd.f32 %v3964, %v3934
      %v3966 = vadd.f32 %v3965, %v3935
      %v3967 = vadd.f32 %v3966, %v3936
      %v3968 = vadd.f32 %v3967, %v3937
      %v3969 = vadd.f32 %v3968, %v3938
      %v3970 = vadd.f32 %v3969, %v3939
      %v3971 = vadd.f32 %v3970, %v3940
      %v3972 = vadd.f32 %v3971, %v3941
      %v3973 = vadd.f32 %v3972, %v3942
      %v3974 = vadd.f32 %v3973, %v3943
      %v3975 = vadd.f32 %v3974, %v3944
      %v3976 = vadd.f32 %v3975, %v3945
      %v3977 = vadd.f32 %v3976, %v3946
      %v3978 = vadd.f32 %v3977, %v3947
      %v3979 = vadd.f32 %v3978, %v3948
      %v3980 = vrot.slane %v3979, 4
      %v3981 = vadd.f32 %v3979, %v3980
      %v3982 = vrot.slane %v3981, 2
      %v3983 = vadd.f32 %v3981, %v3982
      %v3984 = vrot.slane %v3983, 1
      %v3985 = vadd.f32 %v3983, %v3984
      %3986 = vst [vmem:[%s275 + $0x1] sm:$0x1] %v3985
      %v3987 = vpack.c.bf16 %v3756, %v3753
      %v3988 = vpack.c.bf16 %v3764, %v3761
      %v3989 = vpack.c.bf16 %v3772, %v3769
      %v3990 = vpack.c.bf16 %v3780, %v3777
      %v3991 = vpack.c.bf16 %v3788, %v3785
      %v3992 = vpack.c.bf16 %v3796, %v3793
      %v3993 = vpack.c.bf16 %v3804, %v3801
      %v3994 = vpack.c.bf16 %v3812, %v3809
      %v3995 = vpack.c.bf16 %v3820, %v3817
      %v3996 = vpack.c.bf16 %v3828, %v3825
      %v3997 = vpack.c.bf16 %v3836, %v3833
      %v3998 = vpack.c.bf16 %v3844, %v3841
      %v3999 = vpack.c.bf16 %v3852, %v3849
      %v4000 = vpack.c.bf16 %v3860, %v3857
      %v4001 = vpack.c.bf16 %v3868, %v3865
      %v4002 = vpack.c.bf16 %v3876, %v3873
      %v4019 = vunpack.c.l.b16 %v3987
      %v4020 = vunpack.c.h.b16 %v3987
      %v4021 = vunpack.c.l.b16 %v3988
      %v4022 = vunpack.c.h.b16 %v3988
      %v4023 = vunpack.c.l.b16 %v3989
      %v4024 = vunpack.c.h.b16 %v3989
      %v4025 = vunpack.c.l.b16 %v3990
      %v4026 = vunpack.c.h.b16 %v3990
      %v4027 = vunpack.c.l.b16 %v3991
      %v4028 = vunpack.c.h.b16 %v3991
      %v4029 = vunpack.c.l.b16 %v3992
      %v4030 = vunpack.c.h.b16 %v3992
      %v4031 = vunpack.c.l.b16 %v3993
      %v4032 = vunpack.c.h.b16 %v3993
      %v4033 = vunpack.c.l.b16 %v3994
      %v4034 = vunpack.c.h.b16 %v3994
      %v4035 = vunpack.c.l.b16 %v3995
      %v4036 = vunpack.c.h.b16 %v3995
      %v4037 = vunpack.c.l.b16 %v3996
      %v4038 = vunpack.c.h.b16 %v3996
      %v4039 = vunpack.c.l.b16 %v3997
      %v4040 = vunpack.c.h.b16 %v3997
      %v4041 = vunpack.c.l.b16 %v3998
      %v4042 = vunpack.c.h.b16 %v3998
      %v4043 = vunpack.c.l.b16 %v3999
      %v4044 = vunpack.c.h.b16 %v3999
      %v4045 = vunpack.c.l.b16 %v4000
      %v4046 = vunpack.c.h.b16 %v4000
      %v4047 = vunpack.c.l.b16 %v4001
      %v4048 = vunpack.c.h.b16 %v4001
      %v4049 = vunpack.c.l.b16 %v4002
      %v4050 = vunpack.c.h.b16 %v4002
      %v4051 = vpack.c.b16 %v4019, %v4019
      %v4052 = vpack.c.b16 %v4020, %v4020
      %v4053 = vpack.c.b16 %v4021, %v4021
      %v4054 = vpack.c.b16 %v4022, %v4022
      %v4055 = vpack.c.b16 %v4023, %v4023
      %v4056 = vpack.c.b16 %v4024, %v4024
      %v4057 = vpack.c.b16 %v4025, %v4025
      %v4058 = vpack.c.b16 %v4026, %v4026
      %v4059 = vpack.c.b16 %v4027, %v4027
      %v4060 = vpack.c.b16 %v4028, %v4028
      %v4061 = vpack.c.b16 %v4029, %v4029
      %v4062 = vpack.c.b16 %v4030, %v4030
      %v4063 = vpack.c.b16 %v4031, %v4031
      %v4064 = vpack.c.b16 %v4032, %v4032
      %v4065 = vpack.c.b16 %v4033, %v4033
      %v4066 = vpack.c.b16 %v4034, %v4034
      %v4067 = vpack.c.b16 %v4035, %v4035
      %v4068 = vpack.c.b16 %v4036, %v4036
      %v4069 = vpack.c.b16 %v4037, %v4037
      %v4070 = vpack.c.b16 %v4038, %v4038
      %v4071 = vpack.c.b16 %v4039, %v4039
      %v4072 = vpack.c.b16 %v4040, %v4040
      %v4073 = vpack.c.b16 %v4041, %v4041
      %v4074 = vpack.c.b16 %v4042, %v4042
      %v4075 = vpack.c.b16 %v4043, %v4043
      %v4076 = vpack.c.b16 %v4044, %v4044
      %v4077 = vpack.c.b16 %v4045, %v4045
      %v4078 = vpack.c.b16 %v4046, %v4046
      %v4079 = vpack.c.b16 %v4047, %v4047
      %v4080 = vpack.c.b16 %v4048, %v4048
      %v4081 = vpack.c.b16 %v4049, %v4049
      %v4082 = vpack.c.b16 %v4050, %v4050
      %4115 = vst [vmem:[%s271] sm:$0xf] %v4051
      %4116 = vst [vmem:[%s271 + $0x4] sm:$0xf] %v4052
      %4117 = vst [vmem:[%s271 + $0x8] sm:$0xf] %v4053
      %4118 = vst [vmem:[%s271 + $0xc] sm:$0xf] %v4054
      %4119 = vst [vmem:[%s271 + $0x10] sm:$0xf] %v4055
      %4120 = vst [vmem:[%s271 + $0x14] sm:$0xf] %v4056
      %4121 = vst [vmem:[%s271 + $0x18] sm:$0xf] %v4057
      %4122 = vst [vmem:[%s271 + $0x1c] sm:$0xf] %v4058
      %4123 = vst [vmem:[%s271 + $0x20] sm:$0xf] %v4059
      %4124 = vst [vmem:[%s271 + $0x24] sm:$0xf] %v4060
      %4125 = vst [vmem:[%s271 + $0x28] sm:$0xf] %v4061
      %4126 = vst [vmem:[%s271 + $0x2c] sm:$0xf] %v4062
      %4127 = vst [vmem:[%s271 + $0x30] sm:$0xf] %v4063
      %4128 = vst [vmem:[%s271 + $0x34] sm:$0xf] %v4064
      %4129 = vst [vmem:[%s271 + $0x38] sm:$0xf] %v4065
      %4130 = vst [vmem:[%s271 + $0x3c] sm:$0xf] %v4066
      %4131 = vst [vmem:[%s271 + $0x40] sm:$0xf] %v4067
      %4132 = vst [vmem:[%s271 + $0x44] sm:$0xf] %v4068
      %4133 = vst [vmem:[%s271 + $0x48] sm:$0xf] %v4069
      %4134 = vst [vmem:[%s271 + $0x4c] sm:$0xf] %v4070
      %4135 = vst [vmem:[%s271 + $0x50] sm:$0xf] %v4071
      %4136 = vst [vmem:[%s271 + $0x54] sm:$0xf] %v4072
      %4137 = vst [vmem:[%s271 + $0x58] sm:$0xf] %v4073
      %4138 = vst [vmem:[%s271 + $0x5c] sm:$0xf] %v4074
      %4139 = vst [vmem:[%s271 + $0x60] sm:$0xf] %v4075
      %4140 = vst [vmem:[%s271 + $0x64] sm:$0xf] %v4076
      %4141 = vst [vmem:[%s271 + $0x68] sm:$0xf] %v4077
      %4142 = vst [vmem:[%s271 + $0x6c] sm:$0xf] %v4078
      %4143 = vst [vmem:[%s271 + $0x70] sm:$0xf] %v4079
      %4144 = vst [vmem:[%s271 + $0x74] sm:$0xf] %v4080
      %4145 = vst [vmem:[%s271 + $0x78] sm:$0xf] %v4081
      %4146 = vst [vmem:[%s271 + $0x7c] sm:$0xf] %v4082
      %v4147 = vld [vmem:[%s295] sm:$0xf]
      %v4148 = vld [vmem:[%s295 + $0x4] sm:$0xf]
      %v4149 = vld [vmem:[%s295 + $0x8] sm:$0x1]
      %v4150 = vld [vmem:[%s295 + $0xc] sm:$0xf]
      %v4151 = vld [vmem:[%s295 + $0x10] sm:$0xf]
      %v4152 = vld [vmem:[%s295 + $0x14] sm:$0x1]
      %v4153 = vld [vmem:[%s295 + $0x18] sm:$0xf]
      %v4154 = vld [vmem:[%s295 + $0x1c] sm:$0xf]
      %v4155 = vld [vmem:[%s295 + $0x20] sm:$0x1]
      %v4156 = vld [vmem:[%s295 + $0x24] sm:$0xf]
      %v4157 = vld [vmem:[%s295 + $0x28] sm:$0xf]
      %v4158 = vld [vmem:[%s295 + $0x2c] sm:$0x1]
      %v4159 = vld [vmem:[%s295 + $0x30] sm:$0xf]
      %v4160 = vld [vmem:[%s295 + $0x34] sm:$0xf]
      %v4161 = vld [vmem:[%s295 + $0x38] sm:$0x1]
      %v4162 = vld [vmem:[%s295 + $0x3c] sm:$0xf]
      %v4163 = vld [vmem:[%s295 + $0x40] sm:$0xf]
      %v4164 = vld [vmem:[%s295 + $0x44] sm:$0x1]
      %v4165 = vld [vmem:[%s295 + $0x48] sm:$0xf]
      %v4166 = vld [vmem:[%s295 + $0x4c] sm:$0xf]
      %v4167 = vld [vmem:[%s295 + $0x50] sm:$0x1]
      %v4168 = vld [vmem:[%s295 + $0x54] sm:$0xf]
      %v4169 = vld [vmem:[%s295 + $0x58] sm:$0xf]
      %v4170 = vld [vmem:[%s295 + $0x5c] sm:$0x1]
      %v4171 = vld [vmem:[%s295 + $0x60] sm:$0xf]
      %v4172 = vld [vmem:[%s295 + $0x64] sm:$0xf]
      %v4173 = vld [vmem:[%s295 + $0x68] sm:$0x1]
      %v4174 = vld [vmem:[%s295 + $0x6c] sm:$0xf]
      %v4175 = vld [vmem:[%s295 + $0x70] sm:$0xf]
      %v4176 = vld [vmem:[%s295 + $0x74] sm:$0x1]
      %v4177 = vld [vmem:[%s295 + $0x78] sm:$0xf]
      %v4178 = vld [vmem:[%s295 + $0x7c] sm:$0xf]
      %v4179 = vld [vmem:[%s295 + $0x80] sm:$0x1]
      %v4180 = vld [vmem:[%s295 + $0x84] sm:$0xf]
      %v4181 = vld [vmem:[%s295 + $0x88] sm:$0xf]
      %v4182 = vld [vmem:[%s295 + $0x8c] sm:$0x1]
      %v4183 = vld [vmem:[%s295 + $0x90] sm:$0xf]
      %v4184 = vld [vmem:[%s295 + $0x94] sm:$0xf]
      %v4185 = vld [vmem:[%s295 + $0x98] sm:$0x1]
      %v4186 = vld [vmem:[%s295 + $0x9c] sm:$0xf]
      %v4187 = vld [vmem:[%s295 + $0xa0] sm:$0xf]
      %v4188 = vld [vmem:[%s295 + $0xa4] sm:$0x1]
      %v4189 = vld [vmem:[%s295 + $0xa8] sm:$0xf]
      %v4190 = vld [vmem:[%s295 + $0xac] sm:$0xf]
      %v4191 = vld [vmem:[%s295 + $0xb0] sm:$0x1]
      %v4192 = vld [vmem:[%s295 + $0xb4] sm:$0xf]
      %v4193 = vld [vmem:[%s295 + $0xb8] sm:$0xf]
      %v4194 = vld [vmem:[%s295 + $0xbc] sm:$0x1]
      %vm4195 = vsmask.f32 3328
      %vm4196 = vsmask.f32 7440
      %vm4197 = vmor %vm4195, %vm4196
      %v4199 = vshrl.u32 %v4147, 16
      %v4201 = vrot.slane %v4199, 4
      %v4202 = vshll.u32 %v4147, 16
      %v4204 = vrot.slane %v4202, 5
      %v4205 = vor.u32 %v4201, %v4204
      %v4206 = vrot.slane %v4205, 4
      %v4208 = vshll.u32 %v4148, 16
      %v4210 = vrot.slane %v4208, 5
      %v4211 = vsel %vm4197, %v4206, %v4210
      %v4212 = vshrl.u32 %v4148, 16
      %v4214 = vrot.slane %v4212, 4
      %v4215 = vor.u32 %v4214, %v4210
      %v4216 = vrot.slane %v4215, 4
      %v4218 = vshll.u32 %v4149, 16
      %v4220 = vrot.slane %v4218, 5
      %v4221 = vsel %vm4197, %v4216, %v4220
      %v4223 = vshrl.u32 %v4150, 16
      %v4225 = vrot.slane %v4223, 4
      %v4226 = vshll.u32 %v4150, 16
      %v4228 = vrot.slane %v4226, 5
      %v4229 = vor.u32 %v4225, %v4228
      %v4230 = vrot.slane %v4229, 4
      %v4232 = vshll.u32 %v4151, 16
      %v4234 = vrot.slane %v4232, 5
      %v4235 = vsel %vm4197, %v4230, %v4234
      %v4236 = vshrl.u32 %v4151, 16
      %v4238 = vrot.slane %v4236, 4
      %v4239 = vor.u32 %v4238, %v4234
      %v4240 = vrot.slane %v4239, 4
      %v4242 = vshll.u32 %v4152, 16
      %v4244 = vrot.slane %v4242, 5
      %v4245 = vsel %vm4197, %v4240, %v4244
      %v4247 = vshrl.u32 %v4153, 16
      %v4249 = vrot.slane %v4247, 4
      %v4250 = vshll.u32 %v4153, 16
      %v4252 = vrot.slane %v4250, 5
      %v4253 = vor.u32 %v4249, %v4252
      %v4254 = vrot.slane %v4253, 4
      %v4256 = vshll.u32 %v4154, 16
      %v4258 = vrot.slane %v4256, 5
      %v4259 = vsel %vm4197, %v4254, %v4258
      %v4260 = vshrl.u32 %v4154, 16
      %v4262 = vrot.slane %v4260, 4
      %v4263 = vor.u32 %v4262, %v4258
      %v4264 = vrot.slane %v4263, 4
      %v4266 = vshll.u32 %v4155, 16
      %v4268 = vrot.slane %v4266, 5
      %v4269 = vsel %vm4197, %v4264, %v4268
      %v4271 = vshrl.u32 %v4156, 16
      %v4273 = vrot.slane %v4271, 4
      %v4274 = vshll.u32 %v4156, 16
      %v4276 = vrot.slane %v4274, 5
      %v4277 = vor.u32 %v4273, %v4276
      %v4278 = vrot.slane %v4277, 4
      %v4280 = vshll.u32 %v4157, 16
      %v4282 = vrot.slane %v4280, 5
      %v4283 = vsel %vm4197, %v4278, %v4282
      %v4284 = vshrl.u32 %v4157, 16
      %v4286 = vrot.slane %v4284, 4
      %v4287 = vor.u32 %v4286, %v4282
      %v4288 = vrot.slane %v4287, 4
      %v4290 = vshll.u32 %v4158, 16
      %v4292 = vrot.slane %v4290, 5
      %v4293 = vsel %vm4197, %v4288, %v4292
      %v4295 = vshrl.u32 %v4159, 16
      %v4297 = vrot.slane %v4295, 4
      %v4298 = vshll.u32 %v4159, 16
      %v4300 = vrot.slane %v4298, 5
      %v4301 = vor.u32 %v4297, %v4300
      %v4302 = vrot.slane %v4301, 4
      %v4304 = vshll.u32 %v4160, 16
      %v4306 = vrot.slane %v4304, 5
      %v4307 = vsel %vm4197, %v4302, %v4306
      %v4308 = vshrl.u32 %v4160, 16
      %v4310 = vrot.slane %v4308, 4
      %v4311 = vor.u32 %v4310, %v4306
      %v4312 = vrot.slane %v4311, 4
      %v4314 = vshll.u32 %v4161, 16
      %v4316 = vrot.slane %v4314, 5
      %v4317 = vsel %vm4197, %v4312, %v4316
      %v4319 = vshrl.u32 %v4162, 16
      %v4321 = vrot.slane %v4319, 4
      %v4322 = vshll.u32 %v4162, 16
      %v4324 = vrot.slane %v4322, 5
      %v4325 = vor.u32 %v4321, %v4324
      %v4326 = vrot.slane %v4325, 4
      %v4328 = vshll.u32 %v4163, 16
      %v4330 = vrot.slane %v4328, 5
      %v4331 = vsel %vm4197, %v4326, %v4330
      %v4332 = vshrl.u32 %v4163, 16
      %v4334 = vrot.slane %v4332, 4
      %v4335 = vor.u32 %v4334, %v4330
      %v4336 = vrot.slane %v4335, 4
      %v4338 = vshll.u32 %v4164, 16
      %v4340 = vrot.slane %v4338, 5
      %v4341 = vsel %vm4197, %v4336, %v4340
      %v4343 = vshrl.u32 %v4165, 16
      %v4345 = vrot.slane %v4343, 4
      %v4346 = vshll.u32 %v4165, 16
      %v4348 = vrot.slane %v4346, 5
      %v4349 = vor.u32 %v4345, %v4348
      %v4350 = vrot.slane %v4349, 4
      %v4352 = vshll.u32 %v4166, 16
      %v4354 = vrot.slane %v4352, 5
      %v4355 = vsel %vm4197, %v4350, %v4354
      %v4356 = vshrl.u32 %v4166, 16
      %v4358 = vrot.slane %v4356, 4
      %v4359 = vor.u32 %v4358, %v4354
      %v4360 = vrot.slane %v4359, 4
      %v4362 = vshll.u32 %v4167, 16
      %v4364 = vrot.slane %v4362, 5
      %v4365 = vsel %vm4197, %v4360, %v4364
      %v4367 = vshrl.u32 %v4168, 16
      %v4369 = vrot.slane %v4367, 4
      %v4370 = vshll.u32 %v4168, 16
      %v4372 = vrot.slane %v4370, 5
      %v4373 = vor.u32 %v4369, %v4372
      %v4374 = vrot.slane %v4373, 4
      %v4376 = vshll.u32 %v4169, 16
      %v4378 = vrot.slane %v4376, 5
      %v4379 = vsel %vm4197, %v4374, %v4378
      %v4380 = vshrl.u32 %v4169, 16
      %v4382 = vrot.slane %v4380, 4
      %v4383 = vor.u32 %v4382, %v4378
      %v4384 = vrot.slane %v4383, 4
      %v4386 = vshll.u32 %v4170, 16
      %v4388 = vrot.slane %v4386, 5
      %v4389 = vsel %vm4197, %v4384, %v4388
      %v4391 = vshrl.u32 %v4171, 16
      %v4393 = vrot.slane %v4391, 4
      %v4394 = vshll.u32 %v4171, 16
      %v4396 = vrot.slane %v4394, 5
      %v4397 = vor.u32 %v4393, %v4396
      %v4398 = vrot.slane %v4397, 4
      %v4400 = vshll.u32 %v4172, 16
      %v4402 = vrot.slane %v4400, 5
      %v4403 = vsel %vm4197, %v4398, %v4402
      %v4404 = vshrl.u32 %v4172, 16
      %v4406 = vrot.slane %v4404, 4
      %v4407 = vor.u32 %v4406, %v4402
      %v4408 = vrot.slane %v4407, 4
      %v4410 = vshll.u32 %v4173, 16
      %v4412 = vrot.slane %v4410, 5
      %v4413 = vsel %vm4197, %v4408, %v4412
      %v4415 = vshrl.u32 %v4174, 16
      %v4417 = vrot.slane %v4415, 4
      %v4418 = vshll.u32 %v4174, 16
      %v4420 = vrot.slane %v4418, 5
      %v4421 = vor.u32 %v4417, %v4420
      %v4422 = vrot.slane %v4421, 4
      %v4424 = vshll.u32 %v4175, 16
      %v4426 = vrot.slane %v4424, 5
      %v4427 = vsel %vm4197, %v4422, %v4426
      %v4428 = vshrl.u32 %v4175, 16
      %v4430 = vrot.slane %v4428, 4
      %v4431 = vor.u32 %v4430, %v4426
      %v4432 = vrot.slane %v4431, 4
      %v4434 = vshll.u32 %v4176, 16
      %v4436 = vrot.slane %v4434, 5
      %v4437 = vsel %vm4197, %v4432, %v4436
      %v4439 = vshrl.u32 %v4177, 16
      %v4441 = vrot.slane %v4439, 4
      %v4442 = vshll.u32 %v4177, 16
      %v4444 = vrot.slane %v4442, 5
      %v4445 = vor.u32 %v4441, %v4444
      %v4446 = vrot.slane %v4445, 4
      %v4448 = vshll.u32 %v4178, 16
      %v4450 = vrot.slane %v4448, 5
      %v4451 = vsel %vm4197, %v4446, %v4450
      %v4452 = vshrl.u32 %v4178, 16
      %v4454 = vrot.slane %v4452, 4
      %v4455 = vor.u32 %v4454, %v4450
      %v4456 = vrot.slane %v4455, 4
      %v4458 = vshll.u32 %v4179, 16
      %v4460 = vrot.slane %v4458, 5
      %v4461 = vsel %vm4197, %v4456, %v4460
      %v4463 = vshrl.u32 %v4180, 16
      %v4465 = vrot.slane %v4463, 4
      %v4466 = vshll.u32 %v4180, 16
      %v4468 = vrot.slane %v4466, 5
      %v4469 = vor.u32 %v4465, %v4468
      %v4470 = vrot.slane %v4469, 4
      %v4472 = vshll.u32 %v4181, 16
      %v4474 = vrot.slane %v4472, 5
      %v4475 = vsel %vm4197, %v4470, %v4474
      %v4476 = vshrl.u32 %v4181, 16
      %v4478 = vrot.slane %v4476, 4
      %v4479 = vor.u32 %v4478, %v4474
      %v4480 = vrot.slane %v4479, 4
      %v4482 = vshll.u32 %v4182, 16
      %v4484 = vrot.slane %v4482, 5
      %v4485 = vsel %vm4197, %v4480, %v4484
      %v4487 = vshrl.u32 %v4183, 16
      %v4489 = vrot.slane %v4487, 4
      %v4490 = vshll.u32 %v4183, 16
      %v4492 = vrot.slane %v4490, 5
      %v4493 = vor.u32 %v4489, %v4492
      %v4494 = vrot.slane %v4493, 4
      %v4496 = vshll.u32 %v4184, 16
      %v4498 = vrot.slane %v4496, 5
      %v4499 = vsel %vm4197, %v4494, %v4498
      %v4500 = vshrl.u32 %v4184, 16
      %v4502 = vrot.slane %v4500, 4
      %v4503 = vor.u32 %v4502, %v4498
      %v4504 = vrot.slane %v4503, 4
      %v4506 = vshll.u32 %v4185, 16
      %v4508 = vrot.slane %v4506, 5
      %v4509 = vsel %vm4197, %v4504, %v4508
      %v4511 = vshrl.u32 %v4186, 16
      %v4513 = vrot.slane %v4511, 4
      %v4514 = vshll.u32 %v4186, 16
      %v4516 = vrot.slane %v4514, 5
      %v4517 = vor.u32 %v4513, %v4516
      %v4518 = vrot.slane %v4517, 4
      %v4520 = vshll.u32 %v4187, 16
      %v4522 = vrot.slane %v4520, 5
      %v4523 = vsel %vm4197, %v4518, %v4522
      %v4524 = vshrl.u32 %v4187, 16
      %v4526 = vrot.slane %v4524, 4
      %v4527 = vor.u32 %v4526, %v4522
      %v4528 = vrot.slane %v4527, 4
      %v4530 = vshll.u32 %v4188, 16
      %v4532 = vrot.slane %v4530, 5
      %v4533 = vsel %vm4197, %v4528, %v4532
      %v4535 = vshrl.u32 %v4189, 16
      %v4537 = vrot.slane %v4535, 4
      %v4538 = vshll.u32 %v4189, 16
      %v4540 = vrot.slane %v4538, 5
      %v4541 = vor.u32 %v4537, %v4540
      %v4542 = vrot.slane %v4541, 4
      %v4544 = vshll.u32 %v4190, 16
      %v4546 = vrot.slane %v4544, 5
      %v4547 = vsel %vm4197, %v4542, %v4546
      %v4548 = vshrl.u32 %v4190, 16
      %v4550 = vrot.slane %v4548, 4
      %v4551 = vor.u32 %v4550, %v4546
      %v4552 = vrot.slane %v4551, 4
      %v4554 = vshll.u32 %v4191, 16
      %v4556 = vrot.slane %v4554, 5
      %v4557 = vsel %vm4197, %v4552, %v4556
      %v4559 = vshrl.u32 %v4192, 16
      %v4561 = vrot.slane %v4559, 4
      %v4562 = vshll.u32 %v4192, 16
      %v4564 = vrot.slane %v4562, 5
      %v4565 = vor.u32 %v4561, %v4564
      %v4566 = vrot.slane %v4565, 4
      %v4568 = vshll.u32 %v4193, 16
      %v4570 = vrot.slane %v4568, 5
      %v4571 = vsel %vm4197, %v4566, %v4570
      %v4572 = vshrl.u32 %v4193, 16
      %v4574 = vrot.slane %v4572, 4
      %v4575 = vor.u32 %v4574, %v4570
      %v4576 = vrot.slane %v4575, 4
      %v4578 = vshll.u32 %v4194, 16
      %v4580 = vrot.slane %v4578, 5
      %v4581 = vsel %vm4197, %v4576, %v4580
      %v4582 = vld [vmem:[%s2] sm:$0x3]
      %v4583 = vunpack.c.l.b16 %v4211
      %v4584 = vunpack.c.l.b16 %v4221
      %v4585 = vunpack.c.l.b16 %v4235
      %v4586 = vunpack.c.l.b16 %v4245
      %v4587 = vunpack.c.l.b16 %v4259
      %v4588 = vunpack.c.l.b16 %v4269
      %v4589 = vunpack.c.l.b16 %v4283
      %v4590 = vunpack.c.l.b16 %v4293
      %v4591 = vunpack.c.l.b16 %v4307
      %v4592 = vunpack.c.l.b16 %v4317
      %v4593 = vunpack.c.l.b16 %v4331
      %v4594 = vunpack.c.l.b16 %v4341
      %v4595 = vunpack.c.l.b16 %v4355
      %v4596 = vunpack.c.l.b16 %v4365
      %v4597 = vunpack.c.l.b16 %v4379
      %v4598 = vunpack.c.l.b16 %v4389
      %v4599 = vunpack.c.l.b16 %v4403
      %v4600 = vunpack.c.l.b16 %v4413
      %v4601 = vunpack.c.l.b16 %v4427
      %v4602 = vunpack.c.l.b16 %v4437
      %v4603 = vunpack.c.l.b16 %v4451
      %v4604 = vunpack.c.l.b16 %v4461
      %v4605 = vunpack.c.l.b16 %v4475
      %v4606 = vunpack.c.l.b16 %v4485
      %v4607 = vunpack.c.l.b16 %v4499
      %v4608 = vunpack.c.l.b16 %v4509
      %v4609 = vunpack.c.l.b16 %v4523
      %v4610 = vunpack.c.l.b16 %v4533
      %v4611 = vunpack.c.l.b16 %v4547
      %v4612 = vunpack.c.l.b16 %v4557
      %v4613 = vunpack.c.l.b16 %v4571
      %v4614 = vunpack.c.l.b16 %v4581
      %v4615 = vpack.c.b16 %v4584, %v4583
      %v4616 = vpack.c.b16 %v4586, %v4585
      %v4617 = vpack.c.b16 %v4588, %v4587
      %v4618 = vpack.c.b16 %v4590, %v4589
      %v4619 = vpack.c.b16 %v4592, %v4591
      %v4620 = vpack.c.b16 %v4594, %v4593
      %v4621 = vpack.c.b16 %v4596, %v4595
      %v4622 = vpack.c.b16 %v4598, %v4597
      %v4623 = vpack.c.b16 %v4600, %v4599
      %v4624 = vpack.c.b16 %v4602, %v4601
      %v4625 = vpack.c.b16 %v4604, %v4603
      %v4626 = vpack.c.b16 %v4606, %v4605
      %v4627 = vpack.c.b16 %v4608, %v4607
      %v4628 = vpack.c.b16 %v4610, %v4609
      %v4629 = vpack.c.b16 %v4612, %v4611
      %v4630 = vpack.c.b16 %v4614, %v4613
      %v4632 = vsel %vm1089, %v4615, 0
      %v4635 = vsel %vm1089, %v4616, 0
      %v4638 = vsel %vm1089, %v4617, 0
      %v4641 = vsel %vm1089, %v4618, 0
      %v4644 = vsel %vm1089, %v4619, 0
      %v4647 = vsel %vm1089, %v4620, 0
      %v4650 = vsel %vm1089, %v4621, 0
      %v4653 = vsel %vm1089, %v4622, 0
      %v4656 = vsel %vm1089, %v4623, 0
      %v4659 = vsel %vm1089, %v4624, 0
      %v4662 = vsel %vm1089, %v4625, 0
      %v4665 = vsel %vm1089, %v4626, 0
      %v4668 = vsel %vm1089, %v4627, 0
      %v4671 = vsel %vm1089, %v4628, 0
      %v4674 = vsel %vm1089, %v4629, 0
      %v4677 = vsel %vm1089, %v4630, 0
      %v4680 = vsel %vm3714, %v4582, 0
      %4682 = vmatprep.subr.bf16.mxu0 0
      %4683 = vmatpush1.bf16.msra.mxu0 %v4680
      %4684 = vmatprep.subr.bf16.mxu0 0
      %4685 = vmatpush1.bf16.msra.mxu0 0
      %4686 = vmatprep.subr.bf16.mxu0 0
      %4687 = vmatpush1.bf16.msra.mxu0 0
      %4688 = vmatprep.subr.bf16.mxu0 0
      %4689 = vmatpush1.bf16.msra.mxu0 0
      %4690 = vmatprep.subr.bf16.mxu0 0
      %4691 = vmatpush1.bf16.msra.mxu0 0
      %4692 = vmatprep.subr.bf16.mxu0 0
      %4693 = vmatpush1.bf16.msra.mxu0 0
      %4694 = vmatprep.subr.bf16.mxu0 0
      %4695 = vmatpush1.bf16.msra.mxu0 0
      %4696 = vmatprep.subr.bf16.mxu0 0
      %4697 = vmatpush1.bf16.msra.mxu0 0
      %4698 = vmatprep.subr.bf16.mxu0 0
      %4699 = vmatpush1.bf16.msra.mxu0 0
      %4700 = vmatprep.subr.bf16.mxu0 0
      %4701 = vmatpush1.bf16.msra.mxu0 0
      %4702 = vmatprep.subr.bf16.mxu0 0
      %4703 = vmatpush1.bf16.msra.mxu0 0
      %4704 = vmatprep.subr.bf16.mxu0 0
      %4705 = vmatpush1.bf16.msra.mxu0 0
      %4706 = vmatprep.subr.bf16.mxu0 0
      %4707 = vmatpush1.bf16.msra.mxu0 0
      %4708 = vmatprep.subr.bf16.mxu0 0
      %4709 = vmatpush1.bf16.msra.mxu0 0
      %4710 = vmatprep.subr.bf16.mxu0 0
      %4711 = vmatpush1.bf16.msra.mxu0 0
      %4712 = vmatprep.subr.bf16.mxu0 0
      %4713 = vmatpush1.bf16.msra.mxu0 0
      %4714 = vmatprep.mubr.bf16.mxu0 0
      %4715 = vmatmul.mubr.bf16.gmra.mrb[0].mxu0 %v4632
      %v4716 = vpop.f32.mrb[0].mxu0
      %v4717 = vadd.f32 0.0, %v4716
      %v4718 = vpop.f32.mrb[0].mxu0
      %v4719 = vpop.f32.mrb[0].mxu0
      %v4720 = vadd.f32 0.0, %v4719
      %v4721 = vpop.f32.mrb[0].mxu0
      %4722 = vmatprep.mubr.bf16.mxu0 0
      %4723 = vmatmul.mubr.bf16.gmra.mrb[0].mxu0 %v4635
      %v4724 = vpop.f32.mrb[0].mxu0
      %v4725 = vadd.f32 0.0, %v4724
      %v4726 = vpop.f32.mrb[0].mxu0
      %v4727 = vpop.f32.mrb[0].mxu0
      %v4728 = vadd.f32 0.0, %v4727
      %v4729 = vpop.f32.mrb[0].mxu0
      %4730 = vmatprep.mubr.bf16.mxu0 0
      %4731 = vmatmul.mubr.bf16.gmra.mrb[0].mxu0 %v4638
      %v4732 = vpop.f32.mrb[0].mxu0
      %v4733 = vadd.f32 0.0, %v4732
      %v4734 = vpop.f32.mrb[0].mxu0
      %v4735 = vpop.f32.mrb[0].mxu0
      %v4736 = vadd.f32 0.0, %v4735
      %v4737 = vpop.f32.mrb[0].mxu0
      %4738 = vmatprep.mubr.bf16.mxu0 0
      %4739 = vmatmul.mubr.bf16.gmra.mrb[0].mxu0 %v4641
      %v4740 = vpop.f32.mrb[0].mxu0
      %v4741 = vadd.f32 0.0, %v4740
      %v4742 = vpop.f32.mrb[0].mxu0
      %v4743 = vpop.f32.mrb[0].mxu0
      %v4744 = vadd.f32 0.0, %v4743
      %v4745 = vpop.f32.mrb[0].mxu0
      %4746 = vmatprep.mubr.bf16.mxu0 0
      %4747 = vmatmul.mubr.bf16.gmra.mrb[0].mxu0 %v4644
      %v4748 = vpop.f32.mrb[0].mxu0
      %v4749 = vadd.f32 0.0, %v4748
      %v4750 = vpop.f32.mrb[0].mxu0
      %v4751 = vpop.f32.mrb[0].mxu0
      %v4752 = vadd.f32 0.0, %v4751
      %v4753 = vpop.f32.mrb[0].mxu0
      %4754 = vmatprep.mubr.bf16.mxu0 0
      %4755 = vmatmul.mubr.bf16.gmra.mrb[0].mxu0 %v4647
      %v4756 = vpop.f32.mrb[0].mxu0
      %v4757 = vadd.f32 0.0, %v4756
      %v4758 = vpop.f32.mrb[0].mxu0
      %v4759 = vpop.f32.mrb[0].mxu0
      %v4760 = vadd.f32 0.0, %v4759
      %v4761 = vpop.f32.mrb[0].mxu0
      %4762 = vmatprep.mubr.bf16.mxu0 0
      %4763 = vmatmul.mubr.bf16.gmra.mrb[0].mxu0 %v4650
      %v4764 = vpop.f32.mrb[0].mxu0
      %v4765 = vadd.f32 0.0, %v4764
      %v4766 = vpop.f32.mrb[0].mxu0
      %v4767 = vpop.f32.mrb[0].mxu0
      %v4768 = vadd.f32 0.0, %v4767
      %v4769 = vpop.f32.mrb[0].mxu0
      %4770 = vmatprep.mubr.bf16.mxu0 0
      %4771 = vmatmul.mubr.bf16.gmra.mrb[0].mxu0 %v4653
      %v4772 = vpop.f32.mrb[0].mxu0
      %v4773 = vadd.f32 0.0, %v4772
      %v4774 = vpop.f32.mrb[0].mxu0
      %v4775 = vpop.f32.mrb[0].mxu0
      %v4776 = vadd.f32 0.0, %v4775
      %v4777 = vpop.f32.mrb[0].mxu0
      %4778 = vmatprep.mubr.bf16.mxu0 0
      %4779 = vmatmul.mubr.bf16.gmra.mrb[0].mxu0 %v4656
      %v4780 = vpop.f32.mrb[0].mxu0
      %v4781 = vadd.f32 0.0, %v4780
      %v4782 = vpop.f32.mrb[0].mxu0
      %v4783 = vpop.f32.mrb[0].mxu0
      %v4784 = vadd.f32 0.0, %v4783
      %v4785 = vpop.f32.mrb[0].mxu0
      %4786 = vmatprep.mubr.bf16.mxu0 0
      %4787 = vmatmul.mubr.bf16.gmra.mrb[0].mxu0 %v4659
      %v4788 = vpop.f32.mrb[0].mxu0
      %v4789 = vadd.f32 0.0, %v4788
      %v4790 = vpop.f32.mrb[0].mxu0
      %v4791 = vpop.f32.mrb[0].mxu0
      %v4792 = vadd.f32 0.0, %v4791
      %v4793 = vpop.f32.mrb[0].mxu0
      %4794 = vmatprep.mubr.bf16.mxu0 0
      %4795 = vmatmul.mubr.bf16.gmra.mrb[0].mxu0 %v4662
      %v4796 = vpop.f32.mrb[0].mxu0
      %v4797 = vadd.f32 0.0, %v4796
      %v4798 = vpop.f32.mrb[0].mxu0
      %v4799 = vpop.f32.mrb[0].mxu0
      %v4800 = vadd.f32 0.0, %v4799
      %v4801 = vpop.f32.mrb[0].mxu0
      %4802 = vmatprep.mubr.bf16.mxu0 0
      %4803 = vmatmul.mubr.bf16.gmra.mrb[0].mxu0 %v4665
      %v4804 = vpop.f32.mrb[0].mxu0
      %v4805 = vadd.f32 0.0, %v4804
      %v4806 = vpop.f32.mrb[0].mxu0
      %v4807 = vpop.f32.mrb[0].mxu0
      %v4808 = vadd.f32 0.0, %v4807
      %v4809 = vpop.f32.mrb[0].mxu0
      %4810 = vmatprep.mubr.bf16.mxu0 0
      %4811 = vmatmul.mubr.bf16.gmra.mrb[0].mxu0 %v4668
      %v4812 = vpop.f32.mrb[0].mxu0
      %v4813 = vadd.f32 0.0, %v4812
      %v4814 = vpop.f32.mrb[0].mxu0
      %v4815 = vpop.f32.mrb[0].mxu0
      %v4816 = vadd.f32 0.0, %v4815
      %v4817 = vpop.f32.mrb[0].mxu0
      %4818 = vmatprep.mubr.bf16.mxu0 0
      %4819 = vmatmul.mubr.bf16.gmra.mrb[0].mxu0 %v4671
      %v4820 = vpop.f32.mrb[0].mxu0
      %v4821 = vadd.f32 0.0, %v4820
      %v4822 = vpop.f32.mrb[0].mxu0
      %v4823 = vpop.f32.mrb[0].mxu0
      %v4824 = vadd.f32 0.0, %v4823
      %v4825 = vpop.f32.mrb[0].mxu0
      %4826 = vmatprep.mubr.bf16.mxu0 0
      %4827 = vmatmul.mubr.bf16.gmra.mrb[0].mxu0 %v4674
      %v4828 = vpop.f32.mrb[0].mxu0
      %v4829 = vadd.f32 0.0, %v4828
      %v4830 = vpop.f32.mrb[0].mxu0
      %v4831 = vpop.f32.mrb[0].mxu0
      %v4832 = vadd.f32 0.0, %v4831
      %v4833 = vpop.f32.mrb[0].mxu0
      %4834 = vmatprep.mubr.bf16.mxu0 0
      %4835 = vmatmul.mubr.bf16.gmra.mrb[0].mxu0 %v4677
      %v4836 = vpop.f32.mrb[0].mxu0
      %v4837 = vadd.f32 0.0, %v4836
      %v4838 = vpop.f32.mrb[0].mxu0
      %v4839 = vpop.f32.mrb[0].mxu0
      %v4840 = vadd.f32 0.0, %v4839
      %v4841 = vpop.f32.mrb[0].mxu0
      %4842 = vdwg.mxu0
      %v4843 = vadd.f32 %v4717, %v4720
      %v4844 = vadd.f32 %v4843, %v4725
      %v4845 = vadd.f32 %v4844, %v4728
      %v4846 = vadd.f32 %v4845, %v4733
      %v4847 = vadd.f32 %v4846, %v4736
      %v4848 = vadd.f32 %v4847, %v4741
      %v4849 = vadd.f32 %v4848, %v4744
      %v4850 = vadd.f32 %v4849, %v4749
      %v4851 = vadd.f32 %v4850, %v4752
      %v4852 = vadd.f32 %v4851, %v4757
      %v4853 = vadd.f32 %v4852, %v4760
      %v4854 = vadd.f32 %v4853, %v4765
      %v4855 = vadd.f32 %v4854, %v4768
      %v4856 = vadd.f32 %v4855, %v4773
      %v4857 = vadd.f32 %v4856, %v4776
      %v4858 = vadd.f32 %v4857, %v4781
      %v4859 = vadd.f32 %v4858, %v4784
      %v4860 = vadd.f32 %v4859, %v4789
      %v4861 = vadd.f32 %v4860, %v4792
      %v4862 = vadd.f32 %v4861, %v4797
      %v4863 = vadd.f32 %v4862, %v4800
      %v4864 = vadd.f32 %v4863, %v4805
      %v4865 = vadd.f32 %v4864, %v4808
      %v4866 = vadd.f32 %v4865, %v4813
      %v4867 = vadd.f32 %v4866, %v4816
      %v4868 = vadd.f32 %v4867, %v4821
      %v4869 = vadd.f32 %v4868, %v4824
      %v4870 = vadd.f32 %v4869, %v4829
      %v4871 = vadd.f32 %v4870, %v4832
      %v4872 = vadd.f32 %v4871, %v4837
      %v4873 = vadd.f32 %v4872, %v4840
      %v4874 = vrot.slane %v4873, 4
      %v4875 = vadd.f32 %v4873, %v4874
      %v4876 = vrot.slane %v4875, 2
      %v4877 = vadd.f32 %v4875, %v4876
      %v4878 = vrot.slane %v4877, 1
      %v4879 = vadd.f32 %v4877, %v4878
      %4880 = vst [vmem:[%s284] sm:$0x1] %v4879
      %v4881 = vmul.f32 %v4717, %v4717
      %v4882 = vmul.f32 %v4720, %v4720
      %v4883 = vmul.f32 %v4725, %v4725
      %v4884 = vmul.f32 %v4728, %v4728
      %v4885 = vmul.f32 %v4733, %v4733
      %v4886 = vmul.f32 %v4736, %v4736
      %v4887 = vmul.f32 %v4741, %v4741
      %v4888 = vmul.f32 %v4744, %v4744
      %v4889 = vmul.f32 %v4749, %v4749
      %v4890 = vmul.f32 %v4752, %v4752
      %v4891 = vmul.f32 %v4757, %v4757
      %v4892 = vmul.f32 %v4760, %v4760
      %v4893 = vmul.f32 %v4765, %v4765
      %v4894 = vmul.f32 %v4768, %v4768
      %v4895 = vmul.f32 %v4773, %v4773
      %v4896 = vmul.f32 %v4776, %v4776
      %v4897 = vmul.f32 %v4781, %v4781
      %v4898 = vmul.f32 %v4784, %v4784
      %v4899 = vmul.f32 %v4789, %v4789
      %v4900 = vmul.f32 %v4792, %v4792
      %v4901 = vmul.f32 %v4797, %v4797
      %v4902 = vmul.f32 %v4800, %v4800
      %v4903 = vmul.f32 %v4805, %v4805
      %v4904 = vmul.f32 %v4808, %v4808
      %v4905 = vmul.f32 %v4813, %v4813
      %v4906 = vmul.f32 %v4816, %v4816
      %v4907 = vmul.f32 %v4821, %v4821
      %v4908 = vmul.f32 %v4824, %v4824
      %v4909 = vmul.f32 %v4829, %v4829
      %v4910 = vmul.f32 %v4832, %v4832
      %v4911 = vmul.f32 %v4837, %v4837
      %v4912 = vmul.f32 %v4840, %v4840
      %v4913 = vadd.f32 %v4881, %v4882
      %v4914 = vadd.f32 %v4913, %v4883
      %v4915 = vadd.f32 %v4914, %v4884
      %v4916 = vadd.f32 %v4915, %v4885
      %v4917 = vadd.f32 %v4916, %v4886
      %v4918 = vadd.f32 %v4917, %v4887
      %v4919 = vadd.f32 %v4918, %v4888
      %v4920 = vadd.f32 %v4919, %v4889
      %v4921 = vadd.f32 %v4920, %v4890
      %v4922 = vadd.f32 %v4921, %v4891
      %v4923 = vadd.f32 %v4922, %v4892
      %v4924 = vadd.f32 %v4923, %v4893
      %v4925 = vadd.f32 %v4924, %v4894
      %v4926 = vadd.f32 %v4925, %v4895
      %v4927 = vadd.f32 %v4926, %v4896
      %v4928 = vadd.f32 %v4927, %v4897
      %v4929 = vadd.f32 %v4928, %v4898
      %v4930 = vadd.f32 %v4929, %v4899
      %v4931 = vadd.f32 %v4930, %v4900
      %v4932 = vadd.f32 %v4931, %v4901
      %v4933 = vadd.f32 %v4932, %v4902
      %v4934 = vadd.f32 %v4933, %v4903
      %v4935 = vadd.f32 %v4934, %v4904
      %v4936 = vadd.f32 %v4935, %v4905
      %v4937 = vadd.f32 %v4936, %v4906
      %v4938 = vadd.f32 %v4937, %v4907
      %v4939 = vadd.f32 %v4938, %v4908
      %v4940 = vadd.f32 %v4939, %v4909
      %v4941 = vadd.f32 %v4940, %v4910
      %v4942 = vadd.f32 %v4941, %v4911
      %v4943 = vadd.f32 %v4942, %v4912
      %v4944 = vrot.slane %v4943, 4
      %v4945 = vadd.f32 %v4943, %v4944
      %v4946 = vrot.slane %v4945, 2
      %v4947 = vadd.f32 %v4945, %v4946
      %v4948 = vrot.slane %v4947, 1
      %v4949 = vadd.f32 %v4947, %v4948
      %4950 = vst [vmem:[%s284 + $0x1] sm:$0x1] %v4949
      %v4951 = vpack.c.bf16 %v4720, %v4717
      %v4952 = vpack.c.bf16 %v4728, %v4725
      %v4953 = vpack.c.bf16 %v4736, %v4733
      %v4954 = vpack.c.bf16 %v4744, %v4741
      %v4955 = vpack.c.bf16 %v4752, %v4749
      %v4956 = vpack.c.bf16 %v4760, %v4757
      %v4957 = vpack.c.bf16 %v4768, %v4765
      %v4958 = vpack.c.bf16 %v4776, %v4773
      %v4959 = vpack.c.bf16 %v4784, %v4781
      %v4960 = vpack.c.bf16 %v4792, %v4789
      %v4961 = vpack.c.bf16 %v4800, %v4797
      %v4962 = vpack.c.bf16 %v4808, %v4805
      %v4963 = vpack.c.bf16 %v4816, %v4813
      %v4964 = vpack.c.bf16 %v4824, %v4821
      %v4965 = vpack.c.bf16 %v4832, %v4829
      %v4966 = vpack.c.bf16 %v4840, %v4837
      %v4983 = vunpack.c.l.b16 %v4951
      %v4984 = vunpack.c.h.b16 %v4951
      %v4985 = vunpack.c.l.b16 %v4952
      %v4986 = vunpack.c.h.b16 %v4952
      %v4987 = vunpack.c.l.b16 %v4953
      %v4988 = vunpack.c.h.b16 %v4953
      %v4989 = vunpack.c.l.b16 %v4954
      %v4990 = vunpack.c.h.b16 %v4954
      %v4991 = vunpack.c.l.b16 %v4955
      %v4992 = vunpack.c.h.b16 %v4955
      %v4993 = vunpack.c.l.b16 %v4956
      %v4994 = vunpack.c.h.b16 %v4956
      %v4995 = vunpack.c.l.b16 %v4957
      %v4996 = vunpack.c.h.b16 %v4957
      %v4997 = vunpack.c.l.b16 %v4958
      %v4998 = vunpack.c.h.b16 %v4958
      %v4999 = vunpack.c.l.b16 %v4959
      %v5000 = vunpack.c.h.b16 %v4959
      %v5001 = vunpack.c.l.b16 %v4960
      %v5002 = vunpack.c.h.b16 %v4960
      %v5003 = vunpack.c.l.b16 %v4961
      %v5004 = vunpack.c.h.b16 %v4961
      %v5005 = vunpack.c.l.b16 %v4962
      %v5006 = vunpack.c.h.b16 %v4962
      %v5007 = vunpack.c.l.b16 %v4963
      %v5008 = vunpack.c.h.b16 %v4963
      %v5009 = vunpack.c.l.b16 %v4964
      %v5010 = vunpack.c.h.b16 %v4964
      %v5011 = vunpack.c.l.b16 %v4965
      %v5012 = vunpack.c.h.b16 %v4965
      %v5013 = vunpack.c.l.b16 %v4966
      %v5014 = vunpack.c.h.b16 %v4966
      %v5015 = vpack.c.b16 %v4983, %v4983
      %v5016 = vpack.c.b16 %v4984, %v4984
      %v5017 = vpack.c.b16 %v4985, %v4985
      %v5018 = vpack.c.b16 %v4986, %v4986
      %v5019 = vpack.c.b16 %v4987, %v4987
      %v5020 = vpack.c.b16 %v4988, %v4988
      %v5021 = vpack.c.b16 %v4989, %v4989
      %v5022 = vpack.c.b16 %v4990, %v4990
      %v5023 = vpack.c.b16 %v4991, %v4991
      %v5024 = vpack.c.b16 %v4992, %v4992
      %v5025 = vpack.c.b16 %v4993, %v4993
      %v5026 = vpack.c.b16 %v4994, %v4994
      %v5027 = vpack.c.b16 %v4995, %v4995
      %v5028 = vpack.c.b16 %v4996, %v4996
      %v5029 = vpack.c.b16 %v4997, %v4997
      %v5030 = vpack.c.b16 %v4998, %v4998
      %v5031 = vpack.c.b16 %v4999, %v4999
      %v5032 = vpack.c.b16 %v5000, %v5000
      %v5033 = vpack.c.b16 %v5001, %v5001
      %v5034 = vpack.c.b16 %v5002, %v5002
      %v5035 = vpack.c.b16 %v5003, %v5003
      %v5036 = vpack.c.b16 %v5004, %v5004
      %v5037 = vpack.c.b16 %v5005, %v5005
      %v5038 = vpack.c.b16 %v5006, %v5006
      %v5039 = vpack.c.b16 %v5007, %v5007
      %v5040 = vpack.c.b16 %v5008, %v5008
      %v5041 = vpack.c.b16 %v5009, %v5009
      %v5042 = vpack.c.b16 %v5010, %v5010
      %v5043 = vpack.c.b16 %v5011, %v5011
      %v5044 = vpack.c.b16 %v5012, %v5012
      %v5045 = vpack.c.b16 %v5013, %v5013
      %v5046 = vpack.c.b16 %v5014, %v5014
      %5079 = vst [vmem:[%s280] sm:$0xf] %v5015
      %5080 = vst [vmem:[%s280 + $0x4] sm:$0xf] %v5016
      %5081 = vst [vmem:[%s280 + $0x8] sm:$0xf] %v5017
      %5082 = vst [vmem:[%s280 + $0xc] sm:$0xf] %v5018
      %5083 = vst [vmem:[%s280 + $0x10] sm:$0xf] %v5019
      %5084 = vst [vmem:[%s280 + $0x14] sm:$0xf] %v5020
      %5085 = vst [vmem:[%s280 + $0x18] sm:$0xf] %v5021
      %5086 = vst [vmem:[%s280 + $0x1c] sm:$0xf] %v5022
      %5087 = vst [vmem:[%s280 + $0x20] sm:$0xf] %v5023
      %5088 = vst [vmem:[%s280 + $0x24] sm:$0xf] %v5024
      %5089 = vst [vmem:[%s280 + $0x28] sm:$0xf] %v5025
      %5090 = vst [vmem:[%s280 + $0x2c] sm:$0xf] %v5026
      %5091 = vst [vmem:[%s280 + $0x30] sm:$0xf] %v5027
      %5092 = vst [vmem:[%s280 + $0x34] sm:$0xf] %v5028
      %5093 = vst [vmem:[%s280 + $0x38] sm:$0xf] %v5029
      %5094 = vst [vmem:[%s280 + $0x3c] sm:$0xf] %v5030
      %5095 = vst [vmem:[%s280 + $0x40] sm:$0xf] %v5031
      %5096 = vst [vmem:[%s280 + $0x44] sm:$0xf] %v5032
      %5097 = vst [vmem:[%s280 + $0x48] sm:$0xf] %v5033
      %5098 = vst [vmem:[%s280 + $0x4c] sm:$0xf] %v5034
      %5099 = vst [vmem:[%s280 + $0x50] sm:$0xf] %v5035
      %5100 = vst [vmem:[%s280 + $0x54] sm:$0xf] %v5036
      %5101 = vst [vmem:[%s280 + $0x58] sm:$0xf] %v5037
      %5102 = vst [vmem:[%s280 + $0x5c] sm:$0xf] %v5038
      %5103 = vst [vmem:[%s280 + $0x60] sm:$0xf] %v5039
      %5104 = vst [vmem:[%s280 + $0x64] sm:$0xf] %v5040
      %5105 = vst [vmem:[%s280 + $0x68] sm:$0xf] %v5041
      %5106 = vst [vmem:[%s280 + $0x6c] sm:$0xf] %v5042
      %5107 = vst [vmem:[%s280 + $0x70] sm:$0xf] %v5043
      %5108 = vst [vmem:[%s280 + $0x74] sm:$0xf] %v5044
      %5109 = vst [vmem:[%s280 + $0x78] sm:$0xf] %v5045
      %5110 = vst [vmem:[%s280 + $0x7c] sm:$0xf] %v5046
      %p5111 = scmp.lt.s32.totalorder %s18, 1
      %s5112 = scalar_select %p5111, %s18, 1
      %s5113 = smul.addr %s5112, 32
      %s5114 = smul.addr %s5113, 4
      %s5115 = scalar_lea.vmem %s3, %s5114
      %p5116 = scmp.lt.s32.totalorder %s18, 1
      %s5117 = scalar_select %p5116, %s18, 1
      %s5118 = smul.addr %s5117, 2
      %s5119 = scalar_lea.vmem %s4, %s5118
      %p5120 = scmp.lt.s32.totalorder %s18, 1
      %s5121 = scalar_select %p5120, %s18, 1
      %s5122 = smul.addr %s5121, 32
      %s5123 = smul.addr %s5122, 4
      %s5124 = scalar_lea.vmem %s5, %s5123
      %p5125 = scmp.lt.s32.totalorder %s18, 1
      %s5126 = scalar_select %p5125, %s18, 1
      %s5127 = smul.addr %s5126, 2
      %s5128 = scalar_lea.vmem %s6, %s5127
      // Predicated region
      $region33: #{basic_block_forward.3} parent=31 // pred_check
        %p5129 = pneg %p104
      $region34: #{basic_block_forward.3} parent=31 // pred_check_branch
        %5131 = sbr.rel (%p5129) target = $region36
      $region35: #{basic_block_forward.3} parent=31 // pred_region
        _
      $region36: #{basic_block_forward.3} parent=31 // pred_fallthru
        _
      // Predicated region
      $region37: #{basic_block_forward.3} parent=31 // pred_check
        %p5132 = pneg %p130
      $region38: #{basic_block_forward.3} parent=31 // pred_check_branch
        %5134 = sbr.rel (%p5132) target = $region40
      $region39: #{basic_block_forward.3} parent=31 // pred_region
        _
      $region40: #{basic_block_forward.3} parent=31 // pred_fallthru
        _
      // Predicated region
      $region41: #{basic_block_forward.3} parent=31 // pred_check
        %p5135 = pneg %p156
      $region42: #{basic_block_forward.3} parent=31 // pred_check_branch
        %5137 = sbr.rel (%p5135) target = $region44
      $region43: #{basic_block_forward.3} parent=31 // pred_region
        _
      $region44: #{basic_block_forward.3} parent=31 // pred_fallthru
        _
      // Predicated region
      $region45: #{basic_block_forward.3} parent=31 // pred_check
        %p5138 = pneg %p182
      $region46: #{basic_block_forward.3} parent=31 // pred_check_branch
        %5140 = sbr.rel (%p5138) target = $region48
      $region47: #{basic_block_forward.3} parent=31 // pred_region
        _
      $region48: #{basic_block_forward.3} parent=31 // pred_fallthru
        _
    $region32: #{basic_block_forward.3} parent=5 // pred_fallthru
      _
    %p5141 = scmp.le.s32.totalorder 2, %s13
    // Predicated region
    $region49: #{basic_block_forward.3} parent=5 // pred_check
      %p5142 = pneg %p5141
    $region50: #{basic_block_forward.3} parent=5 // pred_check_branch
      %5144 = sbr.rel (%p5142) target = $region52
    $region51: #{basic_block_forward.3} parent=5 // pred_region
      %s5145 = ssub.s32 %s13, 2
      // Predicated region
      $region53: #{basic_block_forward.3} parent=51 // pred_check
        %p5146 = pneg %p110
      $region54: #{basic_block_forward.3} parent=51 // pred_check_branch
        %5148 = sbr.rel (%p5146) target = $region56
      $region55: #{basic_block_forward.3} parent=51 // pred_region
        %p5149 = scmp.lt.s32.totalorder %s19, 1
        %s5150 = scalar_select %p5149, %s19, 1
        %s5151 = smul.addr %s5150, 32
        %s5152 = smul.addr %s5151, 4
        %s5153 = scalar_lea.vmem %s3, %s5152
      $region56: #{basic_block_forward.3} parent=51 // pred_fallthru
        _
      // Predicated region
      $region57: #{basic_block_forward.3} parent=51 // pred_check
        %p5154 = pneg %p136
      $region58: #{basic_block_forward.3} parent=51 // pred_check_branch
        %5156 = sbr.rel (%p5154) target = $region60
      $region59: #{basic_block_forward.3} parent=51 // pred_region
        %p5157 = scmp.lt.s32.totalorder %s19, 1
        %s5158 = scalar_select %p5157, %s19, 1
        %s5159 = smul.addr %s5158, 2
        %s5160 = scalar_lea.vmem %s4, %s5159
      $region60: #{basic_block_forward.3} parent=51 // pred_fallthru
        _
      // Predicated region
      $region61: #{basic_block_forward.3} parent=51 // pred_check
        %p5161 = pneg %p162
      $region62: #{basic_block_forward.3} parent=51 // pred_check_branch
        %5163 = sbr.rel (%p5161) target = $region64
      $region63: #{basic_block_forward.3} parent=51 // pred_region
        %p5164 = scmp.lt.s32.totalorder %s19, 1
        %s5165 = scalar_select %p5164, %s19, 1
        %s5166 = smul.addr %s5165, 32
        %s5167 = smul.addr %s5166, 4
        %s5168 = scalar_lea.vmem %s5, %s5167
      $region64: #{basic_block_forward.3} parent=51 // pred_fallthru
        _
      // Predicated region
      $region65: #{basic_block_forward.3} parent=51 // pred_check
        %p5169 = pneg %p188
      $region66: #{basic_block_forward.3} parent=51 // pred_check_branch
        %5171 = sbr.rel (%p5169) target = $region68
      $region67: #{basic_block_forward.3} parent=51 // pred_region
        %p5172 = scmp.lt.s32.totalorder %s19, 1
        %s5173 = scalar_select %p5172, %s19, 1
        %s5174 = smul.addr %s5173, 2
        %s5175 = scalar_lea.vmem %s6, %s5174
      $region68: #{basic_block_forward.3} parent=51 // pred_fallthru
        _
    $region52: #{basic_block_forward.3} parent=5 // pred_fallthru
      _
  $region6: #{basic_block_forward.3} parent=0 // loop_footer
    %s17 = sadd.s32 1, %s13
  $region7: #{basic_block_forward.3} parent=0 // loop_footer_branch
    %12 = sbr.rel target = $region3
  $region8: #{basic_block_forward.3} parent=0 // loop_exit
    _

// kernel: basic_block_forward.4
$region0: #{basic_block_forward.4}
  #allocation0 [shape = 'u32[]', space=smem, size = 0x4, offset = 0x4, fixed_abs, tag = 'smem constant byte address 0x4 - core index']
  #allocation1 [shape = 'u32[144,128]{1,0:T(1,128)}', space=vmem, size = 0x12000, scoped, tag = 'internal scratch']
  #allocation2 [shape = 'bf16[18,18,128]{2,1,0:T(8,128)(2,1)}', space=vmem, size = 0x1b000, scoped, tag = 'scratch operand']
  #allocation3 [shape = 'bf16[16,16,384]{2,1,0:T(16,128)(2,1)}', space=vmem, size = 0x30000, scoped, tag = 'scratch operand']
  %s0 = inlined_call_operand.vmem [shape: bf16[2,16,16,128], index: 0, kind: input, shape index: {}]
  %s1 = inlined_call_operand.vmem [shape: f32[1,128], index: 1, kind: input, shape index: {}]
  %s2 = inlined_call_operand.vmem [shape: f32[1,128], index: 2, kind: input, shape index: {}]
  %s3 = inlined_call_operand.vmem [shape: bf16[3,384,128], index: 3, kind: input, shape index: {}]
  %s4 = inlined_call_operand.vmem [shape: bf16[2,16,16,128], index: 4, kind: output, shape index: {0}]
  %s5 = inlined_call_operand.vmem [shape: f32[2,2,128], index: 5, kind: output, shape index: {1}]
  %6 = xla_tuple %s4, %s5
  %s7 = sld [smem:[#allocation0]]
  $region57: #{basic_block_forward.4} parent=0
    _
  %s9 = ssub.s32 1, %s7
  %s10 = scalar_select 0, %s9, %s7
  loop: start=0, step=1, limit=4
  $region2: #{basic_block_forward.4} parent=0 // loop_pre_header
    _
  $region3: #{basic_block_forward.4} parent=0 // loop_header
    %s12 = sphi 0, %s16
    %p13 = scmp.ge.s32.totalorder %s12, 4
    %s22 = sphi 0, %s24
    %s25 = sphi 0, %s22
    %s26 = sphi 0, %s25
    %s42 = sphi 0, %s26
    %s46 = sphi 0, %s46
    %s48 = sphi 0, %s46
    %s49 = sphi 0, %s48
    %s63 = sphi 0, %s49
    %s67 = sphi 0, %s67
    %s69 = sphi 0, %s67
    %s70 = sphi 0, %s69
    %s84 = sphi 0, %s70
    %s88 = sphi 0, %s88
    %s90 = sphi 0, %s88
    %s91 = sphi 0, %s90
    %s105 = sphi 0, %s91
    %s111 = sphi 0, %s113
    %s114 = sphi 0, %s111
    %s115 = sphi 0, %s114
    %s131 = sphi 0, %s115
    %s137 = sphi 0, %s139
    %s140 = sphi 0, %s137
    %s141 = sphi 0, %s140
    %s157 = sphi 0, %s141
  $region4: #{basic_block_forward.4} parent=0 // loop_header_branch
    %15 = sbr.rel (%p13) target = $region8
  $region5: #{basic_block_forward.4} parent=0 // loop_body
    %s17 = ssub.s32 %s12, 1
    %s18 = ssub.s32 %s12, 2
    %s19 = sadd.s32 %s12, 1
    %s20 = ssub.s32 %s12, %s19
    %p21 = scmp.eq.s32.totalorder %s20, 0
    %s23 = sadd.s32 %s22, 1
    %s24 = scalar_select %p21, %s22, %s23
    %p27 = pneg %p21
    %p28 = scmp.eq.s32.totalorder %s12, 1
    %p29 = por %p27, %p28
    %p30 = scmp.ne.s32.totalorder %s22, %s25
    %p31 = scmp.eq.s32.totalorder %s12, 0
    %p32 = por %p30, %p31
    %p33 = scmp.ne.s32.totalorder %s22, %s25
    %p34 = scmp.eq.s32.totalorder %s17, 1
    %p35 = por %p33, %p34
    %p36 = scmp.ne.s32.totalorder %s25, %s26
    %p37 = scmp.eq.s32.totalorder %s17, 0
    %p38 = por %p36, %p37
    %p39 = scmp.ne.s32.totalorder %s25, %s26
    %p40 = scmp.eq.s32.totalorder %s18, 1
    %p41 = por %p39, %p40
    %p43 = scmp.ne.s32.totalorder %s26, %s42
    %p44 = scmp.eq.s32.totalorder %s18, 0
    %p45 = por %p43, %p44
    %s47 = sadd.s32 %s46, 1
    %p50 = scmp.eq.s32.totalorder %s12, 1
    %p51 = scmp.ne.s32.totalorder %s46, %s48
    %p52 = scmp.eq.s32.totalorder %s12, 0
    %p53 = por %p51, %p52
    %p54 = scmp.ne.s32.totalorder %s46, %s48
    %p55 = scmp.eq.s32.totalorder %s17, 1
    %p56 = por %p54, %p55
    %p57 = scmp.ne.s32.totalorder %s48, %s49
    %p58 = scmp.eq.s32.totalorder %s17, 0
    %p59 = por %p57, %p58
    %p60 = scmp.ne.s32.totalorder %s48, %s49
    %p61 = scmp.eq.s32.totalorder %s18, 1
    %p62 = por %p60, %p61
    %p64 = scmp.ne.s32.totalorder %s49, %s63
    %p65 = scmp.eq.s32.totalorder %s18, 0
    %p66 = por %p64, %p65
    %s68 = sadd.s32 %s67, 1
    %p71 = scmp.eq.s32.totalorder %s12, 1
    %p72 = scmp.ne.s32.totalorder %s67, %s69
    %p73 = scmp.eq.s32.totalorder %s12, 0
    %p74 = por %p72, %p73
    %p75 = scmp.ne.s32.totalorder %s67, %s69
    %p76 = scmp.eq.s32.totalorder %s17, 1
    %p77 = por %p75, %p76
    %p78 = scmp.ne.s32.totalorder %s69, %s70
    %p79 = scmp.eq.s32.totalorder %s17, 0
    %p80 = por %p78, %p79
    %p81 = scmp.ne.s32.totalorder %s69, %s70
    %p82 = scmp.eq.s32.totalorder %s18, 1
    %p83 = por %p81, %p82
    %p85 = scmp.ne.s32.totalorder %s70, %s84
    %p86 = scmp.eq.s32.totalorder %s18, 0
    %p87 = por %p85, %p86
    %s89 = sadd.s32 %s88, 1
    %p92 = scmp.eq.s32.totalorder %s12, 1
    %p93 = scmp.ne.s32.totalorder %s88, %s90
    %p94 = scmp.eq.s32.totalorder %s12, 0
    %p95 = por %p93, %p94
    %p96 = scmp.ne.s32.totalorder %s88, %s90
    %p97 = scmp.eq.s32.totalorder %s17, 1
    %p98 = por %p96, %p97
    %p99 = scmp.ne.s32.totalorder %s90, %s91
    %p100 = scmp.eq.s32.totalorder %s17, 0
    %p101 = por %p99, %p100
    %p102 = scmp.ne.s32.totalorder %s90, %s91
    %p103 = scmp.eq.s32.totalorder %s18, 1
    %p104 = por %p102, %p103
    %p106 = scmp.ne.s32.totalorder %s91, %s105
    %p107 = scmp.eq.s32.totalorder %s18, 0
    %p108 = por %p106, %p107
    %s109 = ssub.s32 %s12, %s19
    %p110 = scmp.eq.s32.totalorder %s109, 0
    %s112 = sadd.s32 %s111, 1
    %s113 = scalar_select %p110, %s111, %s112
    %p116 = pneg %p110
    %p117 = scmp.eq.s32.totalorder %s12, 1
    %p118 = por %p116, %p117
    %p119 = scmp.ne.s32.totalorder %s111, %s114
    %p120 = scmp.eq.s32.totalorder %s12, 0
    %p121 = por %p119, %p120
    %p122 = scmp.ne.s32.totalorder %s111, %s114
    %p123 = scmp.eq.s32.totalorder %s17, 1
    %p124 = por %p122, %p123
    %p125 = scmp.ne.s32.totalorder %s114, %s115
    %p126 = scmp.eq.s32.totalorder %s17, 0
    %p127 = por %p125, %p126
    %p128 = scmp.ne.s32.totalorder %s114, %s115
    %p129 = scmp.eq.s32.totalorder %s18, 1
    %p130 = por %p128, %p129
    %p132 = scmp.ne.s32.totalorder %s115, %s131
    %p133 = scmp.eq.s32.totalorder %s18, 0
    %p134 = por %p132, %p133
    %s135 = ssub.s32 %s12, %s19
    %p136 = scmp.eq.s32.totalorder %s135, 0
    %s138 = sadd.s32 %s137, 1
    %s139 = scalar_select %p136, %s137, %s138
    %p142 = pneg %p136
    %p143 = scmp.eq.s32.totalorder %s12, 1
    %p144 = por %p142, %p143
    %p145 = scmp.ne.s32.totalorder %s137, %s140
    %p146 = scmp.eq.s32.totalorder %s12, 0
    %p147 = por %p145, %p146
    %p148 = scmp.ne.s32.totalorder %s137, %s140
    %p149 = scmp.eq.s32.totalorder %s17, 1
    %p150 = por %p148, %p149
    %p151 = scmp.ne.s32.totalorder %s140, %s141
    %p152 = scmp.eq.s32.totalorder %s17, 0
    %p153 = por %p151, %p152
    %p154 = scmp.ne.s32.totalorder %s140, %s141
    %p155 = scmp.eq.s32.totalorder %s18, 1
    %p156 = por %p154, %p155
    %p158 = scmp.ne.s32.totalorder %s141, %s157
    %p159 = scmp.eq.s32.totalorder %s18, 0
    %p160 = por %p158, %p159
    %p161 = scmp.le.s32.totalorder 1, %s12
    %p162 = scmp.lt.s32.totalorder %s12, 3
    %p163 = pnand %p161, %p162
    %p164 = pneg %p163
    // Predicated region
    $region9: #{basic_block_forward.4} parent=5 // pred_check
      _
    $region10: #{basic_block_forward.4} parent=5 // pred_check_branch
      %166 = sbr.rel (%p163) target = $region12
    $region11: #{basic_block_forward.4} parent=5 // pred_region
      %s167 = ssub.s32 %s12, 1
      // Predicated region
      $region13: #{basic_block_forward.4} parent=11 // pred_check
        %p168 = pneg %p59
      $region14: #{basic_block_forward.4} parent=11 // pred_check_branch
        %170 = sbr.rel (%p168) target = $region16
      $region15: #{basic_block_forward.4} parent=11 // pred_region
        _
      $region16: #{basic_block_forward.4} parent=11 // pred_fallthru
        _
      // Predicated region
      $region17: #{basic_block_forward.4} parent=11 // pred_check
        %p171 = pneg %p80
      $region18: #{basic_block_forward.4} parent=11 // pred_check_branch
        %173 = sbr.rel (%p171) target = $region20
      $region19: #{basic_block_forward.4} parent=11 // pred_region
        _
      $region20: #{basic_block_forward.4} parent=11 // pred_fallthru
        _
      // Predicated region
      $region21: #{basic_block_forward.4} parent=11 // pred_check
        %p174 = pneg %p101
      $region22: #{basic_block_forward.4} parent=11 // pred_check_branch
        %176 = sbr.rel (%p174) target = $region24
      $region23: #{basic_block_forward.4} parent=11 // pred_region
        _
      $region24: #{basic_block_forward.4} parent=11 // pred_fallthru
        _
    $region12: #{basic_block_forward.4} parent=5 // pred_fallthru
      _
    %p177 = scmp.lt.s32.totalorder %s12, 2
    // Predicated region
    $region25: #{basic_block_forward.4} parent=5 // pred_check
      %p178 = pneg %p177
    $region26: #{basic_block_forward.4} parent=5 // pred_check_branch
      %180 = sbr.rel (%p178) target = $region28
    $region27: #{basic_block_forward.4} parent=5 // pred_region
      // Predicated region
      $region29: #{basic_block_forward.4} parent=27 // pred_check
        %p181 = pneg %p32
      $region30: #{basic_block_forward.4} parent=27 // pred_check_branch
        %183 = sbr.rel (%p181) target = $region32
      $region31: #{basic_block_forward.4} parent=27 // pred_region
        %p184 = scmp.lt.s32.totalorder %s12, 1
        %s185 = scalar_select %p184, %s12, 1
        %s186 = smul.addr %s185, 32
        %s187 = smul.addr %s186, 4
        %s188 = scalar_lea.vmem %s0, %s187
      $region32: #{basic_block_forward.4} parent=27 // pred_fallthru
        _
    $region28: #{basic_block_forward.4} parent=5 // pred_fallthru
      _
    %p189 = scmp.le.s32.totalorder 1, %s12
    %p190 = scmp.lt.s32.totalorder %s12, 3
    %p191 = pnand %p189, %p190
    %p192 = pneg %p191
    // Predicated region
    $region33: #{basic_block_forward.4} parent=5 // pred_check
      _
    $region34: #{basic_block_forward.4} parent=5 // pred_check_branch
      %194 = sbr.rel (%p191) target = $region36
    $region35: #{basic_block_forward.4} parent=5 // pred_region
      %s195 = ssub.s32 %s12, 1
      %p196 = scmp.lt.s32.totalorder %s17, 1
      %s197 = scalar_select %p196, %s17, 1
      %s198 = smul.addr %s197, 32
      %s199 = smul.addr %s198, 4
      %s200 = scalar_lea.vmem %s0, %s199
      %p201 = pneg %p38
      %p202 = pneg %p35
      %p203 = pneg %p59
      %p204 = pneg %p56
      %p205 = pneg %p80
      %p206 = pneg %p77
      %p207 = pneg %p101
      %p208 = pneg %p98
      %p209 = pneg %p127
      %p210 = pneg %p124
      %p211 = scmp.lt.s32.totalorder %s17, 1
      %s212 = scalar_select %p211, %s17, 1
      %s213 = smul.addr %s212, 32
      %s214 = smul.addr %s213, 4
      %s215 = scalar_lea.vmem %s4, %s214
      %p216 = pneg %p153
      %p217 = pneg %p150
      %p218 = scmp.lt.s32.totalorder %s17, 1
      %s219 = scalar_select %p218, %s17, 1
      %s220 = smul.addr %s219, 2
      %s221 = scalar_lea.vmem %s5, %s220
      %p222 = scmp.lt.s32.totalorder %s17, 1
      %s223 = scalar_select %p222, %s17, 1
      %s224 = smul.addr %s223, 32
      %s225 = smul.addr %s224, 4
      %s226 = scalar_lea.vmem %s0, %s225
      %p227 = scmp.lt.s32.totalorder %s17, 1
      %s228 = scalar_select %p227, %s17, 1
      %s229 = smul.addr %s228, 32
      %s230 = smul.addr %s229, 4
      %s231 = scalar_lea.vmem %s4, %s230
      %p232 = scmp.lt.s32.totalorder %s17, 1
      %s233 = scalar_select %p232, %s17, 1
      %s234 = smul.addr %s233, 2
      %s235 = scalar_lea.vmem %s5, %s234
      %v237 = vld [vmem:[%s226] sm:$0xf]
      %v238 = vld [vmem:[%s226 + $0x4] sm:$0xf]
      %v239 = vld [vmem:[%s226 + $0x8] sm:$0xf]
      %v240 = vld [vmem:[%s226 + $0xc] sm:$0xf]
      %v241 = vld [vmem:[%s226 + $0x10] sm:$0xf]
      %v242 = vld [vmem:[%s226 + $0x14] sm:$0xf]
      %v243 = vld [vmem:[%s226 + $0x18] sm:$0xf]
      %v244 = vld [vmem:[%s226 + $0x1c] sm:$0xf]
      %v245 = vld [vmem:[%s226 + $0x20] sm:$0xf]
      %v246 = vld [vmem:[%s226 + $0x24] sm:$0xf]
      %v247 = vld [vmem:[%s226 + $0x28] sm:$0xf]
      %v248 = vld [vmem:[%s226 + $0x2c] sm:$0xf]
      %v249 = vld [vmem:[%s226 + $0x30] sm:$0xf]
      %v250 = vld [vmem:[%s226 + $0x34] sm:$0xf]
      %v251 = vld [vmem:[%s226 + $0x38] sm:$0xf]
      %v252 = vld [vmem:[%s226 + $0x3c] sm:$0xf]
      %v253 = vld [vmem:[%s226 + $0x40] sm:$0xf]
      %v254 = vld [vmem:[%s226 + $0x44] sm:$0xf]
      %v255 = vld [vmem:[%s226 + $0x48] sm:$0xf]
      %v256 = vld [vmem:[%s226 + $0x4c] sm:$0xf]
      %v257 = vld [vmem:[%s226 + $0x50] sm:$0xf]
      %v258 = vld [vmem:[%s226 + $0x54] sm:$0xf]
      %v259 = vld [vmem:[%s226 + $0x58] sm:$0xf]
      %v260 = vld [vmem:[%s226 + $0x5c] sm:$0xf]
      %v261 = vld [vmem:[%s226 + $0x60] sm:$0xf]
      %v262 = vld [vmem:[%s226 + $0x64] sm:$0xf]
      %v263 = vld [vmem:[%s226 + $0x68] sm:$0xf]
      %v264 = vld [vmem:[%s226 + $0x6c] sm:$0xf]
      %v265 = vld [vmem:[%s226 + $0x70] sm:$0xf]
      %v266 = vld [vmem:[%s226 + $0x74] sm:$0xf]
      %v267 = vld [vmem:[%s226 + $0x78] sm:$0xf]
      %v268 = vld [vmem:[%s226 + $0x7c] sm:$0xf]
      %v269 = vld [vmem:[%s1] sm:$0x1]
      %v270 = vunpack.c.l.bf16 %v237
      %v271 = vunpack.c.l.bf16 %v238
      %v272 = vunpack.c.l.bf16 %v239
      %v273 = vunpack.c.l.bf16 %v240
      %v274 = vunpack.c.l.bf16 %v241
      %v275 = vunpack.c.l.bf16 %v242
      %v276 = vunpack.c.l.bf16 %v243
      %v277 = vunpack.c.l.bf16 %v244
      %v278 = vunpack.c.l.bf16 %v245
      %v279 = vunpack.c.l.bf16 %v246
      %v280 = vunpack.c.l.bf16 %v247
      %v281 = vunpack.c.l.bf16 %v248
      %v282 = vunpack.c.l.bf16 %v249
      %v283 = vunpack.c.l.bf16 %v250
      %v284 = vunpack.c.l.bf16 %v251
      %v285 = vunpack.c.l.bf16 %v252
      %v286 = vunpack.c.l.bf16 %v253
      %v287 = vunpack.c.l.bf16 %v254
      %v288 = vunpack.c.l.bf16 %v255
      %v289 = vunpack.c.l.bf16 %v256
      %v290 = vunpack.c.l.bf16 %v257
      %v291 = vunpack.c.l.bf16 %v258
      %v292 = vunpack.c.l.bf16 %v259
      %v293 = vunpack.c.l.bf16 %v260
      %v294 = vunpack.c.l.bf16 %v261
      %v295 = vunpack.c.l.bf16 %v262
      %v296 = vunpack.c.l.bf16 %v263
      %v297 = vunpack.c.l.bf16 %v264
      %v298 = vunpack.c.l.bf16 %v265
      %v299 = vunpack.c.l.bf16 %v266
      %v300 = vunpack.c.l.bf16 %v267
      %v301 = vunpack.c.l.bf16 %v268
      %v303 = vlaneseq
      %v304 = vshrl.u32 %v303, 7
      %v305 = vsub.s32 0, %v304
      %v306 = vrot.slane %v269, %v305
      %v308 = vmul.f32 %v270, %v306
      %v309 = vmul.f32 %v271, %v306
      %v310 = vmul.f32 %v272, %v306
      %v311 = vmul.f32 %v273, %v306
      %v312 = vmul.f32 %v274, %v306
      %v313 = vmul.f32 %v275, %v306
      %v314 = vmul.f32 %v276, %v306
      %v315 = vmul.f32 %v277, %v306
      %v316 = vmul.f32 %v278, %v306
      %v317 = vmul.f32 %v279, %v306
      %v318 = vmul.f32 %v280, %v306
      %v319 = vmul.f32 %v281, %v306
      %v320 = vmul.f32 %v282, %v306
      %v321 = vmul.f32 %v283, %v306
      %v322 = vmul.f32 %v284, %v306
      %v323 = vmul.f32 %v285, %v306
      %v324 = vmul.f32 %v286, %v306
      %v325 = vmul.f32 %v287, %v306
      %v326 = vmul.f32 %v288, %v306
      %v327 = vmul.f32 %v289, %v306
      %v328 = vmul.f32 %v290, %v306
      %v329 = vmul.f32 %v291, %v306
      %v330 = vmul.f32 %v292, %v306
      %v331 = vmul.f32 %v293, %v306
      %v332 = vmul.f32 %v294, %v306
      %v333 = vmul.f32 %v295, %v306
      %v334 = vmul.f32 %v296, %v306
      %v335 = vmul.f32 %v297, %v306
      %v336 = vmul.f32 %v298, %v306
      %v337 = vmul.f32 %v299, %v306
      %v338 = vmul.f32 %v300, %v306
      %v339 = vmul.f32 %v301, %v306
      %v340 = vld [vmem:[%s2] sm:$0x1]
      %v342 = vlaneseq
      %v343 = vshrl.u32 %v342, 7
      %v344 = vsub.s32 0, %v343
      %v345 = vrot.slane %v340, %v344
      %v347 = vadd.f32 %v308, %v345
      %v348 = vadd.f32 %v309, %v345
      %v349 = vadd.f32 %v310, %v345
      %v350 = vadd.f32 %v311, %v345
      %v351 = vadd.f32 %v312, %v345
      %v352 = vadd.f32 %v313, %v345
      %v353 = vadd.f32 %v314, %v345
      %v354 = vadd.f32 %v315, %v345
      %v355 = vadd.f32 %v316, %v345
      %v356 = vadd.f32 %v317, %v345
      %v357 = vadd.f32 %v318, %v345
      %v358 = vadd.f32 %v319, %v345
      %v359 = vadd.f32 %v320, %v345
      %v360 = vadd.f32 %v321, %v345
      %v361 = vadd.f32 %v322, %v345
      %v362 = vadd.f32 %v323, %v345
      %v363 = vadd.f32 %v324, %v345
      %v364 = vadd.f32 %v325, %v345
      %v365 = vadd.f32 %v326, %v345
      %v366 = vadd.f32 %v327, %v345
      %v367 = vadd.f32 %v328, %v345
      %v368 = vadd.f32 %v329, %v345
      %v369 = vadd.f32 %v330, %v345
      %v370 = vadd.f32 %v331, %v345
      %v371 = vadd.f32 %v332, %v345
      %v372 = vadd.f32 %v333, %v345
      %v373 = vadd.f32 %v334, %v345
      %v374 = vadd.f32 %v335, %v345
      %v375 = vadd.f32 %v336, %v345
      %v376 = vadd.f32 %v337, %v345
      %v377 = vadd.f32 %v338, %v345
      %v378 = vadd.f32 %v339, %v345
      %v379 = vmax.f32 %v347, 0.0
      %v380 = vmax.f32 %v348, 0.0
      %v381 = vmax.f32 %v349, 0.0
      %v382 = vmax.f32 %v350, 0.0
      %v383 = vmax.f32 %v351, 0.0
      %v384 = vmax.f32 %v352, 0.0
      %v385 = vmax.f32 %v353, 0.0
      %v386 = vmax.f32 %v354, 0.0
      %v387 = vmax.f32 %v355, 0.0
      %v388 = vmax.f32 %v356, 0.0
      %v389 = vmax.f32 %v357, 0.0
      %v390 = vmax.f32 %v358, 0.0
      %v391 = vmax.f32 %v359, 0.0
      %v392 = vmax.f32 %v360, 0.0
      %v393 = vmax.f32 %v361, 0.0
      %v394 = vmax.f32 %v362, 0.0
      %v395 = vmax.f32 %v363, 0.0
      %v396 = vmax.f32 %v364, 0.0
      %v397 = vmax.f32 %v365, 0.0
      %v398 = vmax.f32 %v366, 0.0
      %v399 = vmax.f32 %v367, 0.0
      %v400 = vmax.f32 %v368, 0.0
      %v401 = vmax.f32 %v369, 0.0
      %v402 = vmax.f32 %v370, 0.0
      %v403 = vmax.f32 %v371, 0.0
      %v404 = vmax.f32 %v372, 0.0
      %v405 = vmax.f32 %v373, 0.0
      %v406 = vmax.f32 %v374, 0.0
      %v407 = vmax.f32 %v375, 0.0
      %v408 = vmax.f32 %v376, 0.0
      %v409 = vmax.f32 %v377, 0.0
      %v410 = vmax.f32 %v378, 0.0
      %411 = vst [vmem:[#allocation2] sm:$0xf] 0
      %412 = vst [vmem:[#allocation2 + $0x4] sm:$0xf] 0
      %413 = vst [vmem:[#allocation2 + $0x8] sm:$0x1] 0
      %s414 = scalar_lea.vmem [#allocation2], 204
      %415 = vst [vmem:[%s414] sm:$0xf] 0
      %416 = vst [vmem:[%s414 + $0x4] sm:$0xf] 0
      %417 = vst [vmem:[%s414 + $0x8] sm:$0x1] 0
      %s418 = scalar_lea.vmem [#allocation2], 12
      %vm419 = vcmask 1040384
      %vm420 = vsmask.f32 256
      %vm421 = vmand %vm419, %vm420
      %v422 = vld [vmem:[%s418] sm:$0x1]
      %v423 = vsel %vm421, 0, %v422
      %424 = vst [vmem:[%s418] sm:$0x1] %v423
      %v425 = vld [vmem:[%s418 + $0xc] sm:$0x1]
      %v426 = vsel %vm421, 0, %v425
      %427 = vst [vmem:[%s418 + $0xc] sm:$0x1] %v426
      %v428 = vld [vmem:[%s418 + $0x18] sm:$0x1]
      %v429 = vsel %vm421, 0, %v428
      %430 = vst [vmem:[%s418 + $0x18] sm:$0x1] %v429
      %v431 = vld [vmem:[%s418 + $0x24] sm:$0x1]
      %v432 = vsel %vm421, 0, %v431
      %433 = vst [vmem:[%s418 + $0x24] sm:$0x1] %v432
      %v434 = vld [vmem:[%s418 + $0x30] sm:$0x1]
      %v435 = vsel %vm421, 0, %v434
      %436 = vst [vmem:[%s418 + $0x30] sm:$0x1] %v435
      %v437 = vld [vmem:[%s418 + $0x3c] sm:$0x1]
      %v438 = vsel %vm421, 0, %v437
      %439 = vst [vmem:[%s418 + $0x3c] sm:$0x1] %v438
      %v440 = vld [vmem:[%s418 + $0x48] sm:$0x1]
      %v441 = vsel %vm421, 0, %v440
      %442 = vst [vmem:[%s418 + $0x48] sm:$0x1] %v441
      %v443 = vld [vmem:[%s418 + $0x54] sm:$0x1]
      %v444 = vsel %vm421, 0, %v443
      %445 = vst [vmem:[%s418 + $0x54] sm:$0x1] %v444
      %v446 = vld [vmem:[%s418 + $0x60] sm:$0x1]
      %v447 = vsel %vm421, 0, %v446
      %448 = vst [vmem:[%s418 + $0x60] sm:$0x1] %v447
      %v449 = vld [vmem:[%s418 + $0x6c] sm:$0x1]
      %v450 = vsel %vm421, 0, %v449
      %451 = vst [vmem:[%s418 + $0x6c] sm:$0x1] %v450
      %v452 = vld [vmem:[%s418 + $0x78] sm:$0x1]
      %v453 = vsel %vm421, 0, %v452
      %454 = vst [vmem:[%s418 + $0x78] sm:$0x1] %v453
      %v455 = vld [vmem:[%s418 + $0x84] sm:$0x1]
      %v456 = vsel %vm421, 0, %v455
      %457 = vst [vmem:[%s418 + $0x84] sm:$0x1] %v456
      %v458 = vld [vmem:[%s418 + $0x90] sm:$0x1]
      %v459 = vsel %vm421, 0, %v458
      %460 = vst [vmem:[%s418 + $0x90] sm:$0x1] %v459
      %v461 = vld [vmem:[%s418 + $0x9c] sm:$0x1]
      %v462 = vsel %vm421, 0, %v461
      %463 = vst [vmem:[%s418 + $0x9c] sm:$0x1] %v462
      %v464 = vld [vmem:[%s418 + $0xa8] sm:$0x1]
      %v465 = vsel %vm421, 0, %v464
      %466 = vst [vmem:[%s418 + $0xa8] sm:$0x1] %v465
      %v467 = vld [vmem:[%s418 + $0xb4] sm:$0x1]
      %v468 = vsel %vm421, 0, %v467
      %469 = vst [vmem:[%s418 + $0xb4] sm:$0x1] %v468
      %vm470 = vsmask.f32 7938
      %vm471 = vmand %vm419, %vm470
      %v472 = vld [vmem:[%s418 + $0x8] sm:$0x1]
      %v473 = vsel %vm471, 0, %v472
      %474 = vst [vmem:[%s418 + $0x8] sm:$0x1] %v473
      %v475 = vld [vmem:[%s418 + $0x14] sm:$0x1]
      %v476 = vsel %vm471, 0, %v475
      %477 = vst [vmem:[%s418 + $0x14] sm:$0x1] %v476
      %v478 = vld [vmem:[%s418 + $0x20] sm:$0x1]
      %v479 = vsel %vm471, 0, %v478
      %480 = vst [vmem:[%s418 + $0x20] sm:$0x1] %v479
      %v481 = vld [vmem:[%s418 + $0x2c] sm:$0x1]
      %v482 = vsel %vm471, 0, %v481
      %483 = vst [vmem:[%s418 + $0x2c] sm:$0x1] %v482
      %v484 = vld [vmem:[%s418 + $0x38] sm:$0x1]
      %v485 = vsel %vm471, 0, %v484
      %486 = vst [vmem:[%s418 + $0x38] sm:$0x1] %v485
      %v487 = vld [vmem:[%s418 + $0x44] sm:$0x1]
      %v488 = vsel %vm471, 0, %v487
      %489 = vst [vmem:[%s418 + $0x44] sm:$0x1] %v488
      %v490 = vld [vmem:[%s418 + $0x50] sm:$0x1]
      %v491 = vsel %vm471, 0, %v490
      %492 = vst [vmem:[%s418 + $0x50] sm:$0x1] %v491
      %v493 = vld [vmem:[%s418 + $0x5c] sm:$0x1]
      %v494 = vsel %vm471, 0, %v493
      %495 = vst [vmem:[%s418 + $0x5c] sm:$0x1] %v494
      %v496 = vld [vmem:[%s418 + $0x68] sm:$0x1]
      %v497 = vsel %vm471, 0, %v496
      %498 = vst [vmem:[%s418 + $0x68] sm:$0x1] %v497
      %v499 = vld [vmem:[%s418 + $0x74] sm:$0x1]
      %v500 = vsel %vm471, 0, %v499
      %501 = vst [vmem:[%s418 + $0x74] sm:$0x1] %v500
      %v502 = vld [vmem:[%s418 + $0x80] sm:$0x1]
      %v503 = vsel %vm471, 0, %v502
      %504 = vst [vmem:[%s418 + $0x80] sm:$0x1] %v503
      %v505 = vld [vmem:[%s418 + $0x8c] sm:$0x1]
      %v506 = vsel %vm471, 0, %v505
      %507 = vst [vmem:[%s418 + $0x8c] sm:$0x1] %v506
      %v508 = vld [vmem:[%s418 + $0x98] sm:$0x1]
      %v509 = vsel %vm471, 0, %v508
      %510 = vst [vmem:[%s418 + $0x98] sm:$0x1] %v509
      %v511 = vld [vmem:[%s418 + $0xa4] sm:$0x1]
      %v512 = vsel %vm471, 0, %v511
      %513 = vst [vmem:[%s418 + $0xa4] sm:$0x1] %v512
      %v514 = vld [vmem:[%s418 + $0xb0] sm:$0x1]
      %v515 = vsel %vm471, 0, %v514
      %516 = vst [vmem:[%s418 + $0xb0] sm:$0x1] %v515
      %v517 = vld [vmem:[%s418 + $0xbc] sm:$0x1]
      %v518 = vsel %vm471, 0, %v517
      %519 = vst [vmem:[%s418 + $0xbc] sm:$0x1] %v518
      %v520 = vpack.c.bf16 %v380, %v379
      %v521 = vpack.c.bf16 %v382, %v381
      %v522 = vpack.c.bf16 %v384, %v383
      %v523 = vpack.c.bf16 %v386, %v385
      %v524 = vpack.c.bf16 %v388, %v387
      %v525 = vpack.c.bf16 %v390, %v389
      %v526 = vpack.c.bf16 %v392, %v391
      %v527 = vpack.c.bf16 %v394, %v393
      %v528 = vpack.c.bf16 %v396, %v395
      %v529 = vpack.c.bf16 %v398, %v397
      %v530 = vpack.c.bf16 %v400, %v399
      %v531 = vpack.c.bf16 %v402, %v401
      %v532 = vpack.c.bf16 %v404, %v403
      %v533 = vpack.c.bf16 %v406, %v405
      %v534 = vpack.c.bf16 %v408, %v407
      %v535 = vpack.c.bf16 %v410, %v409
      %v552 = vunpack.c.l.b16 %v520
      %v553 = vunpack.c.h.b16 %v520
      %v554 = vunpack.c.l.b16 %v521
      %v555 = vunpack.c.h.b16 %v521
      %v556 = vunpack.c.l.b16 %v522
      %v557 = vunpack.c.h.b16 %v522
      %v558 = vunpack.c.l.b16 %v523
      %v559 = vunpack.c.h.b16 %v523
      %v560 = vunpack.c.l.b16 %v524
      %v561 = vunpack.c.h.b16 %v524
      %v562 = vunpack.c.l.b16 %v525
      %v563 = vunpack.c.h.b16 %v525
      %v564 = vunpack.c.l.b16 %v526
      %v565 = vunpack.c.h.b16 %v526
      %v566 = vunpack.c.l.b16 %v527
      %v567 = vunpack.c.h.b16 %v527
      %v568 = vunpack.c.l.b16 %v528
      %v569 = vunpack.c.h.b16 %v528
      %v570 = vunpack.c.l.b16 %v529
      %v571 = vunpack.c.h.b16 %v529
      %v572 = vunpack.c.l.b16 %v530
      %v573 = vunpack.c.h.b16 %v530
      %v574 = vunpack.c.l.b16 %v531
      %v575 = vunpack.c.h.b16 %v531
      %v576 = vunpack.c.l.b16 %v532
      %v577 = vunpack.c.h.b16 %v532
      %v578 = vunpack.c.l.b16 %v533
      %v579 = vunpack.c.h.b16 %v533
      %v580 = vunpack.c.l.b16 %v534
      %v581 = vunpack.c.h.b16 %v534
      %v582 = vunpack.c.l.b16 %v535
      %v583 = vunpack.c.h.b16 %v535
      %v584 = vpack.c.b16 %v552, %v552
      %v585 = vpack.c.b16 %v553, %v553
      %v586 = vpack.c.b16 %v554, %v554
      %v587 = vpack.c.b16 %v555, %v555
      %v588 = vpack.c.b16 %v556, %v556
      %v589 = vpack.c.b16 %v557, %v557
      %v590 = vpack.c.b16 %v558, %v558
      %v591 = vpack.c.b16 %v559, %v559
      %v592 = vpack.c.b16 %v560, %v560
      %v593 = vpack.c.b16 %v561, %v561
      %v594 = vpack.c.b16 %v562, %v562
      %v595 = vpack.c.b16 %v563, %v563
      %v596 = vpack.c.b16 %v564, %v564
      %v597 = vpack.c.b16 %v565, %v565
      %v598 = vpack.c.b16 %v566, %v566
      %v599 = vpack.c.b16 %v567, %v567
      %v600 = vpack.c.b16 %v568, %v568
      %v601 = vpack.c.b16 %v569, %v569
      %v602 = vpack.c.b16 %v570, %v570
      %v603 = vpack.c.b16 %v571, %v571
      %v604 = vpack.c.b16 %v572, %v572
      %v605 = vpack.c.b16 %v573, %v573
      %v606 = vpack.c.b16 %v574, %v574
      %v607 = vpack.c.b16 %v575, %v575
      %v608 = vpack.c.b16 %v576, %v576
      %v609 = vpack.c.b16 %v577, %v577
      %v610 = vpack.c.b16 %v578, %v578
      %v611 = vpack.c.b16 %v579, %v579
      %v612 = vpack.c.b16 %v580, %v580
      %v613 = vpack.c.b16 %v581, %v581
      %v614 = vpack.c.b16 %v582, %v582
      %v615 = vpack.c.b16 %v583, %v583
      %vm616 = vsmask.f32 4368
      %vm617 = vmor %vm420, %vm616
      %v619 = vshrl.u32 %v584, 16
      %v621 = vrot.slane %v619, 7
      %v622 = vshll.u32 %v584, 16
      %v624 = vor.u32 %v621, %v622
      %v625 = vrot.slane %v621, 4
      %v627 = vshrl.u32 %v585, 16
      %v629 = vrot.slane %v627, 7
      %v630 = vshll.u32 %v585, 16
      %v632 = vor.u32 %v629, %v630
      %v633 = vsel %vm617, %v625, %v632
      %v634 = vrot.slane %v629, 4
      %v636 = vshrl.u32 %v586, 16
      %v638 = vrot.slane %v636, 7
      %v639 = vshll.u32 %v586, 16
      %v641 = vor.u32 %v638, %v639
      %v642 = vrot.slane %v638, 4
      %v644 = vshrl.u32 %v587, 16
      %v646 = vrot.slane %v644, 7
      %v647 = vshll.u32 %v587, 16
      %v649 = vor.u32 %v646, %v647
      %v650 = vsel %vm617, %v642, %v649
      %v651 = vrot.slane %v646, 4
      %v653 = vshrl.u32 %v588, 16
      %v655 = vrot.slane %v653, 7
      %v656 = vshll.u32 %v588, 16
      %v658 = vor.u32 %v655, %v656
      %v659 = vrot.slane %v655, 4
      %v661 = vshrl.u32 %v589, 16
      %v663 = vrot.slane %v661, 7
      %v664 = vshll.u32 %v589, 16
      %v666 = vor.u32 %v663, %v664
      %v667 = vsel %vm617, %v659, %v666
      %v668 = vrot.slane %v663, 4
      %v670 = vshrl.u32 %v590, 16
      %v672 = vrot.slane %v670, 7
      %v673 = vshll.u32 %v590, 16
      %v675 = vor.u32 %v672, %v673
      %v676 = vrot.slane %v672, 4
      %v678 = vshrl.u32 %v591, 16
      %v680 = vrot.slane %v678, 7
      %v681 = vshll.u32 %v591, 16
      %v683 = vor.u32 %v680, %v681
      %v684 = vsel %vm617, %v676, %v683
      %v685 = vrot.slane %v680, 4
      %v687 = vshrl.u32 %v592, 16
      %v689 = vrot.slane %v687, 7
      %v690 = vshll.u32 %v592, 16
      %v692 = vor.u32 %v689, %v690
      %v693 = vrot.slane %v689, 4
      %v695 = vshrl.u32 %v593, 16
      %v697 = vrot.slane %v695, 7
      %v698 = vshll.u32 %v593, 16
      %v700 = vor.u32 %v697, %v698
      %v701 = vsel %vm617, %v693, %v700
      %v702 = vrot.slane %v697, 4
      %v704 = vshrl.u32 %v594, 16
      %v706 = vrot.slane %v704, 7
      %v707 = vshll.u32 %v594, 16
      %v709 = vor.u32 %v706, %v707
      %v710 = vrot.slane %v706, 4
      %v712 = vshrl.u32 %v595, 16
      %v714 = vrot.slane %v712, 7
      %v715 = vshll.u32 %v595, 16
      %v717 = vor.u32 %v714, %v715
      %v718 = vsel %vm617, %v710, %v717
      %v719 = vrot.slane %v714, 4
      %v721 = vshrl.u32 %v596, 16
      %v723 = vrot.slane %v721, 7
      %v724 = vshll.u32 %v596, 16
      %v726 = vor.u32 %v723, %v724
      %v727 = vrot.slane %v723, 4
      %v729 = vshrl.u32 %v597, 16
      %v731 = vrot.slane %v729, 7
      %v732 = vshll.u32 %v597, 16
      %v734 = vor.u32 %v731, %v732
      %v735 = vsel %vm617, %v727, %v734
      %v736 = vrot.slane %v731, 4
      %v738 = vshrl.u32 %v598, 16
      %v740 = vrot.slane %v738, 7
      %v741 = vshll.u32 %v598, 16
      %v743 = vor.u32 %v740, %v741
      %v744 = vrot.slane %v740, 4
      %v746 = vshrl.u32 %v599, 16
      %v748 = vrot.slane %v746, 7
      %v749 = vshll.u32 %v599, 16
      %v751 = vor.u32 %v748, %v749
      %v752 = vsel %vm617, %v744, %v751
      %v753 = vrot.slane %v748, 4
      %v755 = vshrl.u32 %v600, 16
      %v757 = vrot.slane %v755, 7
      %v758 = vshll.u32 %v600, 16
      %v760 = vor.u32 %v757, %v758
      %v761 = vrot.slane %v757, 4
      %v763 = vshrl.u32 %v601, 16
      %v765 = vrot.slane %v763, 7
      %v766 = vshll.u32 %v601, 16
      %v768 = vor.u32 %v765, %v766
      %v769 = vsel %vm617, %v761, %v768
      %v770 = vrot.slane %v765, 4
      %v772 = vshrl.u32 %v602, 16
      %v774 = vrot.slane %v772, 7
      %v775 = vshll.u32 %v602, 16
      %v777 = vor.u32 %v774, %v775
      %v778 = vrot.slane %v774, 4
      %v780 = vshrl.u32 %v603, 16
      %v782 = vrot.slane %v780, 7
      %v783 = vshll.u32 %v603, 16
      %v785 = vor.u32 %v782, %v783
      %v786 = vsel %vm617, %v778, %v785
      %v787 = vrot.slane %v782, 4
      %v789 = vshrl.u32 %v604, 16
      %v791 = vrot.slane %v789, 7
      %v792 = vshll.u32 %v604, 16
      %v794 = vor.u32 %v791, %v792
      %v795 = vrot.slane %v791, 4
      %v797 = vshrl.u32 %v605, 16
      %v799 = vrot.slane %v797, 7
      %v800 = vshll.u32 %v605, 16
      %v802 = vor.u32 %v799, %v800
      %v803 = vsel %vm617, %v795, %v802
      %v804 = vrot.slane %v799, 4
      %v806 = vshrl.u32 %v606, 16
      %v808 = vrot.slane %v806, 7
      %v809 = vshll.u32 %v606, 16
      %v811 = vor.u32 %v808, %v809
      %v812 = vrot.slane %v808, 4
      %v814 = vshrl.u32 %v607, 16
      %v816 = vrot.slane %v814, 7
      %v817 = vshll.u32 %v607, 16
      %v819 = vor.u32 %v816, %v817
      %v820 = vsel %vm617, %v812, %v819
      %v821 = vrot.slane %v816, 4
      %v823 = vshrl.u32 %v608, 16
      %v825 = vrot.slane %v823, 7
      %v826 = vshll.u32 %v608, 16
      %v828 = vor.u32 %v825, %v826
      %v829 = vrot.slane %v825, 4
      %v831 = vshrl.u32 %v609, 16
      %v833 = vrot.slane %v831, 7
      %v834 = vshll.u32 %v609, 16
      %v836 = vor.u32 %v833, %v834
      %v837 = vsel %vm617, %v829, %v836
      %v838 = vrot.slane %v833, 4
      %v840 = vshrl.u32 %v610, 16
      %v842 = vrot.slane %v840, 7
      %v843 = vshll.u32 %v610, 16
      %v845 = vor.u32 %v842, %v843
      %v846 = vrot.slane %v842, 4
      %v848 = vshrl.u32 %v611, 16
      %v850 = vrot.slane %v848, 7
      %v851 = vshll.u32 %v611, 16
      %v853 = vor.u32 %v850, %v851
      %v854 = vsel %vm617, %v846, %v853
      %v855 = vrot.slane %v850, 4
      %v857 = vshrl.u32 %v612, 16
      %v859 = vrot.slane %v857, 7
      %v860 = vshll.u32 %v612, 16
      %v862 = vor.u32 %v859, %v860
      %v863 = vrot.slane %v859, 4
      %v865 = vshrl.u32 %v613, 16
      %v867 = vrot.slane %v865, 7
      %v868 = vshll.u32 %v613, 16
      %v870 = vor.u32 %v867, %v868
      %v871 = vsel %vm617, %v863, %v870
      %v872 = vrot.slane %v867, 4
      %v874 = vshrl.u32 %v614, 16
      %v876 = vrot.slane %v874, 7
      %v877 = vshll.u32 %v614, 16
      %v879 = vor.u32 %v876, %v877
      %v880 = vrot.slane %v876, 4
      %v882 = vshrl.u32 %v615, 16
      %v884 = vrot.slane %v882, 7
      %v885 = vshll.u32 %v615, 16
      %v887 = vor.u32 %v884, %v885
      %v888 = vsel %vm617, %v880, %v887
      %v889 = vrot.slane %v884, 4
      %vm938 = vcmask 1043456
      %vm939 = vmand %vm938, %vm470
      %v940 = vld [vmem:[%s418] sm:$0xf]
      %v941 = vsel %vm939, %v624, %v940
      %942 = vst [vmem:[%s418] sm:$0xf] %v941
      %943 = vst [vmem:[%s418 + $0x4] sm:$0xf] %v633
      %v944 = vld [vmem:[%s418 + $0x8] sm:$0x1]
      %v945 = vsel %vm421, %v634, %v944
      %946 = vst [vmem:[%s418 + $0x8] sm:$0x1] %v945
      %v947 = vld [vmem:[%s418 + $0xc] sm:$0xf]
      %v948 = vsel %vm939, %v641, %v947
      %949 = vst [vmem:[%s418 + $0xc] sm:$0xf] %v948
      %950 = vst [vmem:[%s418 + $0x10] sm:$0xf] %v650
      %v951 = vld [vmem:[%s418 + $0x14] sm:$0x1]
      %v952 = vsel %vm421, %v651, %v951
      %953 = vst [vmem:[%s418 + $0x14] sm:$0x1] %v952
      %v954 = vld [vmem:[%s418 + $0x18] sm:$0xf]
      %v955 = vsel %vm939, %v658, %v954
      %956 = vst [vmem:[%s418 + $0x18] sm:$0xf] %v955
      %957 = vst [vmem:[%s418 + $0x1c] sm:$0xf] %v667
      %v958 = vld [vmem:[%s418 + $0x20] sm:$0x1]
      %v959 = vsel %vm421, %v668, %v958
      %960 = vst [vmem:[%s418 + $0x20] sm:$0x1] %v959
      %v961 = vld [vmem:[%s418 + $0x24] sm:$0xf]
      %v962 = vsel %vm939, %v675, %v961
      %963 = vst [vmem:[%s418 + $0x24] sm:$0xf] %v962
      %964 = vst [vmem:[%s418 + $0x28] sm:$0xf] %v684
      %v965 = vld [vmem:[%s418 + $0x2c] sm:$0x1]
      %v966 = vsel %vm421, %v685, %v965
      %967 = vst [vmem:[%s418 + $0x2c] sm:$0x1] %v966
      %v968 = vld [vmem:[%s418 + $0x30] sm:$0xf]
      %v969 = vsel %vm939, %v692, %v968
      %970 = vst [vmem:[%s418 + $0x30] sm:$0xf] %v969
      %971 = vst [vmem:[%s418 + $0x34] sm:$0xf] %v701
      %v972 = vld [vmem:[%s418 + $0x38] sm:$0x1]
      %v973 = vsel %vm421, %v702, %v972
      %974 = vst [vmem:[%s418 + $0x38] sm:$0x1] %v973
      %v975 = vld [vmem:[%s418 + $0x3c] sm:$0xf]
      %v976 = vsel %vm939, %v709, %v975
      %977 = vst [vmem:[%s418 + $0x3c] sm:$0xf] %v976
      %978 = vst [vmem:[%s418 + $0x40] sm:$0xf] %v718
      %v979 = vld [vmem:[%s418 + $0x44] sm:$0x1]
      %v980 = vsel %vm421, %v719, %v979
      %981 = vst [vmem:[%s418 + $0x44] sm:$0x1] %v980
      %v982 = vld [vmem:[%s418 + $0x48] sm:$0xf]
      %v983 = vsel %vm939, %v726, %v982
      %984 = vst [vmem:[%s418 + $0x48] sm:$0xf] %v983
      %985 = vst [vmem:[%s418 + $0x4c] sm:$0xf] %v735
      %v986 = vld [vmem:[%s418 + $0x50] sm:$0x1]
      %v987 = vsel %vm421, %v736, %v986
      %988 = vst [vmem:[%s418 + $0x50] sm:$0x1] %v987
      %v989 = vld [vmem:[%s418 + $0x54] sm:$0xf]
      %v990 = vsel %vm939, %v743, %v989
      %991 = vst [vmem:[%s418 + $0x54] sm:$0xf] %v990
      %992 = vst [vmem:[%s418 + $0x58] sm:$0xf] %v752
      %v993 = vld [vmem:[%s418 + $0x5c] sm:$0x1]
      %v994 = vsel %vm421, %v753, %v993
      %995 = vst [vmem:[%s418 + $0x5c] sm:$0x1] %v994
      %v996 = vld [vmem:[%s418 + $0x60] sm:$0xf]
      %v997 = vsel %vm939, %v760, %v996
      %998 = vst [vmem:[%s418 + $0x60] sm:$0xf] %v997
      %999 = vst [vmem:[%s418 + $0x64] sm:$0xf] %v769
      %v1000 = vld [vmem:[%s418 + $0x68] sm:$0x1]
      %v1001 = vsel %vm421, %v770, %v1000
      %1002 = vst [vmem:[%s418 + $0x68] sm:$0x1] %v1001
      %v1003 = vld [vmem:[%s418 + $0x6c] sm:$0xf]
      %v1004 = vsel %vm939, %v777, %v1003
      %1005 = vst [vmem:[%s418 + $0x6c] sm:$0xf] %v1004
      %1006 = vst [vmem:[%s418 + $0x70] sm:$0xf] %v786
      %v1007 = vld [vmem:[%s418 + $0x74] sm:$0x1]
      %v1008 = vsel %vm421, %v787, %v1007
      %1009 = vst [vmem:[%s418 + $0x74] sm:$0x1] %v1008
      %v1010 = vld [vmem:[%s418 + $0x78] sm:$0xf]
      %v1011 = vsel %vm939, %v794, %v1010
      %1012 = vst [vmem:[%s418 + $0x78] sm:$0xf] %v1011
      %1013 = vst [vmem:[%s418 + $0x7c] sm:$0xf] %v803
      %v1014 = vld [vmem:[%s418 + $0x80] sm:$0x1]
      %v1015 = vsel %vm421, %v804, %v1014
      %1016 = vst [vmem:[%s418 + $0x80] sm:$0x1] %v1015
      %v1017 = vld [vmem:[%s418 + $0x84] sm:$0xf]
      %v1018 = vsel %vm939, %v811, %v1017
      %1019 = vst [vmem:[%s418 + $0x84] sm:$0xf] %v1018
      %1020 = vst [vmem:[%s418 + $0x88] sm:$0xf] %v820
      %v1021 = vld [vmem:[%s418 + $0x8c] sm:$0x1]
      %v1022 = vsel %vm421, %v821, %v1021
      %1023 = vst [vmem:[%s418 + $0x8c] sm:$0x1] %v1022
      %v1024 = vld [vmem:[%s418 + $0x90] sm:$0xf]
      %v1025 = vsel %vm939, %v828, %v1024
      %1026 = vst [vmem:[%s418 + $0x90] sm:$0xf] %v1025
      %1027 = vst [vmem:[%s418 + $0x94] sm:$0xf] %v837
      %v1028 = vld [vmem:[%s418 + $0x98] sm:$0x1]
      %v1029 = vsel %vm421, %v838, %v1028
      %1030 = vst [vmem:[%s418 + $0x98] sm:$0x1] %v1029
      %v1031 = vld [vmem:[%s418 + $0x9c] sm:$0xf]
      %v1032 = vsel %vm939, %v845, %v1031
      %1033 = vst [vmem:[%s418 + $0x9c] sm:$0xf] %v1032
      %1034 = vst [vmem:[%s418 + $0xa0] sm:$0xf] %v854
      %v1035 = vld [vmem:[%s418 + $0xa4] sm:$0x1]
      %v1036 = vsel %vm421, %v855, %v1035
      %1037 = vst [vmem:[%s418 + $0xa4] sm:$0x1] %v1036
      %v1038 = vld [vmem:[%s418 + $0xa8] sm:$0xf]
      %v1039 = vsel %vm939, %v862, %v1038
      %1040 = vst [vmem:[%s418 + $0xa8] sm:$0xf] %v1039
      %1041 = vst [vmem:[%s418 + $0xac] sm:$0xf] %v871
      %v1042 = vld [vmem:[%s418 + $0xb0] sm:$0x1]
      %v1043 = vsel %vm421, %v872, %v1042
      %1044 = vst [vmem:[%s418 + $0xb0] sm:$0x1] %v1043
      %v1045 = vld [vmem:[%s418 + $0xb4] sm:$0xf]
      %v1046 = vsel %vm939, %v879, %v1045
      %1047 = vst [vmem:[%s418 + $0xb4] sm:$0xf] %v1046
      %1048 = vst [vmem:[%s418 + $0xb8] sm:$0xf] %v888
      %v1049 = vld [vmem:[%s418 + $0xbc] sm:$0x1]
      %v1050 = vsel %vm421, %v889, %v1049
      %1051 = vst [vmem:[%s418 + $0xbc] sm:$0x1] %v1050
      %v1052 = vld [vmem:[#allocation2] sm:$0xf]
      %v1053 = vld [vmem:[#allocation2 + $0x4] sm:$0xf]
      %v1054 = vld [vmem:[#allocation2 + $0xc] sm:$0xf]
      %v1055 = vld [vmem:[#allocation2 + $0x10] sm:$0xf]
      %v1056 = vld [vmem:[#allocation2 + $0x18] sm:$0xf]
      %v1057 = vld [vmem:[#allocation2 + $0x1c] sm:$0xf]
      %v1058 = vld [vmem:[#allocation2 + $0x24] sm:$0xf]
      %v1059 = vld [vmem:[#allocation2 + $0x28] sm:$0xf]
      %v1060 = vld [vmem:[#allocation2 + $0x30] sm:$0xf]
      %v1061 = vld [vmem:[#allocation2 + $0x34] sm:$0xf]
      %v1062 = vld [vmem:[#allocation2 + $0x3c] sm:$0xf]
      %v1063 = vld [vmem:[#allocation2 + $0x40] sm:$0xf]
      %v1064 = vld [vmem:[#allocation2 + $0x48] sm:$0xf]
      %v1065 = vld [vmem:[#allocation2 + $0x4c] sm:$0xf]
      %v1066 = vld [vmem:[#allocation2 + $0x54] sm:$0xf]
      %v1067 = vld [vmem:[#allocation2 + $0x58] sm:$0xf]
      %v1068 = vld [vmem:[#allocation2 + $0x60] sm:$0xf]
      %v1069 = vld [vmem:[#allocation2 + $0x64] sm:$0xf]
      %v1070 = vld [vmem:[#allocation2 + $0x6c] sm:$0xf]
      %v1071 = vld [vmem:[#allocation2 + $0x70] sm:$0xf]
      %v1072 = vld [vmem:[#allocation2 + $0x78] sm:$0xf]
      %v1073 = vld [vmem:[#allocation2 + $0x7c] sm:$0xf]
      %v1074 = vld [vmem:[#allocation2 + $0x84] sm:$0xf]
      %v1075 = vld [vmem:[#allocation2 + $0x88] sm:$0xf]
      %v1076 = vld [vmem:[#allocation2 + $0x90] sm:$0xf]
      %v1077 = vld [vmem:[#allocation2 + $0x94] sm:$0xf]
      %v1078 = vld [vmem:[#allocation2 + $0x9c] sm:$0xf]
      %v1079 = vld [vmem:[#allocation2 + $0xa0] sm:$0xf]
      %v1080 = vld [vmem:[#allocation2 + $0xa8] sm:$0xf]
      %v1081 = vld [vmem:[#allocation2 + $0xac] sm:$0xf]
      %v1082 = vld [vmem:[#allocation2 + $0xb4] sm:$0xf]
      %v1083 = vld [vmem:[#allocation2 + $0xb8] sm:$0xf]
      %v1116 = vunpack.c.l.b16 %v1052
      %v1117 = vunpack.c.l.b16 %v1053
      %v1118 = vunpack.c.l.b16 %v1054
      %v1119 = vunpack.c.l.b16 %v1055
      %v1120 = vunpack.c.l.b16 %v1056
      %v1121 = vunpack.c.l.b16 %v1057
      %v1122 = vunpack.c.l.b16 %v1058
      %v1123 = vunpack.c.l.b16 %v1059
      %v1124 = vunpack.c.l.b16 %v1060
      %v1125 = vunpack.c.l.b16 %v1061
      %v1126 = vunpack.c.l.b16 %v1062
      %v1127 = vunpack.c.l.b16 %v1063
      %v1128 = vunpack.c.l.b16 %v1064
      %v1129 = vunpack.c.l.b16 %v1065
      %v1130 = vunpack.c.l.b16 %v1066
      %v1131 = vunpack.c.l.b16 %v1067
      %v1132 = vunpack.c.l.b16 %v1068
      %v1133 = vunpack.c.l.b16 %v1069
      %v1134 = vunpack.c.l.b16 %v1070
      %v1135 = vunpack.c.l.b16 %v1071
      %v1136 = vunpack.c.l.b16 %v1072
      %v1137 = vunpack.c.l.b16 %v1073
      %v1138 = vunpack.c.l.b16 %v1074
      %v1139 = vunpack.c.l.b16 %v1075
      %v1140 = vunpack.c.l.b16 %v1076
      %v1141 = vunpack.c.l.b16 %v1077
      %v1142 = vunpack.c.l.b16 %v1078
      %v1143 = vunpack.c.l.b16 %v1079
      %v1144 = vunpack.c.l.b16 %v1080
      %v1145 = vunpack.c.l.b16 %v1081
      %v1146 = vunpack.c.l.b16 %v1082
      %v1147 = vunpack.c.l.b16 %v1083
      %v1148 = vpack.c.b16 %v1117, %v1116
      %v1149 = vpack.c.b16 %v1119, %v1118
      %v1150 = vpack.c.b16 %v1121, %v1120
      %v1151 = vpack.c.b16 %v1123, %v1122
      %v1152 = vpack.c.b16 %v1125, %v1124
      %v1153 = vpack.c.b16 %v1127, %v1126
      %v1154 = vpack.c.b16 %v1129, %v1128
      %v1155 = vpack.c.b16 %v1131, %v1130
      %v1156 = vpack.c.b16 %v1133, %v1132
      %v1157 = vpack.c.b16 %v1135, %v1134
      %v1158 = vpack.c.b16 %v1137, %v1136
      %v1159 = vpack.c.b16 %v1139, %v1138
      %v1160 = vpack.c.b16 %v1141, %v1140
      %v1161 = vpack.c.b16 %v1143, %v1142
      %v1162 = vpack.c.b16 %v1145, %v1144
      %v1163 = vpack.c.b16 %v1147, %v1146
      %1180 = vst [vmem:[#allocation3] sm:$0xff] %v1148
      %1181 = vst [vmem:[#allocation3 + $0x18] sm:$0xff] %v1149
      %1182 = vst [vmem:[#allocation3 + $0x30] sm:$0xff] %v1150
      %1183 = vst [vmem:[#allocation3 + $0x48] sm:$0xff] %v1151
      %1184 = vst [vmem:[#allocation3 + $0x60] sm:$0xff] %v1152
      %1185 = vst [vmem:[#allocation3 + $0x78] sm:$0xff] %v1153
      %1186 = vst [vmem:[#allocation3 + $0x90] sm:$0xff] %v1154
      %1187 = vst [vmem:[#allocation3 + $0xa8] sm:$0xff] %v1155
      %1188 = vst [vmem:[#allocation3 + $0xc0] sm:$0xff] %v1156
      %1189 = vst [vmem:[#allocation3 + $0xd8] sm:$0xff] %v1157
      %1190 = vst [vmem:[#allocation3 + $0xf0] sm:$0xff] %v1158
      %1191 = vst [vmem:[#allocation3 + $0x108] sm:$0xff] %v1159
      %1192 = vst [vmem:[#allocation3 + $0x120] sm:$0xff] %v1160
      %1193 = vst [vmem:[#allocation3 + $0x138] sm:$0xff] %v1161
      %1194 = vst [vmem:[#allocation3 + $0x150] sm:$0xff] %v1162
      %1195 = vst [vmem:[#allocation3 + $0x168] sm:$0xff] %v1163
      %v1196 = vld [vmem:[#allocation2] sm:$0xf]
      %v1197 = vld [vmem:[#allocation2 + $0x4] sm:$0xf]
      %v1198 = vld [vmem:[#allocation2 + $0x8] sm:$0x1]
      %v1199 = vld [vmem:[#allocation2 + $0xc] sm:$0xf]
      %v1200 = vld [vmem:[#allocation2 + $0x10] sm:$0xf]
      %v1201 = vld [vmem:[#allocation2 + $0x14] sm:$0x1]
      %v1202 = vld [vmem:[#allocation2 + $0x18] sm:$0xf]
      %v1203 = vld [vmem:[#allocation2 + $0x1c] sm:$0xf]
      %v1204 = vld [vmem:[#allocation2 + $0x20] sm:$0x1]
      %v1205 = vld [vmem:[#allocation2 + $0x24] sm:$0xf]
      %v1206 = vld [vmem:[#allocation2 + $0x28] sm:$0xf]
      %v1207 = vld [vmem:[#allocation2 + $0x2c] sm:$0x1]
      %v1208 = vld [vmem:[#allocation2 + $0x30] sm:$0xf]
      %v1209 = vld [vmem:[#allocation2 + $0x34] sm:$0xf]
      %v1210 = vld [vmem:[#allocation2 + $0x38] sm:$0x1]
      %v1211 = vld [vmem:[#allocation2 + $0x3c] sm:$0xf]
      %v1212 = vld [vmem:[#allocation2 + $0x40] sm:$0xf]
      %v1213 = vld [vmem:[#allocation2 + $0x44] sm:$0x1]
      %v1214 = vld [vmem:[#allocation2 + $0x48] sm:$0xf]
      %v1215 = vld [vmem:[#allocation2 + $0x4c] sm:$0xf]
      %v1216 = vld [vmem:[#allocation2 + $0x50] sm:$0x1]
      %v1217 = vld [vmem:[#allocation2 + $0x54] sm:$0xf]
      %v1218 = vld [vmem:[#allocation2 + $0x58] sm:$0xf]
      %v1219 = vld [vmem:[#allocation2 + $0x5c] sm:$0x1]
      %v1220 = vld [vmem:[#allocation2 + $0x60] sm:$0xf]
      %v1221 = vld [vmem:[#allocation2 + $0x64] sm:$0xf]
      %v1222 = vld [vmem:[#allocation2 + $0x68] sm:$0x1]
      %v1223 = vld [vmem:[#allocation2 + $0x6c] sm:$0xf]
      %v1224 = vld [vmem:[#allocation2 + $0x70] sm:$0xf]
      %v1225 = vld [vmem:[#allocation2 + $0x74] sm:$0x1]
      %v1226 = vld [vmem:[#allocation2 + $0x78] sm:$0xf]
      %v1227 = vld [vmem:[#allocation2 + $0x7c] sm:$0xf]
      %v1228 = vld [vmem:[#allocation2 + $0x80] sm:$0x1]
      %v1229 = vld [vmem:[#allocation2 + $0x84] sm:$0xf]
      %v1230 = vld [vmem:[#allocation2 + $0x88] sm:$0xf]
      %v1231 = vld [vmem:[#allocation2 + $0x8c] sm:$0x1]
      %v1232 = vld [vmem:[#allocation2 + $0x90] sm:$0xf]
      %v1233 = vld [vmem:[#allocation2 + $0x94] sm:$0xf]
      %v1234 = vld [vmem:[#allocation2 + $0x98] sm:$0x1]
      %v1235 = vld [vmem:[#allocation2 + $0x9c] sm:$0xf]
      %v1236 = vld [vmem:[#allocation2 + $0xa0] sm:$0xf]
      %v1237 = vld [vmem:[#allocation2 + $0xa4] sm:$0x1]
      %v1238 = vld [vmem:[#allocation2 + $0xa8] sm:$0xf]
      %v1239 = vld [vmem:[#allocation2 + $0xac] sm:$0xf]
      %v1240 = vld [vmem:[#allocation2 + $0xb0] sm:$0x1]
      %v1241 = vld [vmem:[#allocation2 + $0xb4] sm:$0xf]
      %v1242 = vld [vmem:[#allocation2 + $0xb8] sm:$0xf]
      %v1243 = vld [vmem:[#allocation2 + $0xbc] sm:$0x1]
      %v1292 = vunpack.c.l.b16 %v1196
      %v1293 = vunpack.c.l.b16 %v1197
      %v1294 = vunpack.c.l.b16 %v1198
      %v1295 = vunpack.c.l.b16 %v1199
      %v1296 = vunpack.c.l.b16 %v1200
      %v1297 = vunpack.c.l.b16 %v1201
      %v1298 = vunpack.c.l.b16 %v1202
      %v1299 = vunpack.c.l.b16 %v1203
      %v1300 = vunpack.c.l.b16 %v1204
      %v1301 = vunpack.c.l.b16 %v1205
      %v1302 = vunpack.c.l.b16 %v1206
      %v1303 = vunpack.c.l.b16 %v1207
      %v1304 = vunpack.c.l.b16 %v1208
      %v1305 = vunpack.c.l.b16 %v1209
      %v1306 = vunpack.c.l.b16 %v1210
      %v1307 = vunpack.c.l.b16 %v1211
      %v1308 = vunpack.c.l.b16 %v1212
      %v1309 = vunpack.c.l.b16 %v1213
      %v1310 = vunpack.c.l.b16 %v1214
      %v1311 = vunpack.c.l.b16 %v1215
      %v1312 = vunpack.c.l.b16 %v1216
      %v1313 = vunpack.c.l.b16 %v1217
      %v1314 = vunpack.c.l.b16 %v1218
      %v1315 = vunpack.c.l.b16 %v1219
      %v1316 = vunpack.c.l.b16 %v1220
      %v1317 = vunpack.c.l.b16 %v1221
      %v1318 = vunpack.c.l.b16 %v1222
      %v1319 = vunpack.c.l.b16 %v1223
      %v1320 = vunpack.c.l.b16 %v1224
      %v1321 = vunpack.c.l.b16 %v1225
      %v1322 = vunpack.c.l.b16 %v1226
      %v1323 = vunpack.c.l.b16 %v1227
      %v1324 = vunpack.c.l.b16 %v1228
      %v1325 = vunpack.c.l.b16 %v1229
      %v1326 = vunpack.c.l.b16 %v1230
      %v1327 = vunpack.c.l.b16 %v1231
      %v1328 = vunpack.c.l.b16 %v1232
      %v1329 = vunpack.c.l.b16 %v1233
      %v1330 = vunpack.c.l.b16 %v1234
      %v1331 = vunpack.c.l.b16 %v1235
      %v1332 = vunpack.c.l.b16 %v1236
      %v1333 = vunpack.c.l.b16 %v1237
      %v1334 = vunpack.c.l.b16 %v1238
      %v1335 = vunpack.c.l.b16 %v1239
      %v1336 = vunpack.c.l.b16 %v1240
      %v1337 = vunpack.c.l.b16 %v1241
      %v1338 = vunpack.c.l.b16 %v1242
      %v1339 = vunpack.c.l.b16 %v1243
      %v1340 = vpack.c.b16 %v1293, %v1292
      %v1341 = vpack.c.b16 %v1294, %v1294
      %v1342 = vpack.c.b16 %v1296, %v1295
      %v1343 = vpack.c.b16 %v1297, %v1297
      %v1344 = vpack.c.b16 %v1299, %v1298
      %v1345 = vpack.c.b16 %v1300, %v1300
      %v1346 = vpack.c.b16 %v1302, %v1301
      %v1347 = vpack.c.b16 %v1303, %v1303
      %v1348 = vpack.c.b16 %v1305, %v1304
      %v1349 = vpack.c.b16 %v1306, %v1306
      %v1350 = vpack.c.b16 %v1308, %v1307
      %v1351 = vpack.c.b16 %v1309, %v1309
      %v1352 = vpack.c.b16 %v1311, %v1310
      %v1353 = vpack.c.b16 %v1312, %v1312
      %v1354 = vpack.c.b16 %v1314, %v1313
      %v1355 = vpack.c.b16 %v1315, %v1315
      %v1356 = vpack.c.b16 %v1317, %v1316
      %v1357 = vpack.c.b16 %v1318, %v1318
      %v1358 = vpack.c.b16 %v1320, %v1319
      %v1359 = vpack.c.b16 %v1321, %v1321
      %v1360 = vpack.c.b16 %v1323, %v1322
      %v1361 = vpack.c.b16 %v1324, %v1324
      %v1362 = vpack.c.b16 %v1326, %v1325
      %v1363 = vpack.c.b16 %v1327, %v1327
      %v1364 = vpack.c.b16 %v1329, %v1328
      %v1365 = vpack.c.b16 %v1330, %v1330
      %v1366 = vpack.c.b16 %v1332, %v1331
      %v1367 = vpack.c.b16 %v1333, %v1333
      %v1368 = vpack.c.b16 %v1335, %v1334
      %v1369 = vpack.c.b16 %v1336, %v1336
      %v1370 = vpack.c.b16 %v1338, %v1337
      %v1371 = vpack.c.b16 %v1339, %v1339
      %vm1372 = vsmask.f32 7424
      %v1374 = vshrl.u32 %v1340, 16
      %v1376 = vshll.u32 %v1340, 16
      %v1378 = vrot.slane %v1376, 1
      %v1379 = vor.u32 %v1374, %v1378
      %v1381 = vshll.u32 %v1341, 16
      %v1383 = vrot.slane %v1381, 1
      %v1384 = vsel %vm1372, %v1379, %v1383
      %v1386 = vshrl.u32 %v1342, 16
      %v1388 = vshll.u32 %v1342, 16
      %v1390 = vrot.slane %v1388, 1
      %v1391 = vor.u32 %v1386, %v1390
      %v1393 = vshll.u32 %v1343, 16
      %v1395 = vrot.slane %v1393, 1
      %v1396 = vsel %vm1372, %v1391, %v1395
      %v1398 = vshrl.u32 %v1344, 16
      %v1400 = vshll.u32 %v1344, 16
      %v1402 = vrot.slane %v1400, 1
      %v1403 = vor.u32 %v1398, %v1402
      %v1405 = vshll.u32 %v1345, 16
      %v1407 = vrot.slane %v1405, 1
      %v1408 = vsel %vm1372, %v1403, %v1407
      %v1410 = vshrl.u32 %v1346, 16
      %v1412 = vshll.u32 %v1346, 16
      %v1414 = vrot.slane %v1412, 1
      %v1415 = vor.u32 %v1410, %v1414
      %v1417 = vshll.u32 %v1347, 16
      %v1419 = vrot.slane %v1417, 1
      %v1420 = vsel %vm1372, %v1415, %v1419
      %v1422 = vshrl.u32 %v1348, 16
      %v1424 = vshll.u32 %v1348, 16
      %v1426 = vrot.slane %v1424, 1
      %v1427 = vor.u32 %v1422, %v1426
      %v1429 = vshll.u32 %v1349, 16
      %v1431 = vrot.slane %v1429, 1
      %v1432 = vsel %vm1372, %v1427, %v1431
      %v1434 = vshrl.u32 %v1350, 16
      %v1436 = vshll.u32 %v1350, 16
      %v1438 = vrot.slane %v1436, 1
      %v1439 = vor.u32 %v1434, %v1438
      %v1441 = vshll.u32 %v1351, 16
      %v1443 = vrot.slane %v1441, 1
      %v1444 = vsel %vm1372, %v1439, %v1443
      %v1446 = vshrl.u32 %v1352, 16
      %v1448 = vshll.u32 %v1352, 16
      %v1450 = vrot.slane %v1448, 1
      %v1451 = vor.u32 %v1446, %v1450
      %v1453 = vshll.u32 %v1353, 16
      %v1455 = vrot.slane %v1453, 1
      %v1456 = vsel %vm1372, %v1451, %v1455
      %v1458 = vshrl.u32 %v1354, 16
      %v1460 = vshll.u32 %v1354, 16
      %v1462 = vrot.slane %v1460, 1
      %v1463 = vor.u32 %v1458, %v1462
      %v1465 = vshll.u32 %v1355, 16
      %v1467 = vrot.slane %v1465, 1
      %v1468 = vsel %vm1372, %v1463, %v1467
      %v1470 = vshrl.u32 %v1356, 16
      %v1472 = vshll.u32 %v1356, 16
      %v1474 = vrot.slane %v1472, 1
      %v1475 = vor.u32 %v1470, %v1474
      %v1477 = vshll.u32 %v1357, 16
      %v1479 = vrot.slane %v1477, 1
      %v1480 = vsel %vm1372, %v1475, %v1479
      %v1482 = vshrl.u32 %v1358, 16
      %v1484 = vshll.u32 %v1358, 16
      %v1486 = vrot.slane %v1484, 1
      %v1487 = vor.u32 %v1482, %v1486
      %v1489 = vshll.u32 %v1359, 16
      %v1491 = vrot.slane %v1489, 1
      %v1492 = vsel %vm1372, %v1487, %v1491
      %v1494 = vshrl.u32 %v1360, 16
      %v1496 = vshll.u32 %v1360, 16
      %v1498 = vrot.slane %v1496, 1
      %v1499 = vor.u32 %v1494, %v1498
      %v1501 = vshll.u32 %v1361, 16
      %v1503 = vrot.slane %v1501, 1
      %v1504 = vsel %vm1372, %v1499, %v1503
      %v1506 = vshrl.u32 %v1362, 16
      %v1508 = vshll.u32 %v1362, 16
      %v1510 = vrot.slane %v1508, 1
      %v1511 = vor.u32 %v1506, %v1510
      %v1513 = vshll.u32 %v1363, 16
      %v1515 = vrot.slane %v1513, 1
      %v1516 = vsel %vm1372, %v1511, %v1515
      %v1518 = vshrl.u32 %v1364, 16
      %v1520 = vshll.u32 %v1364, 16
      %v1522 = vrot.slane %v1520, 1
      %v1523 = vor.u32 %v1518, %v1522
      %v1525 = vshll.u32 %v1365, 16
      %v1527 = vrot.slane %v1525, 1
      %v1528 = vsel %vm1372, %v1523, %v1527
      %v1530 = vshrl.u32 %v1366, 16
      %v1532 = vshll.u32 %v1366, 16
      %v1534 = vrot.slane %v1532, 1
      %v1535 = vor.u32 %v1530, %v1534
      %v1537 = vshll.u32 %v1367, 16
      %v1539 = vrot.slane %v1537, 1
      %v1540 = vsel %vm1372, %v1535, %v1539
      %v1542 = vshrl.u32 %v1368, 16
      %v1544 = vshll.u32 %v1368, 16
      %v1546 = vrot.slane %v1544, 1
      %v1547 = vor.u32 %v1542, %v1546
      %v1549 = vshll.u32 %v1369, 16
      %v1551 = vrot.slane %v1549, 1
      %v1552 = vsel %vm1372, %v1547, %v1551
      %v1554 = vshrl.u32 %v1370, 16
      %v1556 = vshll.u32 %v1370, 16
      %v1558 = vrot.slane %v1556, 1
      %v1559 = vor.u32 %v1554, %v1558
      %v1561 = vshll.u32 %v1371, 16
      %v1563 = vrot.slane %v1561, 1
      %v1564 = vsel %vm1372, %v1559, %v1563
      %1581 = vst [vmem:[#allocation3 + $0x8] sm:$0xff] %v1384
      %1582 = vst [vmem:[#allocation3 + $0x20] sm:$0xff] %v1396
      %1583 = vst [vmem:[#allocation3 + $0x38] sm:$0xff] %v1408
      %1584 = vst [vmem:[#allocation3 + $0x50] sm:$0xff] %v1420
      %1585 = vst [vmem:[#allocation3 + $0x68] sm:$0xff] %v1432
      %1586 = vst [vmem:[#allocation3 + $0x80] sm:$0xff] %v1444
      %1587 = vst [vmem:[#allocation3 + $0x98] sm:$0xff] %v1456
      %1588 = vst [vmem:[#allocation3 + $0xb0] sm:$0xff] %v1468
      %1589 = vst [vmem:[#allocation3 + $0xc8] sm:$0xff] %v1480
      %1590 = vst [vmem:[#allocation3 + $0xe0] sm:$0xff] %v1492
      %1591 = vst [vmem:[#allocation3 + $0xf8] sm:$0xff] %v1504
      %1592 = vst [vmem:[#allocation3 + $0x110] sm:$0xff] %v1516
      %1593 = vst [vmem:[#allocation3 + $0x128] sm:$0xff] %v1528
      %1594 = vst [vmem:[#allocation3 + $0x140] sm:$0xff] %v1540
      %1595 = vst [vmem:[#allocation3 + $0x158] sm:$0xff] %v1552
      %1596 = vst [vmem:[#allocation3 + $0x170] sm:$0xff] %v1564
      %v1597 = vld [vmem:[#allocation2] sm:$0xe]
      %v1598 = vld [vmem:[#allocation2 + $0x4] sm:$0xf]
      %v1599 = vld [vmem:[#allocation2 + $0x8] sm:$0x1]
      %v1600 = vld [vmem:[#allocation2 + $0xc] sm:$0xe]
      %v1601 = vld [vmem:[#allocation2 + $0x10] sm:$0xf]
      %v1602 = vld [vmem:[#allocation2 + $0x14] sm:$0x1]
      %v1603 = vld [vmem:[#allocation2 + $0x18] sm:$0xe]
      %v1604 = vld [vmem:[#allocation2 + $0x1c] sm:$0xf]
      %v1605 = vld [vmem:[#allocation2 + $0x20] sm:$0x1]
      %v1606 = vld [vmem:[#allocation2 + $0x24] sm:$0xe]
      %v1607 = vld [vmem:[#allocation2 + $0x28] sm:$0xf]
      %v1608 = vld [vmem:[#allocation2 + $0x2c] sm:$0x1]
      %v1609 = vld [vmem:[#allocation2 + $0x30] sm:$0xe]
      %v1610 = vld [vmem:[#allocation2 + $0x34] sm:$0xf]
      %v1611 = vld [vmem:[#allocation2 + $0x38] sm:$0x1]
      %v1612 = vld [vmem:[#allocation2 + $0x3c] sm:$0xe]
      %v1613 = vld [vmem:[#allocation2 + $0x40] sm:$0xf]
      %v1614 = vld [vmem:[#allocation2 + $0x44] sm:$0x1]
      %v1615 = vld [vmem:[#allocation2 + $0x48] sm:$0xe]
      %v1616 = vld [vmem:[#allocation2 + $0x4c] sm:$0xf]
      %v1617 = vld [vmem:[#allocation2 + $0x50] sm:$0x1]
      %v1618 = vld [vmem:[#allocation2 + $0x54] sm:$0xe]
      %v1619 = vld [vmem:[#allocation2 + $0x58] sm:$0xf]
      %v1620 = vld [vmem:[#allocation2 + $0x5c] sm:$0x1]
      %v1621 = vld [vmem:[#allocation2 + $0x60] sm:$0xe]
      %v1622 = vld [vmem:[#allocation2 + $0x64] sm:$0xf]
      %v1623 = vld [vmem:[#allocation2 + $0x68] sm:$0x1]
      %v1624 = vld [vmem:[#allocation2 + $0x6c] sm:$0xe]
      %v1625 = vld [vmem:[#allocation2 + $0x70] sm:$0xf]
      %v1626 = vld [vmem:[#allocation2 + $0x74] sm:$0x1]
      %v1627 = vld [vmem:[#allocation2 + $0x78] sm:$0xe]
      %v1628 = vld [vmem:[#allocation2 + $0x7c] sm:$0xf]
      %v1629 = vld [vmem:[#allocation2 + $0x80] sm:$0x1]
      %v1630 = vld [vmem:[#allocation2 + $0x84] sm:$0xe]
      %v1631 = vld [vmem:[#allocation2 + $0x88] sm:$0xf]
      %v1632 = vld [vmem:[#allocation2 + $0x8c] sm:$0x1]
      %v1633 = vld [vmem:[#allocation2 + $0x90] sm:$0xe]
      %v1634 = vld [vmem:[#allocation2 + $0x94] sm:$0xf]
      %v1635 = vld [vmem:[#allocation2 + $0x98] sm:$0x1]
      %v1636 = vld [vmem:[#allocation2 + $0x9c] sm:$0xe]
      %v1637 = vld [vmem:[#allocation2 + $0xa0] sm:$0xf]
      %v1638 = vld [vmem:[#allocation2 + $0xa4] sm:$0x1]
      %v1639 = vld [vmem:[#allocation2 + $0xa8] sm:$0xe]
      %v1640 = vld [vmem:[#allocation2 + $0xac] sm:$0xf]
      %v1641 = vld [vmem:[#allocation2 + $0xb0] sm:$0x1]
      %v1642 = vld [vmem:[#allocation2 + $0xb4] sm:$0xe]
      %v1643 = vld [vmem:[#allocation2 + $0xb8] sm:$0xf]
      %v1644 = vld [vmem:[#allocation2 + $0xbc] sm:$0x1]
      %v1693 = vunpack.c.l.b16 %v1597
      %v1694 = vunpack.c.l.b16 %v1598
      %v1695 = vunpack.c.l.b16 %v1599
      %v1696 = vunpack.c.l.b16 %v1600
      %v1697 = vunpack.c.l.b16 %v1601
      %v1698 = vunpack.c.l.b16 %v1602
      %v1699 = vunpack.c.l.b16 %v1603
      %v1700 = vunpack.c.l.b16 %v1604
      %v1701 = vunpack.c.l.b16 %v1605
      %v1702 = vunpack.c.l.b16 %v1606
      %v1703 = vunpack.c.l.b16 %v1607
      %v1704 = vunpack.c.l.b16 %v1608
      %v1705 = vunpack.c.l.b16 %v1609
      %v1706 = vunpack.c.l.b16 %v1610
      %v1707 = vunpack.c.l.b16 %v1611
      %v1708 = vunpack.c.l.b16 %v1612
      %v1709 = vunpack.c.l.b16 %v1613
      %v1710 = vunpack.c.l.b16 %v1614
      %v1711 = vunpack.c.l.b16 %v1615
      %v1712 = vunpack.c.l.b16 %v1616
      %v1713 = vunpack.c.l.b16 %v1617
      %v1714 = vunpack.c.l.b16 %v1618
      %v1715 = vunpack.c.l.b16 %v1619
      %v1716 = vunpack.c.l.b16 %v1620
      %v1717 = vunpack.c.l.b16 %v1621
      %v1718 = vunpack.c.l.b16 %v1622
      %v1719 = vunpack.c.l.b16 %v1623
      %v1720 = vunpack.c.l.b16 %v1624
      %v1721 = vunpack.c.l.b16 %v1625
      %v1722 = vunpack.c.l.b16 %v1626
      %v1723 = vunpack.c.l.b16 %v1627
      %v1724 = vunpack.c.l.b16 %v1628
      %v1725 = vunpack.c.l.b16 %v1629
      %v1726 = vunpack.c.l.b16 %v1630
      %v1727 = vunpack.c.l.b16 %v1631
      %v1728 = vunpack.c.l.b16 %v1632
      %v1729 = vunpack.c.l.b16 %v1633
      %v1730 = vunpack.c.l.b16 %v1634
      %v1731 = vunpack.c.l.b16 %v1635
      %v1732 = vunpack.c.l.b16 %v1636
      %v1733 = vunpack.c.l.b16 %v1637
      %v1734 = vunpack.c.l.b16 %v1638
      %v1735 = vunpack.c.l.b16 %v1639
      %v1736 = vunpack.c.l.b16 %v1640
      %v1737 = vunpack.c.l.b16 %v1641
      %v1738 = vunpack.c.l.b16 %v1642
      %v1739 = vunpack.c.l.b16 %v1643
      %v1740 = vunpack.c.l.b16 %v1644
      %v1741 = vpack.c.b16 %v1694, %v1693
      %v1742 = vpack.c.b16 %v1695, %v1695
      %v1743 = vpack.c.b16 %v1697, %v1696
      %v1744 = vpack.c.b16 %v1698, %v1698
      %v1745 = vpack.c.b16 %v1700, %v1699
      %v1746 = vpack.c.b16 %v1701, %v1701
      %v1747 = vpack.c.b16 %v1703, %v1702
      %v1748 = vpack.c.b16 %v1704, %v1704
      %v1749 = vpack.c.b16 %v1706, %v1705
      %v1750 = vpack.c.b16 %v1707, %v1707
      %v1751 = vpack.c.b16 %v1709, %v1708
      %v1752 = vpack.c.b16 %v1710, %v1710
      %v1753 = vpack.c.b16 %v1712, %v1711
      %v1754 = vpack.c.b16 %v1713, %v1713
      %v1755 = vpack.c.b16 %v1715, %v1714
      %v1756 = vpack.c.b16 %v1716, %v1716
      %v1757 = vpack.c.b16 %v1718, %v1717
      %v1758 = vpack.c.b16 %v1719, %v1719
      %v1759 = vpack.c.b16 %v1721, %v1720
      %v1760 = vpack.c.b16 %v1722, %v1722
      %v1761 = vpack.c.b16 %v1724, %v1723
      %v1762 = vpack.c.b16 %v1725, %v1725
      %v1763 = vpack.c.b16 %v1727, %v1726
      %v1764 = vpack.c.b16 %v1728, %v1728
      %v1765 = vpack.c.b16 %v1730, %v1729
      %v1766 = vpack.c.b16 %v1731, %v1731
      %v1767 = vpack.c.b16 %v1733, %v1732
      %v1768 = vpack.c.b16 %v1734, %v1734
      %v1769 = vpack.c.b16 %v1736, %v1735
      %v1770 = vpack.c.b16 %v1737, %v1737
      %v1771 = vpack.c.b16 %v1739, %v1738
      %v1772 = vpack.c.b16 %v1740, %v1740
      %vm1773 = vcmask 1046528
      %v1774 = vrot.slane %v1741, 1
      %v1775 = vrot.slane %v1742, 1
      %v1776 = vsel %vm1773, %v1774, %v1775
      %v1777 = vrot.slane %v1743, 1
      %v1778 = vrot.slane %v1744, 1
      %v1779 = vsel %vm1773, %v1777, %v1778
      %v1780 = vrot.slane %v1745, 1
      %v1781 = vrot.slane %v1746, 1
      %v1782 = vsel %vm1773, %v1780, %v1781
      %v1783 = vrot.slane %v1747, 1
      %v1784 = vrot.slane %v1748, 1
      %v1785 = vsel %vm1773, %v1783, %v1784
      %v1786 = vrot.slane %v1749, 1
      %v1787 = vrot.slane %v1750, 1
      %v1788 = vsel %vm1773, %v1786, %v1787
      %v1789 = vrot.slane %v1751, 1
      %v1790 = vrot.slane %v1752, 1
      %v1791 = vsel %vm1773, %v1789, %v1790
      %v1792 = vrot.slane %v1753, 1
      %v1793 = vrot.slane %v1754, 1
      %v1794 = vsel %vm1773, %v1792, %v1793
      %v1795 = vrot.slane %v1755, 1
      %v1796 = vrot.slane %v1756, 1
      %v1797 = vsel %vm1773, %v1795, %v1796
      %v1798 = vrot.slane %v1757, 1
      %v1799 = vrot.slane %v1758, 1
      %v1800 = vsel %vm1773, %v1798, %v1799
      %v1801 = vrot.slane %v1759, 1
      %v1802 = vrot.slane %v1760, 1
      %v1803 = vsel %vm1773, %v1801, %v1802
      %v1804 = vrot.slane %v1761, 1
      %v1805 = vrot.slane %v1762, 1
      %v1806 = vsel %vm1773, %v1804, %v1805
      %v1807 = vrot.slane %v1763, 1
      %v1808 = vrot.slane %v1764, 1
      %v1809 = vsel %vm1773, %v1807, %v1808
      %v1810 = vrot.slane %v1765, 1
      %v1811 = vrot.slane %v1766, 1
      %v1812 = vsel %vm1773, %v1810, %v1811
      %v1813 = vrot.slane %v1767, 1
      %v1814 = vrot.slane %v1768, 1
      %v1815 = vsel %vm1773, %v1813, %v1814
      %v1816 = vrot.slane %v1769, 1
      %v1817 = vrot.slane %v1770, 1
      %v1818 = vsel %vm1773, %v1816, %v1817
      %v1819 = vrot.slane %v1771, 1
      %v1820 = vrot.slane %v1772, 1
      %v1821 = vsel %vm1773, %v1819, %v1820
      %1838 = vst [vmem:[#allocation3 + $0x10] sm:$0xff] %v1776
      %1839 = vst [vmem:[#allocation3 + $0x28] sm:$0xff] %v1779
      %1840 = vst [vmem:[#allocation3 + $0x40] sm:$0xff] %v1782
      %1841 = vst [vmem:[#allocation3 + $0x58] sm:$0xff] %v1785
      %1842 = vst [vmem:[#allocation3 + $0x70] sm:$0xff] %v1788
      %1843 = vst [vmem:[#allocation3 + $0x88] sm:$0xff] %v1791
      %1844 = vst [vmem:[#allocation3 + $0xa0] sm:$0xff] %v1794
      %1845 = vst [vmem:[#allocation3 + $0xb8] sm:$0xff] %v1797
      %1846 = vst [vmem:[#allocation3 + $0xd0] sm:$0xff] %v1800
      %1847 = vst [vmem:[#allocation3 + $0xe8] sm:$0xff] %v1803
      %1848 = vst [vmem:[#allocation3 + $0x100] sm:$0xff] %v1806
      %1849 = vst [vmem:[#allocation3 + $0x118] sm:$0xff] %v1809
      %1850 = vst [vmem:[#allocation3 + $0x130] sm:$0xff] %v1812
      %1851 = vst [vmem:[#allocation3 + $0x148] sm:$0xff] %v1815
      %1852 = vst [vmem:[#allocation3 + $0x160] sm:$0xff] %v1818
      %1853 = vst [vmem:[#allocation3 + $0x178] sm:$0xff] %v1821
      %v1854 = vld [vmem:[#allocation3] sm:$0xff]
      %v1855 = vld [vmem:[#allocation3 + $0x8] sm:$0xff]
      %v1856 = vld [vmem:[#allocation3 + $0x10] sm:$0xff]
      %v1857 = vld [vmem:[#allocation3 + $0x18] sm:$0xff]
      %v1858 = vld [vmem:[#allocation3 + $0x20] sm:$0xff]
      %v1859 = vld [vmem:[#allocation3 + $0x28] sm:$0xff]
      %v1860 = vld [vmem:[#allocation3 + $0x30] sm:$0xff]
      %v1861 = vld [vmem:[#allocation3 + $0x38] sm:$0xff]
      %v1862 = vld [vmem:[#allocation3 + $0x40] sm:$0xff]
      %v1863 = vld [vmem:[#allocation3 + $0x48] sm:$0xff]
      %v1864 = vld [vmem:[#allocation3 + $0x50] sm:$0xff]
      %v1865 = vld [vmem:[#allocation3 + $0x58] sm:$0xff]
      %v1866 = vld [vmem:[#allocation3 + $0x60] sm:$0xff]
      %v1867 = vld [vmem:[#allocation3 + $0x68] sm:$0xff]
      %v1868 = vld [vmem:[#allocation3 + $0x70] sm:$0xff]
      %v1869 = vld [vmem:[#allocation3 + $0x78] sm:$0xff]
      %v1870 = vld [vmem:[#allocation3 + $0x80] sm:$0xff]
      %v1871 = vld [vmem:[#allocation3 + $0x88] sm:$0xff]
      %v1872 = vld [vmem:[#allocation3 + $0x90] sm:$0xff]
      %v1873 = vld [vmem:[#allocation3 + $0x98] sm:$0xff]
      %v1874 = vld [vmem:[#allocation3 + $0xa0] sm:$0xff]
      %v1875 = vld [vmem:[#allocation3 + $0xa8] sm:$0xff]
      %v1876 = vld [vmem:[#allocation3 + $0xb0] sm:$0xff]
      %v1877 = vld [vmem:[#allocation3 + $0xb8] sm:$0xff]
      %v1878 = vld [vmem:[#allocation3 + $0xc0] sm:$0xff]
      %v1879 = vld [vmem:[#allocation3 + $0xc8] sm:$0xff]
      %v1880 = vld [vmem:[#allocation3 + $0xd0] sm:$0xff]
      %v1881 = vld [vmem:[#allocation3 + $0xd8] sm:$0xff]
      %v1882 = vld [vmem:[#allocation3 + $0xe0] sm:$0xff]
      %v1883 = vld [vmem:[#allocation3 + $0xe8] sm:$0xff]
      %v1884 = vld [vmem:[#allocation3 + $0xf0] sm:$0xff]
      %v1885 = vld [vmem:[#allocation3 + $0xf8] sm:$0xff]
      %v1886 = vld [vmem:[#allocation3 + $0x100] sm:$0xff]
      %v1887 = vld [vmem:[#allocation3 + $0x108] sm:$0xff]
      %v1888 = vld [vmem:[#allocation3 + $0x110] sm:$0xff]
      %v1889 = vld [vmem:[#allocation3 + $0x118] sm:$0xff]
      %v1890 = vld [vmem:[#allocation3 + $0x120] sm:$0xff]
      %v1891 = vld [vmem:[#allocation3 + $0x128] sm:$0xff]
      %v1892 = vld [vmem:[#allocation3 + $0x130] sm:$0xff]
      %v1893 = vld [vmem:[#allocation3 + $0x138] sm:$0xff]
      %v1894 = vld [vmem:[#allocation3 + $0x140] sm:$0xff]
      %v1895 = vld [vmem:[#allocation3 + $0x148] sm:$0xff]
      %v1896 = vld [vmem:[#allocation3 + $0x150] sm:$0xff]
      %v1897 = vld [vmem:[#allocation3 + $0x158] sm:$0xff]
      %v1898 = vld [vmem:[#allocation3 + $0x160] sm:$0xff]
      %v1899 = vld [vmem:[#allocation3 + $0x168] sm:$0xff]
      %v1900 = vld [vmem:[#allocation3 + $0x170] sm:$0xff]
      %v1901 = vld [vmem:[#allocation3 + $0x178] sm:$0xff]
      %v1902 = vld [vmem:[%s3] sm:$0xf]
      %v1903 = vld [vmem:[%s3 + $0x4] sm:$0xf]
      %v1904 = vld [vmem:[%s3 + $0x8] sm:$0xf]
      %v1905 = vld [vmem:[%s3 + $0xc] sm:$0xf]
      %v1906 = vld [vmem:[%s3 + $0x10] sm:$0xf]
      %v1907 = vld [vmem:[%s3 + $0x14] sm:$0xf]
      %v1908 = vld [vmem:[%s3 + $0x18] sm:$0xf]
      %v1909 = vld [vmem:[%s3 + $0x1c] sm:$0xf]
      %v1910 = vld [vmem:[%s3 + $0x20] sm:$0xf]
      %v1911 = vld [vmem:[%s3 + $0x24] sm:$0xf]
      %v1912 = vld [vmem:[%s3 + $0x28] sm:$0xf]
      %v1913 = vld [vmem:[%s3 + $0x2c] sm:$0xf]
      %v1914 = vld [vmem:[%s3 + $0x30] sm:$0xf]
      %v1915 = vld [vmem:[%s3 + $0x34] sm:$0xf]
      %v1916 = vld [vmem:[%s3 + $0x38] sm:$0xf]
      %v1917 = vld [vmem:[%s3 + $0x3c] sm:$0xf]
      %v1918 = vld [vmem:[%s3 + $0x40] sm:$0xf]
      %v1919 = vld [vmem:[%s3 + $0x44] sm:$0xf]
      %v1920 = vld [vmem:[%s3 + $0x48] sm:$0xf]
      %v1921 = vld [vmem:[%s3 + $0x4c] sm:$0xf]
      %v1922 = vld [vmem:[%s3 + $0x50] sm:$0xf]
      %v1923 = vld [vmem:[%s3 + $0x54] sm:$0xf]
      %v1924 = vld [vmem:[%s3 + $0x58] sm:$0xf]
      %v1925 = vld [vmem:[%s3 + $0x5c] sm:$0xf]
      %v1926 = vld [vmem:[%s3 + $0x60] sm:$0xf]
      %v1927 = vld [vmem:[%s3 + $0x64] sm:$0xf]
      %v1928 = vld [vmem:[%s3 + $0x68] sm:$0xf]
      %v1929 = vld [vmem:[%s3 + $0x6c] sm:$0xf]
      %v1930 = vld [vmem:[%s3 + $0x70] sm:$0xf]
      %v1931 = vld [vmem:[%s3 + $0x74] sm:$0xf]
      %v1932 = vld [vmem:[%s3 + $0x78] sm:$0xf]
      %v1933 = vld [vmem:[%s3 + $0x7c] sm:$0xf]
      %v1934 = vld [vmem:[%s3 + $0x80] sm:$0xf]
      %v1935 = vld [vmem:[%s3 + $0x84] sm:$0xf]
      %v1936 = vld [vmem:[%s3 + $0x88] sm:$0xf]
      %v1937 = vld [vmem:[%s3 + $0x8c] sm:$0xf]
      %v1938 = vld [vmem:[%s3 + $0x90] sm:$0xf]
      %v1939 = vld [vmem:[%s3 + $0x94] sm:$0xf]
      %v1940 = vld [vmem:[%s3 + $0x98] sm:$0xf]
      %v1941 = vld [vmem:[%s3 + $0x9c] sm:$0xf]
      %v1942 = vld [vmem:[%s3 + $0xa0] sm:$0xf]
      %v1943 = vld [vmem:[%s3 + $0xa4] sm:$0xf]
      %v1944 = vld [vmem:[%s3 + $0xa8] sm:$0xf]
      %v1945 = vld [vmem:[%s3 + $0xac] sm:$0xf]
      %v1946 = vld [vmem:[%s3 + $0xb0] sm:$0xf]
      %v1947 = vld [vmem:[%s3 + $0xb4] sm:$0xf]
      %v1948 = vld [vmem:[%s3 + $0xb8] sm:$0xf]
      %v1949 = vld [vmem:[%s3 + $0xbc] sm:$0xf]
      %v1950 = vld [vmem:[%s418] sm:$0xf]
      %v1951 = vld [vmem:[%s418 + $0x4] sm:$0xf]
      %v1952 = vld [vmem:[%s418 + $0xc] sm:$0xf]
      %v1953 = vld [vmem:[%s418 + $0x10] sm:$0xf]
      %v1954 = vld [vmem:[%s418 + $0x18] sm:$0xf]
      %v1955 = vld [vmem:[%s418 + $0x1c] sm:$0xf]
      %v1956 = vld [vmem:[%s418 + $0x24] sm:$0xf]
      %v1957 = vld [vmem:[%s418 + $0x28] sm:$0xf]
      %v1958 = vld [vmem:[%s418 + $0x30] sm:$0xf]
      %v1959 = vld [vmem:[%s418 + $0x34] sm:$0xf]
      %v1960 = vld [vmem:[%s418 + $0x3c] sm:$0xf]
      %v1961 = vld [vmem:[%s418 + $0x40] sm:$0xf]
      %v1962 = vld [vmem:[%s418 + $0x48] sm:$0xf]
      %v1963 = vld [vmem:[%s418 + $0x4c] sm:$0xf]
      %v1964 = vld [vmem:[%s418 + $0x54] sm:$0xf]
      %v1965 = vld [vmem:[%s418 + $0x58] sm:$0xf]
      %v1966 = vld [vmem:[%s418 + $0x60] sm:$0xf]
      %v1967 = vld [vmem:[%s418 + $0x64] sm:$0xf]
      %v1968 = vld [vmem:[%s418 + $0x6c] sm:$0xf]
      %v1969 = vld [vmem:[%s418 + $0x70] sm:$0xf]
      %v1970 = vld [vmem:[%s418 + $0x78] sm:$0xf]
      %v1971 = vld [vmem:[%s418 + $0x7c] sm:$0xf]
      %v1972 = vld [vmem:[%s418 + $0x84] sm:$0xf]
      %v1973 = vld [vmem:[%s418 + $0x88] sm:$0xf]
      %v1974 = vld [vmem:[%s418 + $0x90] sm:$0xf]
      %v1975 = vld [vmem:[%s418 + $0x94] sm:$0xf]
      %v1976 = vld [vmem:[%s418 + $0x9c] sm:$0xf]
      %v1977 = vld [vmem:[%s418 + $0xa0] sm:$0xf]
      %v1978 = vld [vmem:[%s418 + $0xa8] sm:$0xf]
      %v1979 = vld [vmem:[%s418 + $0xac] sm:$0xf]
      %v1980 = vld [vmem:[%s418 + $0xb4] sm:$0xf]
      %v1981 = vld [vmem:[%s418 + $0xb8] sm:$0xf]
      %v2014 = vunpack.c.l.b16 %v1950
      %v2015 = vunpack.c.l.b16 %v1951
      %v2016 = vunpack.c.l.b16 %v1952
      %v2017 = vunpack.c.l.b16 %v1953
      %v2018 = vunpack.c.l.b16 %v1954
      %v2019 = vunpack.c.l.b16 %v1955
      %v2020 = vunpack.c.l.b16 %v1956
      %v2021 = vunpack.c.l.b16 %v1957
      %v2022 = vunpack.c.l.b16 %v1958
      %v2023 = vunpack.c.l.b16 %v1959
      %v2024 = vunpack.c.l.b16 %v1960
      %v2025 = vunpack.c.l.b16 %v1961
      %v2026 = vunpack.c.l.b16 %v1962
      %v2027 = vunpack.c.l.b16 %v1963
      %v2028 = vunpack.c.l.b16 %v1964
      %v2029 = vunpack.c.l.b16 %v1965
      %v2030 = vunpack.c.l.b16 %v1966
      %v2031 = vunpack.c.l.b16 %v1967
      %v2032 = vunpack.c.l.b16 %v1968
      %v2033 = vunpack.c.l.b16 %v1969
      %v2034 = vunpack.c.l.b16 %v1970
      %v2035 = vunpack.c.l.b16 %v1971
      %v2036 = vunpack.c.l.b16 %v1972
      %v2037 = vunpack.c.l.b16 %v1973
      %v2038 = vunpack.c.l.b16 %v1974
      %v2039 = vunpack.c.l.b16 %v1975
      %v2040 = vunpack.c.l.b16 %v1976
      %v2041 = vunpack.c.l.b16 %v1977
      %v2042 = vunpack.c.l.b16 %v1978
      %v2043 = vunpack.c.l.b16 %v1979
      %v2044 = vunpack.c.l.b16 %v1980
      %v2045 = vunpack.c.l.b16 %v1981
      %v2046 = vpack.c.b16 %v2015, %v2014
      %v2047 = vpack.c.b16 %v2017, %v2016
      %v2048 = vpack.c.b16 %v2019, %v2018
      %v2049 = vpack.c.b16 %v2021, %v2020
      %v2050 = vpack.c.b16 %v2023, %v2022
      %v2051 = vpack.c.b16 %v2025, %v2024
      %v2052 = vpack.c.b16 %v2027, %v2026
      %v2053 = vpack.c.b16 %v2029, %v2028
      %v2054 = vpack.c.b16 %v2031, %v2030
      %v2055 = vpack.c.b16 %v2033, %v2032
      %v2056 = vpack.c.b16 %v2035, %v2034
      %v2057 = vpack.c.b16 %v2037, %v2036
      %v2058 = vpack.c.b16 %v2039, %v2038
      %v2059 = vpack.c.b16 %v2041, %v2040
      %v2060 = vpack.c.b16 %v2043, %v2042
      %v2061 = vpack.c.b16 %v2045, %v2044
      %2078 = vst [vmem:[#allocation3] sm:$0xff] %v2046
      %2079 = vst [vmem:[#allocation3 + $0x18] sm:$0xff] %v2047
      %2080 = vst [vmem:[#allocation3 + $0x30] sm:$0xff] %v2048
      %2081 = vst [vmem:[#allocation3 + $0x48] sm:$0xff] %v2049
      %2082 = vst [vmem:[#allocation3 + $0x60] sm:$0xff] %v2050
      %2083 = vst [vmem:[#allocation3 + $0x78] sm:$0xff] %v2051
      %2084 = vst [vmem:[#allocation3 + $0x90] sm:$0xff] %v2052
      %2085 = vst [vmem:[#allocation3 + $0xa8] sm:$0xff] %v2053
      %2086 = vst [vmem:[#allocation3 + $0xc0] sm:$0xff] %v2054
      %2087 = vst [vmem:[#allocation3 + $0xd8] sm:$0xff] %v2055
      %2088 = vst [vmem:[#allocation3 + $0xf0] sm:$0xff] %v2056
      %2089 = vst [vmem:[#allocation3 + $0x108] sm:$0xff] %v2057
      %2090 = vst [vmem:[#allocation3 + $0x120] sm:$0xff] %v2058
      %2091 = vst [vmem:[#allocation3 + $0x138] sm:$0xff] %v2059
      %2092 = vst [vmem:[#allocation3 + $0x150] sm:$0xff] %v2060
      %2093 = vst [vmem:[#allocation3 + $0x168] sm:$0xff] %v2061
      %v2094 = vld [vmem:[%s418] sm:$0xf]
      %v2095 = vld [vmem:[%s418 + $0x4] sm:$0xf]
      %v2096 = vld [vmem:[%s418 + $0x8] sm:$0x1]
      %v2097 = vld [vmem:[%s418 + $0xc] sm:$0xf]
      %v2098 = vld [vmem:[%s418 + $0x10] sm:$0xf]
      %v2099 = vld [vmem:[%s418 + $0x14] sm:$0x1]
      %v2100 = vld [vmem:[%s418 + $0x18] sm:$0xf]
      %v2101 = vld [vmem:[%s418 + $0x1c] sm:$0xf]
      %v2102 = vld [vmem:[%s418 + $0x20] sm:$0x1]
      %v2103 = vld [vmem:[%s418 + $0x24] sm:$0xf]
      %v2104 = vld [vmem:[%s418 + $0x28] sm:$0xf]
      %v2105 = vld [vmem:[%s418 + $0x2c] sm:$0x1]
      %v2106 = vld [vmem:[%s418 + $0x30] sm:$0xf]
      %v2107 = vld [vmem:[%s418 + $0x34] sm:$0xf]
      %v2108 = vld [vmem:[%s418 + $0x38] sm:$0x1]
      %v2109 = vld [vmem:[%s418 + $0x3c] sm:$0xf]
      %v2110 = vld [vmem:[%s418 + $0x40] sm:$0xf]
      %v2111 = vld [vmem:[%s418 + $0x44] sm:$0x1]
      %v2112 = vld [vmem:[%s418 + $0x48] sm:$0xf]
      %v2113 = vld [vmem:[%s418 + $0x4c] sm:$0xf]
      %v2114 = vld [vmem:[%s418 + $0x50] sm:$0x1]
      %v2115 = vld [vmem:[%s418 + $0x54] sm:$0xf]
      %v2116 = vld [vmem:[%s418 + $0x58] sm:$0xf]
      %v2117 = vld [vmem:[%s418 + $0x5c] sm:$0x1]
      %v2118 = vld [vmem:[%s418 + $0x60] sm:$0xf]
      %v2119 = vld [vmem:[%s418 + $0x64] sm:$0xf]
      %v2120 = vld [vmem:[%s418 + $0x68] sm:$0x1]
      %v2121 = vld [vmem:[%s418 + $0x6c] sm:$0xf]
      %v2122 = vld [vmem:[%s418 + $0x70] sm:$0xf]
      %v2123 = vld [vmem:[%s418 + $0x74] sm:$0x1]
      %v2124 = vld [vmem:[%s418 + $0x78] sm:$0xf]
      %v2125 = vld [vmem:[%s418 + $0x7c] sm:$0xf]
      %v2126 = vld [vmem:[%s418 + $0x80] sm:$0x1]
      %v2127 = vld [vmem:[%s418 + $0x84] sm:$0xf]
      %v2128 = vld [vmem:[%s418 + $0x88] sm:$0xf]
      %v2129 = vld [vmem:[%s418 + $0x8c] sm:$0x1]
      %v2130 = vld [vmem:[%s418 + $0x90] sm:$0xf]
      %v2131 = vld [vmem:[%s418 + $0x94] sm:$0xf]
      %v2132 = vld [vmem:[%s418 + $0x98] sm:$0x1]
      %v2133 = vld [vmem:[%s418 + $0x9c] sm:$0xf]
      %v2134 = vld [vmem:[%s418 + $0xa0] sm:$0xf]
      %v2135 = vld [vmem:[%s418 + $0xa4] sm:$0x1]
      %v2136 = vld [vmem:[%s418 + $0xa8] sm:$0xf]
      %v2137 = vld [vmem:[%s418 + $0xac] sm:$0xf]
      %v2138 = vld [vmem:[%s418 + $0xb0] sm:$0x1]
      %v2139 = vld [vmem:[%s418 + $0xb4] sm:$0xf]
      %v2140 = vld [vmem:[%s418 + $0xb8] sm:$0xf]
      %v2141 = vld [vmem:[%s418 + $0xbc] sm:$0x1]
      %v2190 = vunpack.c.l.b16 %v2094
      %v2191 = vunpack.c.l.b16 %v2095
      %v2192 = vunpack.c.l.b16 %v2096
      %v2193 = vunpack.c.l.b16 %v2097
      %v2194 = vunpack.c.l.b16 %v2098
      %v2195 = vunpack.c.l.b16 %v2099
      %v2196 = vunpack.c.l.b16 %v2100
      %v2197 = vunpack.c.l.b16 %v2101
      %v2198 = vunpack.c.l.b16 %v2102
      %v2199 = vunpack.c.l.b16 %v2103
      %v2200 = vunpack.c.l.b16 %v2104
      %v2201 = vunpack.c.l.b16 %v2105
      %v2202 = vunpack.c.l.b16 %v2106
      %v2203 = vunpack.c.l.b16 %v2107
      %v2204 = vunpack.c.l.b16 %v2108
      %v2205 = vunpack.c.l.b16 %v2109
      %v2206 = vunpack.c.l.b16 %v2110
      %v2207 = vunpack.c.l.b16 %v2111
      %v2208 = vunpack.c.l.b16 %v2112
      %v2209 = vunpack.c.l.b16 %v2113
      %v2210 = vunpack.c.l.b16 %v2114
      %v2211 = vunpack.c.l.b16 %v2115
      %v2212 = vunpack.c.l.b16 %v2116
      %v2213 = vunpack.c.l.b16 %v2117
      %v2214 = vunpack.c.l.b16 %v2118
      %v2215 = vunpack.c.l.b16 %v2119
      %v2216 = vunpack.c.l.b16 %v2120
      %v2217 = vunpack.c.l.b16 %v2121
      %v2218 = vunpack.c.l.b16 %v2122
      %v2219 = vunpack.c.l.b16 %v2123
      %v2220 = vunpack.c.l.b16 %v2124
      %v2221 = vunpack.c.l.b16 %v2125
      %v2222 = vunpack.c.l.b16 %v2126
      %v2223 = vunpack.c.l.b16 %v2127
      %v2224 = vunpack.c.l.b16 %v2128
      %v2225 = vunpack.c.l.b16 %v2129
      %v2226 = vunpack.c.l.b16 %v2130
      %v2227 = vunpack.c.l.b16 %v2131
      %v2228 = vunpack.c.l.b16 %v2132
      %v2229 = vunpack.c.l.b16 %v2133
      %v2230 = vunpack.c.l.b16 %v2134
      %v2231 = vunpack.c.l.b16 %v2135
      %v2232 = vunpack.c.l.b16 %v2136
      %v2233 = vunpack.c.l.b16 %v2137
      %v2234 = vunpack.c.l.b16 %v2138
      %v2235 = vunpack.c.l.b16 %v2139
      %v2236 = vunpack.c.l.b16 %v2140
      %v2237 = vunpack.c.l.b16 %v2141
      %v2238 = vpack.c.b16 %v2191, %v2190
      %v2239 = vpack.c.b16 %v2192, %v2192
      %v2240 = vpack.c.b16 %v2194, %v2193
      %v2241 = vpack.c.b16 %v2195, %v2195
      %v2242 = vpack.c.b16 %v2197, %v2196
      %v2243 = vpack.c.b16 %v2198, %v2198
      %v2244 = vpack.c.b16 %v2200, %v2199
      %v2245 = vpack.c.b16 %v2201, %v2201
      %v2246 = vpack.c.b16 %v2203, %v2202
      %v2247 = vpack.c.b16 %v2204, %v2204
      %v2248 = vpack.c.b16 %v2206, %v2205
      %v2249 = vpack.c.b16 %v2207, %v2207
      %v2250 = vpack.c.b16 %v2209, %v2208
      %v2251 = vpack.c.b16 %v2210, %v2210
      %v2252 = vpack.c.b16 %v2212, %v2211
      %v2253 = vpack.c.b16 %v2213, %v2213
      %v2254 = vpack.c.b16 %v2215, %v2214
      %v2255 = vpack.c.b16 %v2216, %v2216
      %v2256 = vpack.c.b16 %v2218, %v2217
      %v2257 = vpack.c.b16 %v2219, %v2219
      %v2258 = vpack.c.b16 %v2221, %v2220
      %v2259 = vpack.c.b16 %v2222, %v2222
      %v2260 = vpack.c.b16 %v2224, %v2223
      %v2261 = vpack.c.b16 %v2225, %v2225
      %v2262 = vpack.c.b16 %v2227, %v2226
      %v2263 = vpack.c.b16 %v2228, %v2228
      %v2264 = vpack.c.b16 %v2230, %v2229
      %v2265 = vpack.c.b16 %v2231, %v2231
      %v2266 = vpack.c.b16 %v2233, %v2232
      %v2267 = vpack.c.b16 %v2234, %v2234
      %v2268 = vpack.c.b16 %v2236, %v2235
      %v2269 = vpack.c.b16 %v2237, %v2237
      %v2271 = vshrl.u32 %v2238, 16
      %v2273 = vshll.u32 %v2238, 16
      %v2275 = vrot.slane %v2273, 1
      %v2276 = vor.u32 %v2271, %v2275
      %v2278 = vshll.u32 %v2239, 16
      %v2280 = vrot.slane %v2278, 1
      %v2281 = vsel %vm1372, %v2276, %v2280
      %v2283 = vshrl.u32 %v2240, 16
      %v2285 = vshll.u32 %v2240, 16
      %v2287 = vrot.slane %v2285, 1
      %v2288 = vor.u32 %v2283, %v2287
      %v2290 = vshll.u32 %v2241, 16
      %v2292 = vrot.slane %v2290, 1
      %v2293 = vsel %vm1372, %v2288, %v2292
      %v2295 = vshrl.u32 %v2242, 16
      %v2297 = vshll.u32 %v2242, 16
      %v2299 = vrot.slane %v2297, 1
      %v2300 = vor.u32 %v2295, %v2299
      %v2302 = vshll.u32 %v2243, 16
      %v2304 = vrot.slane %v2302, 1
      %v2305 = vsel %vm1372, %v2300, %v2304
      %v2307 = vshrl.u32 %v2244, 16
      %v2309 = vshll.u32 %v2244, 16
      %v2311 = vrot.slane %v2309, 1
      %v2312 = vor.u32 %v2307, %v2311
      %v2314 = vshll.u32 %v2245, 16
      %v2316 = vrot.slane %v2314, 1
      %v2317 = vsel %vm1372, %v2312, %v2316
      %v2319 = vshrl.u32 %v2246, 16
      %v2321 = vshll.u32 %v2246, 16
      %v2323 = vrot.slane %v2321, 1
      %v2324 = vor.u32 %v2319, %v2323
      %v2326 = vshll.u32 %v2247, 16
      %v2328 = vrot.slane %v2326, 1
      %v2329 = vsel %vm1372, %v2324, %v2328
      %v2331 = vshrl.u32 %v2248, 16
      %v2333 = vshll.u32 %v2248, 16
      %v2335 = vrot.slane %v2333, 1
      %v2336 = vor.u32 %v2331, %v2335
      %v2338 = vshll.u32 %v2249, 16
      %v2340 = vrot.slane %v2338, 1
      %v2341 = vsel %vm1372, %v2336, %v2340
      %v2343 = vshrl.u32 %v2250, 16
      %v2345 = vshll.u32 %v2250, 16
      %v2347 = vrot.slane %v2345, 1
      %v2348 = vor.u32 %v2343, %v2347
      %v2350 = vshll.u32 %v2251, 16
      %v2352 = vrot.slane %v2350, 1
      %v2353 = vsel %vm1372, %v2348, %v2352
      %v2355 = vshrl.u32 %v2252, 16
      %v2357 = vshll.u32 %v2252, 16
      %v2359 = vrot.slane %v2357, 1
      %v2360 = vor.u32 %v2355, %v2359
      %v2362 = vshll.u32 %v2253, 16
      %v2364 = vrot.slane %v2362, 1
      %v2365 = vsel %vm1372, %v2360, %v2364
      %v2367 = vshrl.u32 %v2254, 16
      %v2369 = vshll.u32 %v2254, 16
      %v2371 = vrot.slane %v2369, 1
      %v2372 = vor.u32 %v2367, %v2371
      %v2374 = vshll.u32 %v2255, 16
      %v2376 = vrot.slane %v2374, 1
      %v2377 = vsel %vm1372, %v2372, %v2376
      %v2379 = vshrl.u32 %v2256, 16
      %v2381 = vshll.u32 %v2256, 16
      %v2383 = vrot.slane %v2381, 1
      %v2384 = vor.u32 %v2379, %v2383
      %v2386 = vshll.u32 %v2257, 16
      %v2388 = vrot.slane %v2386, 1
      %v2389 = vsel %vm1372, %v2384, %v2388
      %v2391 = vshrl.u32 %v2258, 16
      %v2393 = vshll.u32 %v2258, 16
      %v2395 = vrot.slane %v2393, 1
      %v2396 = vor.u32 %v2391, %v2395
      %v2398 = vshll.u32 %v2259, 16
      %v2400 = vrot.slane %v2398, 1
      %v2401 = vsel %vm1372, %v2396, %v2400
      %v2403 = vshrl.u32 %v2260, 16
      %v2405 = vshll.u32 %v2260, 16
      %v2407 = vrot.slane %v2405, 1
      %v2408 = vor.u32 %v2403, %v2407
      %v2410 = vshll.u32 %v2261, 16
      %v2412 = vrot.slane %v2410, 1
      %v2413 = vsel %vm1372, %v2408, %v2412
      %v2415 = vshrl.u32 %v2262, 16
      %v2417 = vshll.u32 %v2262, 16
      %v2419 = vrot.slane %v2417, 1
      %v2420 = vor.u32 %v2415, %v2419
      %v2422 = vshll.u32 %v2263, 16
      %v2424 = vrot.slane %v2422, 1
      %v2425 = vsel %vm1372, %v2420, %v2424
      %v2427 = vshrl.u32 %v2264, 16
      %v2429 = vshll.u32 %v2264, 16
      %v2431 = vrot.slane %v2429, 1
      %v2432 = vor.u32 %v2427, %v2431
      %v2434 = vshll.u32 %v2265, 16
      %v2436 = vrot.slane %v2434, 1
      %v2437 = vsel %vm1372, %v2432, %v2436
      %v2439 = vshrl.u32 %v2266, 16
      %v2441 = vshll.u32 %v2266, 16
      %v2443 = vrot.slane %v2441, 1
      %v2444 = vor.u32 %v2439, %v2443
      %v2446 = vshll.u32 %v2267, 16
      %v2448 = vrot.slane %v2446, 1
      %v2449 = vsel %vm1372, %v2444, %v2448
      %v2451 = vshrl.u32 %v2268, 16
      %v2453 = vshll.u32 %v2268, 16
      %v2455 = vrot.slane %v2453, 1
      %v2456 = vor.u32 %v2451, %v2455
      %v2458 = vshll.u32 %v2269, 16
      %v2460 = vrot.slane %v2458, 1
      %v2461 = vsel %vm1372, %v2456, %v2460
      %2478 = vst [vmem:[#allocation3 + $0x8] sm:$0xff] %v2281
      %2479 = vst [vmem:[#allocation3 + $0x20] sm:$0xff] %v2293
      %2480 = vst [vmem:[#allocation3 + $0x38] sm:$0xff] %v2305
      %2481 = vst [vmem:[#allocation3 + $0x50] sm:$0xff] %v2317
      %2482 = vst [vmem:[#allocation3 + $0x68] sm:$0xff] %v2329
      %2483 = vst [vmem:[#allocation3 + $0x80] sm:$0xff] %v2341
      %2484 = vst [vmem:[#allocation3 + $0x98] sm:$0xff] %v2353
      %2485 = vst [vmem:[#allocation3 + $0xb0] sm:$0xff] %v2365
      %2486 = vst [vmem:[#allocation3 + $0xc8] sm:$0xff] %v2377
      %2487 = vst [vmem:[#allocation3 + $0xe0] sm:$0xff] %v2389
      %2488 = vst [vmem:[#allocation3 + $0xf8] sm:$0xff] %v2401
      %2489 = vst [vmem:[#allocation3 + $0x110] sm:$0xff] %v2413
      %2490 = vst [vmem:[#allocation3 + $0x128] sm:$0xff] %v2425
      %2491 = vst [vmem:[#allocation3 + $0x140] sm:$0xff] %v2437
      %2492 = vst [vmem:[#allocation3 + $0x158] sm:$0xff] %v2449
      %2493 = vst [vmem:[#allocation3 + $0x170] sm:$0xff] %v2461
      %v2494 = vld [vmem:[%s418] sm:$0xe]
      %v2495 = vld [vmem:[%s418 + $0x4] sm:$0xf]
      %v2496 = vld [vmem:[%s418 + $0x8] sm:$0x1]
      %v2497 = vld [vmem:[%s418 + $0xc] sm:$0xe]
      %v2498 = vld [vmem:[%s418 + $0x10] sm:$0xf]
      %v2499 = vld [vmem:[%s418 + $0x14] sm:$0x1]
      %v2500 = vld [vmem:[%s418 + $0x18] sm:$0xe]
      %v2501 = vld [vmem:[%s418 + $0x1c] sm:$0xf]
      %v2502 = vld [vmem:[%s418 + $0x20] sm:$0x1]
      %v2503 = vld [vmem:[%s418 + $0x24] sm:$0xe]
      %v2504 = vld [vmem:[%s418 + $0x28] sm:$0xf]
      %v2505 = vld [vmem:[%s418 + $0x2c] sm:$0x1]
      %v2506 = vld [vmem:[%s418 + $0x30] sm:$0xe]
      %v2507 = vld [vmem:[%s418 + $0x34] sm:$0xf]
      %v2508 = vld [vmem:[%s418 + $0x38] sm:$0x1]
      %v2509 = vld [vmem:[%s418 + $0x3c] sm:$0xe]
      %v2510 = vld [vmem:[%s418 + $0x40] sm:$0xf]
      %v2511 = vld [vmem:[%s418 + $0x44] sm:$0x1]
      %v2512 = vld [vmem:[%s418 + $0x48] sm:$0xe]
      %v2513 = vld [vmem:[%s418 + $0x4c] sm:$0xf]
      %v2514 = vld [vmem:[%s418 + $0x50] sm:$0x1]
      %v2515 = vld [vmem:[%s418 + $0x54] sm:$0xe]
      %v2516 = vld [vmem:[%s418 + $0x58] sm:$0xf]
      %v2517 = vld [vmem:[%s418 + $0x5c] sm:$0x1]
      %v2518 = vld [vmem:[%s418 + $0x60] sm:$0xe]
      %v2519 = vld [vmem:[%s418 + $0x64] sm:$0xf]
      %v2520 = vld [vmem:[%s418 + $0x68] sm:$0x1]
      %v2521 = vld [vmem:[%s418 + $0x6c] sm:$0xe]
      %v2522 = vld [vmem:[%s418 + $0x70] sm:$0xf]
      %v2523 = vld [vmem:[%s418 + $0x74] sm:$0x1]
      %v2524 = vld [vmem:[%s418 + $0x78] sm:$0xe]
      %v2525 = vld [vmem:[%s418 + $0x7c] sm:$0xf]
      %v2526 = vld [vmem:[%s418 + $0x80] sm:$0x1]
      %v2527 = vld [vmem:[%s418 + $0x84] sm:$0xe]
      %v2528 = vld [vmem:[%s418 + $0x88] sm:$0xf]
      %v2529 = vld [vmem:[%s418 + $0x8c] sm:$0x1]
      %v2530 = vld [vmem:[%s418 + $0x90] sm:$0xe]
      %v2531 = vld [vmem:[%s418 + $0x94] sm:$0xf]
      %v2532 = vld [vmem:[%s418 + $0x98] sm:$0x1]
      %v2533 = vld [vmem:[%s418 + $0x9c] sm:$0xe]
      %v2534 = vld [vmem:[%s418 + $0xa0] sm:$0xf]
      %v2535 = vld [vmem:[%s418 + $0xa4] sm:$0x1]
      %v2536 = vld [vmem:[%s418 + $0xa8] sm:$0xe]
      %v2537 = vld [vmem:[%s418 + $0xac] sm:$0xf]
      %v2538 = vld [vmem:[%s418 + $0xb0] sm:$0x1]
      %v2539 = vld [vmem:[%s418 + $0xb4] sm:$0xe]
      %v2540 = vld [vmem:[%s418 + $0xb8] sm:$0xf]
      %v2541 = vld [vmem:[%s418 + $0xbc] sm:$0x1]
      %v2590 = vunpack.c.l.b16 %v2494
      %v2591 = vunpack.c.l.b16 %v2495
      %v2592 = vunpack.c.l.b16 %v2496
      %v2593 = vunpack.c.l.b16 %v2497
      %v2594 = vunpack.c.l.b16 %v2498
      %v2595 = vunpack.c.l.b16 %v2499
      %v2596 = vunpack.c.l.b16 %v2500
      %v2597 = vunpack.c.l.b16 %v2501
      %v2598 = vunpack.c.l.b16 %v2502
      %v2599 = vunpack.c.l.b16 %v2503
      %v2600 = vunpack.c.l.b16 %v2504
      %v2601 = vunpack.c.l.b16 %v2505
      %v2602 = vunpack.c.l.b16 %v2506
      %v2603 = vunpack.c.l.b16 %v2507
      %v2604 = vunpack.c.l.b16 %v2508
      %v2605 = vunpack.c.l.b16 %v2509
      %v2606 = vunpack.c.l.b16 %v2510
      %v2607 = vunpack.c.l.b16 %v2511
      %v2608 = vunpack.c.l.b16 %v2512
      %v2609 = vunpack.c.l.b16 %v2513
      %v2610 = vunpack.c.l.b16 %v2514
      %v2611 = vunpack.c.l.b16 %v2515
      %v2612 = vunpack.c.l.b16 %v2516
      %v2613 = vunpack.c.l.b16 %v2517
      %v2614 = vunpack.c.l.b16 %v2518
      %v2615 = vunpack.c.l.b16 %v2519
      %v2616 = vunpack.c.l.b16 %v2520
      %v2617 = vunpack.c.l.b16 %v2521
      %v2618 = vunpack.c.l.b16 %v2522
      %v2619 = vunpack.c.l.b16 %v2523
      %v2620 = vunpack.c.l.b16 %v2524
      %v2621 = vunpack.c.l.b16 %v2525
      %v2622 = vunpack.c.l.b16 %v2526
      %v2623 = vunpack.c.l.b16 %v2527
      %v2624 = vunpack.c.l.b16 %v2528
      %v2625 = vunpack.c.l.b16 %v2529
      %v2626 = vunpack.c.l.b16 %v2530
      %v2627 = vunpack.c.l.b16 %v2531
      %v2628 = vunpack.c.l.b16 %v2532
      %v2629 = vunpack.c.l.b16 %v2533
      %v2630 = vunpack.c.l.b16 %v2534
      %v2631 = vunpack.c.l.b16 %v2535
      %v2632 = vunpack.c.l.b16 %v2536
      %v2633 = vunpack.c.l.b16 %v2537
      %v2634 = vunpack.c.l.b16 %v2538
      %v2635 = vunpack.c.l.b16 %v2539
      %v2636 = vunpack.c.l.b16 %v2540
      %v2637 = vunpack.c.l.b16 %v2541
      %v2638 = vpack.c.b16 %v2591, %v2590
      %v2639 = vpack.c.b16 %v2592, %v2592
      %v2640 = vpack.c.b16 %v2594, %v2593
      %v2641 = vpack.c.b16 %v2595, %v2595
      %v2642 = vpack.c.b16 %v2597, %v2596
      %v2643 = vpack.c.b16 %v2598, %v2598
      %v2644 = vpack.c.b16 %v2600, %v2599
      %v2645 = vpack.c.b16 %v2601, %v2601
      %v2646 = vpack.c.b16 %v2603, %v2602
      %v2647 = vpack.c.b16 %v2604, %v2604
      %v2648 = vpack.c.b16 %v2606, %v2605
      %v2649 = vpack.c.b16 %v2607, %v2607
      %v2650 = vpack.c.b16 %v2609, %v2608
      %v2651 = vpack.c.b16 %v2610, %v2610
      %v2652 = vpack.c.b16 %v2612, %v2611
      %v2653 = vpack.c.b16 %v2613, %v2613
      %v2654 = vpack.c.b16 %v2615, %v2614
      %v2655 = vpack.c.b16 %v2616, %v2616
      %v2656 = vpack.c.b16 %v2618, %v2617
      %v2657 = vpack.c.b16 %v2619, %v2619
      %v2658 = vpack.c.b16 %v2621, %v2620
      %v2659 = vpack.c.b16 %v2622, %v2622
      %v2660 = vpack.c.b16 %v2624, %v2623
      %v2661 = vpack.c.b16 %v2625, %v2625
      %v2662 = vpack.c.b16 %v2627, %v2626
      %v2663 = vpack.c.b16 %v2628, %v2628
      %v2664 = vpack.c.b16 %v2630, %v2629
      %v2665 = vpack.c.b16 %v2631, %v2631
      %v2666 = vpack.c.b16 %v2633, %v2632
      %v2667 = vpack.c.b16 %v2634, %v2634
      %v2668 = vpack.c.b16 %v2636, %v2635
      %v2669 = vpack.c.b16 %v2637, %v2637
      %v2670 = vrot.slane %v2638, 1
      %v2671 = vrot.slane %v2639, 1
      %v2672 = vsel %vm1773, %v2670, %v2671
      %v2673 = vrot.slane %v2640, 1
      %v2674 = vrot.slane %v2641, 1
      %v2675 = vsel %vm1773, %v2673, %v2674
      %v2676 = vrot.slane %v2642, 1
      %v2677 = vrot.slane %v2643, 1
      %v2678 = vsel %vm1773, %v2676, %v2677
      %v2679 = vrot.slane %v2644, 1
      %v2680 = vrot.slane %v2645, 1
      %v2681 = vsel %vm1773, %v2679, %v2680
      %v2682 = vrot.slane %v2646, 1
      %v2683 = vrot.slane %v2647, 1
      %v2684 = vsel %vm1773, %v2682, %v2683
      %v2685 = vrot.slane %v2648, 1
      %v2686 = vrot.slane %v2649, 1
      %v2687 = vsel %vm1773, %v2685, %v2686
      %v2688 = vrot.slane %v2650, 1
      %v2689 = vrot.slane %v2651, 1
      %v2690 = vsel %vm1773, %v2688, %v2689
      %v2691 = vrot.slane %v2652, 1
      %v2692 = vrot.slane %v2653, 1
      %v2693 = vsel %vm1773, %v2691, %v2692
      %v2694 = vrot.slane %v2654, 1
      %v2695 = vrot.slane %v2655, 1
      %v2696 = vsel %vm1773, %v2694, %v2695
      %v2697 = vrot.slane %v2656, 1
      %v2698 = vrot.slane %v2657, 1
      %v2699 = vsel %vm1773, %v2697, %v2698
      %v2700 = vrot.slane %v2658, 1
      %v2701 = vrot.slane %v2659, 1
      %v2702 = vsel %vm1773, %v2700, %v2701
      %v2703 = vrot.slane %v2660, 1
      %v2704 = vrot.slane %v2661, 1
      %v2705 = vsel %vm1773, %v2703, %v2704
      %v2706 = vrot.slane %v2662, 1
      %v2707 = vrot.slane %v2663, 1
      %v2708 = vsel %vm1773, %v2706, %v2707
      %v2709 = vrot.slane %v2664, 1
      %v2710 = vrot.slane %v2665, 1
      %v2711 = vsel %vm1773, %v2709, %v2710
      %v2712 = vrot.slane %v2666, 1
      %v2713 = vrot.slane %v2667, 1
      %v2714 = vsel %vm1773, %v2712, %v2713
      %v2715 = vrot.slane %v2668, 1
      %v2716 = vrot.slane %v2669, 1
      %v2717 = vsel %vm1773, %v2715, %v2716
      %2734 = vst [vmem:[#allocation3 + $0x10] sm:$0xff] %v2672
      %2735 = vst [vmem:[#allocation3 + $0x28] sm:$0xff] %v2675
      %2736 = vst [vmem:[#allocation3 + $0x40] sm:$0xff] %v2678
      %2737 = vst [vmem:[#allocation3 + $0x58] sm:$0xff] %v2681
      %2738 = vst [vmem:[#allocation3 + $0x70] sm:$0xff] %v2684
      %2739 = vst [vmem:[#allocation3 + $0x88] sm:$0xff] %v2687
      %2740 = vst [vmem:[#allocation3 + $0xa0] sm:$0xff] %v2690
      %2741 = vst [vmem:[#allocation3 + $0xb8] sm:$0xff] %v2693
      %2742 = vst [vmem:[#allocation3 + $0xd0] sm:$0xff] %v2696
      %2743 = vst [vmem:[#allocation3 + $0xe8] sm:$0xff] %v2699
      %2744 = vst [vmem:[#allocation3 + $0x100] sm:$0xff] %v2702
      %2745 = vst [vmem:[#allocation3 + $0x118] sm:$0xff] %v2705
      %2746 = vst [vmem:[#allocation3 + $0x130] sm:$0xff] %v2708
      %2747 = vst [vmem:[#allocation3 + $0x148] sm:$0xff] %v2711
      %2748 = vst [vmem:[#allocation3 + $0x160] sm:$0xff] %v2714
      %2749 = vst [vmem:[#allocation3 + $0x178] sm:$0xff] %v2717
      %v2750 = vld [vmem:[#allocation3] sm:$0xff]
      %v2751 = vld [vmem:[#allocation3 + $0x8] sm:$0xff]
      %v2752 = vld [vmem:[#allocation3 + $0x10] sm:$0xff]
      %v2753 = vld [vmem:[#allocation3 + $0x18] sm:$0xff]
      %v2754 = vld [vmem:[#allocation3 + $0x20] sm:$0xff]
      %v2755 = vld [vmem:[#allocation3 + $0x28] sm:$0xff]
      %v2756 = vld [vmem:[#allocation3 + $0x30] sm:$0xff]
      %v2757 = vld [vmem:[#allocation3 + $0x38] sm:$0xff]
      %v2758 = vld [vmem:[#allocation3 + $0x40] sm:$0xff]
      %v2759 = vld [vmem:[#allocation3 + $0x48] sm:$0xff]
      %v2760 = vld [vmem:[#allocation3 + $0x50] sm:$0xff]
      %v2761 = vld [vmem:[#allocation3 + $0x58] sm:$0xff]
      %v2762 = vld [vmem:[#allocation3 + $0x60] sm:$0xff]
      %v2763 = vld [vmem:[#allocation3 + $0x68] sm:$0xff]
      %v2764 = vld [vmem:[#allocation3 + $0x70] sm:$0xff]
      %v2765 = vld [vmem:[#allocation3 + $0x78] sm:$0xff]
      %v2766 = vld [vmem:[#allocation3 + $0x80] sm:$0xff]
      %v2767 = vld [vmem:[#allocation3 + $0x88] sm:$0xff]
      %v2768 = vld [vmem:[#allocation3 + $0x90] sm:$0xff]
      %v2769 = vld [vmem:[#allocation3 + $0x98] sm:$0xff]
      %v2770 = vld [vmem:[#allocation3 + $0xa0] sm:$0xff]
      %v2771 = vld [vmem:[#allocation3 + $0xa8] sm:$0xff]
      %v2772 = vld [vmem:[#allocation3 + $0xb0] sm:$0xff]
      %v2773 = vld [vmem:[#allocation3 + $0xb8] sm:$0xff]
      %v2774 = vld [vmem:[#allocation3 + $0xc0] sm:$0xff]
      %v2775 = vld [vmem:[#allocation3 + $0xc8] sm:$0xff]
      %v2776 = vld [vmem:[#allocation3 + $0xd0] sm:$0xff]
      %v2777 = vld [vmem:[#allocation3 + $0xd8] sm:$0xff]
      %v2778 = vld [vmem:[#allocation3 + $0xe0] sm:$0xff]
      %v2779 = vld [vmem:[#allocation3 + $0xe8] sm:$0xff]
      %v2780 = vld [vmem:[#allocation3 + $0xf0] sm:$0xff]
      %v2781 = vld [vmem:[#allocation3 + $0xf8] sm:$0xff]
      %v2782 = vld [vmem:[#allocation3 + $0x100] sm:$0xff]
      %v2783 = vld [vmem:[#allocation3 + $0x108] sm:$0xff]
      %v2784 = vld [vmem:[#allocation3 + $0x110] sm:$0xff]
      %v2785 = vld [vmem:[#allocation3 + $0x118] sm:$0xff]
      %v2786 = vld [vmem:[#allocation3 + $0x120] sm:$0xff]
      %v2787 = vld [vmem:[#allocation3 + $0x128] sm:$0xff]
      %v2788 = vld [vmem:[#allocation3 + $0x130] sm:$0xff]
      %v2789 = vld [vmem:[#allocation3 + $0x138] sm:$0xff]
      %v2790 = vld [vmem:[#allocation3 + $0x140] sm:$0xff]
      %v2791 = vld [vmem:[#allocation3 + $0x148] sm:$0xff]
      %v2792 = vld [vmem:[#allocation3 + $0x150] sm:$0xff]
      %v2793 = vld [vmem:[#allocation3 + $0x158] sm:$0xff]
      %v2794 = vld [vmem:[#allocation3 + $0x160] sm:$0xff]
      %v2795 = vld [vmem:[#allocation3 + $0x168] sm:$0xff]
      %v2796 = vld [vmem:[#allocation3 + $0x170] sm:$0xff]
      %v2797 = vld [vmem:[#allocation3 + $0x178] sm:$0xff]
      %s2798 = scalar_lea.vmem %s3, 192
      %v2799 = vld [vmem:[%s2798] sm:$0xf]
      %v2800 = vld [vmem:[%s2798 + $0x4] sm:$0xf]
      %v2801 = vld [vmem:[%s2798 + $0x8] sm:$0xf]
      %v2802 = vld [vmem:[%s2798 + $0xc] sm:$0xf]
      %v2803 = vld [vmem:[%s2798 + $0x10] sm:$0xf]
      %v2804 = vld [vmem:[%s2798 + $0x14] sm:$0xf]
      %v2805 = vld [vmem:[%s2798 + $0x18] sm:$0xf]
      %v2806 = vld [vmem:[%s2798 + $0x1c] sm:$0xf]
      %v2807 = vld [vmem:[%s2798 + $0x20] sm:$0xf]
      %v2808 = vld [vmem:[%s2798 + $0x24] sm:$0xf]
      %v2809 = vld [vmem:[%s2798 + $0x28] sm:$0xf]
      %v2810 = vld [vmem:[%s2798 + $0x2c] sm:$0xf]
      %v2811 = vld [vmem:[%s2798 + $0x30] sm:$0xf]
      %v2812 = vld [vmem:[%s2798 + $0x34] sm:$0xf]
      %v2813 = vld [vmem:[%s2798 + $0x38] sm:$0xf]
      %v2814 = vld [vmem:[%s2798 + $0x3c] sm:$0xf]
      %v2815 = vld [vmem:[%s2798 + $0x40] sm:$0xf]
      %v2816 = vld [vmem:[%s2798 + $0x44] sm:$0xf]
      %v2817 = vld [vmem:[%s2798 + $0x48] sm:$0xf]
      %v2818 = vld [vmem:[%s2798 + $0x4c] sm:$0xf]
      %v2819 = vld [vmem:[%s2798 + $0x50] sm:$0xf]
      %v2820 = vld [vmem:[%s2798 + $0x54] sm:$0xf]
      %v2821 = vld [vmem:[%s2798 + $0x58] sm:$0xf]
      %v2822 = vld [vmem:[%s2798 + $0x5c] sm:$0xf]
      %v2823 = vld [vmem:[%s2798 + $0x60] sm:$0xf]
      %v2824 = vld [vmem:[%s2798 + $0x64] sm:$0xf]
      %v2825 = vld [vmem:[%s2798 + $0x68] sm:$0xf]
      %v2826 = vld [vmem:[%s2798 + $0x6c] sm:$0xf]
      %v2827 = vld [vmem:[%s2798 + $0x70] sm:$0xf]
      %v2828 = vld [vmem:[%s2798 + $0x74] sm:$0xf]
      %v2829 = vld [vmem:[%s2798 + $0x78] sm:$0xf]
      %v2830 = vld [vmem:[%s2798 + $0x7c] sm:$0xf]
      %v2831 = vld [vmem:[%s2798 + $0x80] sm:$0xf]
      %v2832 = vld [vmem:[%s2798 + $0x84] sm:$0xf]
      %v2833 = vld [vmem:[%s2798 + $0x88] sm:$0xf]
      %v2834 = vld [vmem:[%s2798 + $0x8c] sm:$0xf]
      %v2835 = vld [vmem:[%s2798 + $0x90] sm:$0xf]
      %v2836 = vld [vmem:[%s2798 + $0x94] sm:$0xf]
      %v2837 = vld [vmem:[%s2798 + $0x98] sm:$0xf]
      %v2838 = vld [vmem:[%s2798 + $0x9c] sm:$0xf]
      %v2839 = vld [vmem:[%s2798 + $0xa0] sm:$0xf]
      %v2840 = vld [vmem:[%s2798 + $0xa4] sm:$0xf]
      %v2841 = vld [vmem:[%s2798 + $0xa8] sm:$0xf]
      %v2842 = vld [vmem:[%s2798 + $0xac] sm:$0xf]
      %v2843 = vld [vmem:[%s2798 + $0xb0] sm:$0xf]
      %v2844 = vld [vmem:[%s2798 + $0xb4] sm:$0xf]
      %v2845 = vld [vmem:[%s2798 + $0xb8] sm:$0xf]
      %v2846 = vld [vmem:[%s2798 + $0xbc] sm:$0xf]
      %v2895 = vunpack.c.l.b16 %v2799
      %v2896 = vunpack.c.l.b16 %v2800
      %v2897 = vunpack.c.l.b16 %v2801
      %v2898 = vunpack.c.l.b16 %v2802
      %v2899 = vunpack.c.l.b16 %v2803
      %v2900 = vunpack.c.l.b16 %v2804
      %v2901 = vunpack.c.l.b16 %v2805
      %v2902 = vunpack.c.l.b16 %v2806
      %v2903 = vunpack.c.l.b16 %v2807
      %v2904 = vunpack.c.l.b16 %v2808
      %v2905 = vunpack.c.l.b16 %v2809
      %v2906 = vunpack.c.l.b16 %v2810
      %v2907 = vunpack.c.l.b16 %v2811
      %v2908 = vunpack.c.l.b16 %v2812
      %v2909 = vunpack.c.l.b16 %v2813
      %v2910 = vunpack.c.l.b16 %v2814
      %v2911 = vunpack.c.l.b16 %v2815
      %v2912 = vunpack.c.l.b16 %v2816
      %v2913 = vunpack.c.l.b16 %v2817
      %v2914 = vunpack.c.l.b16 %v2818
      %v2915 = vunpack.c.l.b16 %v2819
      %v2916 = vunpack.c.l.b16 %v2820
      %v2917 = vunpack.c.l.b16 %v2821
      %v2918 = vunpack.c.l.b16 %v2822
      %v2919 = vunpack.c.l.b16 %v2823
      %v2920 = vunpack.c.l.b16 %v2824
      %v2921 = vunpack.c.l.b16 %v2825
      %v2922 = vunpack.c.l.b16 %v2826
      %v2923 = vunpack.c.l.b16 %v2827
      %v2924 = vunpack.c.l.b16 %v2828
      %v2925 = vunpack.c.l.b16 %v2829
      %v2926 = vunpack.c.l.b16 %v2830
      %v2927 = vunpack.c.l.b16 %v2831
      %v2928 = vunpack.c.l.b16 %v2832
      %v2929 = vunpack.c.l.b16 %v2833
      %v2930 = vunpack.c.l.b16 %v2834
      %v2931 = vunpack.c.l.b16 %v2835
      %v2932 = vunpack.c.l.b16 %v2836
      %v2933 = vunpack.c.l.b16 %v2837
      %v2934 = vunpack.c.l.b16 %v2838
      %v2935 = vunpack.c.l.b16 %v2839
      %v2936 = vunpack.c.l.b16 %v2840
      %v2937 = vunpack.c.l.b16 %v2841
      %v2938 = vunpack.c.l.b16 %v2842
      %v2939 = vunpack.c.l.b16 %v2843
      %v2940 = vunpack.c.l.b16 %v2844
      %v2941 = vunpack.c.l.b16 %v2845
      %v2942 = vunpack.c.l.b16 %v2846
      %v2943 = vpack.c.b16 %v2896, %v2895
      %v2944 = vpack.c.b16 %v2898, %v2897
      %v2945 = vpack.c.b16 %v2900, %v2899
      %v2946 = vpack.c.b16 %v2902, %v2901
      %v2947 = vpack.c.b16 %v2904, %v2903
      %v2948 = vpack.c.b16 %v2906, %v2905
      %v2949 = vpack.c.b16 %v2908, %v2907
      %v2950 = vpack.c.b16 %v2910, %v2909
      %v2951 = vpack.c.b16 %v2912, %v2911
      %v2952 = vpack.c.b16 %v2914, %v2913
      %v2953 = vpack.c.b16 %v2916, %v2915
      %v2954 = vpack.c.b16 %v2918, %v2917
      %v2955 = vpack.c.b16 %v2920, %v2919
      %v2956 = vpack.c.b16 %v2922, %v2921
      %v2957 = vpack.c.b16 %v2924, %v2923
      %v2958 = vpack.c.b16 %v2926, %v2925
      %v2959 = vpack.c.b16 %v2928, %v2927
      %v2960 = vpack.c.b16 %v2930, %v2929
      %v2961 = vpack.c.b16 %v2932, %v2931
      %v2962 = vpack.c.b16 %v2934, %v2933
      %v2963 = vpack.c.b16 %v2936, %v2935
      %v2964 = vpack.c.b16 %v2938, %v2937
      %v2965 = vpack.c.b16 %v2940, %v2939
      %v2966 = vpack.c.b16 %v2942, %v2941
      %2991 = vmatprep.subr.bf16.mxu0 0
      %2992 = vmatpush1.bf16.msra.mxu0 %v2943
      %2993 = vmatprep.subr.bf16.mxu0 0
      %2994 = vmatpush1.bf16.msra.mxu0 %v2944
      %2995 = vmatprep.subr.bf16.mxu0 0
      %2996 = vmatpush1.bf16.msra.mxu0 %v2945
      %2997 = vmatprep.subr.bf16.mxu0 0
      %2998 = vmatpush1.bf16.msra.mxu0 %v2946
      %2999 = vmatprep.subr.bf16.mxu0 0
      %3000 = vmatpush1.bf16.msra.mxu0 %v2947
      %3001 = vmatprep.subr.bf16.mxu0 0
      %3002 = vmatpush1.bf16.msra.mxu0 %v2948
      %3003 = vmatprep.subr.bf16.mxu0 0
      %3004 = vmatpush1.bf16.msra.mxu0 %v2949
      %3005 = vmatprep.subr.bf16.mxu0 0
      %3006 = vmatpush1.bf16.msra.mxu0 %v2950
      %3007 = vmatprep.subr.bf16.mxu0 0
      %3008 = vmatpush1.bf16.msra.mxu0 %v2951
      %3009 = vmatprep.subr.bf16.mxu0 0
      %3010 = vmatpush1.bf16.msra.mxu0 %v2952
      %3011 = vmatprep.subr.bf16.mxu0 0
      %3012 = vmatpush1.bf16.msra.mxu0 %v2953
      %3013 = vmatprep.subr.bf16.mxu0 0
      %3014 = vmatpush1.bf16.msra.mxu0 %v2954
      %3015 = vmatprep.subr.bf16.mxu0 0
      %3016 = vmatpush1.bf16.msra.mxu0 %v2955
      %3017 = vmatprep.subr.bf16.mxu0 0
      %3018 = vmatpush1.bf16.msra.mxu0 %v2956
      %3019 = vmatprep.subr.bf16.mxu0 0
      %3020 = vmatpush1.bf16.msra.mxu0 %v2957
      %3021 = vmatprep.subr.bf16.mxu0 0
      %3022 = vmatpush1.bf16.msra.mxu0 %v2958
      %3023 = vmatprep.mubr.bf16.mxu0 %v2751
      %3024 = vmatmul.mubr.bf16.gmra.mrb[0].mxu0 %v2750
      %v3025 = vpop.f32.mrb[0].mxu0
      %v3026 = vadd.f32 0.0, %v3025
      %v3027 = vpop.f32.mrb[0].mxu0
      %v3028 = vpop.f32.mrb[0].mxu0
      %v3029 = vadd.f32 0.0, %v3028
      %v3030 = vpop.f32.mrb[0].mxu0
      %3031 = vmatprep.mubr.bf16.mxu0 %v2754
      %3032 = vmatmul.mubr.bf16.gmra.mrb[0].mxu0 %v2753
      %v3033 = vpop.f32.mrb[0].mxu0
      %v3034 = vadd.f32 0.0, %v3033
      %v3035 = vpop.f32.mrb[0].mxu0
      %v3036 = vpop.f32.mrb[0].mxu0
      %v3037 = vadd.f32 0.0, %v3036
      %v3038 = vpop.f32.mrb[0].mxu0
      %3039 = vmatprep.mubr.bf16.mxu0 %v2757
      %3040 = vmatmul.mubr.bf16.gmra.mrb[0].mxu0 %v2756
      %v3041 = vpop.f32.mrb[0].mxu0
      %v3042 = vadd.f32 0.0, %v3041
      %v3043 = vpop.f32.mrb[0].mxu0
      %v3044 = vpop.f32.mrb[0].mxu0
      %v3045 = vadd.f32 0.0, %v3044
      %v3046 = vpop.f32.mrb[0].mxu0
      %3047 = vmatprep.mubr.bf16.mxu0 %v2760
      %3048 = vmatmul.mubr.bf16.gmra.mrb[0].mxu0 %v2759
      %v3049 = vpop.f32.mrb[0].mxu0
      %v3050 = vadd.f32 0.0, %v3049
      %v3051 = vpop.f32.mrb[0].mxu0
      %v3052 = vpop.f32.mrb[0].mxu0
      %v3053 = vadd.f32 0.0, %v3052
      %v3054 = vpop.f32.mrb[0].mxu0
      %3055 = vmatprep.mubr.bf16.mxu0 %v2763
      %3056 = vmatmul.mubr.bf16.gmra.mrb[0].mxu0 %v2762
      %v3057 = vpop.f32.mrb[0].mxu0
      %v3058 = vadd.f32 0.0, %v3057
      %v3059 = vpop.f32.mrb[0].mxu0
      %v3060 = vpop.f32.mrb[0].mxu0
      %v3061 = vadd.f32 0.0, %v3060
      %v3062 = vpop.f32.mrb[0].mxu0
      %3063 = vmatprep.mubr.bf16.mxu0 %v2766
      %3064 = vmatmul.mubr.bf16.gmra.mrb[0].mxu0 %v2765
      %v3065 = vpop.f32.mrb[0].mxu0
      %v3066 = vadd.f32 0.0, %v3065
      %v3067 = vpop.f32.mrb[0].mxu0
      %v3068 = vpop.f32.mrb[0].mxu0
      %v3069 = vadd.f32 0.0, %v3068
      %v3070 = vpop.f32.mrb[0].mxu0
      %3071 = vmatprep.mubr.bf16.mxu0 %v2769
      %3072 = vmatmul.mubr.bf16.gmra.mrb[0].mxu0 %v2768
      %v3073 = vpop.f32.mrb[0].mxu0
      %v3074 = vadd.f32 0.0, %v3073
      %v3075 = vpop.f32.mrb[0].mxu0
      %v3076 = vpop.f32.mrb[0].mxu0
      %v3077 = vadd.f32 0.0, %v3076
      %v3078 = vpop.f32.mrb[0].mxu0
      %3079 = vmatprep.mubr.bf16.mxu0 %v2772
      %3080 = vmatmul.mubr.bf16.gmra.mrb[0].mxu0 %v2771
      %v3081 = vpop.f32.mrb[0].mxu0
      %v3082 = vadd.f32 0.0, %v3081
      %v3083 = vpop.f32.mrb[0].mxu0
      %v3084 = vpop.f32.mrb[0].mxu0
      %v3085 = vadd.f32 0.0, %v3084
      %v3086 = vpop.f32.mrb[0].mxu0
      %3087 = vmatprep.mubr.bf16.mxu0 %v2775
      %3088 = vmatmul.mubr.bf16.gmra.mrb[0].mxu0 %v2774
      %v3089 = vpop.f32.mrb[0].mxu0
      %v3090 = vadd.f32 0.0, %v3089
      %v3091 = vpop.f32.mrb[0].mxu0
      %v3092 = vpop.f32.mrb[0].mxu0
      %v3093 = vadd.f32 0.0, %v3092
      %v3094 = vpop.f32.mrb[0].mxu0
      %3095 = vmatprep.mubr.bf16.mxu0 %v2778
      %3096 = vmatmul.mubr.bf16.gmra.mrb[0].mxu0 %v2777
      %v3097 = vpop.f32.mrb[0].mxu0
      %v3098 = vadd.f32 0.0, %v3097
      %v3099 = vpop.f32.mrb[0].mxu0
      %v3100 = vpop.f32.mrb[0].mxu0
      %v3101 = vadd.f32 0.0, %v3100
      %v3102 = vpop.f32.mrb[0].mxu0
      %3103 = vmatprep.mubr.bf16.mxu0 %v2781
      %3104 = vmatmul.mubr.bf16.gmra.mrb[0].mxu0 %v2780
      %v3105 = vpop.f32.mrb[0].mxu0
      %v3106 = vadd.f32 0.0, %v3105
      %v3107 = vpop.f32.mrb[0].mxu0
      %v3108 = vpop.f32.mrb[0].mxu0
      %v3109 = vadd.f32 0.0, %v3108
      %v3110 = vpop.f32.mrb[0].mxu0
      %3111 = vmatprep.mubr.bf16.mxu0 %v2784
      %3112 = vmatmul.mubr.bf16.gmra.mrb[0].mxu0 %v2783
      %v3113 = vpop.f32.mrb[0].mxu0
      %v3114 = vadd.f32 0.0, %v3113
      %v3115 = vpop.f32.mrb[0].mxu0
      %v3116 = vpop.f32.mrb[0].mxu0
      %v3117 = vadd.f32 0.0, %v3116
      %v3118 = vpop.f32.mrb[0].mxu0
      %3119 = vmatprep.mubr.bf16.mxu0 %v2787
      %3120 = vmatmul.mubr.bf16.gmra.mrb[0].mxu0 %v2786
      %v3121 = vpop.f32.mrb[0].mxu0
      %v3122 = vadd.f32 0.0, %v3121
      %v3123 = vpop.f32.mrb[0].mxu0
      %v3124 = vpop.f32.mrb[0].mxu0
      %v3125 = vadd.f32 0.0, %v3124
      %v3126 = vpop.f32.mrb[0].mxu0
      %3127 = vmatprep.mubr.bf16.mxu0 %v2790
      %3128 = vmatmul.mubr.bf16.gmra.mrb[0].mxu0 %v2789
      %v3129 = vpop.f32.mrb[0].mxu0
      %v3130 = vadd.f32 0.0, %v3129
      %v3131 = vpop.f32.mrb[0].mxu0
      %v3132 = vpop.f32.mrb[0].mxu0
      %v3133 = vadd.f32 0.0, %v3132
      %v3134 = vpop.f32.mrb[0].mxu0
      %3135 = vmatprep.mubr.bf16.mxu0 %v2793
      %3136 = vmatmul.mubr.bf16.gmra.mrb[0].mxu0 %v2792
      %v3137 = vpop.f32.mrb[0].mxu0
      %v3138 = vadd.f32 0.0, %v3137
      %v3139 = vpop.f32.mrb[0].mxu0
      %v3140 = vpop.f32.mrb[0].mxu0
      %v3141 = vadd.f32 0.0, %v3140
      %v3142 = vpop.f32.mrb[0].mxu0
      %3143 = vmatprep.mubr.bf16.mxu0 %v2796
      %3144 = vmatmul.mubr.bf16.gmra.mrb[0].mxu0 %v2795
      %v3145 = vpop.f32.mrb[0].mxu0
      %v3146 = vadd.f32 0.0, %v3145
      %v3147 = vpop.f32.mrb[0].mxu0
      %v3148 = vpop.f32.mrb[0].mxu0
      %v3149 = vadd.f32 0.0, %v3148
      %v3150 = vpop.f32.mrb[0].mxu0
      %3151 = vdwg.mxu0
      %3152 = vmatprep.subr.bf16.mxu0 0
      %3153 = vmatpush1.bf16.msra.mxu0 %v2959
      %3154 = vmatprep.subr.bf16.mxu0 0
      %3155 = vmatpush1.bf16.msra.mxu0 %v2960
      %3156 = vmatprep.subr.bf16.mxu0 0
      %3157 = vmatpush1.bf16.msra.mxu0 %v2961
      %3158 = vmatprep.subr.bf16.mxu0 0
      %3159 = vmatpush1.bf16.msra.mxu0 %v2962
      %3160 = vmatprep.subr.bf16.mxu0 0
      %3161 = vmatpush1.bf16.msra.mxu0 %v2963
      %3162 = vmatprep.subr.bf16.mxu0 0
      %3163 = vmatpush1.bf16.msra.mxu0 %v2964
      %3164 = vmatprep.subr.bf16.mxu0 0
      %3165 = vmatpush1.bf16.msra.mxu0 %v2965
      %3166 = vmatprep.subr.bf16.mxu0 0
      %3167 = vmatpush1.bf16.msra.mxu0 %v2966
      %3168 = vmatprep.subr.bf16.mxu0 0
      %3169 = vmatpush1.bf16.msra.mxu0 0
      %3170 = vmatprep.subr.bf16.mxu0 0
      %3171 = vmatpush1.bf16.msra.mxu0 0
      %3172 = vmatprep.subr.bf16.mxu0 0
      %3173 = vmatpush1.bf16.msra.mxu0 0
      %3174 = vmatprep.subr.bf16.mxu0 0
      %3175 = vmatpush1.bf16.msra.mxu0 0
      %3176 = vmatprep.subr.bf16.mxu0 0
      %3177 = vmatpush1.bf16.msra.mxu0 0
      %3178 = vmatprep.subr.bf16.mxu0 0
      %3179 = vmatpush1.bf16.msra.mxu0 0
      %3180 = vmatprep.subr.bf16.mxu0 0
      %3181 = vmatpush1.bf16.msra.mxu0 0
      %3182 = vmatprep.subr.bf16.mxu0 0
      %3183 = vmatpush1.bf16.msra.mxu0 0
      %3184 = vmatprep.mubr.bf16.mxu0 0
      %3185 = vmatmul.mubr.bf16.gmra.mrb[0].mxu0 %v2752
      %v3186 = vpop.f32.mrb[0].mxu0
      %v3187 = vadd.f32 %v3026, %v3186
      %v3188 = vpop.f32.mrb[0].mxu0
      %v3189 = vpop.f32.mrb[0].mxu0
      %v3190 = vadd.f32 %v3029, %v3189
      %v3191 = vpop.f32.mrb[0].mxu0
      %3192 = vmatprep.mubr.bf16.mxu0 0
      %3193 = vmatmul.mubr.bf16.gmra.mrb[0].mxu0 %v2755
      %v3194 = vpop.f32.mrb[0].mxu0
      %v3195 = vadd.f32 %v3034, %v3194
      %v3196 = vpop.f32.mrb[0].mxu0
      %v3197 = vpop.f32.mrb[0].mxu0
      %v3198 = vadd.f32 %v3037, %v3197
      %v3199 = vpop.f32.mrb[0].mxu0
      %3200 = vmatprep.mubr.bf16.mxu0 0
      %3201 = vmatmul.mubr.bf16.gmra.mrb[0].mxu0 %v2758
      %v3202 = vpop.f32.mrb[0].mxu0
      %v3203 = vadd.f32 %v3042, %v3202
      %v3204 = vpop.f32.mrb[0].mxu0
      %v3205 = vpop.f32.mrb[0].mxu0
      %v3206 = vadd.f32 %v3045, %v3205
      %v3207 = vpop.f32.mrb[0].mxu0
      %3208 = vmatprep.mubr.bf16.mxu0 0
      %3209 = vmatmul.mubr.bf16.gmra.mrb[0].mxu0 %v2761
      %v3210 = vpop.f32.mrb[0].mxu0
      %v3211 = vadd.f32 %v3050, %v3210
      %v3212 = vpop.f32.mrb[0].mxu0
      %v3213 = vpop.f32.mrb[0].mxu0
      %v3214 = vadd.f32 %v3053, %v3213
      %v3215 = vpop.f32.mrb[0].mxu0
      %3216 = vmatprep.mubr.bf16.mxu0 0
      %3217 = vmatmul.mubr.bf16.gmra.mrb[0].mxu0 %v2764
      %v3218 = vpop.f32.mrb[0].mxu0
      %v3219 = vadd.f32 %v3058, %v3218
      %v3220 = vpop.f32.mrb[0].mxu0
      %v3221 = vpop.f32.mrb[0].mxu0
      %v3222 = vadd.f32 %v3061, %v3221
      %v3223 = vpop.f32.mrb[0].mxu0
      %3224 = vmatprep.mubr.bf16.mxu0 0
      %3225 = vmatmul.mubr.bf16.gmra.mrb[0].mxu0 %v2767
      %v3226 = vpop.f32.mrb[0].mxu0
      %v3227 = vadd.f32 %v3066, %v3226
      %v3228 = vpop.f32.mrb[0].mxu0
      %v3229 = vpop.f32.mrb[0].mxu0
      %v3230 = vadd.f32 %v3069, %v3229
      %v3231 = vpop.f32.mrb[0].mxu0
      %3232 = vmatprep.mubr.bf16.mxu0 0
      %3233 = vmatmul.mubr.bf16.gmra.mrb[0].mxu0 %v2770
      %v3234 = vpop.f32.mrb[0].mxu0
      %v3235 = vadd.f32 %v3074, %v3234
      %v3236 = vpop.f32.mrb[0].mxu0
      %v3237 = vpop.f32.mrb[0].mxu0
      %v3238 = vadd.f32 %v3077, %v3237
      %v3239 = vpop.f32.mrb[0].mxu0
      %3240 = vmatprep.mubr.bf16.mxu0 0
      %3241 = vmatmul.mubr.bf16.gmra.mrb[0].mxu0 %v2773
      %v3242 = vpop.f32.mrb[0].mxu0
      %v3243 = vadd.f32 %v3082, %v3242
      %v3244 = vpop.f32.mrb[0].mxu0
      %v3245 = vpop.f32.mrb[0].mxu0
      %v3246 = vadd.f32 %v3085, %v3245
      %v3247 = vpop.f32.mrb[0].mxu0
      %3248 = vmatprep.mubr.bf16.mxu0 0
      %3249 = vmatmul.mubr.bf16.gmra.mrb[0].mxu0 %v2776
      %v3250 = vpop.f32.mrb[0].mxu0
      %v3251 = vadd.f32 %v3090, %v3250
      %v3252 = vpop.f32.mrb[0].mxu0
      %v3253 = vpop.f32.mrb[0].mxu0
      %v3254 = vadd.f32 %v3093, %v3253
      %v3255 = vpop.f32.mrb[0].mxu0
      %3256 = vmatprep.mubr.bf16.mxu0 0
      %3257 = vmatmul.mubr.bf16.gmra.mrb[0].mxu0 %v2779
      %v3258 = vpop.f32.mrb[0].mxu0
      %v3259 = vadd.f32 %v3098, %v3258
      %v3260 = vpop.f32.mrb[0].mxu0
      %v3261 = vpop.f32.mrb[0].mxu0
      %v3262 = vadd.f32 %v3101, %v3261
      %v3263 = vpop.f32.mrb[0].mxu0
      %3264 = vmatprep.mubr.bf16.mxu0 0
      %3265 = vmatmul.mubr.bf16.gmra.mrb[0].mxu0 %v2782
      %v3266 = vpop.f32.mrb[0].mxu0
      %v3267 = vadd.f32 %v3106, %v3266
      %v3268 = vpop.f32.mrb[0].mxu0
      %v3269 = vpop.f32.mrb[0].mxu0
      %v3270 = vadd.f32 %v3109, %v3269
      %v3271 = vpop.f32.mrb[0].mxu0
      %3272 = vmatprep.mubr.bf16.mxu0 0
      %3273 = vmatmul.mubr.bf16.gmra.mrb[0].mxu0 %v2785
      %v3274 = vpop.f32.mrb[0].mxu0
      %v3275 = vadd.f32 %v3114, %v3274
      %v3276 = vpop.f32.mrb[0].mxu0
      %v3277 = vpop.f32.mrb[0].mxu0
      %v3278 = vadd.f32 %v3117, %v3277
      %v3279 = vpop.f32.mrb[0].mxu0
      %3280 = vmatprep.mubr.bf16.mxu0 0
      %3281 = vmatmul.mubr.bf16.gmra.mrb[0].mxu0 %v2788
      %v3282 = vpop.f32.mrb[0].mxu0
      %v3283 = vadd.f32 %v3122, %v3282
      %v3284 = vpop.f32.mrb[0].mxu0
      %v3285 = vpop.f32.mrb[0].mxu0
      %v3286 = vadd.f32 %v3125, %v3285
      %v3287 = vpop.f32.mrb[0].mxu0
      %3288 = vmatprep.mubr.bf16.mxu0 0
      %3289 = vmatmul.mubr.bf16.gmra.mrb[0].mxu0 %v2791
      %v3290 = vpop.f32.mrb[0].mxu0
      %v3291 = vadd.f32 %v3130, %v3290
      %v3292 = vpop.f32.mrb[0].mxu0
      %v3293 = vpop.f32.mrb[0].mxu0
      %v3294 = vadd.f32 %v3133, %v3293
      %v3295 = vpop.f32.mrb[0].mxu0
      %3296 = vmatprep.mubr.bf16.mxu0 0
      %3297 = vmatmul.mubr.bf16.gmra.mrb[0].mxu0 %v2794
      %v3298 = vpop.f32.mrb[0].mxu0
      %v3299 = vadd.f32 %v3138, %v3298
      %v3300 = vpop.f32.mrb[0].mxu0
      %v3301 = vpop.f32.mrb[0].mxu0
      %v3302 = vadd.f32 %v3141, %v3301
      %v3303 = vpop.f32.mrb[0].mxu0
      %3304 = vmatprep.mubr.bf16.mxu0 0
      %3305 = vmatmul.mubr.bf16.gmra.mrb[0].mxu0 %v2797
      %v3306 = vpop.f32.mrb[0].mxu0
      %v3307 = vadd.f32 %v3146, %v3306
      %v3308 = vpop.f32.mrb[0].mxu0
      %v3309 = vpop.f32.mrb[0].mxu0
      %v3310 = vadd.f32 %v3149, %v3309
      %v3311 = vpop.f32.mrb[0].mxu0
      %3312 = vdwg.mxu0
      %v3361 = vunpack.c.l.b16 %v1902
      %v3362 = vunpack.c.l.b16 %v1903
      %v3363 = vunpack.c.l.b16 %v1904
      %v3364 = vunpack.c.l.b16 %v1905
      %v3365 = vunpack.c.l.b16 %v1906
      %v3366 = vunpack.c.l.b16 %v1907
      %v3367 = vunpack.c.l.b16 %v1908
      %v3368 = vunpack.c.l.b16 %v1909
      %v3369 = vunpack.c.l.b16 %v1910
      %v3370 = vunpack.c.l.b16 %v1911
      %v3371 = vunpack.c.l.b16 %v1912
      %v3372 = vunpack.c.l.b16 %v1913
      %v3373 = vunpack.c.l.b16 %v1914
      %v3374 = vunpack.c.l.b16 %v1915
      %v3375 = vunpack.c.l.b16 %v1916
      %v3376 = vunpack.c.l.b16 %v1917
      %v3377 = vunpack.c.l.b16 %v1918
      %v3378 = vunpack.c.l.b16 %v1919
      %v3379 = vunpack.c.l.b16 %v1920
      %v3380 = vunpack.c.l.b16 %v1921
      %v3381 = vunpack.c.l.b16 %v1922
      %v3382 = vunpack.c.l.b16 %v1923
      %v3383 = vunpack.c.l.b16 %v1924
      %v3384 = vunpack.c.l.b16 %v1925
      %v3385 = vunpack.c.l.b16 %v1926
      %v3386 = vunpack.c.l.b16 %v1927
      %v3387 = vunpack.c.l.b16 %v1928
      %v3388 = vunpack.c.l.b16 %v1929
      %v3389 = vunpack.c.l.b16 %v1930
      %v3390 = vunpack.c.l.b16 %v1931
      %v3391 = vunpack.c.l.b16 %v1932
      %v3392 = vunpack.c.l.b16 %v1933
      %v3393 = vunpack.c.l.b16 %v1934
      %v3394 = vunpack.c.l.b16 %v1935
      %v3395 = vunpack.c.l.b16 %v1936
      %v3396 = vunpack.c.l.b16 %v1937
      %v3397 = vunpack.c.l.b16 %v1938
      %v3398 = vunpack.c.l.b16 %v1939
      %v3399 = vunpack.c.l.b16 %v1940
      %v3400 = vunpack.c.l.b16 %v1941
      %v3401 = vunpack.c.l.b16 %v1942
      %v3402 = vunpack.c.l.b16 %v1943
      %v3403 = vunpack.c.l.b16 %v1944
      %v3404 = vunpack.c.l.b16 %v1945
      %v3405 = vunpack.c.l.b16 %v1946
      %v3406 = vunpack.c.l.b16 %v1947
      %v3407 = vunpack.c.l.b16 %v1948
      %v3408 = vunpack.c.l.b16 %v1949
      %v3409 = vpack.c.b16 %v3362, %v3361
      %v3410 = vpack.c.b16 %v3364, %v3363
      %v3411 = vpack.c.b16 %v3366, %v3365
      %v3412 = vpack.c.b16 %v3368, %v3367
      %v3413 = vpack.c.b16 %v3370, %v3369
      %v3414 = vpack.c.b16 %v3372, %v3371
      %v3415 = vpack.c.b16 %v3374, %v3373
      %v3416 = vpack.c.b16 %v3376, %v3375
      %v3417 = vpack.c.b16 %v3378, %v3377
      %v3418 = vpack.c.b16 %v3380, %v3379
      %v3419 = vpack.c.b16 %v3382, %v3381
      %v3420 = vpack.c.b16 %v3384, %v3383
      %v3421 = vpack.c.b16 %v3386, %v3385
      %v3422 = vpack.c.b16 %v3388, %v3387
      %v3423 = vpack.c.b16 %v3390, %v3389
      %v3424 = vpack.c.b16 %v3392, %v3391
      %v3425 = vpack.c.b16 %v3394, %v3393
      %v3426 = vpack.c.b16 %v3396, %v3395
      %v3427 = vpack.c.b16 %v3398, %v3397
      %v3428 = vpack.c.b16 %v3400, %v3399
      %v3429 = vpack.c.b16 %v3402, %v3401
      %v3430 = vpack.c.b16 %v3404, %v3403
      %v3431 = vpack.c.b16 %v3406, %v3405
      %v3432 = vpack.c.b16 %v3408, %v3407
      %3457 = vmatprep.subr.bf16.mxu0 0
      %3458 = vmatpush1.bf16.msra.mxu0 %v3409
      %3459 = vmatprep.subr.bf16.mxu0 0
      %3460 = vmatpush1.bf16.msra.mxu0 %v3410
      %3461 = vmatprep.subr.bf16.mxu0 0
      %3462 = vmatpush1.bf16.msra.mxu0 %v3411
      %3463 = vmatprep.subr.bf16.mxu0 0
      %3464 = vmatpush1.bf16.msra.mxu0 %v3412
      %3465 = vmatprep.subr.bf16.mxu0 0
      %3466 = vmatpush1.bf16.msra.mxu0 %v3413
      %3467 = vmatprep.subr.bf16.mxu0 0
      %3468 = vmatpush1.bf16.msra.mxu0 %v3414
      %3469 = vmatprep.subr.bf16.mxu0 0
      %3470 = vmatpush1.bf16.msra.mxu0 %v3415
      %3471 = vmatprep.subr.bf16.mxu0 0
      %3472 = vmatpush1.bf16.msra.mxu0 %v3416
      %3473 = vmatprep.subr.bf16.mxu0 0
      %3474 = vmatpush1.bf16.msra.mxu0 %v3417
      %3475 = vmatprep.subr.bf16.mxu0 0
      %3476 = vmatpush1.bf16.msra.mxu0 %v3418
      %3477 = vmatprep.subr.bf16.mxu0 0
      %3478 = vmatpush1.bf16.msra.mxu0 %v3419
      %3479 = vmatprep.subr.bf16.mxu0 0
      %3480 = vmatpush1.bf16.msra.mxu0 %v3420
      %3481 = vmatprep.subr.bf16.mxu0 0
      %3482 = vmatpush1.bf16.msra.mxu0 %v3421
      %3483 = vmatprep.subr.bf16.mxu0 0
      %3484 = vmatpush1.bf16.msra.mxu0 %v3422
      %3485 = vmatprep.subr.bf16.mxu0 0
      %3486 = vmatpush1.bf16.msra.mxu0 %v3423
      %3487 = vmatprep.subr.bf16.mxu0 0
      %3488 = vmatpush1.bf16.msra.mxu0 %v3424
      %3489 = vmatprep.mubr.bf16.mxu0 %v1855
      %3490 = vmatmul.mubr.bf16.gmra.mrb[0].mxu0 %v1854
      %v3491 = vpop.f32.mrb[0].mxu0
      %v3492 = vadd.f32 %v3187, %v3491
      %v3493 = vpop.f32.mrb[0].mxu0
      %v3494 = vpop.f32.mrb[0].mxu0
      %v3495 = vadd.f32 %v3190, %v3494
      %v3496 = vpop.f32.mrb[0].mxu0
      %3497 = vmatprep.mubr.bf16.mxu0 %v1858
      %3498 = vmatmul.mubr.bf16.gmra.mrb[0].mxu0 %v1857
      %v3499 = vpop.f32.mrb[0].mxu0
      %v3500 = vadd.f32 %v3195, %v3499
      %v3501 = vpop.f32.mrb[0].mxu0
      %v3502 = vpop.f32.mrb[0].mxu0
      %v3503 = vadd.f32 %v3198, %v3502
      %v3504 = vpop.f32.mrb[0].mxu0
      %3505 = vmatprep.mubr.bf16.mxu0 %v1861
      %3506 = vmatmul.mubr.bf16.gmra.mrb[0].mxu0 %v1860
      %v3507 = vpop.f32.mrb[0].mxu0
      %v3508 = vadd.f32 %v3203, %v3507
      %v3509 = vpop.f32.mrb[0].mxu0
      %v3510 = vpop.f32.mrb[0].mxu0
      %v3511 = vadd.f32 %v3206, %v3510
      %v3512 = vpop.f32.mrb[0].mxu0
      %3513 = vmatprep.mubr.bf16.mxu0 %v1864
      %3514 = vmatmul.mubr.bf16.gmra.mrb[0].mxu0 %v1863
      %v3515 = vpop.f32.mrb[0].mxu0
      %v3516 = vadd.f32 %v3211, %v3515
      %v3517 = vpop.f32.mrb[0].mxu0
      %v3518 = vpop.f32.mrb[0].mxu0
      %v3519 = vadd.f32 %v3214, %v3518
      %v3520 = vpop.f32.mrb[0].mxu0
      %3521 = vmatprep.mubr.bf16.mxu0 %v1867
      %3522 = vmatmul.mubr.bf16.gmra.mrb[0].mxu0 %v1866
      %v3523 = vpop.f32.mrb[0].mxu0
      %v3524 = vadd.f32 %v3219, %v3523
      %v3525 = vpop.f32.mrb[0].mxu0
      %v3526 = vpop.f32.mrb[0].mxu0
      %v3527 = vadd.f32 %v3222, %v3526
      %v3528 = vpop.f32.mrb[0].mxu0
      %3529 = vmatprep.mubr.bf16.mxu0 %v1870
      %3530 = vmatmul.mubr.bf16.gmra.mrb[0].mxu0 %v1869
      %v3531 = vpop.f32.mrb[0].mxu0
      %v3532 = vadd.f32 %v3227, %v3531
      %v3533 = vpop.f32.mrb[0].mxu0
      %v3534 = vpop.f32.mrb[0].mxu0
      %v3535 = vadd.f32 %v3230, %v3534
      %v3536 = vpop.f32.mrb[0].mxu0
      %3537 = vmatprep.mubr.bf16.mxu0 %v1873
      %3538 = vmatmul.mubr.bf16.gmra.mrb[0].mxu0 %v1872
      %v3539 = vpop.f32.mrb[0].mxu0
      %v3540 = vadd.f32 %v3235, %v3539
      %v3541 = vpop.f32.mrb[0].mxu0
      %v3542 = vpop.f32.mrb[0].mxu0
      %v3543 = vadd.f32 %v3238, %v3542
      %v3544 = vpop.f32.mrb[0].mxu0
      %3545 = vmatprep.mubr.bf16.mxu0 %v1876
      %3546 = vmatmul.mubr.bf16.gmra.mrb[0].mxu0 %v1875
      %v3547 = vpop.f32.mrb[0].mxu0
      %v3548 = vadd.f32 %v3243, %v3547
      %v3549 = vpop.f32.mrb[0].mxu0
      %v3550 = vpop.f32.mrb[0].mxu0
      %v3551 = vadd.f32 %v3246, %v3550
      %v3552 = vpop.f32.mrb[0].mxu0
      %3553 = vmatprep.mubr.bf16.mxu0 %v1879
      %3554 = vmatmul.mubr.bf16.gmra.mrb[0].mxu0 %v1878
      %v3555 = vpop.f32.mrb[0].mxu0
      %v3556 = vadd.f32 %v3251, %v3555
      %v3557 = vpop.f32.mrb[0].mxu0
      %v3558 = vpop.f32.mrb[0].mxu0
      %v3559 = vadd.f32 %v3254, %v3558
      %v3560 = vpop.f32.mrb[0].mxu0
      %3561 = vmatprep.mubr.bf16.mxu0 %v1882
      %3562 = vmatmul.mubr.bf16.gmra.mrb[0].mxu0 %v1881
      %v3563 = vpop.f32.mrb[0].mxu0
      %v3564 = vadd.f32 %v3259, %v3563
      %v3565 = vpop.f32.mrb[0].mxu0
      %v3566 = vpop.f32.mrb[0].mxu0
      %v3567 = vadd.f32 %v3262, %v3566
      %v3568 = vpop.f32.mrb[0].mxu0
      %3569 = vmatprep.mubr.bf16.mxu0 %v1885
      %3570 = vmatmul.mubr.bf16.gmra.mrb[0].mxu0 %v1884
      %v3571 = vpop.f32.mrb[0].mxu0
      %v3572 = vadd.f32 %v3267, %v3571
      %v3573 = vpop.f32.mrb[0].mxu0
      %v3574 = vpop.f32.mrb[0].mxu0
      %v3575 = vadd.f32 %v3270, %v3574
      %v3576 = vpop.f32.mrb[0].mxu0
      %3577 = vmatprep.mubr.bf16.mxu0 %v1888
      %3578 = vmatmul.mubr.bf16.gmra.mrb[0].mxu0 %v1887
      %v3579 = vpop.f32.mrb[0].mxu0
      %v3580 = vadd.f32 %v3275, %v3579
      %v3581 = vpop.f32.mrb[0].mxu0
      %v3582 = vpop.f32.mrb[0].mxu0
      %v3583 = vadd.f32 %v3278, %v3582
      %v3584 = vpop.f32.mrb[0].mxu0
      %3585 = vmatprep.mubr.bf16.mxu0 %v1891
      %3586 = vmatmul.mubr.bf16.gmra.mrb[0].mxu0 %v1890
      %v3587 = vpop.f32.mrb[0].mxu0
      %v3588 = vadd.f32 %v3283, %v3587
      %v3589 = vpop.f32.mrb[0].mxu0
      %v3590 = vpop.f32.mrb[0].mxu0
      %v3591 = vadd.f32 %v3286, %v3590
      %v3592 = vpop.f32.mrb[0].mxu0
      %3593 = vmatprep.mubr.bf16.mxu0 %v1894
      %3594 = vmatmul.mubr.bf16.gmra.mrb[0].mxu0 %v1893
      %v3595 = vpop.f32.mrb[0].mxu0
      %v3596 = vadd.f32 %v3291, %v3595
      %v3597 = vpop.f32.mrb[0].mxu0
      %v3598 = vpop.f32.mrb[0].mxu0
      %v3599 = vadd.f32 %v3294, %v3598
      %v3600 = vpop.f32.mrb[0].mxu0
      %3601 = vmatprep.mubr.bf16.mxu0 %v1897
      %3602 = vmatmul.mubr.bf16.gmra.mrb[0].mxu0 %v1896
      %v3603 = vpop.f32.mrb[0].mxu0
      %v3604 = vadd.f32 %v3299, %v3603
      %v3605 = vpop.f32.mrb[0].mxu0
      %v3606 = vpop.f32.mrb[0].mxu0
      %v3607 = vadd.f32 %v3302, %v3606
      %v3608 = vpop.f32.mrb[0].mxu0
      %3609 = vmatprep.mubr.bf16.mxu0 %v1900
      %3610 = vmatmul.mubr.bf16.gmra.mrb[0].mxu0 %v1899
      %v3611 = vpop.f32.mrb[0].mxu0
      %v3612 = vadd.f32 %v3307, %v3611
      %v3613 = vpop.f32.mrb[0].mxu0
      %v3614 = vpop.f32.mrb[0].mxu0
      %v3615 = vadd.f32 %v3310, %v3614
      %v3616 = vpop.f32.mrb[0].mxu0
      %3617 = vdwg.mxu0
      %3618 = vmatprep.subr.bf16.mxu0 0
      %3619 = vmatpush1.bf16.msra.mxu0 %v3425
      %3620 = vmatprep.subr.bf16.mxu0 0
      %3621 = vmatpush1.bf16.msra.mxu0 %v3426
      %3622 = vmatprep.subr.bf16.mxu0 0
      %3623 = vmatpush1.bf16.msra.mxu0 %v3427
      %3624 = vmatprep.subr.bf16.mxu0 0
      %3625 = vmatpush1.bf16.msra.mxu0 %v3428
      %3626 = vmatprep.subr.bf16.mxu0 0
      %3627 = vmatpush1.bf16.msra.mxu0 %v3429
      %3628 = vmatprep.subr.bf16.mxu0 0
      %3629 = vmatpush1.bf16.msra.mxu0 %v3430
      %3630 = vmatprep.subr.bf16.mxu0 0
      %3631 = vmatpush1.bf16.msra.mxu0 %v3431
      %3632 = vmatprep.subr.bf16.mxu0 0
      %3633 = vmatpush1.bf16.msra.mxu0 %v3432
      %3634 = vmatprep.subr.bf16.mxu0 0
      %3635 = vmatpush1.bf16.msra.mxu0 0
      %3636 = vmatprep.subr.bf16.mxu0 0
      %3637 = vmatpush1.bf16.msra.mxu0 0
      %3638 = vmatprep.subr.bf16.mxu0 0
      %3639 = vmatpush1.bf16.msra.mxu0 0
      %3640 = vmatprep.subr.bf16.mxu0 0
      %3641 = vmatpush1.bf16.msra.mxu0 0
      %3642 = vmatprep.subr.bf16.mxu0 0
      %3643 = vmatpush1.bf16.msra.mxu0 0
      %3644 = vmatprep.subr.bf16.mxu0 0
      %3645 = vmatpush1.bf16.msra.mxu0 0
      %3646 = vmatprep.subr.bf16.mxu0 0
      %3647 = vmatpush1.bf16.msra.mxu0 0
      %3648 = vmatprep.subr.bf16.mxu0 0
      %3649 = vmatpush1.bf16.msra.mxu0 0
      %3650 = vmatprep.mubr.bf16.mxu0 0
      %3651 = vmatmul.mubr.bf16.gmra.mrb[0].mxu0 %v1856
      %v3652 = vpop.f32.mrb[0].mxu0
      %v3653 = vadd.f32 %v3492, %v3652
      %v3654 = vpop.f32.mrb[0].mxu0
      %v3655 = vpop.f32.mrb[0].mxu0
      %v3656 = vadd.f32 %v3495, %v3655
      %v3657 = vpop.f32.mrb[0].mxu0
      %3658 = vmatprep.mubr.bf16.mxu0 0
      %3659 = vmatmul.mubr.bf16.gmra.mrb[0].mxu0 %v1859
      %v3660 = vpop.f32.mrb[0].mxu0
      %v3661 = vadd.f32 %v3500, %v3660
      %v3662 = vpop.f32.mrb[0].mxu0
      %v3663 = vpop.f32.mrb[0].mxu0
      %v3664 = vadd.f32 %v3503, %v3663
      %v3665 = vpop.f32.mrb[0].mxu0
      %3666 = vmatprep.mubr.bf16.mxu0 0
      %3667 = vmatmul.mubr.bf16.gmra.mrb[0].mxu0 %v1862
      %v3668 = vpop.f32.mrb[0].mxu0
      %v3669 = vadd.f32 %v3508, %v3668
      %v3670 = vpop.f32.mrb[0].mxu0
      %v3671 = vpop.f32.mrb[0].mxu0
      %v3672 = vadd.f32 %v3511, %v3671
      %v3673 = vpop.f32.mrb[0].mxu0
      %3674 = vmatprep.mubr.bf16.mxu0 0
      %3675 = vmatmul.mubr.bf16.gmra.mrb[0].mxu0 %v1865
      %v3676 = vpop.f32.mrb[0].mxu0
      %v3677 = vadd.f32 %v3516, %v3676
      %v3678 = vpop.f32.mrb[0].mxu0
      %v3679 = vpop.f32.mrb[0].mxu0
      %v3680 = vadd.f32 %v3519, %v3679
      %v3681 = vpop.f32.mrb[0].mxu0
      %3682 = vmatprep.mubr.bf16.mxu0 0
      %3683 = vmatmul.mubr.bf16.gmra.mrb[0].mxu0 %v1868
      %v3684 = vpop.f32.mrb[0].mxu0
      %v3685 = vadd.f32 %v3524, %v3684
      %v3686 = vpop.f32.mrb[0].mxu0
      %v3687 = vpop.f32.mrb[0].mxu0
      %v3688 = vadd.f32 %v3527, %v3687
      %v3689 = vpop.f32.mrb[0].mxu0
      %3690 = vmatprep.mubr.bf16.mxu0 0
      %3691 = vmatmul.mubr.bf16.gmra.mrb[0].mxu0 %v1871
      %v3692 = vpop.f32.mrb[0].mxu0
      %v3693 = vadd.f32 %v3532, %v3692
      %v3694 = vpop.f32.mrb[0].mxu0
      %v3695 = vpop.f32.mrb[0].mxu0
      %v3696 = vadd.f32 %v3535, %v3695
      %v3697 = vpop.f32.mrb[0].mxu0
      %3698 = vmatprep.mubr.bf16.mxu0 0
      %3699 = vmatmul.mubr.bf16.gmra.mrb[0].mxu0 %v1874
      %v3700 = vpop.f32.mrb[0].mxu0
      %v3701 = vadd.f32 %v3540, %v3700
      %v3702 = vpop.f32.mrb[0].mxu0
      %v3703 = vpop.f32.mrb[0].mxu0
      %v3704 = vadd.f32 %v3543, %v3703
      %v3705 = vpop.f32.mrb[0].mxu0
      %3706 = vmatprep.mubr.bf16.mxu0 0
      %3707 = vmatmul.mubr.bf16.gmra.mrb[0].mxu0 %v1877
      %v3708 = vpop.f32.mrb[0].mxu0
      %v3709 = vadd.f32 %v3548, %v3708
      %v3710 = vpop.f32.mrb[0].mxu0
      %v3711 = vpop.f32.mrb[0].mxu0
      %v3712 = vadd.f32 %v3551, %v3711
      %v3713 = vpop.f32.mrb[0].mxu0
      %3714 = vmatprep.mubr.bf16.mxu0 0
      %3715 = vmatmul.mubr.bf16.gmra.mrb[0].mxu0 %v1880
      %v3716 = vpop.f32.mrb[0].mxu0
      %v3717 = vadd.f32 %v3556, %v3716
      %v3718 = vpop.f32.mrb[0].mxu0
      %v3719 = vpop.f32.mrb[0].mxu0
      %v3720 = vadd.f32 %v3559, %v3719
      %v3721 = vpop.f32.mrb[0].mxu0
      %3722 = vmatprep.mubr.bf16.mxu0 0
      %3723 = vmatmul.mubr.bf16.gmra.mrb[0].mxu0 %v1883
      %v3724 = vpop.f32.mrb[0].mxu0
      %v3725 = vadd.f32 %v3564, %v3724
      %v3726 = vpop.f32.mrb[0].mxu0
      %v3727 = vpop.f32.mrb[0].mxu0
      %v3728 = vadd.f32 %v3567, %v3727
      %v3729 = vpop.f32.mrb[0].mxu0
      %3730 = vmatprep.mubr.bf16.mxu0 0
      %3731 = vmatmul.mubr.bf16.gmra.mrb[0].mxu0 %v1886
      %v3732 = vpop.f32.mrb[0].mxu0
      %v3733 = vadd.f32 %v3572, %v3732
      %v3734 = vpop.f32.mrb[0].mxu0
      %v3735 = vpop.f32.mrb[0].mxu0
      %v3736 = vadd.f32 %v3575, %v3735
      %v3737 = vpop.f32.mrb[0].mxu0
      %3738 = vmatprep.mubr.bf16.mxu0 0
      %3739 = vmatmul.mubr.bf16.gmra.mrb[0].mxu0 %v1889
      %v3740 = vpop.f32.mrb[0].mxu0
      %v3741 = vadd.f32 %v3580, %v3740
      %v3742 = vpop.f32.mrb[0].mxu0
      %v3743 = vpop.f32.mrb[0].mxu0
      %v3744 = vadd.f32 %v3583, %v3743
      %v3745 = vpop.f32.mrb[0].mxu0
      %3746 = vmatprep.mubr.bf16.mxu0 0
      %3747 = vmatmul.mubr.bf16.gmra.mrb[0].mxu0 %v1892
      %v3748 = vpop.f32.mrb[0].mxu0
      %v3749 = vadd.f32 %v3588, %v3748
      %v3750 = vpop.f32.mrb[0].mxu0
      %v3751 = vpop.f32.mrb[0].mxu0
      %v3752 = vadd.f32 %v3591, %v3751
      %v3753 = vpop.f32.mrb[0].mxu0
      %3754 = vmatprep.mubr.bf16.mxu0 0
      %3755 = vmatmul.mubr.bf16.gmra.mrb[0].mxu0 %v1895
      %v3756 = vpop.f32.mrb[0].mxu0
      %v3757 = vadd.f32 %v3596, %v3756
      %v3758 = vpop.f32.mrb[0].mxu0
      %v3759 = vpop.f32.mrb[0].mxu0
      %v3760 = vadd.f32 %v3599, %v3759
      %v3761 = vpop.f32.mrb[0].mxu0
      %3762 = vmatprep.mubr.bf16.mxu0 0
      %3763 = vmatmul.mubr.bf16.gmra.mrb[0].mxu0 %v1898
      %v3764 = vpop.f32.mrb[0].mxu0
      %v3765 = vadd.f32 %v3604, %v3764
      %v3766 = vpop.f32.mrb[0].mxu0
      %v3767 = vpop.f32.mrb[0].mxu0
      %v3768 = vadd.f32 %v3607, %v3767
      %v3769 = vpop.f32.mrb[0].mxu0
      %3770 = vmatprep.mubr.bf16.mxu0 0
      %3771 = vmatmul.mubr.bf16.gmra.mrb[0].mxu0 %v1901
      %v3772 = vpop.f32.mrb[0].mxu0
      %v3773 = vadd.f32 %v3612, %v3772
      %v3774 = vpop.f32.mrb[0].mxu0
      %v3775 = vpop.f32.mrb[0].mxu0
      %v3776 = vadd.f32 %v3615, %v3775
      %v3777 = vpop.f32.mrb[0].mxu0
      %3778 = vdwg.mxu0
      %s3779 = scalar_lea.vmem [#allocation2], 24
      %v3780 = vld [vmem:[%s3779] sm:$0xf]
      %v3781 = vld [vmem:[%s3779 + $0x4] sm:$0xf]
      %v3782 = vld [vmem:[%s3779 + $0xc] sm:$0xf]
      %v3783 = vld [vmem:[%s3779 + $0x10] sm:$0xf]
      %v3784 = vld [vmem:[%s3779 + $0x18] sm:$0xf]
      %v3785 = vld [vmem:[%s3779 + $0x1c] sm:$0xf]
      %v3786 = vld [vmem:[%s3779 + $0x24] sm:$0xf]
      %v3787 = vld [vmem:[%s3779 + $0x28] sm:$0xf]
      %v3788 = vld [vmem:[%s3779 + $0x30] sm:$0xf]
      %v3789 = vld [vmem:[%s3779 + $0x34] sm:$0xf]
      %v3790 = vld [vmem:[%s3779 + $0x3c] sm:$0xf]
      %v3791 = vld [vmem:[%s3779 + $0x40] sm:$0xf]
      %v3792 = vld [vmem:[%s3779 + $0x48] sm:$0xf]
      %v3793 = vld [vmem:[%s3779 + $0x4c] sm:$0xf]
      %v3794 = vld [vmem:[%s3779 + $0x54] sm:$0xf]
      %v3795 = vld [vmem:[%s3779 + $0x58] sm:$0xf]
      %v3796 = vld [vmem:[%s3779 + $0x60] sm:$0xf]
      %v3797 = vld [vmem:[%s3779 + $0x64] sm:$0xf]
      %v3798 = vld [vmem:[%s3779 + $0x6c] sm:$0xf]
      %v3799 = vld [vmem:[%s3779 + $0x70] sm:$0xf]
      %v3800 = vld [vmem:[%s3779 + $0x78] sm:$0xf]
      %v3801 = vld [vmem:[%s3779 + $0x7c] sm:$0xf]
      %v3802 = vld [vmem:[%s3779 + $0x84] sm:$0xf]
      %v3803 = vld [vmem:[%s3779 + $0x88] sm:$0xf]
      %v3804 = vld [vmem:[%s3779 + $0x90] sm:$0xf]
      %v3805 = vld [vmem:[%s3779 + $0x94] sm:$0xf]
      %v3806 = vld [vmem:[%s3779 + $0x9c] sm:$0xf]
      %v3807 = vld [vmem:[%s3779 + $0xa0] sm:$0xf]
      %v3808 = vld [vmem:[%s3779 + $0xa8] sm:$0xf]
      %v3809 = vld [vmem:[%s3779 + $0xac] sm:$0xf]
      %v3810 = vld [vmem:[%s3779 + $0xb4] sm:$0xf]
      %v3811 = vld [vmem:[%s3779 + $0xb8] sm:$0xf]
      %v3844 = vunpack.c.l.b16 %v3780
      %v3845 = vunpack.c.l.b16 %v3781
      %v3846 = vunpack.c.l.b16 %v3782
      %v3847 = vunpack.c.l.b16 %v3783
      %v3848 = vunpack.c.l.b16 %v3784
      %v3849 = vunpack.c.l.b16 %v3785
      %v3850 = vunpack.c.l.b16 %v3786
      %v3851 = vunpack.c.l.b16 %v3787
      %v3852 = vunpack.c.l.b16 %v3788
      %v3853 = vunpack.c.l.b16 %v3789
      %v3854 = vunpack.c.l.b16 %v3790
      %v3855 = vunpack.c.l.b16 %v3791
      %v3856 = vunpack.c.l.b16 %v3792
      %v3857 = vunpack.c.l.b16 %v3793
      %v3858 = vunpack.c.l.b16 %v3794
      %v3859 = vunpack.c.l.b16 %v3795
      %v3860 = vunpack.c.l.b16 %v3796
      %v3861 = vunpack.c.l.b16 %v3797
      %v3862 = vunpack.c.l.b16 %v3798
      %v3863 = vunpack.c.l.b16 %v3799
      %v3864 = vunpack.c.l.b16 %v3800
      %v3865 = vunpack.c.l.b16 %v3801
      %v3866 = vunpack.c.l.b16 %v3802
      %v3867 = vunpack.c.l.b16 %v3803
      %v3868 = vunpack.c.l.b16 %v3804
      %v3869 = vunpack.c.l.b16 %v3805
      %v3870 = vunpack.c.l.b16 %v3806
      %v3871 = vunpack.c.l.b16 %v3807
      %v3872 = vunpack.c.l.b16 %v3808
      %v3873 = vunpack.c.l.b16 %v3809
      %v3874 = vunpack.c.l.b16 %v3810
      %v3875 = vunpack.c.l.b16 %v3811
      %v3876 = vpack.c.b16 %v3845, %v3844
      %v3877 = vpack.c.b16 %v3847, %v3846
      %v3878 = vpack.c.b16 %v3849, %v3848
      %v3879 = vpack.c.b16 %v3851, %v3850
      %v3880 = vpack.c.b16 %v3853, %v3852
      %v3881 = vpack.c.b16 %v3855, %v3854
      %v3882 = vpack.c.b16 %v3857, %v3856
      %v3883 = vpack.c.b16 %v3859, %v3858
      %v3884 = vpack.c.b16 %v3861, %v3860
      %v3885 = vpack.c.b16 %v3863, %v3862
      %v3886 = vpack.c.b16 %v3865, %v3864
      %v3887 = vpack.c.b16 %v3867, %v3866
      %v3888 = vpack.c.b16 %v3869, %v3868
      %v3889 = vpack.c.b16 %v3871, %v3870
      %v3890 = vpack.c.b16 %v3873, %v3872
      %v3891 = vpack.c.b16 %v3875, %v3874
      %3908 = vst [vmem:[#allocation3] sm:$0xff] %v3876
      %3909 = vst [vmem:[#allocation3 + $0x18] sm:$0xff] %v3877
      %3910 = vst [vmem:[#allocation3 + $0x30] sm:$0xff] %v3878
      %3911 = vst [vmem:[#allocation3 + $0x48] sm:$0xff] %v3879
      %3912 = vst [vmem:[#allocation3 + $0x60] sm:$0xff] %v3880
      %3913 = vst [vmem:[#allocation3 + $0x78] sm:$0xff] %v3881
      %3914 = vst [vmem:[#allocation3 + $0x90] sm:$0xff] %v3882
      %3915 = vst [vmem:[#allocation3 + $0xa8] sm:$0xff] %v3883
      %3916 = vst [vmem:[#allocation3 + $0xc0] sm:$0xff] %v3884
      %3917 = vst [vmem:[#allocation3 + $0xd8] sm:$0xff] %v3885
      %3918 = vst [vmem:[#allocation3 + $0xf0] sm:$0xff] %v3886
      %3919 = vst [vmem:[#allocation3 + $0x108] sm:$0xff] %v3887
      %3920 = vst [vmem:[#allocation3 + $0x120] sm:$0xff] %v3888
      %3921 = vst [vmem:[#allocation3 + $0x138] sm:$0xff] %v3889
      %3922 = vst [vmem:[#allocation3 + $0x150] sm:$0xff] %v3890
      %3923 = vst [vmem:[#allocation3 + $0x168] sm:$0xff] %v3891
      %v3924 = vld [vmem:[%s3779] sm:$0xf]
      %v3925 = vld [vmem:[%s3779 + $0x4] sm:$0xf]
      %v3926 = vld [vmem:[%s3779 + $0x8] sm:$0x1]
      %v3927 = vld [vmem:[%s3779 + $0xc] sm:$0xf]
      %v3928 = vld [vmem:[%s3779 + $0x10] sm:$0xf]
      %v3929 = vld [vmem:[%s3779 + $0x14] sm:$0x1]
      %v3930 = vld [vmem:[%s3779 + $0x18] sm:$0xf]
      %v3931 = vld [vmem:[%s3779 + $0x1c] sm:$0xf]
      %v3932 = vld [vmem:[%s3779 + $0x20] sm:$0x1]
      %v3933 = vld [vmem:[%s3779 + $0x24] sm:$0xf]
      %v3934 = vld [vmem:[%s3779 + $0x28] sm:$0xf]
      %v3935 = vld [vmem:[%s3779 + $0x2c] sm:$0x1]
      %v3936 = vld [vmem:[%s3779 + $0x30] sm:$0xf]
      %v3937 = vld [vmem:[%s3779 + $0x34] sm:$0xf]
      %v3938 = vld [vmem:[%s3779 + $0x38] sm:$0x1]
      %v3939 = vld [vmem:[%s3779 + $0x3c] sm:$0xf]
      %v3940 = vld [vmem:[%s3779 + $0x40] sm:$0xf]
      %v3941 = vld [vmem:[%s3779 + $0x44] sm:$0x1]
      %v3942 = vld [vmem:[%s3779 + $0x48] sm:$0xf]
      %v3943 = vld [vmem:[%s3779 + $0x4c] sm:$0xf]
      %v3944 = vld [vmem:[%s3779 + $0x50] sm:$0x1]
      %v3945 = vld [vmem:[%s3779 + $0x54] sm:$0xf]
      %v3946 = vld [vmem:[%s3779 + $0x58] sm:$0xf]
      %v3947 = vld [vmem:[%s3779 + $0x5c] sm:$0x1]
      %v3948 = vld [vmem:[%s3779 + $0x60] sm:$0xf]
      %v3949 = vld [vmem:[%s3779 + $0x64] sm:$0xf]
      %v3950 = vld [vmem:[%s3779 + $0x68] sm:$0x1]
      %v3951 = vld [vmem:[%s3779 + $0x6c] sm:$0xf]
      %v3952 = vld [vmem:[%s3779 + $0x70] sm:$0xf]
      %v3953 = vld [vmem:[%s3779 + $0x74] sm:$0x1]
      %v3954 = vld [vmem:[%s3779 + $0x78] sm:$0xf]
      %v3955 = vld [vmem:[%s3779 + $0x7c] sm:$0xf]
      %v3956 = vld [vmem:[%s3779 + $0x80] sm:$0x1]
      %v3957 = vld [vmem:[%s3779 + $0x84] sm:$0xf]
      %v3958 = vld [vmem:[%s3779 + $0x88] sm:$0xf]
      %v3959 = vld [vmem:[%s3779 + $0x8c] sm:$0x1]
      %v3960 = vld [vmem:[%s3779 + $0x90] sm:$0xf]
      %v3961 = vld [vmem:[%s3779 + $0x94] sm:$0xf]
      %v3962 = vld [vmem:[%s3779 + $0x98] sm:$0x1]
      %v3963 = vld [vmem:[%s3779 + $0x9c] sm:$0xf]
      %v3964 = vld [vmem:[%s3779 + $0xa0] sm:$0xf]
      %v3965 = vld [vmem:[%s3779 + $0xa4] sm:$0x1]
      %v3966 = vld [vmem:[%s3779 + $0xa8] sm:$0xf]
      %v3967 = vld [vmem:[%s3779 + $0xac] sm:$0xf]
      %v3968 = vld [vmem:[%s3779 + $0xb0] sm:$0x1]
      %v3969 = vld [vmem:[%s3779 + $0xb4] sm:$0xf]
      %v3970 = vld [vmem:[%s3779 + $0xb8] sm:$0xf]
      %v3971 = vld [vmem:[%s3779 + $0xbc] sm:$0x1]
      %v4020 = vunpack.c.l.b16 %v3924
      %v4021 = vunpack.c.l.b16 %v3925
      %v4022 = vunpack.c.l.b16 %v3926
      %v4023 = vunpack.c.l.b16 %v3927
      %v4024 = vunpack.c.l.b16 %v3928
      %v4025 = vunpack.c.l.b16 %v3929
      %v4026 = vunpack.c.l.b16 %v3930
      %v4027 = vunpack.c.l.b16 %v3931
      %v4028 = vunpack.c.l.b16 %v3932
      %v4029 = vunpack.c.l.b16 %v3933
      %v4030 = vunpack.c.l.b16 %v3934
      %v4031 = vunpack.c.l.b16 %v3935
      %v4032 = vunpack.c.l.b16 %v3936
      %v4033 = vunpack.c.l.b16 %v3937
      %v4034 = vunpack.c.l.b16 %v3938
      %v4035 = vunpack.c.l.b16 %v3939
      %v4036 = vunpack.c.l.b16 %v3940
      %v4037 = vunpack.c.l.b16 %v3941
      %v4038 = vunpack.c.l.b16 %v3942
      %v4039 = vunpack.c.l.b16 %v3943
      %v4040 = vunpack.c.l.b16 %v3944
      %v4041 = vunpack.c.l.b16 %v3945
      %v4042 = vunpack.c.l.b16 %v3946
      %v4043 = vunpack.c.l.b16 %v3947
      %v4044 = vunpack.c.l.b16 %v3948
      %v4045 = vunpack.c.l.b16 %v3949
      %v4046 = vunpack.c.l.b16 %v3950
      %v4047 = vunpack.c.l.b16 %v3951
      %v4048 = vunpack.c.l.b16 %v3952
      %v4049 = vunpack.c.l.b16 %v3953
      %v4050 = vunpack.c.l.b16 %v3954
      %v4051 = vunpack.c.l.b16 %v3955
      %v4052 = vunpack.c.l.b16 %v3956
      %v4053 = vunpack.c.l.b16 %v3957
      %v4054 = vunpack.c.l.b16 %v3958
      %v4055 = vunpack.c.l.b16 %v3959
      %v4056 = vunpack.c.l.b16 %v3960
      %v4057 = vunpack.c.l.b16 %v3961
      %v4058 = vunpack.c.l.b16 %v3962
      %v4059 = vunpack.c.l.b16 %v3963
      %v4060 = vunpack.c.l.b16 %v3964
      %v4061 = vunpack.c.l.b16 %v3965
      %v4062 = vunpack.c.l.b16 %v3966
      %v4063 = vunpack.c.l.b16 %v3967
      %v4064 = vunpack.c.l.b16 %v3968
      %v4065 = vunpack.c.l.b16 %v3969
      %v4066 = vunpack.c.l.b16 %v3970
      %v4067 = vunpack.c.l.b16 %v3971
      %v4068 = vpack.c.b16 %v4021, %v4020
      %v4069 = vpack.c.b16 %v4022, %v4022
      %v4070 = vpack.c.b16 %v4024, %v4023
      %v4071 = vpack.c.b16 %v4025, %v4025
      %v4072 = vpack.c.b16 %v4027, %v4026
      %v4073 = vpack.c.b16 %v4028, %v4028
      %v4074 = vpack.c.b16 %v4030, %v4029
      %v4075 = vpack.c.b16 %v4031, %v4031
      %v4076 = vpack.c.b16 %v4033, %v4032
      %v4077 = vpack.c.b16 %v4034, %v4034
      %v4078 = vpack.c.b16 %v4036, %v4035
      %v4079 = vpack.c.b16 %v4037, %v4037
      %v4080 = vpack.c.b16 %v4039, %v4038
      %v4081 = vpack.c.b16 %v4040, %v4040
      %v4082 = vpack.c.b16 %v4042, %v4041
      %v4083 = vpack.c.b16 %v4043, %v4043
      %v4084 = vpack.c.b16 %v4045, %v4044
      %v4085 = vpack.c.b16 %v4046, %v4046
      %v4086 = vpack.c.b16 %v4048, %v4047
      %v4087 = vpack.c.b16 %v4049, %v4049
      %v4088 = vpack.c.b16 %v4051, %v4050
      %v4089 = vpack.c.b16 %v4052, %v4052
      %v4090 = vpack.c.b16 %v4054, %v4053
      %v4091 = vpack.c.b16 %v4055, %v4055
      %v4092 = vpack.c.b16 %v4057, %v4056
      %v4093 = vpack.c.b16 %v4058, %v4058
      %v4094 = vpack.c.b16 %v4060, %v4059
      %v4095 = vpack.c.b16 %v4061, %v4061
      %v4096 = vpack.c.b16 %v4063, %v4062
      %v4097 = vpack.c.b16 %v4064, %v4064
      %v4098 = vpack.c.b16 %v4066, %v4065
      %v4099 = vpack.c.b16 %v4067, %v4067
      %v4101 = vshrl.u32 %v4068, 16
      %v4103 = vshll.u32 %v4068, 16
      %v4105 = vrot.slane %v4103, 1
      %v4106 = vor.u32 %v4101, %v4105
      %v4108 = vshll.u32 %v4069, 16
      %v4110 = vrot.slane %v4108, 1
      %v4111 = vsel %vm1372, %v4106, %v4110
      %v4113 = vshrl.u32 %v4070, 16
      %v4115 = vshll.u32 %v4070, 16
      %v4117 = vrot.slane %v4115, 1
      %v4118 = vor.u32 %v4113, %v4117
      %v4120 = vshll.u32 %v4071, 16
      %v4122 = vrot.slane %v4120, 1
      %v4123 = vsel %vm1372, %v4118, %v4122
      %v4125 = vshrl.u32 %v4072, 16
      %v4127 = vshll.u32 %v4072, 16
      %v4129 = vrot.slane %v4127, 1
      %v4130 = vor.u32 %v4125, %v4129
      %v4132 = vshll.u32 %v4073, 16
      %v4134 = vrot.slane %v4132, 1
      %v4135 = vsel %vm1372, %v4130, %v4134
      %v4137 = vshrl.u32 %v4074, 16
      %v4139 = vshll.u32 %v4074, 16
      %v4141 = vrot.slane %v4139, 1
      %v4142 = vor.u32 %v4137, %v4141
      %v4144 = vshll.u32 %v4075, 16
      %v4146 = vrot.slane %v4144, 1
      %v4147 = vsel %vm1372, %v4142, %v4146
      %v4149 = vshrl.u32 %v4076, 16
      %v4151 = vshll.u32 %v4076, 16
      %v4153 = vrot.slane %v4151, 1
      %v4154 = vor.u32 %v4149, %v4153
      %v4156 = vshll.u32 %v4077, 16
      %v4158 = vrot.slane %v4156, 1
      %v4159 = vsel %vm1372, %v4154, %v4158
      %v4161 = vshrl.u32 %v4078, 16
      %v4163 = vshll.u32 %v4078, 16
      %v4165 = vrot.slane %v4163, 1
      %v4166 = vor.u32 %v4161, %v4165
      %v4168 = vshll.u32 %v4079, 16
      %v4170 = vrot.slane %v4168, 1
      %v4171 = vsel %vm1372, %v4166, %v4170
      %v4173 = vshrl.u32 %v4080, 16
      %v4175 = vshll.u32 %v4080, 16
      %v4177 = vrot.slane %v4175, 1
      %v4178 = vor.u32 %v4173, %v4177
      %v4180 = vshll.u32 %v4081, 16
      %v4182 = vrot.slane %v4180, 1
      %v4183 = vsel %vm1372, %v4178, %v4182
      %v4185 = vshrl.u32 %v4082, 16
      %v4187 = vshll.u32 %v4082, 16
      %v4189 = vrot.slane %v4187, 1
      %v4190 = vor.u32 %v4185, %v4189
      %v4192 = vshll.u32 %v4083, 16
      %v4194 = vrot.slane %v4192, 1
      %v4195 = vsel %vm1372, %v4190, %v4194
      %v4197 = vshrl.u32 %v4084, 16
      %v4199 = vshll.u32 %v4084, 16
      %v4201 = vrot.slane %v4199, 1
      %v4202 = vor.u32 %v4197, %v4201
      %v4204 = vshll.u32 %v4085, 16
      %v4206 = vrot.slane %v4204, 1
      %v4207 = vsel %vm1372, %v4202, %v4206
      %v4209 = vshrl.u32 %v4086, 16
      %v4211 = vshll.u32 %v4086, 16
      %v4213 = vrot.slane %v4211, 1
      %v4214 = vor.u32 %v4209, %v4213
      %v4216 = vshll.u32 %v4087, 16
      %v4218 = vrot.slane %v4216, 1
      %v4219 = vsel %vm1372, %v4214, %v4218
      %v4221 = vshrl.u32 %v4088, 16
      %v4223 = vshll.u32 %v4088, 16
      %v4225 = vrot.slane %v4223, 1
      %v4226 = vor.u32 %v4221, %v4225
      %v4228 = vshll.u32 %v4089, 16
      %v4230 = vrot.slane %v4228, 1
      %v4231 = vsel %vm1372, %v4226, %v4230
      %v4233 = vshrl.u32 %v4090, 16
      %v4235 = vshll.u32 %v4090, 16
      %v4237 = vrot.slane %v4235, 1
      %v4238 = vor.u32 %v4233, %v4237
      %v4240 = vshll.u32 %v4091, 16
      %v4242 = vrot.slane %v4240, 1
      %v4243 = vsel %vm1372, %v4238, %v4242
      %v4245 = vshrl.u32 %v4092, 16
      %v4247 = vshll.u32 %v4092, 16
      %v4249 = vrot.slane %v4247, 1
      %v4250 = vor.u32 %v4245, %v4249
      %v4252 = vshll.u32 %v4093, 16
      %v4254 = vrot.slane %v4252, 1
      %v4255 = vsel %vm1372, %v4250, %v4254
      %v4257 = vshrl.u32 %v4094, 16
      %v4259 = vshll.u32 %v4094, 16
      %v4261 = vrot.slane %v4259, 1
      %v4262 = vor.u32 %v4257, %v4261
      %v4264 = vshll.u32 %v4095, 16
      %v4266 = vrot.slane %v4264, 1
      %v4267 = vsel %vm1372, %v4262, %v4266
      %v4269 = vshrl.u32 %v4096, 16
      %v4271 = vshll.u32 %v4096, 16
      %v4273 = vrot.slane %v4271, 1
      %v4274 = vor.u32 %v4269, %v4273
      %v4276 = vshll.u32 %v4097, 16
      %v4278 = vrot.slane %v4276, 1
      %v4279 = vsel %vm1372, %v4274, %v4278
      %v4281 = vshrl.u32 %v4098, 16
      %v4283 = vshll.u32 %v4098, 16
      %v4285 = vrot.slane %v4283, 1
      %v4286 = vor.u32 %v4281, %v4285
      %v4288 = vshll.u32 %v4099, 16
      %v4290 = vrot.slane %v4288, 1
      %v4291 = vsel %vm1372, %v4286, %v4290
      %4308 = vst [vmem:[#allocation3 + $0x8] sm:$0xff] %v4111
      %4309 = vst [vmem:[#allocation3 + $0x20] sm:$0xff] %v4123
      %4310 = vst [vmem:[#allocation3 + $0x38] sm:$0xff] %v4135
      %4311 = vst [vmem:[#allocation3 + $0x50] sm:$0xff] %v4147
      %4312 = vst [vmem:[#allocation3 + $0x68] sm:$0xff] %v4159
      %4313 = vst [vmem:[#allocation3 + $0x80] sm:$0xff] %v4171
      %4314 = vst [vmem:[#allocation3 + $0x98] sm:$0xff] %v4183
      %4315 = vst [vmem:[#allocation3 + $0xb0] sm:$0xff] %v4195
      %4316 = vst [vmem:[#allocation3 + $0xc8] sm:$0xff] %v4207
      %4317 = vst [vmem:[#allocation3 + $0xe0] sm:$0xff] %v4219
      %4318 = vst [vmem:[#allocation3 + $0xf8] sm:$0xff] %v4231
      %4319 = vst [vmem:[#allocation3 + $0x110] sm:$0xff] %v4243
      %4320 = vst [vmem:[#allocation3 + $0x128] sm:$0xff] %v4255
      %4321 = vst [vmem:[#allocation3 + $0x140] sm:$0xff] %v4267
      %4322 = vst [vmem:[#allocation3 + $0x158] sm:$0xff] %v4279
      %4323 = vst [vmem:[#allocation3 + $0x170] sm:$0xff] %v4291
      %v4324 = vld [vmem:[%s3779] sm:$0xe]
      %v4325 = vld [vmem:[%s3779 + $0x4] sm:$0xf]
      %v4326 = vld [vmem:[%s3779 + $0x8] sm:$0x1]
      %v4327 = vld [vmem:[%s3779 + $0xc] sm:$0xe]
      %v4328 = vld [vmem:[%s3779 + $0x10] sm:$0xf]
      %v4329 = vld [vmem:[%s3779 + $0x14] sm:$0x1]
      %v4330 = vld [vmem:[%s3779 + $0x18] sm:$0xe]
      %v4331 = vld [vmem:[%s3779 + $0x1c] sm:$0xf]
      %v4332 = vld [vmem:[%s3779 + $0x20] sm:$0x1]
      %v4333 = vld [vmem:[%s3779 + $0x24] sm:$0xe]
      %v4334 = vld [vmem:[%s3779 + $0x28] sm:$0xf]
      %v4335 = vld [vmem:[%s3779 + $0x2c] sm:$0x1]
      %v4336 = vld [vmem:[%s3779 + $0x30] sm:$0xe]
      %v4337 = vld [vmem:[%s3779 + $0x34] sm:$0xf]
      %v4338 = vld [vmem:[%s3779 + $0x38] sm:$0x1]
      %v4339 = vld [vmem:[%s3779 + $0x3c] sm:$0xe]
      %v4340 = vld [vmem:[%s3779 + $0x40] sm:$0xf]
      %v4341 = vld [vmem:[%s3779 + $0x44] sm:$0x1]
      %v4342 = vld [vmem:[%s3779 + $0x48] sm:$0xe]
      %v4343 = vld [vmem:[%s3779 + $0x4c] sm:$0xf]
      %v4344 = vld [vmem:[%s3779 + $0x50] sm:$0x1]
      %v4345 = vld [vmem:[%s3779 + $0x54] sm:$0xe]
      %v4346 = vld [vmem:[%s3779 + $0x58] sm:$0xf]
      %v4347 = vld [vmem:[%s3779 + $0x5c] sm:$0x1]
      %v4348 = vld [vmem:[%s3779 + $0x60] sm:$0xe]
      %v4349 = vld [vmem:[%s3779 + $0x64] sm:$0xf]
      %v4350 = vld [vmem:[%s3779 + $0x68] sm:$0x1]
      %v4351 = vld [vmem:[%s3779 + $0x6c] sm:$0xe]
      %v4352 = vld [vmem:[%s3779 + $0x70] sm:$0xf]
      %v4353 = vld [vmem:[%s3779 + $0x74] sm:$0x1]
      %v4354 = vld [vmem:[%s3779 + $0x78] sm:$0xe]
      %v4355 = vld [vmem:[%s3779 + $0x7c] sm:$0xf]
      %v4356 = vld [vmem:[%s3779 + $0x80] sm:$0x1]
      %v4357 = vld [vmem:[%s3779 + $0x84] sm:$0xe]
      %v4358 = vld [vmem:[%s3779 + $0x88] sm:$0xf]
      %v4359 = vld [vmem:[%s3779 + $0x8c] sm:$0x1]
      %v4360 = vld [vmem:[%s3779 + $0x90] sm:$0xe]
      %v4361 = vld [vmem:[%s3779 + $0x94] sm:$0xf]
      %v4362 = vld [vmem:[%s3779 + $0x98] sm:$0x1]
      %v4363 = vld [vmem:[%s3779 + $0x9c] sm:$0xe]
      %v4364 = vld [vmem:[%s3779 + $0xa0] sm:$0xf]
      %v4365 = vld [vmem:[%s3779 + $0xa4] sm:$0x1]
      %v4366 = vld [vmem:[%s3779 + $0xa8] sm:$0xe]
      %v4367 = vld [vmem:[%s3779 + $0xac] sm:$0xf]
      %v4368 = vld [vmem:[%s3779 + $0xb0] sm:$0x1]
      %v4369 = vld [vmem:[%s3779 + $0xb4] sm:$0xe]
      %v4370 = vld [vmem:[%s3779 + $0xb8] sm:$0xf]
      %v4371 = vld [vmem:[%s3779 + $0xbc] sm:$0x1]
      %v4420 = vunpack.c.l.b16 %v4324
      %v4421 = vunpack.c.l.b16 %v4325
      %v4422 = vunpack.c.l.b16 %v4326
      %v4423 = vunpack.c.l.b16 %v4327
      %v4424 = vunpack.c.l.b16 %v4328
      %v4425 = vunpack.c.l.b16 %v4329
      %v4426 = vunpack.c.l.b16 %v4330
      %v4427 = vunpack.c.l.b16 %v4331
      %v4428 = vunpack.c.l.b16 %v4332
      %v4429 = vunpack.c.l.b16 %v4333
      %v4430 = vunpack.c.l.b16 %v4334
      %v4431 = vunpack.c.l.b16 %v4335
      %v4432 = vunpack.c.l.b16 %v4336
      %v4433 = vunpack.c.l.b16 %v4337
      %v4434 = vunpack.c.l.b16 %v4338
      %v4435 = vunpack.c.l.b16 %v4339
      %v4436 = vunpack.c.l.b16 %v4340
      %v4437 = vunpack.c.l.b16 %v4341
      %v4438 = vunpack.c.l.b16 %v4342
      %v4439 = vunpack.c.l.b16 %v4343
      %v4440 = vunpack.c.l.b16 %v4344
      %v4441 = vunpack.c.l.b16 %v4345
      %v4442 = vunpack.c.l.b16 %v4346
      %v4443 = vunpack.c.l.b16 %v4347
      %v4444 = vunpack.c.l.b16 %v4348
      %v4445 = vunpack.c.l.b16 %v4349
      %v4446 = vunpack.c.l.b16 %v4350
      %v4447 = vunpack.c.l.b16 %v4351
      %v4448 = vunpack.c.l.b16 %v4352
      %v4449 = vunpack.c.l.b16 %v4353
      %v4450 = vunpack.c.l.b16 %v4354
      %v4451 = vunpack.c.l.b16 %v4355
      %v4452 = vunpack.c.l.b16 %v4356
      %v4453 = vunpack.c.l.b16 %v4357
      %v4454 = vunpack.c.l.b16 %v4358
      %v4455 = vunpack.c.l.b16 %v4359
      %v4456 = vunpack.c.l.b16 %v4360
      %v4457 = vunpack.c.l.b16 %v4361
      %v4458 = vunpack.c.l.b16 %v4362
      %v4459 = vunpack.c.l.b16 %v4363
      %v4460 = vunpack.c.l.b16 %v4364
      %v4461 = vunpack.c.l.b16 %v4365
      %v4462 = vunpack.c.l.b16 %v4366
      %v4463 = vunpack.c.l.b16 %v4367
      %v4464 = vunpack.c.l.b16 %v4368
      %v4465 = vunpack.c.l.b16 %v4369
      %v4466 = vunpack.c.l.b16 %v4370
      %v4467 = vunpack.c.l.b16 %v4371
      %v4468 = vpack.c.b16 %v4421, %v4420
      %v4469 = vpack.c.b16 %v4422, %v4422
      %v4470 = vpack.c.b16 %v4424, %v4423
      %v4471 = vpack.c.b16 %v4425, %v4425
      %v4472 = vpack.c.b16 %v4427, %v4426
      %v4473 = vpack.c.b16 %v4428, %v4428
      %v4474 = vpack.c.b16 %v4430, %v4429
      %v4475 = vpack.c.b16 %v4431, %v4431
      %v4476 = vpack.c.b16 %v4433, %v4432
      %v4477 = vpack.c.b16 %v4434, %v4434
      %v4478 = vpack.c.b16 %v4436, %v4435
      %v4479 = vpack.c.b16 %v4437, %v4437
      %v4480 = vpack.c.b16 %v4439, %v4438
      %v4481 = vpack.c.b16 %v4440, %v4440
      %v4482 = vpack.c.b16 %v4442, %v4441
      %v4483 = vpack.c.b16 %v4443, %v4443
      %v4484 = vpack.c.b16 %v4445, %v4444
      %v4485 = vpack.c.b16 %v4446, %v4446
      %v4486 = vpack.c.b16 %v4448, %v4447
      %v4487 = vpack.c.b16 %v4449, %v4449
      %v4488 = vpack.c.b16 %v4451, %v4450
      %v4489 = vpack.c.b16 %v4452, %v4452
      %v4490 = vpack.c.b16 %v4454, %v4453
      %v4491 = vpack.c.b16 %v4455, %v4455
      %v4492 = vpack.c.b16 %v4457, %v4456
      %v4493 = vpack.c.b16 %v4458, %v4458
      %v4494 = vpack.c.b16 %v4460, %v4459
      %v4495 = vpack.c.b16 %v4461, %v4461
      %v4496 = vpack.c.b16 %v4463, %v4462
      %v4497 = vpack.c.b16 %v4464, %v4464
      %v4498 = vpack.c.b16 %v4466, %v4465
      %v4499 = vpack.c.b16 %v4467, %v4467
      %v4500 = vrot.slane %v4468, 1
      %v4501 = vrot.slane %v4469, 1
      %v4502 = vsel %vm1773, %v4500, %v4501
      %v4503 = vrot.slane %v4470, 1
      %v4504 = vrot.slane %v4471, 1
      %v4505 = vsel %vm1773, %v4503, %v4504
      %v4506 = vrot.slane %v4472, 1
      %v4507 = vrot.slane %v4473, 1
      %v4508 = vsel %vm1773, %v4506, %v4507
      %v4509 = vrot.slane %v4474, 1
      %v4510 = vrot.slane %v4475, 1
      %v4511 = vsel %vm1773, %v4509, %v4510
      %v4512 = vrot.slane %v4476, 1
      %v4513 = vrot.slane %v4477, 1
      %v4514 = vsel %vm1773, %v4512, %v4513
      %v4515 = vrot.slane %v4478, 1
      %v4516 = vrot.slane %v4479, 1
      %v4517 = vsel %vm1773, %v4515, %v4516
      %v4518 = vrot.slane %v4480, 1
      %v4519 = vrot.slane %v4481, 1
      %v4520 = vsel %vm1773, %v4518, %v4519
      %v4521 = vrot.slane %v4482, 1
      %v4522 = vrot.slane %v4483, 1
      %v4523 = vsel %vm1773, %v4521, %v4522
      %v4524 = vrot.slane %v4484, 1
      %v4525 = vrot.slane %v4485, 1
      %v4526 = vsel %vm1773, %v4524, %v4525
      %v4527 = vrot.slane %v4486, 1
      %v4528 = vrot.slane %v4487, 1
      %v4529 = vsel %vm1773, %v4527, %v4528
      %v4530 = vrot.slane %v4488, 1
      %v4531 = vrot.slane %v4489, 1
      %v4532 = vsel %vm1773, %v4530, %v4531
      %v4533 = vrot.slane %v4490, 1
      %v4534 = vrot.slane %v4491, 1
      %v4535 = vsel %vm1773, %v4533, %v4534
      %v4536 = vrot.slane %v4492, 1
      %v4537 = vrot.slane %v4493, 1
      %v4538 = vsel %vm1773, %v4536, %v4537
      %v4539 = vrot.slane %v4494, 1
      %v4540 = vrot.slane %v4495, 1
      %v4541 = vsel %vm1773, %v4539, %v4540
      %v4542 = vrot.slane %v4496, 1
      %v4543 = vrot.slane %v4497, 1
      %v4544 = vsel %vm1773, %v4542, %v4543
      %v4545 = vrot.slane %v4498, 1
      %v4546 = vrot.slane %v4499, 1
      %v4547 = vsel %vm1773, %v4545, %v4546
      %4564 = vst [vmem:[#allocation3 + $0x10] sm:$0xff] %v4502
      %4565 = vst [vmem:[#allocation3 + $0x28] sm:$0xff] %v4505
      %4566 = vst [vmem:[#allocation3 + $0x40] sm:$0xff] %v4508
      %4567 = vst [vmem:[#allocation3 + $0x58] sm:$0xff] %v4511
      %4568 = vst [vmem:[#allocation3 + $0x70] sm:$0xff] %v4514
      %4569 = vst [vmem:[#allocation3 + $0x88] sm:$0xff] %v4517
      %4570 = vst [vmem:[#allocation3 + $0xa0] sm:$0xff] %v4520
      %4571 = vst [vmem:[#allocation3 + $0xb8] sm:$0xff] %v4523
      %4572 = vst [vmem:[#allocation3 + $0xd0] sm:$0xff] %v4526
      %4573 = vst [vmem:[#allocation3 + $0xe8] sm:$0xff] %v4529
      %4574 = vst [vmem:[#allocation3 + $0x100] sm:$0xff] %v4532
      %4575 = vst [vmem:[#allocation3 + $0x118] sm:$0xff] %v4535
      %4576 = vst [vmem:[#allocation3 + $0x130] sm:$0xff] %v4538
      %4577 = vst [vmem:[#allocation3 + $0x148] sm:$0xff] %v4541
      %4578 = vst [vmem:[#allocation3 + $0x160] sm:$0xff] %v4544
      %4579 = vst [vmem:[#allocation3 + $0x178] sm:$0xff] %v4547
      %v4580 = vld [vmem:[#allocation3] sm:$0xff]
      %v4581 = vld [vmem:[#allocation3 + $0x8] sm:$0xff]
      %v4582 = vld [vmem:[#allocation3 + $0x10] sm:$0xff]
      %v4583 = vld [vmem:[#allocation3 + $0x18] sm:$0xff]
      %v4584 = vld [vmem:[#allocation3 + $0x20] sm:$0xff]
      %v4585 = vld [vmem:[#allocation3 + $0x28] sm:$0xff]
      %v4586 = vld [vmem:[#allocation3 + $0x30] sm:$0xff]
      %v4587 = vld [vmem:[#allocation3 + $0x38] sm:$0xff]
      %v4588 = vld [vmem:[#allocation3 + $0x40] sm:$0xff]
      %v4589 = vld [vmem:[#allocation3 + $0x48] sm:$0xff]
      %v4590 = vld [vmem:[#allocation3 + $0x50] sm:$0xff]
      %v4591 = vld [vmem:[#allocation3 + $0x58] sm:$0xff]
      %v4592 = vld [vmem:[#allocation3 + $0x60] sm:$0xff]
      %v4593 = vld [vmem:[#allocation3 + $0x68] sm:$0xff]
      %v4594 = vld [vmem:[#allocation3 + $0x70] sm:$0xff]
      %v4595 = vld [vmem:[#allocation3 + $0x78] sm:$0xff]
      %v4596 = vld [vmem:[#allocation3 + $0x80] sm:$0xff]
      %v4597 = vld [vmem:[#allocation3 + $0x88] sm:$0xff]
      %v4598 = vld [vmem:[#allocation3 + $0x90] sm:$0xff]
      %v4599 = vld [vmem:[#allocation3 + $0x98] sm:$0xff]
      %v4600 = vld [vmem:[#allocation3 + $0xa0] sm:$0xff]
      %v4601 = vld [vmem:[#allocation3 + $0xa8] sm:$0xff]
      %v4602 = vld [vmem:[#allocation3 + $0xb0] sm:$0xff]
      %v4603 = vld [vmem:[#allocation3 + $0xb8] sm:$0xff]
      %v4604 = vld [vmem:[#allocation3 + $0xc0] sm:$0xff]
      %v4605 = vld [vmem:[#allocation3 + $0xc8] sm:$0xff]
      %v4606 = vld [vmem:[#allocation3 + $0xd0] sm:$0xff]
      %v4607 = vld [vmem:[#allocation3 + $0xd8] sm:$0xff]
      %v4608 = vld [vmem:[#allocation3 + $0xe0] sm:$0xff]
      %v4609 = vld [vmem:[#allocation3 + $0xe8] sm:$0xff]
      %v4610 = vld [vmem:[#allocation3 + $0xf0] sm:$0xff]
      %v4611 = vld [vmem:[#allocation3 + $0xf8] sm:$0xff]
      %v4612 = vld [vmem:[#allocation3 + $0x100] sm:$0xff]
      %v4613 = vld [vmem:[#allocation3 + $0x108] sm:$0xff]
      %v4614 = vld [vmem:[#allocation3 + $0x110] sm:$0xff]
      %v4615 = vld [vmem:[#allocation3 + $0x118] sm:$0xff]
      %v4616 = vld [vmem:[#allocation3 + $0x120] sm:$0xff]
      %v4617 = vld [vmem:[#allocation3 + $0x128] sm:$0xff]
      %v4618 = vld [vmem:[#allocation3 + $0x130] sm:$0xff]
      %v4619 = vld [vmem:[#allocation3 + $0x138] sm:$0xff]
      %v4620 = vld [vmem:[#allocation3 + $0x140] sm:$0xff]
      %v4621 = vld [vmem:[#allocation3 + $0x148] sm:$0xff]
      %v4622 = vld [vmem:[#allocation3 + $0x150] sm:$0xff]
      %v4623 = vld [vmem:[#allocation3 + $0x158] sm:$0xff]
      %v4624 = vld [vmem:[#allocation3 + $0x160] sm:$0xff]
      %v4625 = vld [vmem:[#allocation3 + $0x168] sm:$0xff]
      %v4626 = vld [vmem:[#allocation3 + $0x170] sm:$0xff]
      %v4627 = vld [vmem:[#allocation3 + $0x178] sm:$0xff]
      %s4628 = scalar_lea.vmem %s3, 384
      %v4629 = vld [vmem:[%s4628] sm:$0xf]
      %v4630 = vld [vmem:[%s4628 + $0x4] sm:$0xf]
      %v4631 = vld [vmem:[%s4628 + $0x8] sm:$0xf]
      %v4632 = vld [vmem:[%s4628 + $0xc] sm:$0xf]
      %v4633 = vld [vmem:[%s4628 + $0x10] sm:$0xf]
      %v4634 = vld [vmem:[%s4628 + $0x14] sm:$0xf]
      %v4635 = vld [vmem:[%s4628 + $0x18] sm:$0xf]
      %v4636 = vld [vmem:[%s4628 + $0x1c] sm:$0xf]
      %v4637 = vld [vmem:[%s4628 + $0x20] sm:$0xf]
      %v4638 = vld [vmem:[%s4628 + $0x24] sm:$0xf]
      %v4639 = vld [vmem:[%s4628 + $0x28] sm:$0xf]
      %v4640 = vld [vmem:[%s4628 + $0x2c] sm:$0xf]
      %v4641 = vld [vmem:[%s4628 + $0x30] sm:$0xf]
      %v4642 = vld [vmem:[%s4628 + $0x34] sm:$0xf]
      %v4643 = vld [vmem:[%s4628 + $0x38] sm:$0xf]
      %v4644 = vld [vmem:[%s4628 + $0x3c] sm:$0xf]
      %v4645 = vld [vmem:[%s4628 + $0x40] sm:$0xf]
      %v4646 = vld [vmem:[%s4628 + $0x44] sm:$0xf]
      %v4647 = vld [vmem:[%s4628 + $0x48] sm:$0xf]
      %v4648 = vld [vmem:[%s4628 + $0x4c] sm:$0xf]
      %v4649 = vld [vmem:[%s4628 + $0x50] sm:$0xf]
      %v4650 = vld [vmem:[%s4628 + $0x54] sm:$0xf]
      %v4651 = vld [vmem:[%s4628 + $0x58] sm:$0xf]
      %v4652 = vld [vmem:[%s4628 + $0x5c] sm:$0xf]
      %v4653 = vld [vmem:[%s4628 + $0x60] sm:$0xf]
      %v4654 = vld [vmem:[%s4628 + $0x64] sm:$0xf]
      %v4655 = vld [vmem:[%s4628 + $0x68] sm:$0xf]
      %v4656 = vld [vmem:[%s4628 + $0x6c] sm:$0xf]
      %v4657 = vld [vmem:[%s4628 + $0x70] sm:$0xf]
      %v4658 = vld [vmem:[%s4628 + $0x74] sm:$0xf]
      %v4659 = vld [vmem:[%s4628 + $0x78] sm:$0xf]
      %v4660 = vld [vmem:[%s4628 + $0x7c] sm:$0xf]
      %v4661 = vld [vmem:[%s4628 + $0x80] sm:$0xf]
      %v4662 = vld [vmem:[%s4628 + $0x84] sm:$0xf]
      %v4663 = vld [vmem:[%s4628 + $0x88] sm:$0xf]
      %v4664 = vld [vmem:[%s4628 + $0x8c] sm:$0xf]
      %v4665 = vld [vmem:[%s4628 + $0x90] sm:$0xf]
      %v4666 = vld [vmem:[%s4628 + $0x94] sm:$0xf]
      %v4667 = vld [vmem:[%s4628 + $0x98] sm:$0xf]
      %v4668 = vld [vmem:[%s4628 + $0x9c] sm:$0xf]
      %v4669 = vld [vmem:[%s4628 + $0xa0] sm:$0xf]
      %v4670 = vld [vmem:[%s4628 + $0xa4] sm:$0xf]
      %v4671 = vld [vmem:[%s4628 + $0xa8] sm:$0xf]
      %v4672 = vld [vmem:[%s4628 + $0xac] sm:$0xf]
      %v4673 = vld [vmem:[%s4628 + $0xb0] sm:$0xf]
      %v4674 = vld [vmem:[%s4628 + $0xb4] sm:$0xf]
      %v4675 = vld [vmem:[%s4628 + $0xb8] sm:$0xf]
      %v4676 = vld [vmem:[%s4628 + $0xbc] sm:$0xf]
      %v4725 = vunpack.c.l.b16 %v4629
      %v4726 = vunpack.c.l.b16 %v4630
      %v4727 = vunpack.c.l.b16 %v4631
      %v4728 = vunpack.c.l.b16 %v4632
      %v4729 = vunpack.c.l.b16 %v4633
      %v4730 = vunpack.c.l.b16 %v4634
      %v4731 = vunpack.c.l.b16 %v4635
      %v4732 = vunpack.c.l.b16 %v4636
      %v4733 = vunpack.c.l.b16 %v4637
      %v4734 = vunpack.c.l.b16 %v4638
      %v4735 = vunpack.c.l.b16 %v4639
      %v4736 = vunpack.c.l.b16 %v4640
      %v4737 = vunpack.c.l.b16 %v4641
      %v4738 = vunpack.c.l.b16 %v4642
      %v4739 = vunpack.c.l.b16 %v4643
      %v4740 = vunpack.c.l.b16 %v4644
      %v4741 = vunpack.c.l.b16 %v4645
      %v4742 = vunpack.c.l.b16 %v4646
      %v4743 = vunpack.c.l.b16 %v4647
      %v4744 = vunpack.c.l.b16 %v4648
      %v4745 = vunpack.c.l.b16 %v4649
      %v4746 = vunpack.c.l.b16 %v4650
      %v4747 = vunpack.c.l.b16 %v4651
      %v4748 = vunpack.c.l.b16 %v4652
      %v4749 = vunpack.c.l.b16 %v4653
      %v4750 = vunpack.c.l.b16 %v4654
      %v4751 = vunpack.c.l.b16 %v4655
      %v4752 = vunpack.c.l.b16 %v4656
      %v4753 = vunpack.c.l.b16 %v4657
      %v4754 = vunpack.c.l.b16 %v4658
      %v4755 = vunpack.c.l.b16 %v4659
      %v4756 = vunpack.c.l.b16 %v4660
      %v4757 = vunpack.c.l.b16 %v4661
      %v4758 = vunpack.c.l.b16 %v4662
      %v4759 = vunpack.c.l.b16 %v4663
      %v4760 = vunpack.c.l.b16 %v4664
      %v4761 = vunpack.c.l.b16 %v4665
      %v4762 = vunpack.c.l.b16 %v4666
      %v4763 = vunpack.c.l.b16 %v4667
      %v4764 = vunpack.c.l.b16 %v4668
      %v4765 = vunpack.c.l.b16 %v4669
      %v4766 = vunpack.c.l.b16 %v4670
      %v4767 = vunpack.c.l.b16 %v4671
      %v4768 = vunpack.c.l.b16 %v4672
      %v4769 = vunpack.c.l.b16 %v4673
      %v4770 = vunpack.c.l.b16 %v4674
      %v4771 = vunpack.c.l.b16 %v4675
      %v4772 = vunpack.c.l.b16 %v4676
      %v4773 = vpack.c.b16 %v4726, %v4725
      %v4774 = vpack.c.b16 %v4728, %v4727
      %v4775 = vpack.c.b16 %v4730, %v4729
      %v4776 = vpack.c.b16 %v4732, %v4731
      %v4777 = vpack.c.b16 %v4734, %v4733
      %v4778 = vpack.c.b16 %v4736, %v4735
      %v4779 = vpack.c.b16 %v4738, %v4737
      %v4780 = vpack.c.b16 %v4740, %v4739
      %v4781 = vpack.c.b16 %v4742, %v4741
      %v4782 = vpack.c.b16 %v4744, %v4743
      %v4783 = vpack.c.b16 %v4746, %v4745
      %v4784 = vpack.c.b16 %v4748, %v4747
      %v4785 = vpack.c.b16 %v4750, %v4749
      %v4786 = vpack.c.b16 %v4752, %v4751
      %v4787 = vpack.c.b16 %v4754, %v4753
      %v4788 = vpack.c.b16 %v4756, %v4755
      %v4789 = vpack.c.b16 %v4758, %v4757
      %v4790 = vpack.c.b16 %v4760, %v4759
      %v4791 = vpack.c.b16 %v4762, %v4761
      %v4792 = vpack.c.b16 %v4764, %v4763
      %v4793 = vpack.c.b16 %v4766, %v4765
      %v4794 = vpack.c.b16 %v4768, %v4767
      %v4795 = vpack.c.b16 %v4770, %v4769
      %v4796 = vpack.c.b16 %v4772, %v4771
      %4821 = vmatprep.subr.bf16.mxu0 0
      %4822 = vmatpush1.bf16.msra.mxu0 %v4773
      %4823 = vmatprep.subr.bf16.mxu0 0
      %4824 = vmatpush1.bf16.msra.mxu0 %v4774
      %4825 = vmatprep.subr.bf16.mxu0 0
      %4826 = vmatpush1.bf16.msra.mxu0 %v4775
      %4827 = vmatprep.subr.bf16.mxu0 0
      %4828 = vmatpush1.bf16.msra.mxu0 %v4776
      %4829 = vmatprep.subr.bf16.mxu0 0
      %4830 = vmatpush1.bf16.msra.mxu0 %v4777
      %4831 = vmatprep.subr.bf16.mxu0 0
      %4832 = vmatpush1.bf16.msra.mxu0 %v4778
      %4833 = vmatprep.subr.bf16.mxu0 0
      %4834 = vmatpush1.bf16.msra.mxu0 %v4779
      %4835 = vmatprep.subr.bf16.mxu0 0
      %4836 = vmatpush1.bf16.msra.mxu0 %v4780
      %4837 = vmatprep.subr.bf16.mxu0 0
      %4838 = vmatpush1.bf16.msra.mxu0 %v4781
      %4839 = vmatprep.subr.bf16.mxu0 0
      %4840 = vmatpush1.bf16.msra.mxu0 %v4782
      %4841 = vmatprep.subr.bf16.mxu0 0
      %4842 = vmatpush1.bf16.msra.mxu0 %v4783
      %4843 = vmatprep.subr.bf16.mxu0 0
      %4844 = vmatpush1.bf16.msra.mxu0 %v4784
      %4845 = vmatprep.subr.bf16.mxu0 0
      %4846 = vmatpush1.bf16.msra.mxu0 %v4785
      %4847 = vmatprep.subr.bf16.mxu0 0
      %4848 = vmatpush1.bf16.msra.mxu0 %v4786
      %4849 = vmatprep.subr.bf16.mxu0 0
      %4850 = vmatpush1.bf16.msra.mxu0 %v4787
      %4851 = vmatprep.subr.bf16.mxu0 0
      %4852 = vmatpush1.bf16.msra.mxu0 %v4788
      %4853 = vmatprep.mubr.bf16.mxu0 %v4581
      %4854 = vmatmul.mubr.bf16.gmra.mrb[0].mxu0 %v4580
      %v4855 = vpop.f32.mrb[0].mxu0
      %v4856 = vadd.f32 0.0, %v4855
      %v4857 = vpop.f32.mrb[0].mxu0
      %v4858 = vpop.f32.mrb[0].mxu0
      %v4859 = vadd.f32 0.0, %v4858
      %v4860 = vpop.f32.mrb[0].mxu0
      %4861 = vmatprep.mubr.bf16.mxu0 %v4584
      %4862 = vmatmul.mubr.bf16.gmra.mrb[0].mxu0 %v4583
      %v4863 = vpop.f32.mrb[0].mxu0
      %v4864 = vadd.f32 0.0, %v4863
      %v4865 = vpop.f32.mrb[0].mxu0
      %v4866 = vpop.f32.mrb[0].mxu0
      %v4867 = vadd.f32 0.0, %v4866
      %v4868 = vpop.f32.mrb[0].mxu0
      %4869 = vmatprep.mubr.bf16.mxu0 %v4587
      %4870 = vmatmul.mubr.bf16.gmra.mrb[0].mxu0 %v4586
      %v4871 = vpop.f32.mrb[0].mxu0
      %v4872 = vadd.f32 0.0, %v4871
      %v4873 = vpop.f32.mrb[0].mxu0
      %v4874 = vpop.f32.mrb[0].mxu0
      %v4875 = vadd.f32 0.0, %v4874
      %v4876 = vpop.f32.mrb[0].mxu0
      %4877 = vmatprep.mubr.bf16.mxu0 %v4590
      %4878 = vmatmul.mubr.bf16.gmra.mrb[0].mxu0 %v4589
      %v4879 = vpop.f32.mrb[0].mxu0
      %v4880 = vadd.f32 0.0, %v4879
      %v4881 = vpop.f32.mrb[0].mxu0
      %v4882 = vpop.f32.mrb[0].mxu0
      %v4883 = vadd.f32 0.0, %v4882
      %v4884 = vpop.f32.mrb[0].mxu0
      %4885 = vmatprep.mubr.bf16.mxu0 %v4593
      %4886 = vmatmul.mubr.bf16.gmra.mrb[0].mxu0 %v4592
      %v4887 = vpop.f32.mrb[0].mxu0
      %v4888 = vadd.f32 0.0, %v4887
      %v4889 = vpop.f32.mrb[0].mxu0
      %v4890 = vpop.f32.mrb[0].mxu0
      %v4891 = vadd.f32 0.0, %v4890
      %v4892 = vpop.f32.mrb[0].mxu0
      %4893 = vmatprep.mubr.bf16.mxu0 %v4596
      %4894 = vmatmul.mubr.bf16.gmra.mrb[0].mxu0 %v4595
      %v4895 = vpop.f32.mrb[0].mxu0
      %v4896 = vadd.f32 0.0, %v4895
      %v4897 = vpop.f32.mrb[0].mxu0
      %v4898 = vpop.f32.mrb[0].mxu0
      %v4899 = vadd.f32 0.0, %v4898
      %v4900 = vpop.f32.mrb[0].mxu0
      %4901 = vmatprep.mubr.bf16.mxu0 %v4599
      %4902 = vmatmul.mubr.bf16.gmra.mrb[0].mxu0 %v4598
      %v4903 = vpop.f32.mrb[0].mxu0
      %v4904 = vadd.f32 0.0, %v4903
      %v4905 = vpop.f32.mrb[0].mxu0
      %v4906 = vpop.f32.mrb[0].mxu0
      %v4907 = vadd.f32 0.0, %v4906
      %v4908 = vpop.f32.mrb[0].mxu0
      %4909 = vmatprep.mubr.bf16.mxu0 %v4602
      %4910 = vmatmul.mubr.bf16.gmra.mrb[0].mxu0 %v4601
      %v4911 = vpop.f32.mrb[0].mxu0
      %v4912 = vadd.f32 0.0, %v4911
      %v4913 = vpop.f32.mrb[0].mxu0
      %v4914 = vpop.f32.mrb[0].mxu0
      %v4915 = vadd.f32 0.0, %v4914
      %v4916 = vpop.f32.mrb[0].mxu0
      %4917 = vmatprep.mubr.bf16.mxu0 %v4605
      %4918 = vmatmul.mubr.bf16.gmra.mrb[0].mxu0 %v4604
      %v4919 = vpop.f32.mrb[0].mxu0
      %v4920 = vadd.f32 0.0, %v4919
      %v4921 = vpop.f32.mrb[0].mxu0
      %v4922 = vpop.f32.mrb[0].mxu0
      %v4923 = vadd.f32 0.0, %v4922
      %v4924 = vpop.f32.mrb[0].mxu0
      %4925 = vmatprep.mubr.bf16.mxu0 %v4608
      %4926 = vmatmul.mubr.bf16.gmra.mrb[0].mxu0 %v4607
      %v4927 = vpop.f32.mrb[0].mxu0
      %v4928 = vadd.f32 0.0, %v4927
      %v4929 = vpop.f32.mrb[0].mxu0
      %v4930 = vpop.f32.mrb[0].mxu0
      %v4931 = vadd.f32 0.0, %v4930
      %v4932 = vpop.f32.mrb[0].mxu0
      %4933 = vmatprep.mubr.bf16.mxu0 %v4611
      %4934 = vmatmul.mubr.bf16.gmra.mrb[0].mxu0 %v4610
      %v4935 = vpop.f32.mrb[0].mxu0
      %v4936 = vadd.f32 0.0, %v4935
      %v4937 = vpop.f32.mrb[0].mxu0
      %v4938 = vpop.f32.mrb[0].mxu0
      %v4939 = vadd.f32 0.0, %v4938
      %v4940 = vpop.f32.mrb[0].mxu0
      %4941 = vmatprep.mubr.bf16.mxu0 %v4614
      %4942 = vmatmul.mubr.bf16.gmra.mrb[0].mxu0 %v4613
      %v4943 = vpop.f32.mrb[0].mxu0
      %v4944 = vadd.f32 0.0, %v4943
      %v4945 = vpop.f32.mrb[0].mxu0
      %v4946 = vpop.f32.mrb[0].mxu0
      %v4947 = vadd.f32 0.0, %v4946
      %v4948 = vpop.f32.mrb[0].mxu0
      %4949 = vmatprep.mubr.bf16.mxu0 %v4617
      %4950 = vmatmul.mubr.bf16.gmra.mrb[0].mxu0 %v4616
      %v4951 = vpop.f32.mrb[0].mxu0
      %v4952 = vadd.f32 0.0, %v4951
      %v4953 = vpop.f32.mrb[0].mxu0
      %v4954 = vpop.f32.mrb[0].mxu0
      %v4955 = vadd.f32 0.0, %v4954
      %v4956 = vpop.f32.mrb[0].mxu0
      %4957 = vmatprep.mubr.bf16.mxu0 %v4620
      %4958 = vmatmul.mubr.bf16.gmra.mrb[0].mxu0 %v4619
      %v4959 = vpop.f32.mrb[0].mxu0
      %v4960 = vadd.f32 0.0, %v4959
      %v4961 = vpop.f32.mrb[0].mxu0
      %v4962 = vpop.f32.mrb[0].mxu0
      %v4963 = vadd.f32 0.0, %v4962
      %v4964 = vpop.f32.mrb[0].mxu0
      %4965 = vmatprep.mubr.bf16.mxu0 %v4623
      %4966 = vmatmul.mubr.bf16.gmra.mrb[0].mxu0 %v4622
      %v4967 = vpop.f32.mrb[0].mxu0
      %v4968 = vadd.f32 0.0, %v4967
      %v4969 = vpop.f32.mrb[0].mxu0
      %v4970 = vpop.f32.mrb[0].mxu0
      %v4971 = vadd.f32 0.0, %v4970
      %v4972 = vpop.f32.mrb[0].mxu0
      %4973 = vmatprep.mubr.bf16.mxu0 %v4626
      %4974 = vmatmul.mubr.bf16.gmra.mrb[0].mxu0 %v4625
      %v4975 = vpop.f32.mrb[0].mxu0
      %v4976 = vadd.f32 0.0, %v4975
      %v4977 = vpop.f32.mrb[0].mxu0
      %v4978 = vpop.f32.mrb[0].mxu0
      %v4979 = vadd.f32 0.0, %v4978
      %v4980 = vpop.f32.mrb[0].mxu0
      %4981 = vdwg.mxu0
      %4982 = vmatprep.subr.bf16.mxu0 0
      %4983 = vmatpush1.bf16.msra.mxu0 %v4789
      %4984 = vmatprep.subr.bf16.mxu0 0
      %4985 = vmatpush1.bf16.msra.mxu0 %v4790
      %4986 = vmatprep.subr.bf16.mxu0 0
      %4987 = vmatpush1.bf16.msra.mxu0 %v4791
      %4988 = vmatprep.subr.bf16.mxu0 0
      %4989 = vmatpush1.bf16.msra.mxu0 %v4792
      %4990 = vmatprep.subr.bf16.mxu0 0
      %4991 = vmatpush1.bf16.msra.mxu0 %v4793
      %4992 = vmatprep.subr.bf16.mxu0 0
      %4993 = vmatpush1.bf16.msra.mxu0 %v4794
      %4994 = vmatprep.subr.bf16.mxu0 0
      %4995 = vmatpush1.bf16.msra.mxu0 %v4795
      %4996 = vmatprep.subr.bf16.mxu0 0
      %4997 = vmatpush1.bf16.msra.mxu0 %v4796
      %4998 = vmatprep.subr.bf16.mxu0 0
      %4999 = vmatpush1.bf16.msra.mxu0 0
      %5000 = vmatprep.subr.bf16.mxu0 0
      %5001 = vmatpush1.bf16.msra.mxu0 0
      %5002 = vmatprep.subr.bf16.mxu0 0
      %5003 = vmatpush1.bf16.msra.mxu0 0
      %5004 = vmatprep.subr.bf16.mxu0 0
      %5005 = vmatpush1.bf16.msra.mxu0 0
      %5006 = vmatprep.subr.bf16.mxu0 0
      %5007 = vmatpush1.bf16.msra.mxu0 0
      %5008 = vmatprep.subr.bf16.mxu0 0
      %5009 = vmatpush1.bf16.msra.mxu0 0
      %5010 = vmatprep.subr.bf16.mxu0 0
      %5011 = vmatpush1.bf16.msra.mxu0 0
      %5012 = vmatprep.subr.bf16.mxu0 0
      %5013 = vmatpush1.bf16.msra.mxu0 0
      %5014 = vmatprep.mubr.bf16.mxu0 0
      %5015 = vmatmul.mubr.bf16.gmra.mrb[0].mxu0 %v4582
      %v5016 = vpop.f32.mrb[0].mxu0
      %v5017 = vadd.f32 %v4856, %v5016
      %v5018 = vpop.f32.mrb[0].mxu0
      %v5019 = vpop.f32.mrb[0].mxu0
      %v5020 = vadd.f32 %v4859, %v5019
      %v5021 = vpop.f32.mrb[0].mxu0
      %5022 = vmatprep.mubr.bf16.mxu0 0
      %5023 = vmatmul.mubr.bf16.gmra.mrb[0].mxu0 %v4585
      %v5024 = vpop.f32.mrb[0].mxu0
      %v5025 = vadd.f32 %v4864, %v5024
      %v5026 = vpop.f32.mrb[0].mxu0
      %v5027 = vpop.f32.mrb[0].mxu0
      %v5028 = vadd.f32 %v4867, %v5027
      %v5029 = vpop.f32.mrb[0].mxu0
      %5030 = vmatprep.mubr.bf16.mxu0 0
      %5031 = vmatmul.mubr.bf16.gmra.mrb[0].mxu0 %v4588
      %v5032 = vpop.f32.mrb[0].mxu0
      %v5033 = vadd.f32 %v4872, %v5032
      %v5034 = vpop.f32.mrb[0].mxu0
      %v5035 = vpop.f32.mrb[0].mxu0
      %v5036 = vadd.f32 %v4875, %v5035
      %v5037 = vpop.f32.mrb[0].mxu0
      %5038 = vmatprep.mubr.bf16.mxu0 0
      %5039 = vmatmul.mubr.bf16.gmra.mrb[0].mxu0 %v4591
      %v5040 = vpop.f32.mrb[0].mxu0
      %v5041 = vadd.f32 %v4880, %v5040
      %v5042 = vpop.f32.mrb[0].mxu0
      %v5043 = vpop.f32.mrb[0].mxu0
      %v5044 = vadd.f32 %v4883, %v5043
      %v5045 = vpop.f32.mrb[0].mxu0
      %5046 = vmatprep.mubr.bf16.mxu0 0
      %5047 = vmatmul.mubr.bf16.gmra.mrb[0].mxu0 %v4594
      %v5048 = vpop.f32.mrb[0].mxu0
      %v5049 = vadd.f32 %v4888, %v5048
      %v5050 = vpop.f32.mrb[0].mxu0
      %v5051 = vpop.f32.mrb[0].mxu0
      %v5052 = vadd.f32 %v4891, %v5051
      %v5053 = vpop.f32.mrb[0].mxu0
      %5054 = vmatprep.mubr.bf16.mxu0 0
      %5055 = vmatmul.mubr.bf16.gmra.mrb[0].mxu0 %v4597
      %v5056 = vpop.f32.mrb[0].mxu0
      %v5057 = vadd.f32 %v4896, %v5056
      %v5058 = vpop.f32.mrb[0].mxu0
      %v5059 = vpop.f32.mrb[0].mxu0
      %v5060 = vadd.f32 %v4899, %v5059
      %v5061 = vpop.f32.mrb[0].mxu0
      %5062 = vmatprep.mubr.bf16.mxu0 0
      %5063 = vmatmul.mubr.bf16.gmra.mrb[0].mxu0 %v4600
      %v5064 = vpop.f32.mrb[0].mxu0
      %v5065 = vadd.f32 %v4904, %v5064
      %v5066 = vpop.f32.mrb[0].mxu0
      %v5067 = vpop.f32.mrb[0].mxu0
      %v5068 = vadd.f32 %v4907, %v5067
      %v5069 = vpop.f32.mrb[0].mxu0
      %5070 = vmatprep.mubr.bf16.mxu0 0
      %5071 = vmatmul.mubr.bf16.gmra.mrb[0].mxu0 %v4603
      %v5072 = vpop.f32.mrb[0].mxu0
      %v5073 = vadd.f32 %v4912, %v5072
      %v5074 = vpop.f32.mrb[0].mxu0
      %v5075 = vpop.f32.mrb[0].mxu0
      %v5076 = vadd.f32 %v4915, %v5075
      %v5077 = vpop.f32.mrb[0].mxu0
      %5078 = vmatprep.mubr.bf16.mxu0 0
      %5079 = vmatmul.mubr.bf16.gmra.mrb[0].mxu0 %v4606
      %v5080 = vpop.f32.mrb[0].mxu0
      %v5081 = vadd.f32 %v4920, %v5080
      %v5082 = vpop.f32.mrb[0].mxu0
      %v5083 = vpop.f32.mrb[0].mxu0
      %v5084 = vadd.f32 %v4923, %v5083
      %v5085 = vpop.f32.mrb[0].mxu0
      %5086 = vmatprep.mubr.bf16.mxu0 0
      %5087 = vmatmul.mubr.bf16.gmra.mrb[0].mxu0 %v4609
      %v5088 = vpop.f32.mrb[0].mxu0
      %v5089 = vadd.f32 %v4928, %v5088
      %v5090 = vpop.f32.mrb[0].mxu0
      %v5091 = vpop.f32.mrb[0].mxu0
      %v5092 = vadd.f32 %v4931, %v5091
      %v5093 = vpop.f32.mrb[0].mxu0
      %5094 = vmatprep.mubr.bf16.mxu0 0
      %5095 = vmatmul.mubr.bf16.gmra.mrb[0].mxu0 %v4612
      %v5096 = vpop.f32.mrb[0].mxu0
      %v5097 = vadd.f32 %v4936, %v5096
      %v5098 = vpop.f32.mrb[0].mxu0
      %v5099 = vpop.f32.mrb[0].mxu0
      %v5100 = vadd.f32 %v4939, %v5099
      %v5101 = vpop.f32.mrb[0].mxu0
      %5102 = vmatprep.mubr.bf16.mxu0 0
      %5103 = vmatmul.mubr.bf16.gmra.mrb[0].mxu0 %v4615
      %v5104 = vpop.f32.mrb[0].mxu0
      %v5105 = vadd.f32 %v4944, %v5104
      %v5106 = vpop.f32.mrb[0].mxu0
      %v5107 = vpop.f32.mrb[0].mxu0
      %v5108 = vadd.f32 %v4947, %v5107
      %v5109 = vpop.f32.mrb[0].mxu0
      %5110 = vmatprep.mubr.bf16.mxu0 0
      %5111 = vmatmul.mubr.bf16.gmra.mrb[0].mxu0 %v4618
      %v5112 = vpop.f32.mrb[0].mxu0
      %v5113 = vadd.f32 %v4952, %v5112
      %v5114 = vpop.f32.mrb[0].mxu0
      %v5115 = vpop.f32.mrb[0].mxu0
      %v5116 = vadd.f32 %v4955, %v5115
      %v5117 = vpop.f32.mrb[0].mxu0
      %5118 = vmatprep.mubr.bf16.mxu0 0
      %5119 = vmatmul.mubr.bf16.gmra.mrb[0].mxu0 %v4621
      %v5120 = vpop.f32.mrb[0].mxu0
      %v5121 = vadd.f32 %v4960, %v5120
      %v5122 = vpop.f32.mrb[0].mxu0
      %v5123 = vpop.f32.mrb[0].mxu0
      %v5124 = vadd.f32 %v4963, %v5123
      %v5125 = vpop.f32.mrb[0].mxu0
      %5126 = vmatprep.mubr.bf16.mxu0 0
      %5127 = vmatmul.mubr.bf16.gmra.mrb[0].mxu0 %v4624
      %v5128 = vpop.f32.mrb[0].mxu0
      %v5129 = vadd.f32 %v4968, %v5128
      %v5130 = vpop.f32.mrb[0].mxu0
      %v5131 = vpop.f32.mrb[0].mxu0
      %v5132 = vadd.f32 %v4971, %v5131
      %v5133 = vpop.f32.mrb[0].mxu0
      %5134 = vmatprep.mubr.bf16.mxu0 0
      %5135 = vmatmul.mubr.bf16.gmra.mrb[0].mxu0 %v4627
      %v5136 = vpop.f32.mrb[0].mxu0
      %v5137 = vadd.f32 %v4976, %v5136
      %v5138 = vpop.f32.mrb[0].mxu0
      %v5139 = vpop.f32.mrb[0].mxu0
      %v5140 = vadd.f32 %v4979, %v5139
      %v5141 = vpop.f32.mrb[0].mxu0
      %5142 = vdwg.mxu0
      %v5143 = vadd.f32 %v3653, %v5017
      %v5144 = vadd.f32 %v3656, %v5020
      %v5145 = vadd.f32 %v3661, %v5025
      %v5146 = vadd.f32 %v3664, %v5028
      %v5147 = vadd.f32 %v3669, %v5033
      %v5148 = vadd.f32 %v3672, %v5036
      %v5149 = vadd.f32 %v3677, %v5041
      %v5150 = vadd.f32 %v3680, %v5044
      %v5151 = vadd.f32 %v3685, %v5049
      %v5152 = vadd.f32 %v3688, %v5052
      %v5153 = vadd.f32 %v3693, %v5057
      %v5154 = vadd.f32 %v3696, %v5060
      %v5155 = vadd.f32 %v3701, %v5065
      %v5156 = vadd.f32 %v3704, %v5068
      %v5157 = vadd.f32 %v3709, %v5073
      %v5158 = vadd.f32 %v3712, %v5076
      %v5159 = vadd.f32 %v3717, %v5081
      %v5160 = vadd.f32 %v3720, %v5084
      %v5161 = vadd.f32 %v3725, %v5089
      %v5162 = vadd.f32 %v3728, %v5092
      %v5163 = vadd.f32 %v3733, %v5097
      %v5164 = vadd.f32 %v3736, %v5100
      %v5165 = vadd.f32 %v3741, %v5105
      %v5166 = vadd.f32 %v3744, %v5108
      %v5167 = vadd.f32 %v3749, %v5113
      %v5168 = vadd.f32 %v3752, %v5116
      %v5169 = vadd.f32 %v3757, %v5121
      %v5170 = vadd.f32 %v3760, %v5124
      %v5171 = vadd.f32 %v3765, %v5129
      %v5172 = vadd.f32 %v3768, %v5132
      %v5173 = vadd.f32 %v3773, %v5137
      %v5174 = vadd.f32 %v3776, %v5140
      %v5175 = vadd.f32 %v5143, %v5144
      %v5176 = vadd.f32 %v5175, %v5145
      %v5177 = vadd.f32 %v5176, %v5146
      %v5178 = vadd.f32 %v5177, %v5147
      %v5179 = vadd.f32 %v5178, %v5148
      %v5180 = vadd.f32 %v5179, %v5149
      %v5181 = vadd.f32 %v5180, %v5150
      %v5182 = vadd.f32 %v5181, %v5151
      %v5183 = vadd.f32 %v5182, %v5152
      %v5184 = vadd.f32 %v5183, %v5153
      %v5185 = vadd.f32 %v5184, %v5154
      %v5186 = vadd.f32 %v5185, %v5155
      %v5187 = vadd.f32 %v5186, %v5156
      %v5188 = vadd.f32 %v5187, %v5157
      %v5189 = vadd.f32 %v5188, %v5158
      %v5190 = vadd.f32 %v5189, %v5159
      %v5191 = vadd.f32 %v5190, %v5160
      %v5192 = vadd.f32 %v5191, %v5161
      %v5193 = vadd.f32 %v5192, %v5162
      %v5194 = vadd.f32 %v5193, %v5163
      %v5195 = vadd.f32 %v5194, %v5164
      %v5196 = vadd.f32 %v5195, %v5165
      %v5197 = vadd.f32 %v5196, %v5166
      %v5198 = vadd.f32 %v5197, %v5167
      %v5199 = vadd.f32 %v5198, %v5168
      %v5200 = vadd.f32 %v5199, %v5169
      %v5201 = vadd.f32 %v5200, %v5170
      %v5202 = vadd.f32 %v5201, %v5171
      %v5203 = vadd.f32 %v5202, %v5172
      %v5204 = vadd.f32 %v5203, %v5173
      %v5205 = vadd.f32 %v5204, %v5174
      %v5206 = vrot.slane %v5205, 4
      %v5207 = vadd.f32 %v5205, %v5206
      %v5208 = vrot.slane %v5207, 2
      %v5209 = vadd.f32 %v5207, %v5208
      %v5210 = vrot.slane %v5209, 1
      %v5211 = vadd.f32 %v5209, %v5210
      %5212 = vst [vmem:[%s235] sm:$0x1] %v5211
      %v5213 = vmul.f32 %v5143, %v5143
      %v5214 = vmul.f32 %v5144, %v5144
      %v5215 = vmul.f32 %v5145, %v5145
      %v5216 = vmul.f32 %v5146, %v5146
      %v5217 = vmul.f32 %v5147, %v5147
      %v5218 = vmul.f32 %v5148, %v5148
      %v5219 = vmul.f32 %v5149, %v5149
      %v5220 = vmul.f32 %v5150, %v5150
      %v5221 = vmul.f32 %v5151, %v5151
      %v5222 = vmul.f32 %v5152, %v5152
      %v5223 = vmul.f32 %v5153, %v5153
      %v5224 = vmul.f32 %v5154, %v5154
      %v5225 = vmul.f32 %v5155, %v5155
      %v5226 = vmul.f32 %v5156, %v5156
      %v5227 = vmul.f32 %v5157, %v5157
      %v5228 = vmul.f32 %v5158, %v5158
      %v5229 = vmul.f32 %v5159, %v5159
      %v5230 = vmul.f32 %v5160, %v5160
      %v5231 = vmul.f32 %v5161, %v5161
      %v5232 = vmul.f32 %v5162, %v5162
      %v5233 = vmul.f32 %v5163, %v5163
      %v5234 = vmul.f32 %v5164, %v5164
      %v5235 = vmul.f32 %v5165, %v5165
      %v5236 = vmul.f32 %v5166, %v5166
      %v5237 = vmul.f32 %v5167, %v5167
      %v5238 = vmul.f32 %v5168, %v5168
      %v5239 = vmul.f32 %v5169, %v5169
      %v5240 = vmul.f32 %v5170, %v5170
      %v5241 = vmul.f32 %v5171, %v5171
      %v5242 = vmul.f32 %v5172, %v5172
      %v5243 = vmul.f32 %v5173, %v5173
      %v5244 = vmul.f32 %v5174, %v5174
      %v5245 = vadd.f32 %v5213, %v5214
      %v5246 = vadd.f32 %v5245, %v5215
      %v5247 = vadd.f32 %v5246, %v5216
      %v5248 = vadd.f32 %v5247, %v5217
      %v5249 = vadd.f32 %v5248, %v5218
      %v5250 = vadd.f32 %v5249, %v5219
      %v5251 = vadd.f32 %v5250, %v5220
      %v5252 = vadd.f32 %v5251, %v5221
      %v5253 = vadd.f32 %v5252, %v5222
      %v5254 = vadd.f32 %v5253, %v5223
      %v5255 = vadd.f32 %v5254, %v5224
      %v5256 = vadd.f32 %v5255, %v5225
      %v5257 = vadd.f32 %v5256, %v5226
      %v5258 = vadd.f32 %v5257, %v5227
      %v5259 = vadd.f32 %v5258, %v5228
      %v5260 = vadd.f32 %v5259, %v5229
      %v5261 = vadd.f32 %v5260, %v5230
      %v5262 = vadd.f32 %v5261, %v5231
      %v5263 = vadd.f32 %v5262, %v5232
      %v5264 = vadd.f32 %v5263, %v5233
      %v5265 = vadd.f32 %v5264, %v5234
      %v5266 = vadd.f32 %v5265, %v5235
      %v5267 = vadd.f32 %v5266, %v5236
      %v5268 = vadd.f32 %v5267, %v5237
      %v5269 = vadd.f32 %v5268, %v5238
      %v5270 = vadd.f32 %v5269, %v5239
      %v5271 = vadd.f32 %v5270, %v5240
      %v5272 = vadd.f32 %v5271, %v5241
      %v5273 = vadd.f32 %v5272, %v5242
      %v5274 = vadd.f32 %v5273, %v5243
      %v5275 = vadd.f32 %v5274, %v5244
      %v5276 = vrot.slane %v5275, 4
      %v5277 = vadd.f32 %v5275, %v5276
      %v5278 = vrot.slane %v5277, 2
      %v5279 = vadd.f32 %v5277, %v5278
      %v5280 = vrot.slane %v5279, 1
      %v5281 = vadd.f32 %v5279, %v5280
      %5282 = vst [vmem:[%s235 + $0x1] sm:$0x1] %v5281
      %v5283 = vpack.c.bf16 %v5144, %v5143
      %v5284 = vpack.c.bf16 %v5146, %v5145
      %v5285 = vpack.c.bf16 %v5148, %v5147
      %v5286 = vpack.c.bf16 %v5150, %v5149
      %v5287 = vpack.c.bf16 %v5152, %v5151
      %v5288 = vpack.c.bf16 %v5154, %v5153
      %v5289 = vpack.c.bf16 %v5156, %v5155
      %v5290 = vpack.c.bf16 %v5158, %v5157
      %v5291 = vpack.c.bf16 %v5160, %v5159
      %v5292 = vpack.c.bf16 %v5162, %v5161
      %v5293 = vpack.c.bf16 %v5164, %v5163
      %v5294 = vpack.c.bf16 %v5166, %v5165
      %v5295 = vpack.c.bf16 %v5168, %v5167
      %v5296 = vpack.c.bf16 %v5170, %v5169
      %v5297 = vpack.c.bf16 %v5172, %v5171
      %v5298 = vpack.c.bf16 %v5174, %v5173
      %v5315 = vunpack.c.l.b16 %v5283
      %v5316 = vunpack.c.h.b16 %v5283
      %v5317 = vunpack.c.l.b16 %v5284
      %v5318 = vunpack.c.h.b16 %v5284
      %v5319 = vunpack.c.l.b16 %v5285
      %v5320 = vunpack.c.h.b16 %v5285
      %v5321 = vunpack.c.l.b16 %v5286
      %v5322 = vunpack.c.h.b16 %v5286
      %v5323 = vunpack.c.l.b16 %v5287
      %v5324 = vunpack.c.h.b16 %v5287
      %v5325 = vunpack.c.l.b16 %v5288
      %v5326 = vunpack.c.h.b16 %v5288
      %v5327 = vunpack.c.l.b16 %v5289
      %v5328 = vunpack.c.h.b16 %v5289
      %v5329 = vunpack.c.l.b16 %v5290
      %v5330 = vunpack.c.h.b16 %v5290
      %v5331 = vunpack.c.l.b16 %v5291
      %v5332 = vunpack.c.h.b16 %v5291
      %v5333 = vunpack.c.l.b16 %v5292
      %v5334 = vunpack.c.h.b16 %v5292
      %v5335 = vunpack.c.l.b16 %v5293
      %v5336 = vunpack.c.h.b16 %v5293
      %v5337 = vunpack.c.l.b16 %v5294
      %v5338 = vunpack.c.h.b16 %v5294
      %v5339 = vunpack.c.l.b16 %v5295
      %v5340 = vunpack.c.h.b16 %v5295
      %v5341 = vunpack.c.l.b16 %v5296
      %v5342 = vunpack.c.h.b16 %v5296
      %v5343 = vunpack.c.l.b16 %v5297
      %v5344 = vunpack.c.h.b16 %v5297
      %v5345 = vunpack.c.l.b16 %v5298
      %v5346 = vunpack.c.h.b16 %v5298
      %v5347 = vpack.c.b16 %v5315, %v5315
      %v5348 = vpack.c.b16 %v5316, %v5316
      %v5349 = vpack.c.b16 %v5317, %v5317
      %v5350 = vpack.c.b16 %v5318, %v5318
      %v5351 = vpack.c.b16 %v5319, %v5319
      %v5352 = vpack.c.b16 %v5320, %v5320
      %v5353 = vpack.c.b16 %v5321, %v5321
      %v5354 = vpack.c.b16 %v5322, %v5322
      %v5355 = vpack.c.b16 %v5323, %v5323
      %v5356 = vpack.c.b16 %v5324, %v5324
      %v5357 = vpack.c.b16 %v5325, %v5325
      %v5358 = vpack.c.b16 %v5326, %v5326
      %v5359 = vpack.c.b16 %v5327, %v5327
      %v5360 = vpack.c.b16 %v5328, %v5328
      %v5361 = vpack.c.b16 %v5329, %v5329
      %v5362 = vpack.c.b16 %v5330, %v5330
      %v5363 = vpack.c.b16 %v5331, %v5331
      %v5364 = vpack.c.b16 %v5332, %v5332
      %v5365 = vpack.c.b16 %v5333, %v5333
      %v5366 = vpack.c.b16 %v5334, %v5334
      %v5367 = vpack.c.b16 %v5335, %v5335
      %v5368 = vpack.c.b16 %v5336, %v5336
      %v5369 = vpack.c.b16 %v5337, %v5337
      %v5370 = vpack.c.b16 %v5338, %v5338
      %v5371 = vpack.c.b16 %v5339, %v5339
      %v5372 = vpack.c.b16 %v5340, %v5340
      %v5373 = vpack.c.b16 %v5341, %v5341
      %v5374 = vpack.c.b16 %v5342, %v5342
      %v5375 = vpack.c.b16 %v5343, %v5343
      %v5376 = vpack.c.b16 %v5344, %v5344
      %v5377 = vpack.c.b16 %v5345, %v5345
      %v5378 = vpack.c.b16 %v5346, %v5346
      %5411 = vst [vmem:[%s231] sm:$0xf] %v5347
      %5412 = vst [vmem:[%s231 + $0x4] sm:$0xf] %v5348
      %5413 = vst [vmem:[%s231 + $0x8] sm:$0xf] %v5349
      %5414 = vst [vmem:[%s231 + $0xc] sm:$0xf] %v5350
      %5415 = vst [vmem:[%s231 + $0x10] sm:$0xf] %v5351
      %5416 = vst [vmem:[%s231 + $0x14] sm:$0xf] %v5352
      %5417 = vst [vmem:[%s231 + $0x18] sm:$0xf] %v5353
      %5418 = vst [vmem:[%s231 + $0x1c] sm:$0xf] %v5354
      %5419 = vst [vmem:[%s231 + $0x20] sm:$0xf] %v5355
      %5420 = vst [vmem:[%s231 + $0x24] sm:$0xf] %v5356
      %5421 = vst [vmem:[%s231 + $0x28] sm:$0xf] %v5357
      %5422 = vst [vmem:[%s231 + $0x2c] sm:$0xf] %v5358
      %5423 = vst [vmem:[%s231 + $0x30] sm:$0xf] %v5359
      %5424 = vst [vmem:[%s231 + $0x34] sm:$0xf] %v5360
      %5425 = vst [vmem:[%s231 + $0x38] sm:$0xf] %v5361
      %5426 = vst [vmem:[%s231 + $0x3c] sm:$0xf] %v5362
      %5427 = vst [vmem:[%s231 + $0x40] sm:$0xf] %v5363
      %5428 = vst [vmem:[%s231 + $0x44] sm:$0xf] %v5364
      %5429 = vst [vmem:[%s231 + $0x48] sm:$0xf] %v5365
      %5430 = vst [vmem:[%s231 + $0x4c] sm:$0xf] %v5366
      %5431 = vst [vmem:[%s231 + $0x50] sm:$0xf] %v5367
      %5432 = vst [vmem:[%s231 + $0x54] sm:$0xf] %v5368
      %5433 = vst [vmem:[%s231 + $0x58] sm:$0xf] %v5369
      %5434 = vst [vmem:[%s231 + $0x5c] sm:$0xf] %v5370
      %5435 = vst [vmem:[%s231 + $0x60] sm:$0xf] %v5371
      %5436 = vst [vmem:[%s231 + $0x64] sm:$0xf] %v5372
      %5437 = vst [vmem:[%s231 + $0x68] sm:$0xf] %v5373
      %5438 = vst [vmem:[%s231 + $0x6c] sm:$0xf] %v5374
      %5439 = vst [vmem:[%s231 + $0x70] sm:$0xf] %v5375
      %5440 = vst [vmem:[%s231 + $0x74] sm:$0xf] %v5376
      %5441 = vst [vmem:[%s231 + $0x78] sm:$0xf] %v5377
      %5442 = vst [vmem:[%s231 + $0x7c] sm:$0xf] %v5378
      %p5443 = scmp.lt.s32.totalorder %s17, 1
      %s5444 = scalar_select %p5443, %s17, 1
      %s5445 = smul.addr %s5444, 32
      %s5446 = smul.addr %s5445, 4
      %s5447 = scalar_lea.vmem %s4, %s5446
      %p5448 = scmp.lt.s32.totalorder %s17, 1
      %s5449 = scalar_select %p5448, %s17, 1
      %s5450 = smul.addr %s5449, 2
      %s5451 = scalar_lea.vmem %s5, %s5450
      // Predicated region
      $region37: #{basic_block_forward.4} parent=35 // pred_check
        %p5452 = pneg %p124
      $region38: #{basic_block_forward.4} parent=35 // pred_check_branch
        %5454 = sbr.rel (%p5452) target = $region40
      $region39: #{basic_block_forward.4} parent=35 // pred_region
        _
      $region40: #{basic_block_forward.4} parent=35 // pred_fallthru
        _
      // Predicated region
      $region41: #{basic_block_forward.4} parent=35 // pred_check
        %p5455 = pneg %p150
      $region42: #{basic_block_forward.4} parent=35 // pred_check_branch
        %5457 = sbr.rel (%p5455) target = $region44
      $region43: #{basic_block_forward.4} parent=35 // pred_region
        _
      $region44: #{basic_block_forward.4} parent=35 // pred_fallthru
        _
    $region36: #{basic_block_forward.4} parent=5 // pred_fallthru
      _
    %p5458 = scmp.le.s32.totalorder 2, %s12
    // Predicated region
    $region45: #{basic_block_forward.4} parent=5 // pred_check
      %p5459 = pneg %p5458
    $region46: #{basic_block_forward.4} parent=5 // pred_check_branch
      %5461 = sbr.rel (%p5459) target = $region48
    $region47: #{basic_block_forward.4} parent=5 // pred_region
      %s5462 = ssub.s32 %s12, 2
      // Predicated region
      $region49: #{basic_block_forward.4} parent=47 // pred_check
        %p5463 = pneg %p130
      $region50: #{basic_block_forward.4} parent=47 // pred_check_branch
        %5465 = sbr.rel (%p5463) target = $region52
      $region51: #{basic_block_forward.4} parent=47 // pred_region
        %p5466 = scmp.lt.s32.totalorder %s18, 1
        %s5467 = scalar_select %p5466, %s18, 1
        %s5468 = smul.addr %s5467, 32
        %s5469 = smul.addr %s5468, 4
        %s5470 = scalar_lea.vmem %s4, %s5469
      $region52: #{basic_block_forward.4} parent=47 // pred_fallthru
        _
      // Predicated region
      $region53: #{basic_block_forward.4} parent=47 // pred_check
        %p5471 = pneg %p156
      $region54: #{basic_block_forward.4} parent=47 // pred_check_branch
        %5473 = sbr.rel (%p5471) target = $region56
      $region55: #{basic_block_forward.4} parent=47 // pred_region
        %p5474 = scmp.lt.s32.totalorder %s18, 1
        %s5475 = scalar_select %p5474, %s18, 1
        %s5476 = smul.addr %s5475, 2
        %s5477 = scalar_lea.vmem %s5, %s5476
      $region56: #{basic_block_forward.4} parent=47 // pred_fallthru
        _
    $region48: #{basic_block_forward.4} parent=5 // pred_fallthru
      _
  $region6: #{basic_block_forward.4} parent=0 // loop_footer
    %s16 = sadd.s32 1, %s12
  $region7: #{basic_block_forward.4} parent=0 // loop_footer_branch
    %11 = sbr.rel target = $region3
  $region8: #{basic_block_forward.4} parent=0 // loop_exit
    _

</llo_original>
